<compile_context>
chip_gen: v7x
topology: tpu7x:2x2x1
jax: 0.10.0
libtpu: 0.0.40
codegen_flags: <defaults>
</compile_context>

<pallas_src>
import functools

import numpy as np
import jax
import jax.numpy as jnp
from jax import lax
from jax.experimental import pallas as pl
from jax.experimental.pallas import tpu as pltpu

# ----------------------------- configuration --------------------------------
N = 2            # batch
H = W = 16       # spatial
HW = H * W       # 256 pixels per image
NP = N * HW      # 512 pixels total on the lane axis (img0 | img1)
CH_HIGH = 32     # in_high_channels
C = 64           # out_channels == in_low_channels
R = 4
CB = C // R      # bottleneck channels
EPS = 1e-5


# ----------------------------- parameter setup ------------------------------
def _bn(key, c):
    k1, k2, k3, k4 = jax.random.split(key, 4)
    gamma = 1.0 + 0.1 * jax.random.normal(k1, (c,), jnp.float32)
    beta = 0.1 * jax.random.normal(k2, (c,), jnp.float32)
    mean = 0.1 * jax.random.normal(k3, (c,), jnp.float32)
    var = jax.random.uniform(k4, (c,), jnp.float32, minval=0.5, maxval=1.5)
    return gamma, beta, mean, var


def init_params(key):
    ks = jax.random.split(key, 20)

    def cw(k, shape, fan_in):
        return jax.random.normal(k, shape, jnp.float32) / np.sqrt(fan_in)

    p = {}
    # feature_high: 1x1 conv (CH_HIGH -> C) + BN(C)
    p['w_fh'] = cw(ks[0], (CH_HIGH, C), CH_HIGH)
    p['b_fh'] = 0.1 * jax.random.normal(ks[1], (C,), jnp.float32)
    p['bn_fh'] = _bn(ks[2], C)
    # topdown: GAP -> 1x1 conv (C->CB)+BN+ReLU -> 1x1 conv (CB->C)+BN+Sigmoid
    p['w_td1'] = cw(ks[3], (C, CB), C)
    p['b_td1'] = 0.1 * jax.random.normal(ks[4], (CB,), jnp.float32)
    p['bn_td1'] = _bn(ks[5], CB)
    p['w_td2'] = cw(ks[6], (CB, C), CB)
    p['b_td2'] = 0.1 * jax.random.normal(ks[7], (C,), jnp.float32)
    p['bn_td2'] = _bn(ks[8], C)
    # bottomup: 1x1 conv (C->CB)+BN+ReLU -> SpatialAttention(k=3) -> Sigmoid
    p['w_bu'] = cw(ks[9], (C, CB), C)
    p['b_bu'] = 0.1 * jax.random.normal(ks[10], (CB,), jnp.float32)
    p['bn_bu'] = _bn(ks[11], CB)
    p['w_sa'] = cw(ks[12], (9, 2), 18)          # SpatialAttention conv, bias=False
    # post: 3x3 conv (C->C, pad=1) + BN(C) + ReLU (shared between both branches)
    p['w_post'] = cw(ks[13], (9, C, C), 9 * C)  # index k = 3*dy + dx, (k, Cin, Cout)
    p['b_post'] = 0.1 * jax.random.normal(ks[14], (C,), jnp.float32)
    p['bn_post'] = _bn(ks[15], C)
    return p


def fold_bn(w, b, bn):
    """Fold conv bias + eval-mode BN into (w', b'): y = x@w' + b'."""
    gamma, beta, mean, var = bn
    s = gamma / jnp.sqrt(var + EPS)
    return w * s, b * s + beta - mean * s


# --------------------- host-precomputed 3x3 border masks ---------------------
def _make_tap_mask():
    ys, xs = np.meshgrid(np.arange(H), np.arange(W), indexing="ij")
    ys, xs = ys.reshape(-1), xs.reshape(-1)
    m = np.zeros((9, HW), np.float32)
    for k in range(9):
        dy, dx = k // 3 - 1, k % 3 - 1
        m[k] = ((ys + dy >= 0) & (ys + dy < H) &
                (xs + dx >= 0) & (xs + dx < W)).astype(np.float32)
    return np.tile(m, (1, N))          # (9, NP): identical for every image segment


_TAP_MASK_NP = _make_tap_mask()


# ----------------------- pltpu.roll direction probe --------------------------
_SHIFT_MODE = None


def _roll_probe_kernel(x_ref, o_ref):
    o_ref[...] = pltpu.roll(x_ref[...], 1, 1)


def _lane_shift_mode():
    """Determine pltpu.roll's direction once (eagerly); fall back to concat shifts."""
    global _SHIFT_MODE
    if _SHIFT_MODE is not None:
        return _SHIFT_MODE
    try:
        with jax.ensure_compile_time_eval():
            x = jnp.arange(8 * 128, dtype=jnp.float32).reshape(8, 128)
            r = pl.pallas_call(
                _roll_probe_kernel,
                out_shape=jax.ShapeDtypeStruct((8, 128), jnp.float32),
            )(x)
            r = np.asarray(jax.device_get(r))
        xn = np.arange(8 * 128, dtype=np.float32).reshape(8, 128)
        if np.array_equal(r, np.roll(xn, 1, axis=1)):
            _SHIFT_MODE = "roll_like_jnp"     # roll(x, t)[q] == x[(q - t) % L]
        elif np.array_equal(r, np.roll(xn, -1, axis=1)):
            _SHIFT_MODE = "roll_reversed"     # roll(x, t)[q] == x[(q + t) % L]
        else:
            _SHIFT_MODE = "concat"
    except Exception:                          # any lowering / API issue -> safe path
        _SHIFT_MODE = "concat"
    return _SHIFT_MODE


def _shift_lanes(x, s, mode="concat"):
    """Cyclic lane shift: out[..., q] = x[..., (q + s) % L]."""
    L = x.shape[-1]
    s = s % L
    if s == 0:
        return x
    if mode == "roll_like_jnp":
        return pltpu.roll(x, L - s, 1)
    if mode == "roll_reversed":
        return pltpu.roll(x, s, 1)
    return jnp.concatenate([x[..., s:], x[..., :s]], axis=-1)


# ------------------------------ Pallas kernel --------------------------------
def _fused_kernel_body(xh_ref, xl_ref, mask_ref,
                       w_fh_ref, b_fh_ref,
                       w_td1_ref, b_td1_ref, w_td2_ref, b_td2_ref,
                       w_bu_ref, b_bu_ref, w_sa_ref,
                       w_post_ref, b_post_ref,
                       out1_ref, out2_ref,
                       slab_ref, *, shift_mode):
    f32 = jnp.float32
    bf16 = jnp.bfloat16

    msk = mask_ref[...]                                        # (9, NP) 0/1 f32

    # ---- feature_high: 1x1 conv (BN folded) + ReLU --------------------------
    xh = jnp.concatenate([xh_ref[0], xh_ref[1]], axis=-1)      # (CH_HIGH, NP) bf16
    feat = jnp.dot(w_fh_ref[...], xh, preferred_element_type=f32)
    feat = jnp.maximum(feat + b_fh_ref[...], 0.0)              # (C, NP) f32

    # ---- topdown: per-image GAP -> bottleneck MLP (batched over N) -> sigmoid
    gap = jnp.concatenate(
        [jnp.mean(feat[:, n * HW:(n + 1) * HW], axis=1, keepdims=True)
         for n in range(N)], axis=1)                           # (C, N)
    hmid = jnp.maximum(
        jnp.dot(w_td1_ref[...], gap, preferred_element_type=f32) + b_td1_ref[...],
        0.0)                                                   # (CB, N)
    td = jax.nn.sigmoid(
        jnp.dot(w_td2_ref[...], hmid, preferred_element_type=f32) + b_td2_ref[...])  # (C, N)
    td_full = jnp.concatenate(
        [jnp.broadcast_to(td[:, n:n + 1], (C, HW)) for n in range(N)], axis=1)  # (C, NP)

    # ---- bottomup: 1x1 conv + ReLU -> channel mean/max -> 3x3 SA -> sigmoid^2
    xl = jnp.concatenate([xl_ref[0], xl_ref[1]], axis=-1)      # (C, NP) f32
    y = xl * td_full                                           # xl * topdown_wei
    z = jnp.maximum(
        jnp.dot(w_bu_ref[...], y.astype(bf16), preferred_element_type=f32)
        + b_bu_ref[...], 0.0)                                  # (CB, NP) f32
    am = jnp.concatenate([jnp.mean(z, axis=0, keepdims=True),
                          jnp.max(z, axis=0, keepdims=True)], axis=0)   # (2, NP)

    # 3x3 conv (2 -> 1, bias=False) as 9 masked lane shifts; then double sigmoid.
    # (arrays here are tiny (2, 512); keep the portable concat shift for them)
    sa = jnp.zeros((1, NP), f32)
    for k in range(9):
        s = (k // 3 - 1) * W + (k % 3 - 1)
        r = _shift_lanes(am, s)                                # (2, NP)
        tap = r[0:1, :] * w_sa_ref[2 * k] + r[1:2, :] * w_sa_ref[2 * k + 1]
        sa = sa + tap * msk[k:k + 1, :]
    wei = jax.nn.sigmoid(jax.nn.sigmoid(sa))                   # (1, NP)

    # ---- post: shared 3x3 conv (BN + the branch "2*" factor folded) + ReLU ---
    # im2col taps streamed straight into a VMEM scratch slab (bounded live set),
    # one deep-K matmul: (C, 9C) @ (9C, 2*NP).
    def emit_taps(src, col0):                                  # src: (C, NP) f32
        for k in range(9):
            s = (k // 3 - 1) * W + (k % 3 - 1)
            t = _shift_lanes(src, s, shift_mode) * msk[k:k + 1, :]
            slab_ref[k * C:(k + 1) * C, col0:col0 + NP] = t.astype(bf16)

    emit_taps(y, 0)              # branch 1: 2 * xl   * topdown_wei  (2x is in w_post)
    emit_taps(feat * wei, NP)    # branch 2: 2 * feat * bottomup_wei

    res = jnp.dot(w_post_ref[...], slab_ref[...], preferred_element_type=f32)  # (C, 2*NP)
    res = jnp.maximum(res + b_post_ref[...], 0.0)

    # columns: [branch1 img0, branch1 img1, branch2 img0, branch2 img1]
    out1_ref[0] = res[:, 0 * HW:1 * HW]
    out1_ref[1] = res[:, 1 * HW:2 * HW]
    out2_ref[0] = res[:, 2 * HW:3 * HW]
    out2_ref[1] = res[:, 3 * HW:4 * HW]


def _make_fused_kernel(shift_mode):
    def fused_kernel(*refs):
        _fused_kernel_body(*refs, shift_mode=shift_mode)
    return fused_kernel


# ------------------------------ forward wrapper ------------------------------
def asym_bi_cha_fuse(xh_nchw, xl_nchw, p):
    w_fh, b_fh = fold_bn(p['w_fh'], p['b_fh'], p['bn_fh'])
    w_td1, b_td1 = fold_bn(p['w_td1'], p['b_td1'], p['bn_td1'])
    w_td2, b_td2 = fold_bn(p['w_td2'], p['b_td2'], p['bn_td2'])
    w_bu, b_bu = fold_bn(p['w_bu'], p['b_bu'], p['bn_bu'])
    w_post, b_post = fold_bn(p['w_post'], p['b_post'], p['bn_post'])

    # Transpose-free boundary: NCHW -> (N, C, HW) is a free, contiguous reshape.
    xh = xh_nchw.reshape(N, CH_HIGH, HW).astype(jnp.bfloat16)
    xl = xl_nchw.reshape(N, C, HW)

    w_fh_t = w_fh.T.astype(jnp.bfloat16)                        # (C, CH_HIGH)
    w_td1_t = w_td1.T                                           # (CB, C)  f32
    w_td2_t = w_td2.T                                           # (C, CB)  f32
    w_bu_t = w_bu.T.astype(jnp.bfloat16)                        # (CB, C)
    # fold the branch "2 * x" into the post weights (exact power-of-two scale)
    w_post_t = (2.0 * jnp.transpose(w_post, (2, 0, 1)).reshape(C, 9 * C)).astype(jnp.bfloat16)
    w_sa_flat = p['w_sa'].reshape(-1)                           # (18,): [k0_avg, k0_max, ...]
    mask = jnp.asarray(_TAP_MASK_NP)                            # (9, NP) 0/1 f32

    kernel = _make_fused_kernel(_lane_shift_mode())

    vmem = pl.BlockSpec(memory_space=pltpu.MemorySpace.VMEM)
    smem = pl.BlockSpec(memory_space=pltpu.MemorySpace.SMEM)

    out1, out2 = pl.pallas_call(
        kernel,
        out_shape=(jax.ShapeDtypeStruct((N, C, HW), jnp.float32),
                   jax.ShapeDtypeStruct((N, C, HW), jnp.float32)),
        in_specs=[vmem, vmem, vmem,               # xh, xl, tap mask
                  vmem, vmem,                     # feature_high
                  vmem, vmem, vmem, vmem,         # topdown
                  vmem, vmem, smem,               # bottomup + spatial-attention weights
                  vmem, vmem],                    # post
        out_specs=(vmem, vmem),
        scratch_shapes=[pltpu.VMEM((9 * C, 2 * NP), jnp.bfloat16)],   # im2col slab
    )(xh, xl, mask,
      w_fh_t, b_fh.reshape(C, 1),
      w_td1_t, b_td1.reshape(CB, 1), w_td2_t, b_td2.reshape(C, 1),
      w_bu_t, b_bu.reshape(CB, 1), w_sa_flat,
      w_post_t, b_post.reshape(C, 1))

    # (N, C, HW) -> (N, C, H, W) is free.
    return out1.reshape(N, C, H, W), out2.reshape(N, C, H, W)


# ------------------------------ plain-JAX reference --------------------------
def reference(xh_nchw, xl_nchw, p):
    xh = jnp.transpose(xh_nchw, (0, 2, 3, 1))
    xl = jnp.transpose(xl_nchw, (0, 2, 3, 1))
    w_fh, b_fh = fold_bn(p['w_fh'], p['b_fh'], p['bn_fh'])
    w_td1, b_td1 = fold_bn(p['w_td1'], p['b_td1'], p['bn_td1'])
    w_td2, b_td2 = fold_bn(p['w_td2'], p['b_td2'], p['bn_td2'])
    w_bu, b_bu = fold_bn(p['w_bu'], p['b_bu'], p['bn_bu'])
    w_post, b_post = fold_bn(p['w_post'], p['b_post'], p['bn_post'])

    feat = jax.nn.relu(jnp.einsum('nhwc,cd->nhwd', xh, w_fh) + b_fh)
    gap = jnp.mean(feat, axis=(1, 2))
    hmid = jax.nn.relu(gap @ w_td1 + b_td1)
    td = jax.nn.sigmoid(hmid @ w_td2 + b_td2)
    y = xl * td[:, None, None, :]
    z = jax.nn.relu(jnp.einsum('nhwc,cb->nhwb', y, w_bu) + b_bu)
    am = jnp.concatenate([jnp.mean(z, -1, keepdims=True), jnp.max(z, -1, keepdims=True)], -1)
    sa = lax.conv_general_dilated(am, p['w_sa'].reshape(3, 3, 2, 1), (1, 1),
                                  ((1, 1), (1, 1)),
                                  dimension_numbers=('NHWC', 'HWIO', 'NHWC'))[..., 0]
    wei = jax.nn.sigmoid(jax.nn.sigmoid(sa))

    def post(x):
        yy = lax.conv_general_dilated(x, w_post.reshape(3, 3, C, C), (1, 1),
                                      ((1, 1), (1, 1)),
                                      dimension_numbers=('NHWC', 'HWIO', 'NHWC'))
        return jax.nn.relu(yy + b_post)

    xs1 = 2.0 * xl * td[:, None, None, :]
    xs2 = 2.0 * feat * wei[..., None]
    o1, o2 = post(xs1), post(xs2)
    return jnp.transpose(o1, (0, 3, 1, 2)), jnp.transpose(o2, (0, 3, 1, 2))


# ----------------------------------- main ------------------------------------
if __name__ == "__main__":
    key = jax.random.PRNGKey(0)
    kx, kp = jax.random.split(key)
    kh, kl = jax.random.split(kx)
    xh_nchw = jax.random.normal(kh, (N, CH_HIGH, H, W), jnp.float32)
    xl_nchw = jax.random.normal(kl, (N, C, H, W), jnp.float32)
    params = init_params(kp)

    _lane_shift_mode()        # probe pltpu.roll direction once, eagerly (outside jit)

    fwd = jax.jit(lambda a, b: asym_bi_cha_fuse(a, b, params))
    out1, out2 = fwd(xh_nchw, xl_nchw)
    jax.block_until_ready((out1, out2))

    assert out1.shape == (N, C, H, W) and out2.shape == (N, C, H, W)

    r1, r2 = reference(xh_nchw, xl_nchw, params)
    scale = float(jnp.maximum(jnp.max(jnp.abs(r1)), jnp.max(jnp.abs(r2)))) + 1e-6
    err = max(float(jnp.max(jnp.abs(out1 - r1))), float(jnp.max(jnp.abs(out2 - r2))))
    assert err / scale < 3e-2, f"mismatch: max abs err {err} (scale {scale})"

    print("KERNEL_OK")
</pallas_src>

<mosaic_0001>
module attributes {stable_mosaic.version = 11 : i64} {
  func.func @_roll_probe_kernel(%arg0: memref<8x128xf32, #tpu.memory_space<vmem>>, %arg1: memref<8x128xf32, #tpu.memory_space<vmem>>) attributes {dimension_semantics = [], scalar_prefetch = 0 : i64, scratch_operands = 0 : i64, tpu.core_type = #tpu.core_type<tc>} {
    %c0 = arith.constant 0 : index
    %c0_0 = arith.constant 0 : index
    %0 = vector.load %arg0[%c0, %c0_0] : memref<8x128xf32, #tpu.memory_space<vmem>>, vector<8x128xf32>
    %c1_i32 = arith.constant 1 : i32
    %1 = tpu.dynamic_rotate %0 by %c1_i32 dim 1 : vector<8x128xf32>, i32 -> vector<8x128xf32>
    %c0_1 = arith.constant 0 : index
    %c0_2 = arith.constant 0 : index
    %2 = vector.load %arg1[%c0_1, %c0_2] : memref<8x128xf32, #tpu.memory_space<vmem>>, vector<8x128xf32>
    tpu.vector_store %arg1[%c0_1, %c0_2], %1 {strides = array<i32>} : memref<8x128xf32, #tpu.memory_space<vmem>>, vector<8x128xf32>,
    return
  }
}

module attributes {stable_mosaic.version = 11 : i64} {
  func.func @fused_kernel(%arg0: memref<2x32x256xbf16, #tpu.memory_space<vmem>>, %arg1: memref<2x64x256xf32, #tpu.memory_space<vmem>>, %arg2: memref<9x512xf32, #tpu.memory_space<vmem>>, %arg3: memref<64x32xbf16, #tpu.memory_space<vmem>>, %arg4: memref<64x1xf32, #tpu.memory_space<vmem>>, %arg5: memref<16x64xf32, #tpu.memory_space<vmem>>, %arg6: memref<16x1xf32, #tpu.memory_space<vmem>>, %arg7: memref<64x16xf32, #tpu.memory_space<vmem>>, %arg8: memref<64x1xf32, #tpu.memory_space<vmem>>, %arg9: memref<16x64xbf16, #tpu.memory_space<vmem>>, %arg10: memref<16x1xf32, #tpu.memory_space<vmem>>, %arg11: memref<18xf32, #tpu.memory_space<smem>>, %arg12: memref<64x576xbf16, #tpu.memory_space<vmem>>, %arg13: memref<64x1xf32, #tpu.memory_space<vmem>>, %arg14: memref<2x64x256xf32, #tpu.memory_space<vmem>>, %arg15: memref<2x64x256xf32, #tpu.memory_space<vmem>>, %arg16: memref<576x1024xbf16, #tpu.memory_space<vmem>>) attributes {dimension_semantics = [], scalar_prefetch = 0 : i64, scratch_operands = 1 : i64, tpu.core_type = #tpu.core_type<tc>} {
    %c0 = arith.constant 0 : index
    %c0_0 = arith.constant 0 : index
    %0 = vector.load %arg2[%c0, %c0_0] : memref<9x512xf32, #tpu.memory_space<vmem>>, vector<9x512xf32>
    %c0_1 = arith.constant 0 : index
    %c0_2 = arith.constant 0 : index
    %c0_3 = arith.constant 0 : index
    %1 = vector.load %arg0[%c0_1, %c0_2, %c0_3] : memref<2x32x256xbf16, #tpu.memory_space<vmem>>, vector<1x32x256xbf16>
    %2 = vector.shape_cast %1 : vector<1x32x256xbf16> to vector<32x256xbf16>
    %c1 = arith.constant 1 : index
    %c0_4 = arith.constant 0 : index
    %c0_5 = arith.constant 0 : index
    %3 = vector.load %arg0[%c1, %c0_4, %c0_5] : memref<2x32x256xbf16, #tpu.memory_space<vmem>>, vector<1x32x256xbf16>
    %4 = vector.shape_cast %3 : vector<1x32x256xbf16> to vector<32x256xbf16>
    %5 = tpu.concatenate %2, %4 in 1 : vector<32x256xbf16>, vector<32x256xbf16> -> vector<32x512xbf16>
    %c0_6 = arith.constant 0 : index
    %c0_7 = arith.constant 0 : index
    %6 = vector.load %arg3[%c0_6, %c0_7] : memref<64x32xbf16, #tpu.memory_space<vmem>>, vector<64x32xbf16>
    %cst = arith.constant dense<0.000000e+00> : vector<64x512xf32>
    %7 = tpu.matmul %6, %5, %cst {dimension_numbers = #tpu.dot_dimension_numbers<[1], [0], [0], [1], [0, 0, 1, 1], [], []>} : vector<64x32xbf16>, vector<32x512xbf16>, vector<64x512xf32> -> vector<64x512xf32>
    %c0_8 = arith.constant 0 : index
    %c0_9 = arith.constant 0 : index
    %8 = vector.load %arg4[%c0_8, %c0_9] : memref<64x1xf32, #tpu.memory_space<vmem>>, vector<64x1xf32>
    %9 = vector.broadcast %8 : vector<64x1xf32> to vector<64x512xf32>
    %10 = arith.addf %7, %9 : vector<64x512xf32>
    %cst_10 = arith.constant 0.000000e+00 : f32
    %11 = vector.broadcast %cst_10 : f32 to vector<64x512xf32>
    %12 = arith.maximumf %10, %11 : vector<64x512xf32>
    %13 = vector.extract_strided_slice %12 {offsets = [0, 0], sizes = [64, 256], strides = [1, 1]} : vector<64x512xf32> to vector<64x256xf32>
    %cst_11 = arith.constant dense<0.000000e+00> : vector<64xf32>
    %14 = vector.multi_reduction <add>, %13, %cst_11 [1] : vector<64x256xf32> to vector<64xf32>
    %15 = vector.shape_cast %14 : vector<64xf32> to vector<64x1xf32>
    %cst_12 = arith.constant 2.560000e+02 : f32
    %16 = vector.broadcast %cst_12 : f32 to vector<64x1xf32>
    %17 = arith.divf %15, %16 : vector<64x1xf32>
    %18 = vector.extract_strided_slice %12 {offsets = [0, 256], sizes = [64, 256], strides = [1, 1]} : vector<64x512xf32> to vector<64x256xf32>
    %cst_13 = arith.constant dense<0.000000e+00> : vector<64xf32>
    %19 = vector.multi_reduction <add>, %18, %cst_13 [1] : vector<64x256xf32> to vector<64xf32>
    %20 = vector.shape_cast %19 : vector<64xf32> to vector<64x1xf32>
    %cst_14 = arith.constant 2.560000e+02 : f32
    %21 = vector.broadcast %cst_14 : f32 to vector<64x1xf32>
    %22 = arith.divf %20, %21 : vector<64x1xf32>
    %23 = tpu.concatenate %17, %22 in 1 : vector<64x1xf32>, vector<64x1xf32> -> vector<64x2xf32>
    %c0_15 = arith.constant 0 : index
    %c0_16 = arith.constant 0 : index
    %24 = vector.load %arg5[%c0_15, %c0_16] : memref<16x64xf32, #tpu.memory_space<vmem>>, vector<16x64xf32>
    %cst_17 = arith.constant dense<0.000000e+00> : vector<16x2xf32>
    %25 = tpu.matmul %24, %23, %cst_17 {dimension_numbers = #tpu.dot_dimension_numbers<[1], [0], [0], [1], [0, 0, 1, 1], [], []>} : vector<16x64xf32>, vector<64x2xf32>, vector<16x2xf32> -> vector<16x2xf32>
    %c0_18 = arith.constant 0 : index
    %c0_19 = arith.constant 0 : index
    %26 = vector.load %arg6[%c0_18, %c0_19] : memref<16x1xf32, #tpu.memory_space<vmem>>, vector<16x1xf32>
    %27 = vector.broadcast %26 : vector<16x1xf32> to vector<16x2xf32>
    %28 = arith.addf %25, %27 : vector<16x2xf32>
    %cst_20 = arith.constant 0.000000e+00 : f32
    %29 = vector.broadcast %cst_20 : f32 to vector<16x2xf32>
    %30 = arith.maximumf %28, %29 : vector<16x2xf32>
    %c0_21 = arith.constant 0 : index
    %c0_22 = arith.constant 0 : index
    %31 = vector.load %arg7[%c0_21, %c0_22] : memref<64x16xf32, #tpu.memory_space<vmem>>, vector<64x16xf32>
    %cst_23 = arith.constant dense<0.000000e+00> : vector<64x2xf32>
    %32 = tpu.matmul %31, %30, %cst_23 {dimension_numbers = #tpu.dot_dimension_numbers<[1], [0], [0], [1], [0, 0, 1, 1], [], []>} : vector<64x16xf32>, vector<16x2xf32>, vector<64x2xf32> -> vector<64x2xf32>
    %c0_24 = arith.constant 0 : index
    %c0_25 = arith.constant 0 : index
    %33 = vector.load %arg8[%c0_24, %c0_25] : memref<64x1xf32, #tpu.memory_space<vmem>>, vector<64x1xf32>
    %34 = vector.broadcast %33 : vector<64x1xf32> to vector<64x2xf32>
    %35 = arith.addf %32, %34 : vector<64x2xf32>
    %36 = arith.negf %35 : vector<64x2xf32>
    %37 = math.exp %36 : vector<64x2xf32>
    %cst_26 = arith.constant 1.000000e+00 : f32
    %38 = vector.broadcast %cst_26 : f32 to vector<64x2xf32>
    %39 = arith.addf %38, %37 : vector<64x2xf32>
    %40 = arith.divf %38, %39 : vector<64x2xf32>
    %41 = vector.extract_strided_slice %40 {offsets = [0, 0], sizes = [64, 1], strides = [1, 1]} : vector<64x2xf32> to vector<64x1xf32>
    %42 = vector.shape_cast %41 : vector<64x1xf32> to vector<64x1xf32>
    %43 = vector.broadcast %42 : vector<64x1xf32> to vector<64x256xf32>
    %44 = vector.extract_strided_slice %40 {offsets = [0, 1], sizes = [64, 1], strides = [1, 1]} : vector<64x2xf32> to vector<64x1xf32>
    %45 = vector.shape_cast %44 : vector<64x1xf32> to vector<64x1xf32>
    %46 = vector.broadcast %45 : vector<64x1xf32> to vector<64x256xf32>
    %47 = tpu.concatenate %43, %46 in 1 : vector<64x256xf32>, vector<64x256xf32> -> vector<64x512xf32>
    %c0_27 = arith.constant 0 : index
    %c0_28 = arith.constant 0 : index
    %c0_29 = arith.constant 0 : index
    %48 = vector.load %arg1[%c0_27, %c0_28, %c0_29] : memref<2x64x256xf32, #tpu.memory_space<vmem>>, vector<1x64x256xf32>
    %49 = vector.shape_cast %48 : vector<1x64x256xf32> to vector<64x256xf32>
    %c1_30 = arith.constant 1 : index
    %c0_31 = arith.constant 0 : index
    %c0_32 = arith.constant 0 : index
    %50 = vector.load %arg1[%c1_30, %c0_31, %c0_32] : memref<2x64x256xf32, #tpu.memory_space<vmem>>, vector<1x64x256xf32>
    %51 = vector.shape_cast %50 : vector<1x64x256xf32> to vector<64x256xf32>
    %52 = tpu.concatenate %49, %51 in 1 : vector<64x256xf32>, vector<64x256xf32> -> vector<64x512xf32>
    %53 = arith.mulf %52, %47 : vector<64x512xf32>
    %c0_33 = arith.constant 0 : index
    %c0_34 = arith.constant 0 : index
    %54 = vector.load %arg9[%c0_33, %c0_34] : memref<16x64xbf16, #tpu.memory_space<vmem>>, vector<16x64xbf16>
    %55 = arith.truncf %53 : vector<64x512xf32> to vector<64x512xbf16>
    %cst_35 = arith.constant dense<0.000000e+00> : vector<16x512xf32>
    %56 = tpu.matmul %54, %55, %cst_35 {dimension_numbers = #tpu.dot_dimension_numbers<[1], [0], [0], [1], [0, 0, 1, 1], [], []>} : vector<16x64xbf16>, vector<64x512xbf16>, vector<16x512xf32> -> vector<16x512xf32>
    %c0_36 = arith.constant 0 : index
    %c0_37 = arith.constant 0 : index
    %57 = vector.load %arg10[%c0_36, %c0_37] : memref<16x1xf32, #tpu.memory_space<vmem>>, vector<16x1xf32>
    %58 = vector.broadcast %57 : vector<16x1xf32> to vector<16x512xf32>
    %59 = arith.addf %56, %58 : vector<16x512xf32>
    %cst_38 = arith.constant 0.000000e+00 : f32
    %60 = vector.broadcast %cst_38 : f32 to vector<16x512xf32>
    %61 = arith.maximumf %59, %60 : vector<16x512xf32>
    %cst_39 = arith.constant dense<0.000000e+00> : vector<512xf32>
    %62 = vector.multi_reduction <add>, %61, %cst_39 [0] : vector<16x512xf32> to vector<512xf32>
    %63 = vector.shape_cast %62 : vector<512xf32> to vector<1x512xf32>
    %cst_40 = arith.constant 1.600000e+01 : f32
    %64 = vector.broadcast %cst_40 : f32 to vector<1x512xf32>
    %65 = arith.divf %63, %64 : vector<1x512xf32>
    %cst_41 = arith.constant dense<0xFF800000> : vector<512xf32>
    %66 = vector.multi_reduction <maximumf>, %61, %cst_41 [0] : vector<16x512xf32> to vector<512xf32>
    %67 = vector.shape_cast %66 : vector<512xf32> to vector<1x512xf32>
    %68 = tpu.concatenate %65, %67 in 0 : vector<1x512xf32>, vector<1x512xf32> -> vector<2x512xf32>
    %cst_42 = arith.constant 0.000000e+00 : f32
    %69 = vector.broadcast %cst_42 : f32 to vector<1x512xf32>
    %70 = vector.extract_strided_slice %68 {offsets = [0, 495], sizes = [2, 17], strides = [1, 1]} : vector<2x512xf32> to vector<2x17xf32>
    %71 = vector.extract_strided_slice %68 {offsets = [0, 0], sizes = [2, 495], strides = [1, 1]} : vector<2x512xf32> to vector<2x495xf32>
    %72 = tpu.concatenate %70, %71 in 1 : vector<2x17xf32>, vector<2x495xf32> -> vector<2x512xf32>
    %73 = vector.extract_strided_slice %72 {offsets = [0, 0], sizes = [1, 512], strides = [1, 1]} : vector<2x512xf32> to vector<1x512xf32>
    %c0_43 = arith.constant 0 : index
    %74 = memref.load %arg11[%c0_43] : memref<18xf32, #tpu.memory_space<smem>>
    %75 = vector.broadcast %74 : f32 to vector<1x512xf32>
    %76 = arith.mulf %73, %75 : vector<1x512xf32>
    %77 = vector.extract_strided_slice %72 {offsets = [1, 0], sizes = [1, 512], strides = [1, 1]} : vector<2x512xf32> to vector<1x512xf32>
    %c1_44 = arith.constant 1 : index
    %78 = memref.load %arg11[%c1_44] : memref<18xf32, #tpu.memory_space<smem>>
    %79 = vector.broadcast %78 : f32 to vector<1x512xf32>
    %80 = arith.mulf %77, %79 : vector<1x512xf32>
    %81 = arith.addf %76, %80 : vector<1x512xf32>
    %82 = vector.extract_strided_slice %0 {offsets = [0, 0], sizes = [1, 512], strides = [1, 1]} : vector<9x512xf32> to vector<1x512xf32>
    %83 = arith.mulf %81, %82 : vector<1x512xf32>
    %84 = arith.addf %69, %83 : vector<1x512xf32>
    %85 = vector.extract_strided_slice %68 {offsets = [0, 496], sizes = [2, 16], strides = [1, 1]} : vector<2x512xf32> to vector<2x16xf32>
    %86 = vector.extract_strided_slice %68 {offsets = [0, 0], sizes = [2, 496], strides = [1, 1]} : vector<2x512xf32> to vector<2x496xf32>
    %87 = tpu.concatenate %85, %86 in 1 : vector<2x16xf32>, vector<2x496xf32> -> vector<2x512xf32>
    %88 = vector.extract_strided_slice %87 {offsets = [0, 0], sizes = [1, 512], strides = [1, 1]} : vector<2x512xf32> to vector<1x512xf32>
    %c2 = arith.constant 2 : index
    %89 = memref.load %arg11[%c2] : memref<18xf32, #tpu.memory_space<smem>>
    %90 = vector.broadcast %89 : f32 to vector<1x512xf32>
    %91 = arith.mulf %88, %90 : vector<1x512xf32>
    %92 = vector.extract_strided_slice %87 {offsets = [1, 0], sizes = [1, 512], strides = [1, 1]} : vector<2x512xf32> to vector<1x512xf32>
    %c3 = arith.constant 3 : index
    %93 = memref.load %arg11[%c3] : memref<18xf32, #tpu.memory_space<smem>>
    %94 = vector.broadcast %93 : f32 to vector<1x512xf32>
    %95 = arith.mulf %92, %94 : vector<1x512xf32>
    %96 = arith.addf %91, %95 : vector<1x512xf32>
    %97 = vector.extract_strided_slice %0 {offsets = [1, 0], sizes = [1, 512], strides = [1, 1]} : vector<9x512xf32> to vector<1x512xf32>
    %98 = arith.mulf %96, %97 : vector<1x512xf32>
    %99 = arith.addf %84, %98 : vector<1x512xf32>
    %100 = vector.extract_strided_slice %68 {offsets = [0, 497], sizes = [2, 15], strides = [1, 1]} : vector<2x512xf32> to vector<2x15xf32>
    %101 = vector.extract_strided_slice %68 {offsets = [0, 0], sizes = [2, 497], strides = [1, 1]} : vector<2x512xf32> to vector<2x497xf32>
    %102 = tpu.concatenate %100, %101 in 1 : vector<2x15xf32>, vector<2x497xf32> -> vector<2x512xf32>
    %103 = vector.extract_strided_slice %102 {offsets = [0, 0], sizes = [1, 512], strides = [1, 1]} : vector<2x512xf32> to vector<1x512xf32>
    %c4 = arith.constant 4 : index
    %104 = memref.load %arg11[%c4] : memref<18xf32, #tpu.memory_space<smem>>
    %105 = vector.broadcast %104 : f32 to vector<1x512xf32>
    %106 = arith.mulf %103, %105 : vector<1x512xf32>
    %107 = vector.extract_strided_slice %102 {offsets = [1, 0], sizes = [1, 512], strides = [1, 1]} : vector<2x512xf32> to vector<1x512xf32>
    %c5 = arith.constant 5 : index
    %108 = memref.load %arg11[%c5] : memref<18xf32, #tpu.memory_space<smem>>
    %109 = vector.broadcast %108 : f32 to vector<1x512xf32>
    %110 = arith.mulf %107, %109 : vector<1x512xf32>
    %111 = arith.addf %106, %110 : vector<1x512xf32>
    %112 = vector.extract_strided_slice %0 {offsets = [2, 0], sizes = [1, 512], strides = [1, 1]} : vector<9x512xf32> to vector<1x512xf32>
    %113 = arith.mulf %111, %112 : vector<1x512xf32>
    %114 = arith.addf %99, %113 : vector<1x512xf32>
    %115 = vector.extract_strided_slice %68 {offsets = [0, 511], sizes = [2, 1], strides = [1, 1]} : vector<2x512xf32> to vector<2x1xf32>
    %116 = vector.extract_strided_slice %68 {offsets = [0, 0], sizes = [2, 511], strides = [1, 1]} : vector<2x512xf32> to vector<2x511xf32>
    %117 = tpu.concatenate %115, %116 in 1 : vector<2x1xf32>, vector<2x511xf32> -> vector<2x512xf32>
    %118 = vector.extract_strided_slice %117 {offsets = [0, 0], sizes = [1, 512], strides = [1, 1]} : vector<2x512xf32> to vector<1x512xf32>
    %c6 = arith.constant 6 : index
    %119 = memref.load %arg11[%c6] : memref<18xf32, #tpu.memory_space<smem>>
    %120 = vector.broadcast %119 : f32 to vector<1x512xf32>
    %121 = arith.mulf %118, %120 : vector<1x512xf32>
    %122 = vector.extract_strided_slice %117 {offsets = [1, 0], sizes = [1, 512], strides = [1, 1]} : vector<2x512xf32> to vector<1x512xf32>
    %c7 = arith.constant 7 : index
    %123 = memref.load %arg11[%c7] : memref<18xf32, #tpu.memory_space<smem>>
    %124 = vector.broadcast %123 : f32 to vector<1x512xf32>
    %125 = arith.mulf %122, %124 : vector<1x512xf32>
    %126 = arith.addf %121, %125 : vector<1x512xf32>
    %127 = vector.extract_strided_slice %0 {offsets = [3, 0], sizes = [1, 512], strides = [1, 1]} : vector<9x512xf32> to vector<1x512xf32>
    %128 = arith.mulf %126, %127 : vector<1x512xf32>
    %129 = arith.addf %114, %128 : vector<1x512xf32>
    %130 = vector.extract_strided_slice %68 {offsets = [0, 0], sizes = [1, 512], strides = [1, 1]} : vector<2x512xf32> to vector<1x512xf32>
    %c8 = arith.constant 8 : index
    %131 = memref.load %arg11[%c8] : memref<18xf32, #tpu.memory_space<smem>>
    %132 = vector.broadcast %131 : f32 to vector<1x512xf32>
    %133 = arith.mulf %130, %132 : vector<1x512xf32>
    %134 = vector.extract_strided_slice %68 {offsets = [1, 0], sizes = [1, 512], strides = [1, 1]} : vector<2x512xf32> to vector<1x512xf32>
    %c9 = arith.constant 9 : index
    %135 = memref.load %arg11[%c9] : memref<18xf32, #tpu.memory_space<smem>>
    %136 = vector.broadcast %135 : f32 to vector<1x512xf32>
    %137 = arith.mulf %134, %136 : vector<1x512xf32>
    %138 = arith.addf %133, %137 : vector<1x512xf32>
    %139 = vector.extract_strided_slice %0 {offsets = [4, 0], sizes = [1, 512], strides = [1, 1]} : vector<9x512xf32> to vector<1x512xf32>
    %140 = arith.mulf %138, %139 : vector<1x512xf32>
    %141 = arith.addf %129, %140 : vector<1x512xf32>
    %142 = vector.extract_strided_slice %68 {offsets = [0, 1], sizes = [2, 511], strides = [1, 1]} : vector<2x512xf32> to vector<2x511xf32>
    %143 = vector.extract_strided_slice %68 {offsets = [0, 0], sizes = [2, 1], strides = [1, 1]} : vector<2x512xf32> to vector<2x1xf32>
    %144 = tpu.concatenate %142, %143 in 1 : vector<2x511xf32>, vector<2x1xf32> -> vector<2x512xf32>
    %145 = vector.extract_strided_slice %144 {offsets = [0, 0], sizes = [1, 512], strides = [1, 1]} : vector<2x512xf32> to vector<1x512xf32>
    %c10 = arith.constant 10 : index
    %146 = memref.load %arg11[%c10] : memref<18xf32, #tpu.memory_space<smem>>
    %147 = vector.broadcast %146 : f32 to vector<1x512xf32>
    %148 = arith.mulf %145, %147 : vector<1x512xf32>
    %149 = vector.extract_strided_slice %144 {offsets = [1, 0], sizes = [1, 512], strides = [1, 1]} : vector<2x512xf32> to vector<1x512xf32>
    %c11 = arith.constant 11 : index
    %150 = memref.load %arg11[%c11] : memref<18xf32, #tpu.memory_space<smem>>
    %151 = vector.broadcast %150 : f32 to vector<1x512xf32>
    %152 = arith.mulf %149, %151 : vector<1x512xf32>
    %153 = arith.addf %148, %152 : vector<1x512xf32>
    %154 = vector.extract_strided_slice %0 {offsets = [5, 0], sizes = [1, 512], strides = [1, 1]} : vector<9x512xf32> to vector<1x512xf32>
    %155 = arith.mulf %153, %154 : vector<1x512xf32>
    %156 = arith.addf %141, %155 : vector<1x512xf32>
    %157 = vector.extract_strided_slice %68 {offsets = [0, 15], sizes = [2, 497], strides = [1, 1]} : vector<2x512xf32> to vector<2x497xf32>
    %158 = vector.extract_strided_slice %68 {offsets = [0, 0], sizes = [2, 15], strides = [1, 1]} : vector<2x512xf32> to vector<2x15xf32>
    %159 = tpu.concatenate %157, %158 in 1 : vector<2x497xf32>, vector<2x15xf32> -> vector<2x512xf32>
    %160 = vector.extract_strided_slice %159 {offsets = [0, 0], sizes = [1, 512], strides = [1, 1]} : vector<2x512xf32> to vector<1x512xf32>
    %c12 = arith.constant 12 : index
    %161 = memref.load %arg11[%c12] : memref<18xf32, #tpu.memory_space<smem>>
    %162 = vector.broadcast %161 : f32 to vector<1x512xf32>
    %163 = arith.mulf %160, %162 : vector<1x512xf32>
    %164 = vector.extract_strided_slice %159 {offsets = [1, 0], sizes = [1, 512], strides = [1, 1]} : vector<2x512xf32> to vector<1x512xf32>
    %c13 = arith.constant 13 : index
    %165 = memref.load %arg11[%c13] : memref<18xf32, #tpu.memory_space<smem>>
    %166 = vector.broadcast %165 : f32 to vector<1x512xf32>
    %167 = arith.mulf %164, %166 : vector<1x512xf32>
    %168 = arith.addf %163, %167 : vector<1x512xf32>
    %169 = vector.extract_strided_slice %0 {offsets = [6, 0], sizes = [1, 512], strides = [1, 1]} : vector<9x512xf32> to vector<1x512xf32>
    %170 = arith.mulf %168, %169 : vector<1x512xf32>
    %171 = arith.addf %156, %170 : vector<1x512xf32>
    %172 = vector.extract_strided_slice %68 {offsets = [0, 16], sizes = [2, 496], strides = [1, 1]} : vector<2x512xf32> to vector<2x496xf32>
    %173 = vector.extract_strided_slice %68 {offsets = [0, 0], sizes = [2, 16], strides = [1, 1]} : vector<2x512xf32> to vector<2x16xf32>
    %174 = tpu.concatenate %172, %173 in 1 : vector<2x496xf32>, vector<2x16xf32> -> vector<2x512xf32>
    %175 = vector.extract_strided_slice %174 {offsets = [0, 0], sizes = [1, 512], strides = [1, 1]} : vector<2x512xf32> to vector<1x512xf32>
    %c14 = arith.constant 14 : index
    %176 = memref.load %arg11[%c14] : memref<18xf32, #tpu.memory_space<smem>>
    %177 = vector.broadcast %176 : f32 to vector<1x512xf32>
    %178 = arith.mulf %175, %177 : vector<1x512xf32>
    %179 = vector.extract_strided_slice %174 {offsets = [1, 0], sizes = [1, 512], strides = [1, 1]} : vector<2x512xf32> to vector<1x512xf32>
    %c15 = arith.constant 15 : index
    %180 = memref.load %arg11[%c15] : memref<18xf32, #tpu.memory_space<smem>>
    %181 = vector.broadcast %180 : f32 to vector<1x512xf32>
    %182 = arith.mulf %179, %181 : vector<1x512xf32>
    %183 = arith.addf %178, %182 : vector<1x512xf32>
    %184 = vector.extract_strided_slice %0 {offsets = [7, 0], sizes = [1, 512], strides = [1, 1]} : vector<9x512xf32> to vector<1x512xf32>
    %185 = arith.mulf %183, %184 : vector<1x512xf32>
    %186 = arith.addf %171, %185 : vector<1x512xf32>
    %187 = vector.extract_strided_slice %68 {offsets = [0, 17], sizes = [2, 495], strides = [1, 1]} : vector<2x512xf32> to vector<2x495xf32>
    %188 = vector.extract_strided_slice %68 {offsets = [0, 0], sizes = [2, 17], strides = [1, 1]} : vector<2x512xf32> to vector<2x17xf32>
    %189 = tpu.concatenate %187, %188 in 1 : vector<2x495xf32>, vector<2x17xf32> -> vector<2x512xf32>
    %190 = vector.extract_strided_slice %189 {offsets = [0, 0], sizes = [1, 512], strides = [1, 1]} : vector<2x512xf32> to vector<1x512xf32>
    %c16 = arith.constant 16 : index
    %191 = memref.load %arg11[%c16] : memref<18xf32, #tpu.memory_space<smem>>
    %192 = vector.broadcast %191 : f32 to vector<1x512xf32>
    %193 = arith.mulf %190, %192 : vector<1x512xf32>
    %194 = vector.extract_strided_slice %189 {offsets = [1, 0], sizes = [1, 512], strides = [1, 1]} : vector<2x512xf32> to vector<1x512xf32>
    %c17 = arith.constant 17 : index
    %195 = memref.load %arg11[%c17] : memref<18xf32, #tpu.memory_space<smem>>
    %196 = vector.broadcast %195 : f32 to vector<1x512xf32>
    %197 = arith.mulf %194, %196 : vector<1x512xf32>
    %198 = arith.addf %193, %197 : vector<1x512xf32>
    %199 = vector.extract_strided_slice %0 {offsets = [8, 0], sizes = [1, 512], strides = [1, 1]} : vector<9x512xf32> to vector<1x512xf32>
    %200 = arith.mulf %198, %199 : vector<1x512xf32>
    %201 = arith.addf %186, %200 : vector<1x512xf32>
    %202 = arith.negf %201 : vector<1x512xf32>
    %203 = math.exp %202 : vector<1x512xf32>
    %cst_45 = arith.constant 1.000000e+00 : f32
    %204 = vector.broadcast %cst_45 : f32 to vector<1x512xf32>
    %205 = arith.addf %204, %203 : vector<1x512xf32>
    %206 = arith.divf %204, %205 : vector<1x512xf32>
    %207 = arith.negf %206 : vector<1x512xf32>
    %208 = math.exp %207 : vector<1x512xf32>
    %cst_46 = arith.constant 1.000000e+00 : f32
    %209 = vector.broadcast %cst_46 : f32 to vector<1x512xf32>
    %210 = arith.addf %209, %208 : vector<1x512xf32>
    %211 = arith.divf %209, %210 : vector<1x512xf32>
    %212 = vector.extract_strided_slice %53 {offsets = [0, 495], sizes = [64, 17], strides = [1, 1]} : vector<64x512xf32> to vector<64x17xf32>
    %213 = vector.extract_strided_slice %53 {offsets = [0, 0], sizes = [64, 495], strides = [1, 1]} : vector<64x512xf32> to vector<64x495xf32>
    %214 = tpu.concatenate %212, %213 in 1 : vector<64x17xf32>, vector<64x495xf32> -> vector<64x512xf32>
    %215 = vector.extract_strided_slice %0 {offsets = [0, 0], sizes = [1, 512], strides = [1, 1]} : vector<9x512xf32> to vector<1x512xf32>
    %216 = vector.broadcast %215 : vector<1x512xf32> to vector<64x512xf32>
    %217 = arith.mulf %214, %216 : vector<64x512xf32>
    %218 = arith.truncf %217 : vector<64x512xf32> to vector<64x512xbf16>
    %c0_47 = arith.constant 0 : index
    %c0_48 = arith.constant 0 : index
    %219 = vector.load %arg16[%c0_47, %c0_48] : memref<576x1024xbf16, #tpu.memory_space<vmem>>, vector<64x512xbf16>
    tpu.vector_store %arg16[%c0_47, %c0_48], %218 {strides = array<i32>} : memref<576x1024xbf16, #tpu.memory_space<vmem>>, vector<64x512xbf16>,
    %220 = vector.extract_strided_slice %53 {offsets = [0, 496], sizes = [64, 16], strides = [1, 1]} : vector<64x512xf32> to vector<64x16xf32>
    %221 = vector.extract_strided_slice %53 {offsets = [0, 0], sizes = [64, 496], strides = [1, 1]} : vector<64x512xf32> to vector<64x496xf32>
    %222 = tpu.concatenate %220, %221 in 1 : vector<64x16xf32>, vector<64x496xf32> -> vector<64x512xf32>
    %223 = vector.extract_strided_slice %0 {offsets = [1, 0], sizes = [1, 512], strides = [1, 1]} : vector<9x512xf32> to vector<1x512xf32>
    %224 = vector.broadcast %223 : vector<1x512xf32> to vector<64x512xf32>
    %225 = arith.mulf %222, %224 : vector<64x512xf32>
    %226 = arith.truncf %225 : vector<64x512xf32> to vector<64x512xbf16>
    %c64 = arith.constant 64 : index
    %c0_49 = arith.constant 0 : index
    %227 = vector.load %arg16[%c64, %c0_49] : memref<576x1024xbf16, #tpu.memory_space<vmem>>, vector<64x512xbf16>
    tpu.vector_store %arg16[%c64, %c0_49], %226 {strides = array<i32>} : memref<576x1024xbf16, #tpu.memory_space<vmem>>, vector<64x512xbf16>,
    %228 = vector.extract_strided_slice %53 {offsets = [0, 497], sizes = [64, 15], strides = [1, 1]} : vector<64x512xf32> to vector<64x15xf32>
    %229 = vector.extract_strided_slice %53 {offsets = [0, 0], sizes = [64, 497], strides = [1, 1]} : vector<64x512xf32> to vector<64x497xf32>
    %230 = tpu.concatenate %228, %229 in 1 : vector<64x15xf32>, vector<64x497xf32> -> vector<64x512xf32>
    %231 = vector.extract_strided_slice %0 {offsets = [2, 0], sizes = [1, 512], strides = [1, 1]} : vector<9x512xf32> to vector<1x512xf32>
    %232 = vector.broadcast %231 : vector<1x512xf32> to vector<64x512xf32>
    %233 = arith.mulf %230, %232 : vector<64x512xf32>
    %234 = arith.truncf %233 : vector<64x512xf32> to vector<64x512xbf16>
    %c128 = arith.constant 128 : index
    %c0_50 = arith.constant 0 : index
    %235 = vector.load %arg16[%c128, %c0_50] : memref<576x1024xbf16, #tpu.memory_space<vmem>>, vector<64x512xbf16>
    tpu.vector_store %arg16[%c128, %c0_50], %234 {strides = array<i32>} : memref<576x1024xbf16, #tpu.memory_space<vmem>>, vector<64x512xbf16>,
    %236 = vector.extract_strided_slice %53 {offsets = [0, 511], sizes = [64, 1], strides = [1, 1]} : vector<64x512xf32> to vector<64x1xf32>
    %237 = vector.extract_strided_slice %53 {offsets = [0, 0], sizes = [64, 511], strides = [1, 1]} : vector<64x512xf32> to vector<64x511xf32>
    %238 = tpu.concatenate %236, %237 in 1 : vector<64x1xf32>, vector<64x511xf32> -> vector<64x512xf32>
    %239 = vector.extract_strided_slice %0 {offsets = [3, 0], sizes = [1, 512], strides = [1, 1]} : vector<9x512xf32> to vector<1x512xf32>
    %240 = vector.broadcast %239 : vector<1x512xf32> to vector<64x512xf32>
    %241 = arith.mulf %238, %240 : vector<64x512xf32>
    %242 = arith.truncf %241 : vector<64x512xf32> to vector<64x512xbf16>
    %c192 = arith.constant 192 : index
    %c0_51 = arith.constant 0 : index
    %243 = vector.load %arg16[%c192, %c0_51] : memref<576x1024xbf16, #tpu.memory_space<vmem>>, vector<64x512xbf16>
    tpu.vector_store %arg16[%c192, %c0_51], %242 {strides = array<i32>} : memref<576x1024xbf16, #tpu.memory_space<vmem>>, vector<64x512xbf16>,
    %244 = vector.extract_strided_slice %0 {offsets = [4, 0], sizes = [1, 512], strides = [1, 1]} : vector<9x512xf32> to vector<1x512xf32>
    %245 = vector.broadcast %244 : vector<1x512xf32> to vector<64x512xf32>
    %246 = arith.mulf %53, %245 : vector<64x512xf32>
    %247 = arith.truncf %246 : vector<64x512xf32> to vector<64x512xbf16>
    %c256 = arith.constant 256 : index
    %c0_52 = arith.constant 0 : index
    %248 = vector.load %arg16[%c256, %c0_52] : memref<576x1024xbf16, #tpu.memory_space<vmem>>, vector<64x512xbf16>
    tpu.vector_store %arg16[%c256, %c0_52], %247 {strides = array<i32>} : memref<576x1024xbf16, #tpu.memory_space<vmem>>, vector<64x512xbf16>,
    %249 = vector.extract_strided_slice %53 {offsets = [0, 1], sizes = [64, 511], strides = [1, 1]} : vector<64x512xf32> to vector<64x511xf32>
    %250 = vector.extract_strided_slice %53 {offsets = [0, 0], sizes = [64, 1], strides = [1, 1]} : vector<64x512xf32> to vector<64x1xf32>
    %251 = tpu.concatenate %249, %250 in 1 : vector<64x511xf32>, vector<64x1xf32> -> vector<64x512xf32>
    %252 = vector.extract_strided_slice %0 {offsets = [5, 0], sizes = [1, 512], strides = [1, 1]} : vector<9x512xf32> to vector<1x512xf32>
    %253 = vector.broadcast %252 : vector<1x512xf32> to vector<64x512xf32>
    %254 = arith.mulf %251, %253 : vector<64x512xf32>
    %255 = arith.truncf %254 : vector<64x512xf32> to vector<64x512xbf16>
    %c320 = arith.constant 320 : index
    %c0_53 = arith.constant 0 : index
    %256 = vector.load %arg16[%c320, %c0_53] : memref<576x1024xbf16, #tpu.memory_space<vmem>>, vector<64x512xbf16>
    tpu.vector_store %arg16[%c320, %c0_53], %255 {strides = array<i32>} : memref<576x1024xbf16, #tpu.memory_space<vmem>>, vector<64x512xbf16>,
    %257 = vector.extract_strided_slice %53 {offsets = [0, 15], sizes = [64, 497], strides = [1, 1]} : vector<64x512xf32> to vector<64x497xf32>
    %258 = vector.extract_strided_slice %53 {offsets = [0, 0], sizes = [64, 15], strides = [1, 1]} : vector<64x512xf32> to vector<64x15xf32>
    %259 = tpu.concatenate %257, %258 in 1 : vector<64x497xf32>, vector<64x15xf32> -> vector<64x512xf32>
    %260 = vector.extract_strided_slice %0 {offsets = [6, 0], sizes = [1, 512], strides = [1, 1]} : vector<9x512xf32> to vector<1x512xf32>
    %261 = vector.broadcast %260 : vector<1x512xf32> to vector<64x512xf32>
    %262 = arith.mulf %259, %261 : vector<64x512xf32>
    %263 = arith.truncf %262 : vector<64x512xf32> to vector<64x512xbf16>
    %c384 = arith.constant 384 : index
    %c0_54 = arith.constant 0 : index
    %264 = vector.load %arg16[%c384, %c0_54] : memref<576x1024xbf16, #tpu.memory_space<vmem>>, vector<64x512xbf16>
    tpu.vector_store %arg16[%c384, %c0_54], %263 {strides = array<i32>} : memref<576x1024xbf16, #tpu.memory_space<vmem>>, vector<64x512xbf16>,
    %265 = vector.extract_strided_slice %53 {offsets = [0, 16], sizes = [64, 496], strides = [1, 1]} : vector<64x512xf32> to vector<64x496xf32>
    %266 = vector.extract_strided_slice %53 {offsets = [0, 0], sizes = [64, 16], strides = [1, 1]} : vector<64x512xf32> to vector<64x16xf32>
    %267 = tpu.concatenate %265, %266 in 1 : vector<64x496xf32>, vector<64x16xf32> -> vector<64x512xf32>
    %268 = vector.extract_strided_slice %0 {offsets = [7, 0], sizes = [1, 512], strides = [1, 1]} : vector<9x512xf32> to vector<1x512xf32>
    %269 = vector.broadcast %268 : vector<1x512xf32> to vector<64x512xf32>
    %270 = arith.mulf %267, %269 : vector<64x512xf32>
    %271 = arith.truncf %270 : vector<64x512xf32> to vector<64x512xbf16>
    %c448 = arith.constant 448 : index
    %c0_55 = arith.constant 0 : index
    %272 = vector.load %arg16[%c448, %c0_55] : memref<576x1024xbf16, #tpu.memory_space<vmem>>, vector<64x512xbf16>
    tpu.vector_store %arg16[%c448, %c0_55], %271 {strides = array<i32>} : memref<576x1024xbf16, #tpu.memory_space<vmem>>, vector<64x512xbf16>,
    %273 = vector.extract_strided_slice %53 {offsets = [0, 17], sizes = [64, 495], strides = [1, 1]} : vector<64x512xf32> to vector<64x495xf32>
    %274 = vector.extract_strided_slice %53 {offsets = [0, 0], sizes = [64, 17], strides = [1, 1]} : vector<64x512xf32> to vector<64x17xf32>
    %275 = tpu.concatenate %273, %274 in 1 : vector<64x495xf32>, vector<64x17xf32> -> vector<64x512xf32>
    %276 = vector.extract_strided_slice %0 {offsets = [8, 0], sizes = [1, 512], strides = [1, 1]} : vector<9x512xf32> to vector<1x512xf32>
    %277 = vector.broadcast %276 : vector<1x512xf32> to vector<64x512xf32>
    %278 = arith.mulf %275, %277 : vector<64x512xf32>
    %279 = arith.truncf %278 : vector<64x512xf32> to vector<64x512xbf16>
    %c512 = arith.constant 512 : index
    %c0_56 = arith.constant 0 : index
    %280 = vector.load %arg16[%c512, %c0_56] : memref<576x1024xbf16, #tpu.memory_space<vmem>>, vector<64x512xbf16>
    tpu.vector_store %arg16[%c512, %c0_56], %279 {strides = array<i32>} : memref<576x1024xbf16, #tpu.memory_space<vmem>>, vector<64x512xbf16>,
    %281 = vector.broadcast %211 : vector<1x512xf32> to vector<64x512xf32>
    %282 = arith.mulf %12, %281 : vector<64x512xf32>
    %283 = vector.extract_strided_slice %282 {offsets = [0, 495], sizes = [64, 17], strides = [1, 1]} : vector<64x512xf32> to vector<64x17xf32>
    %284 = vector.extract_strided_slice %282 {offsets = [0, 0], sizes = [64, 495], strides = [1, 1]} : vector<64x512xf32> to vector<64x495xf32>
    %285 = tpu.concatenate %283, %284 in 1 : vector<64x17xf32>, vector<64x495xf32> -> vector<64x512xf32>
    %286 = vector.extract_strided_slice %0 {offsets = [0, 0], sizes = [1, 512], strides = [1, 1]} : vector<9x512xf32> to vector<1x512xf32>
    %287 = vector.broadcast %286 : vector<1x512xf32> to vector<64x512xf32>
    %288 = arith.mulf %285, %287 : vector<64x512xf32>
    %289 = arith.truncf %288 : vector<64x512xf32> to vector<64x512xbf16>
    %c0_57 = arith.constant 0 : index
    %c512_58 = arith.constant 512 : index
    %290 = vector.load %arg16[%c0_57, %c512_58] : memref<576x1024xbf16, #tpu.memory_space<vmem>>, vector<64x512xbf16>
    tpu.vector_store %arg16[%c0_57, %c512_58], %289 {strides = array<i32>} : memref<576x1024xbf16, #tpu.memory_space<vmem>>, vector<64x512xbf16>,
    %291 = vector.extract_strided_slice %282 {offsets = [0, 496], sizes = [64, 16], strides = [1, 1]} : vector<64x512xf32> to vector<64x16xf32>
    %292 = vector.extract_strided_slice %282 {offsets = [0, 0], sizes = [64, 496], strides = [1, 1]} : vector<64x512xf32> to vector<64x496xf32>
    %293 = tpu.concatenate %291, %292 in 1 : vector<64x16xf32>, vector<64x496xf32> -> vector<64x512xf32>
    %294 = vector.extract_strided_slice %0 {offsets = [1, 0], sizes = [1, 512], strides = [1, 1]} : vector<9x512xf32> to vector<1x512xf32>
    %295 = vector.broadcast %294 : vector<1x512xf32> to vector<64x512xf32>
    %296 = arith.mulf %293, %295 : vector<64x512xf32>
    %297 = arith.truncf %296 : vector<64x512xf32> to vector<64x512xbf16>
    %c64_59 = arith.constant 64 : index
    %c512_60 = arith.constant 512 : index
    %298 = vector.load %arg16[%c64_59, %c512_60] : memref<576x1024xbf16, #tpu.memory_space<vmem>>, vector<64x512xbf16>
    tpu.vector_store %arg16[%c64_59, %c512_60], %297 {strides = array<i32>} : memref<576x1024xbf16, #tpu.memory_space<vmem>>, vector<64x512xbf16>,
    %299 = vector.extract_strided_slice %282 {offsets = [0, 497], sizes = [64, 15], strides = [1, 1]} : vector<64x512xf32> to vector<64x15xf32>
    %300 = vector.extract_strided_slice %282 {offsets = [0, 0], sizes = [64, 497], strides = [1, 1]} : vector<64x512xf32> to vector<64x497xf32>
    %301 = tpu.concatenate %299, %300 in 1 : vector<64x15xf32>, vector<64x497xf32> -> vector<64x512xf32>
    %302 = vector.extract_strided_slice %0 {offsets = [2, 0], sizes = [1, 512], strides = [1, 1]} : vector<9x512xf32> to vector<1x512xf32>
    %303 = vector.broadcast %302 : vector<1x512xf32> to vector<64x512xf32>
    %304 = arith.mulf %301, %303 : vector<64x512xf32>
    %305 = arith.truncf %304 : vector<64x512xf32> to vector<64x512xbf16>
    %c128_61 = arith.constant 128 : index
    %c512_62 = arith.constant 512 : index
    %306 = vector.load %arg16[%c128_61, %c512_62] : memref<576x1024xbf16, #tpu.memory_space<vmem>>, vector<64x512xbf16>
    tpu.vector_store %arg16[%c128_61, %c512_62], %305 {strides = array<i32>} : memref<576x1024xbf16, #tpu.memory_space<vmem>>, vector<64x512xbf16>,
    %307 = vector.extract_strided_slice %282 {offsets = [0, 511], sizes = [64, 1], strides = [1, 1]} : vector<64x512xf32> to vector<64x1xf32>
    %308 = vector.extract_strided_slice %282 {offsets = [0, 0], sizes = [64, 511], strides = [1, 1]} : vector<64x512xf32> to vector<64x511xf32>
    %309 = tpu.concatenate %307, %308 in 1 : vector<64x1xf32>, vector<64x511xf32> -> vector<64x512xf32>
    %310 = vector.extract_strided_slice %0 {offsets = [3, 0], sizes = [1, 512], strides = [1, 1]} : vector<9x512xf32> to vector<1x512xf32>
    %311 = vector.broadcast %310 : vector<1x512xf32> to vector<64x512xf32>
    %312 = arith.mulf %309, %311 : vector<64x512xf32>
    %313 = arith.truncf %312 : vector<64x512xf32> to vector<64x512xbf16>
    %c192_63 = arith.constant 192 : index
    %c512_64 = arith.constant 512 : index
    %314 = vector.load %arg16[%c192_63, %c512_64] : memref<576x1024xbf16, #tpu.memory_space<vmem>>, vector<64x512xbf16>
    tpu.vector_store %arg16[%c192_63, %c512_64], %313 {strides = array<i32>} : memref<576x1024xbf16, #tpu.memory_space<vmem>>, vector<64x512xbf16>,
    %315 = vector.extract_strided_slice %0 {offsets = [4, 0], sizes = [1, 512], strides = [1, 1]} : vector<9x512xf32> to vector<1x512xf32>
    %316 = vector.broadcast %315 : vector<1x512xf32> to vector<64x512xf32>
    %317 = arith.mulf %282, %316 : vector<64x512xf32>
    %318 = arith.truncf %317 : vector<64x512xf32> to vector<64x512xbf16>
    %c256_65 = arith.constant 256 : index
    %c512_66 = arith.constant 512 : index
    %319 = vector.load %arg16[%c256_65, %c512_66] : memref<576x1024xbf16, #tpu.memory_space<vmem>>, vector<64x512xbf16>
    tpu.vector_store %arg16[%c256_65, %c512_66], %318 {strides = array<i32>} : memref<576x1024xbf16, #tpu.memory_space<vmem>>, vector<64x512xbf16>,
    %320 = vector.extract_strided_slice %282 {offsets = [0, 1], sizes = [64, 511], strides = [1, 1]} : vector<64x512xf32> to vector<64x511xf32>
    %321 = vector.extract_strided_slice %282 {offsets = [0, 0], sizes = [64, 1], strides = [1, 1]} : vector<64x512xf32> to vector<64x1xf32>
    %322 = tpu.concatenate %320, %321 in 1 : vector<64x511xf32>, vector<64x1xf32> -> vector<64x512xf32>
    %323 = vector.extract_strided_slice %0 {offsets = [5, 0], sizes = [1, 512], strides = [1, 1]} : vector<9x512xf32> to vector<1x512xf32>
    %324 = vector.broadcast %323 : vector<1x512xf32> to vector<64x512xf32>
    %325 = arith.mulf %322, %324 : vector<64x512xf32>
    %326 = arith.truncf %325 : vector<64x512xf32> to vector<64x512xbf16>
    %c320_67 = arith.constant 320 : index
    %c512_68 = arith.constant 512 : index
    %327 = vector.load %arg16[%c320_67, %c512_68] : memref<576x1024xbf16, #tpu.memory_space<vmem>>, vector<64x512xbf16>
    tpu.vector_store %arg16[%c320_67, %c512_68], %326 {strides = array<i32>} : memref<576x1024xbf16, #tpu.memory_space<vmem>>, vector<64x512xbf16>,
    %328 = vector.extract_strided_slice %282 {offsets = [0, 15], sizes = [64, 497], strides = [1, 1]} : vector<64x512xf32> to vector<64x497xf32>
    %329 = vector.extract_strided_slice %282 {offsets = [0, 0], sizes = [64, 15], strides = [1, 1]} : vector<64x512xf32> to vector<64x15xf32>
    %330 = tpu.concatenate %328, %329 in 1 : vector<64x497xf32>, vector<64x15xf32> -> vector<64x512xf32>
    %331 = vector.extract_strided_slice %0 {offsets = [6, 0], sizes = [1, 512], strides = [1, 1]} : vector<9x512xf32> to vector<1x512xf32>
    %332 = vector.broadcast %331 : vector<1x512xf32> to vector<64x512xf32>
    %333 = arith.mulf %330, %332 : vector<64x512xf32>
    %334 = arith.truncf %333 : vector<64x512xf32> to vector<64x512xbf16>
    %c384_69 = arith.constant 384 : index
    %c512_70 = arith.constant 512 : index
    %335 = vector.load %arg16[%c384_69, %c512_70] : memref<576x1024xbf16, #tpu.memory_space<vmem>>, vector<64x512xbf16>
    tpu.vector_store %arg16[%c384_69, %c512_70], %334 {strides = array<i32>} : memref<576x1024xbf16, #tpu.memory_space<vmem>>, vector<64x512xbf16>,
    %336 = vector.extract_strided_slice %282 {offsets = [0, 16], sizes = [64, 496], strides = [1, 1]} : vector<64x512xf32> to vector<64x496xf32>
    %337 = vector.extract_strided_slice %282 {offsets = [0, 0], sizes = [64, 16], strides = [1, 1]} : vector<64x512xf32> to vector<64x16xf32>
    %338 = tpu.concatenate %336, %337 in 1 : vector<64x496xf32>, vector<64x16xf32> -> vector<64x512xf32>
    %339 = vector.extract_strided_slice %0 {offsets = [7, 0], sizes = [1, 512], strides = [1, 1]} : vector<9x512xf32> to vector<1x512xf32>
    %340 = vector.broadcast %339 : vector<1x512xf32> to vector<64x512xf32>
    %341 = arith.mulf %338, %340 : vector<64x512xf32>
    %342 = arith.truncf %341 : vector<64x512xf32> to vector<64x512xbf16>
    %c448_71 = arith.constant 448 : index
    %c512_72 = arith.constant 512 : index
    %343 = vector.load %arg16[%c448_71, %c512_72] : memref<576x1024xbf16, #tpu.memory_space<vmem>>, vector<64x512xbf16>
    tpu.vector_store %arg16[%c448_71, %c512_72], %342 {strides = array<i32>} : memref<576x1024xbf16, #tpu.memory_space<vmem>>, vector<64x512xbf16>,
    %344 = vector.extract_strided_slice %282 {offsets = [0, 17], sizes = [64, 495], strides = [1, 1]} : vector<64x512xf32> to vector<64x495xf32>
    %345 = vector.extract_strided_slice %282 {offsets = [0, 0], sizes = [64, 17], strides = [1, 1]} : vector<64x512xf32> to vector<64x17xf32>
    %346 = tpu.concatenate %344, %345 in 1 : vector<64x495xf32>, vector<64x17xf32> -> vector<64x512xf32>
    %347 = vector.extract_strided_slice %0 {offsets = [8, 0], sizes = [1, 512], strides = [1, 1]} : vector<9x512xf32> to vector<1x512xf32>
    %348 = vector.broadcast %347 : vector<1x512xf32> to vector<64x512xf32>
    %349 = arith.mulf %346, %348 : vector<64x512xf32>
    %350 = arith.truncf %349 : vector<64x512xf32> to vector<64x512xbf16>
    %c512_73 = arith.constant 512 : index
    %c512_74 = arith.constant 512 : index
    %351 = vector.load %arg16[%c512_73, %c512_74] : memref<576x1024xbf16, #tpu.memory_space<vmem>>, vector<64x512xbf16>
    tpu.vector_store %arg16[%c512_73, %c512_74], %350 {strides = array<i32>} : memref<576x1024xbf16, #tpu.memory_space<vmem>>, vector<64x512xbf16>,
    %c0_75 = arith.constant 0 : index
    %c0_76 = arith.constant 0 : index
    %352 = vector.load %arg12[%c0_75, %c0_76] : memref<64x576xbf16, #tpu.memory_space<vmem>>, vector<64x576xbf16>
    %c0_77 = arith.constant 0 : index
    %c0_78 = arith.constant 0 : index
    %353 = vector.load %arg16[%c0_77, %c0_78] : memref<576x1024xbf16, #tpu.memory_space<vmem>>, vector<576x1024xbf16>
    %cst_79 = arith.constant dense<0.000000e+00> : vector<64x1024xf32>
    %354 = tpu.matmul %352, %353, %cst_79 {dimension_numbers = #tpu.dot_dimension_numbers<[1], [0], [0], [1], [0, 0, 1, 1], [], []>} : vector<64x576xbf16>, vector<576x1024xbf16>, vector<64x1024xf32> -> vector<64x1024xf32>
    %c0_80 = arith.constant 0 : index
    %c0_81 = arith.constant 0 : index
    %355 = vector.load %arg13[%c0_80, %c0_81] : memref<64x1xf32, #tpu.memory_space<vmem>>, vector<64x1xf32>
    %356 = vector.broadcast %355 : vector<64x1xf32> to vector<64x1024xf32>
    %357 = arith.addf %354, %356 : vector<64x1024xf32>
    %cst_82 = arith.constant 0.000000e+00 : f32
    %358 = vector.broadcast %cst_82 : f32 to vector<64x1024xf32>
    %359 = arith.maximumf %357, %358 : vector<64x1024xf32>
    %360 = vector.extract_strided_slice %359 {offsets = [0, 0], sizes = [64, 256], strides = [1, 1]} : vector<64x1024xf32> to vector<64x256xf32>
    %c0_83 = arith.constant 0 : index
    %c0_84 = arith.constant 0 : index
    %c0_85 = arith.constant 0 : index
    %361 = vector.load %arg14[%c0_83, %c0_84, %c0_85] : memref<2x64x256xf32, #tpu.memory_space<vmem>>, vector<1x64x256xf32>
    %362 = vector.shape_cast %361 : vector<1x64x256xf32> to vector<64x256xf32>
    %363 = vector.shape_cast %360 : vector<64x256xf32> to vector<1x64x256xf32>
    tpu.vector_store %arg14[%c0_83, %c0_84, %c0_85], %363 {strides = array<i32>} : memref<2x64x256xf32, #tpu.memory_space<vmem>>, vector<1x64x256xf32>,
    %364 = vector.extract_strided_slice %359 {offsets = [0, 256], sizes = [64, 256], strides = [1, 1]} : vector<64x1024xf32> to vector<64x256xf32>
    %c1_86 = arith.constant 1 : index
    %c0_87 = arith.constant 0 : index
    %c0_88 = arith.constant 0 : index
    %365 = vector.load %arg14[%c1_86, %c0_87, %c0_88] : memref<2x64x256xf32, #tpu.memory_space<vmem>>, vector<1x64x256xf32>
    %366 = vector.shape_cast %365 : vector<1x64x256xf32> to vector<64x256xf32>
    %367 = vector.shape_cast %364 : vector<64x256xf32> to vector<1x64x256xf32>
    tpu.vector_store %arg14[%c1_86, %c0_87, %c0_88], %367 {strides = array<i32>} : memref<2x64x256xf32, #tpu.memory_space<vmem>>, vector<1x64x256xf32>,
    %368 = vector.extract_strided_slice %359 {offsets = [0, 512], sizes = [64, 256], strides = [1, 1]} : vector<64x1024xf32> to vector<64x256xf32>
    %c0_89 = arith.constant 0 : index
    %c0_90 = arith.constant 0 : index
    %c0_91 = arith.constant 0 : index
    %369 = vector.load %arg15[%c0_89, %c0_90, %c0_91] : memref<2x64x256xf32, #tpu.memory_space<vmem>>, vector<1x64x256xf32>
    %370 = vector.shape_cast %369 : vector<1x64x256xf32> to vector<64x256xf32>
    %371 = vector.shape_cast %368 : vector<64x256xf32> to vector<1x64x256xf32>
    tpu.vector_store %arg15[%c0_89, %c0_90, %c0_91], %371 {strides = array<i32>} : memref<2x64x256xf32, #tpu.memory_space<vmem>>, vector<1x64x256xf32>,
    %372 = vector.extract_strided_slice %359 {offsets = [0, 768], sizes = [64, 256], strides = [1, 1]} : vector<64x1024xf32> to vector<64x256xf32>
    %c1_92 = arith.constant 1 : index
    %c0_93 = arith.constant 0 : index
    %c0_94 = arith.constant 0 : index
    %373 = vector.load %arg15[%c1_92, %c0_93, %c0_94] : memref<2x64x256xf32, #tpu.memory_space<vmem>>, vector<1x64x256xf32>
    %374 = vector.shape_cast %373 : vector<1x64x256xf32> to vector<64x256xf32>
    %375 = vector.shape_cast %372 : vector<64x256xf32> to vector<1x64x256xf32>
    tpu.vector_store %arg15[%c1_92, %c0_93, %c0_94], %375 {strides = array<i32>} : memref<2x64x256xf32, #tpu.memory_space<vmem>>, vector<1x64x256xf32>,
    return
  }
}

</mosaic_0001>

<llo_original>
// kernel: tpu_custom_call.1
$region0: #{tpu_custom_call.1}
  #allocation0 [shape = 'u32[]', space=smem, size = 0x4, offset = 0x4, fixed_abs, tag = 'smem constant byte address 0x4 - core index']
  #allocation1 [shape = 'u32[144,128]{1,0:T(1,128)}', space=vmem, size = 0x12000, scoped, tag = 'internal scratch']
  %s0 = inlined_call_operand.hbm [shape: f32[8,128], index: 0, kind: input, shape index: {}]
  %s1 = inlined_call_operand.hbm [shape: f32[8,128], index: 1, kind: output, shape index: {}]
  %s2 = sld [smem:[#allocation0]]
  $region18: #{tpu_custom_call.1} parent=0
    _
  %s4 = ssub.s32 1, %s2
  %s5 = scalar_select 0, %s4, %s2
  $region1: #{tpu_custom_call.1} parent=0
    #allocation2 [shape = 'u8[4096]{0}', space=vmem, size = 0x1000, scoped, tag = 'input window, operand 0, single buffered']
    #allocation3 [shape = 's32[1]{0}', space=sflag, size = 0x4, scoped, tag = 'scoped memory for tpu_custom_call.1']
    #allocation4 [shape = 's32[1]{0}', space=sflag, size = 0x4, scoped, tag = 'scoped memory for tpu_custom_call.1']
    #allocation5 [shape = 'u8[4096]{0}', space=vmem, size = 0x1000, scoped, tag = 'output window, operand 0, single buffered']
    %6 = vsyncpa [#allocation3], 0
    %7 = vsyncpa [#allocation4], 0
    // Predicated region
    $region2: #{tpu_custom_call.1} parent=1 // pred_check
      _
    $region3: #{tpu_custom_call.1} parent=1 // pred_check_branch
      %9 = sbr.rel (0) target = $region5
    $region4: #{tpu_custom_call.1} parent=1 // pred_region
      %s11 = ssub.s32 128, 128
      %12 = vsyncadd [#allocation3], %s11
      %s14 = sshll.u32 [#allocation2], 4
      %s15 = int_to_ptr.vmem [resolvable:$true] %s14
      %17 = dma.hbm_to_vmem [thread:$0]  %s0, 128, %s15, [#allocation3]
    $region5: #{tpu_custom_call.1} parent=1 // pred_fallthru
      _
    // Predicated region
    $region6: #{tpu_custom_call.1} parent=1 // pred_check
      _
    $region7: #{tpu_custom_call.1} parent=1 // pred_check_branch
      %19 = sbr.rel (0) target = $region9
    $region8: #{tpu_custom_call.1} parent=1 // pred_region
      %20 = dma.done [#allocation3], 128
    $region9: #{tpu_custom_call.1} parent=1 // pred_fallthru
      _
    %v21 = vld [vmem:[#allocation2] sm:$0xff]
    %22 = vrot.lane.b32.xlu0 %v21, 1
    %v23 = vpop.permute.xlu0 %22
    %24 = vst [vmem:[#allocation5] sm:$0xff] %v23
    // Predicated region
    $region10: #{tpu_custom_call.1} parent=1 // pred_check
      _
    $region11: #{tpu_custom_call.1} parent=1 // pred_check_branch
      %26 = sbr.rel (0) target = $region13
    $region12: #{tpu_custom_call.1} parent=1 // pred_region
      %s28 = ssub.s32 128, 128
      %29 = vsyncadd [#allocation4], %s28
      %s31 = sshll.u32 [#allocation5], 4
      %s32 = int_to_ptr.vmem [resolvable:$true] %s31
      %34 = dma.vmem_to_hbm [thread:$0]  %s32, 128, %s1, [#allocation4]
    $region13: #{tpu_custom_call.1} parent=1 // pred_fallthru
      _
    // Predicated region
    $region14: #{tpu_custom_call.1} parent=1 // pred_check
      _
    $region15: #{tpu_custom_call.1} parent=1 // pred_check_branch
      %36 = sbr.rel (0) target = $region17
    $region16: #{tpu_custom_call.1} parent=1 // pred_region
      %37 = dma.done [#allocation4], 128
    $region17: #{tpu_custom_call.1} parent=1 // pred_fallthru
      _
    %38 = vsyncpa [#allocation3], 1
    %39 = vsyncpa [#allocation4], 1

// kernel: _lambda_.1
$region0: #{_lambda_.1}
  #allocation0 [shape = 'u32[]', space=smem, size = 0x4, offset = 0x4, fixed_abs, tag = 'smem constant byte address 0x4 - core index']
  #allocation1 [shape = 'u32[144,128]{1,0:T(1,128)}', space=vmem, size = 0x12000, scoped, tag = 'internal scratch']
  #allocation2 [shape = 'bf16[576,1024]{1,0:T(16,128)(2,1)}', space=vmem, size = 0x120000, scoped, tag = 'scratch operand']
  %s0 = inlined_call_operand.vmem [shape: bf16[2,32,256], index: 0, kind: input, shape index: {}]
  %s1 = inlined_call_operand.vmem [shape: f32[2,64,256], index: 1, kind: input, shape index: {}]
  %s2 = inlined_call_operand.vmem [shape: f32[9,512], index: 2, kind: input, shape index: {}]
  %s3 = inlined_call_operand.vmem [shape: bf16[64,32], index: 3, kind: input, shape index: {}]
  %s4 = inlined_call_operand.vmem [shape: f32[64,1], index: 4, kind: input, shape index: {}]
  %s5 = inlined_call_operand.vmem [shape: f32[16,64], index: 5, kind: input, shape index: {}]
  %s6 = inlined_call_operand.vmem [shape: f32[16,1], index: 6, kind: input, shape index: {}]
  %s7 = inlined_call_operand.vmem [shape: f32[64,16], index: 7, kind: input, shape index: {}]
  %s8 = inlined_call_operand.vmem [shape: f32[64,1], index: 8, kind: input, shape index: {}]
  %s9 = inlined_call_operand.vmem [shape: bf16[16,64], index: 9, kind: input, shape index: {}]
  %s10 = inlined_call_operand.vmem [shape: f32[16,1], index: 10, kind: input, shape index: {}]
  %s11 = inlined_call_operand.vmem [shape: f32[18], index: 11, kind: input, shape index: {}]
  %s12 = inlined_call_operand.vmem [shape: bf16[64,576], index: 12, kind: input, shape index: {}]
  %s13 = inlined_call_operand.vmem [shape: f32[64,1], index: 13, kind: input, shape index: {}]
  %s14 = inlined_call_operand.vmem [shape: f32[2,64,256], index: 14, kind: output, shape index: {0}]
  %s15 = inlined_call_operand.vmem [shape: f32[2,64,256], index: 15, kind: output, shape index: {1}]
  %16 = xla_tuple %s14, %s15
  %s17 = sld [smem:[#allocation0]]
  $region78: #{_lambda_.1} parent=0
    _
  %s19 = ssub.s32 1, %s17
  %s20 = scalar_select 0, %s19, %s17
  $region1: #{_lambda_.1} parent=0
    #allocation3 [shape = 'u8[512]{0}', space=smem, size = 0x200, scoped, tag = 'input window, operand 11, single buffered']
    #allocation4 [shape = 's32[1]{0}', space=sflag, size = 0x4, scoped, tag = 'scoped memory for _lambda_.1']
    %21 = vsyncpa [#allocation4], 0
    // Predicated region
    $region2: #{_lambda_.1} parent=1 // pred_check
      _
    $region3: #{_lambda_.1} parent=1 // pred_check_branch
      %23 = sbr.rel (0) target = $region5
    $region4: #{_lambda_.1} parent=1 // pred_region
      _
    $region5: #{_lambda_.1} parent=1 // pred_fallthru
      _
    // Predicated region
    $region6: #{_lambda_.1} parent=1 // pred_check
      _
    $region7: #{_lambda_.1} parent=1 // pred_check_branch
      %25 = sbr.rel (0) target = $region9
    $region8: #{_lambda_.1} parent=1 // pred_region
      _
    $region9: #{_lambda_.1} parent=1 // pred_fallthru
      _
    // Predicated region
    $region10: #{_lambda_.1} parent=1 // pred_check
      _
    $region11: #{_lambda_.1} parent=1 // pred_check_branch
      %27 = sbr.rel (0) target = $region13
    $region12: #{_lambda_.1} parent=1 // pred_region
      _
    $region13: #{_lambda_.1} parent=1 // pred_fallthru
      _
    // Predicated region
    $region14: #{_lambda_.1} parent=1 // pred_check
      _
    $region15: #{_lambda_.1} parent=1 // pred_check_branch
      %29 = sbr.rel (0) target = $region17
    $region16: #{_lambda_.1} parent=1 // pred_region
      _
    $region17: #{_lambda_.1} parent=1 // pred_fallthru
      _
    // Predicated region
    $region18: #{_lambda_.1} parent=1 // pred_check
      _
    $region19: #{_lambda_.1} parent=1 // pred_check_branch
      %31 = sbr.rel (0) target = $region21
    $region20: #{_lambda_.1} parent=1 // pred_region
      _
    $region21: #{_lambda_.1} parent=1 // pred_fallthru
      _
    // Predicated region
    $region22: #{_lambda_.1} parent=1 // pred_check
      _
    $region23: #{_lambda_.1} parent=1 // pred_check_branch
      %33 = sbr.rel (0) target = $region25
    $region24: #{_lambda_.1} parent=1 // pred_region
      _
    $region25: #{_lambda_.1} parent=1 // pred_fallthru
      _
    // Predicated region
    $region26: #{_lambda_.1} parent=1 // pred_check
      _
    $region27: #{_lambda_.1} parent=1 // pred_check_branch
      %35 = sbr.rel (0) target = $region29
    $region28: #{_lambda_.1} parent=1 // pred_region
      _
    $region29: #{_lambda_.1} parent=1 // pred_fallthru
      _
    // Predicated region
    $region30: #{_lambda_.1} parent=1 // pred_check
      _
    $region31: #{_lambda_.1} parent=1 // pred_check_branch
      %37 = sbr.rel (0) target = $region33
    $region32: #{_lambda_.1} parent=1 // pred_region
      _
    $region33: #{_lambda_.1} parent=1 // pred_fallthru
      _
    // Predicated region
    $region34: #{_lambda_.1} parent=1 // pred_check
      _
    $region35: #{_lambda_.1} parent=1 // pred_check_branch
      %39 = sbr.rel (0) target = $region37
    $region36: #{_lambda_.1} parent=1 // pred_region
      _
    $region37: #{_lambda_.1} parent=1 // pred_fallthru
      _
    // Predicated region
    $region38: #{_lambda_.1} parent=1 // pred_check
      _
    $region39: #{_lambda_.1} parent=1 // pred_check_branch
      %41 = sbr.rel (0) target = $region41
    $region40: #{_lambda_.1} parent=1 // pred_region
      _
    $region41: #{_lambda_.1} parent=1 // pred_fallthru
      _
    // Predicated region
    $region42: #{_lambda_.1} parent=1 // pred_check
      _
    $region43: #{_lambda_.1} parent=1 // pred_check_branch
      %43 = sbr.rel (0) target = $region45
    $region44: #{_lambda_.1} parent=1 // pred_region
      _
    $region45: #{_lambda_.1} parent=1 // pred_fallthru
      _
    // Predicated region
    $region46: #{_lambda_.1} parent=1 // pred_check
      _
    $region47: #{_lambda_.1} parent=1 // pred_check_branch
      %45 = sbr.rel (0) target = $region49
    $region48: #{_lambda_.1} parent=1 // pred_region
      %s47 = ssub.s32 16, 16
      %48 = vsyncadd [#allocation4], %s47
      %s50 = sshll.u32 %s11, 4
      %s51 = int_to_ptr.vmem [resolvable:$true] %s50
      %53 = dma.vmem_to_smem %s51, 16, [#allocation3], [#allocation4]
    $region49: #{_lambda_.1} parent=1 // pred_fallthru
      _
    // Predicated region
    $region50: #{_lambda_.1} parent=1 // pred_check
      _
    $region51: #{_lambda_.1} parent=1 // pred_check_branch
      %55 = sbr.rel (0) target = $region53
    $region52: #{_lambda_.1} parent=1 // pred_region
      _
    $region53: #{_lambda_.1} parent=1 // pred_fallthru
      _
    // Predicated region
    $region54: #{_lambda_.1} parent=1 // pred_check
      _
    $region55: #{_lambda_.1} parent=1 // pred_check_branch
      %57 = sbr.rel (0) target = $region57
    $region56: #{_lambda_.1} parent=1 // pred_region
      _
    $region57: #{_lambda_.1} parent=1 // pred_fallthru
      _
    // Predicated region
    $region58: #{_lambda_.1} parent=1 // pred_check
      _
    $region59: #{_lambda_.1} parent=1 // pred_check_branch
      %59 = sbr.rel (0) target = $region61
    $region60: #{_lambda_.1} parent=1 // pred_region
      %60 = dma.done [#allocation4], 16
    $region61: #{_lambda_.1} parent=1 // pred_fallthru
      _
    %61 = sfence
    %v63 = vld [vmem:[%s2] sm:$0xff]
    %v64 = vld [vmem:[%s2 + $0x8] sm:$0xff]
    %v65 = vld [vmem:[%s2 + $0x10] sm:$0xff]
    %v66 = vld [vmem:[%s2 + $0x18] sm:$0xff]
    %v67 = vld [vmem:[%s2 + $0x20] sm:$0x1]
    %v68 = vld [vmem:[%s2 + $0x28] sm:$0x1]
    %v69 = vld [vmem:[%s2 + $0x30] sm:$0x1]
    %v70 = vld [vmem:[%s2 + $0x38] sm:$0x1]
    %v71 = vld [vmem:[%s0] sm:$0xff]
    %v72 = vld [vmem:[%s0 + $0x8] sm:$0xff]
    %v73 = vld [vmem:[%s0 + $0x10] sm:$0xff]
    %v74 = vld [vmem:[%s0 + $0x18] sm:$0xff]
    %s75 = scalar_lea.vmem %s0, 32
    %v76 = vld [vmem:[%s75] sm:$0xff]
    %v77 = vld [vmem:[%s75 + $0x8] sm:$0xff]
    %v78 = vld [vmem:[%s75 + $0x10] sm:$0xff]
    %v79 = vld [vmem:[%s75 + $0x18] sm:$0xff]
    %v84 = vunpack.c.l.b16 %v71
    %v85 = vunpack.c.h.b16 %v71
    %v86 = vunpack.c.l.b16 %v72
    %v87 = vunpack.c.h.b16 %v72
    %v88 = vunpack.c.l.b16 %v73
    %v89 = vunpack.c.h.b16 %v73
    %v90 = vunpack.c.l.b16 %v74
    %v91 = vunpack.c.h.b16 %v74
    %v92 = vpack.c.b16 %v86, %v84
    %v93 = vpack.c.b16 %v87, %v85
    %v94 = vpack.c.b16 %v90, %v88
    %v95 = vpack.c.b16 %v91, %v89
    %v104 = vunpack.c.l.b16 %v76
    %v105 = vunpack.c.h.b16 %v76
    %v106 = vunpack.c.l.b16 %v77
    %v107 = vunpack.c.h.b16 %v77
    %v108 = vunpack.c.l.b16 %v78
    %v109 = vunpack.c.h.b16 %v78
    %v110 = vunpack.c.l.b16 %v79
    %v111 = vunpack.c.h.b16 %v79
    %v112 = vpack.c.b16 %v106, %v104
    %v113 = vpack.c.b16 %v107, %v105
    %v114 = vpack.c.b16 %v110, %v108
    %v115 = vpack.c.b16 %v111, %v109
    %v120 = vld [vmem:[%s3] sm:$0xf]
    %v121 = vld [vmem:[%s3 + $0x4] sm:$0xf]
    %v122 = vld [vmem:[%s3 + $0x8] sm:$0xf]
    %v123 = vld [vmem:[%s3 + $0xc] sm:$0xf]
    %v124 = vld [vmem:[%s3 + $0x10] sm:$0xf]
    %v125 = vld [vmem:[%s3 + $0x14] sm:$0xf]
    %v126 = vld [vmem:[%s3 + $0x18] sm:$0xf]
    %v127 = vld [vmem:[%s3 + $0x1c] sm:$0xf]
    %v128 = vld [vmem:[%s4] sm:$0xff]
    %v129 = vld [vmem:[%s4 + $0x8] sm:$0xff]
    %v130 = vld [vmem:[%s4 + $0x10] sm:$0xff]
    %v131 = vld [vmem:[%s4 + $0x18] sm:$0xff]
    %v132 = vld [vmem:[%s4 + $0x20] sm:$0xff]
    %v133 = vld [vmem:[%s4 + $0x28] sm:$0xff]
    %v134 = vld [vmem:[%s4 + $0x30] sm:$0xff]
    %v135 = vld [vmem:[%s4 + $0x38] sm:$0xff]
    %137 = vset.pattern.permute.xlu0 0
    %138 = vperm.xlu0 %137, %v128
    %v139 = vpop.permute.xlu0 %138
    %142 = vset.pattern.permute.xlu0 0
    %143 = vperm.xlu0 %142, %v129
    %v144 = vpop.permute.xlu0 %143
    %147 = vset.pattern.permute.xlu0 0
    %148 = vperm.xlu0 %147, %v130
    %v149 = vpop.permute.xlu0 %148
    %152 = vset.pattern.permute.xlu0 0
    %153 = vperm.xlu0 %152, %v131
    %v154 = vpop.permute.xlu0 %153
    %157 = vset.pattern.permute.xlu0 0
    %158 = vperm.xlu0 %157, %v132
    %v159 = vpop.permute.xlu0 %158
    %162 = vset.pattern.permute.xlu0 0
    %163 = vperm.xlu0 %162, %v133
    %v164 = vpop.permute.xlu0 %163
    %167 = vset.pattern.permute.xlu0 0
    %168 = vperm.xlu0 %167, %v134
    %v169 = vpop.permute.xlu0 %168
    %172 = vset.pattern.permute.xlu0 0
    %173 = vperm.xlu0 %172, %v135
    %v174 = vpop.permute.xlu0 %173
    %v184 = vunpack.c.l.b16 %v120
    %v185 = vunpack.c.l.b16 %v121
    %v186 = vunpack.c.l.b16 %v122
    %v187 = vunpack.c.l.b16 %v123
    %v188 = vunpack.c.l.b16 %v124
    %v189 = vunpack.c.l.b16 %v125
    %v190 = vunpack.c.l.b16 %v126
    %v191 = vunpack.c.l.b16 %v127
    %v192 = vpack.c.b16 %v185, %v184
    %v193 = vpack.c.b16 %v187, %v186
    %v194 = vpack.c.b16 %v189, %v188
    %v195 = vpack.c.b16 %v191, %v190
    %vm196 = vcmask 261120
    %v198 = vsel %vm196, %v192, 0
    %v201 = vsel %vm196, %v193, 0
    %v204 = vsel %vm196, %v194, 0
    %v207 = vsel %vm196, %v195, 0
    %209 = vmatprep.subr.bf16.mxu0 %v93
    %210 = vmatpush1.bf16.msra.mxu0 %v92
    %211 = vmatprep.subr.bf16.mxu0 %v95
    %212 = vmatpush1.bf16.msra.mxu0 %v94
    %213 = vmatprep.subr.bf16.mxu0 0
    %214 = vmatpush1.bf16.msra.mxu0 0
    %215 = vmatprep.subr.bf16.mxu0 0
    %216 = vmatpush1.bf16.msra.mxu0 0
    %217 = vmatprep.subr.bf16.mxu0 0
    %218 = vmatpush1.bf16.msra.mxu0 0
    %219 = vmatprep.subr.bf16.mxu0 0
    %220 = vmatpush1.bf16.msra.mxu0 0
    %221 = vmatprep.subr.bf16.mxu0 0
    %222 = vmatpush1.bf16.msra.mxu0 0
    %223 = vmatprep.subr.bf16.mxu0 0
    %224 = vmatpush1.bf16.msra.mxu0 0
    %225 = vmatprep.subr.bf16.mxu0 0
    %226 = vmatpush1.bf16.msra.mxu0 0
    %227 = vmatprep.subr.bf16.mxu0 0
    %228 = vmatpush1.bf16.msra.mxu0 0
    %229 = vmatprep.subr.bf16.mxu0 0
    %230 = vmatpush1.bf16.msra.mxu0 0
    %231 = vmatprep.subr.bf16.mxu0 0
    %232 = vmatpush1.bf16.msra.mxu0 0
    %233 = vmatprep.subr.bf16.mxu0 0
    %234 = vmatpush1.bf16.msra.mxu0 0
    %235 = vmatprep.subr.bf16.mxu0 0
    %236 = vmatpush1.bf16.msra.mxu0 0
    %237 = vmatprep.subr.bf16.mxu0 0
    %238 = vmatpush1.bf16.msra.mxu0 0
    %239 = vmatprep.subr.bf16.mxu0 0
    %240 = vmatpush1.bf16.msra.mxu0 0
    %241 = vmatprep.mubr.bf16.mxu0 0
    %242 = vmatmul.mubr.bf16.gmra.mrb[0].mxu0 %v198
    %v243 = vpop.f32.mrb[0].mxu0
    %v244 = vadd.f32 %v139, %v243
    %v245 = vpop.f32.mrb[0].mxu0
    %v246 = vadd.f32 %v139, %v245
    %v247 = vpop.f32.mrb[0].mxu0
    %v248 = vadd.f32 %v144, %v247
    %v249 = vpop.f32.mrb[0].mxu0
    %v250 = vadd.f32 %v144, %v249
    %251 = vmatprep.mubr.bf16.mxu0 0
    %252 = vmatmul.mubr.bf16.gmra.mrb[0].mxu0 %v201
    %v253 = vpop.f32.mrb[0].mxu0
    %v254 = vadd.f32 %v149, %v253
    %v255 = vpop.f32.mrb[0].mxu0
    %v256 = vadd.f32 %v149, %v255
    %v257 = vpop.f32.mrb[0].mxu0
    %v258 = vadd.f32 %v154, %v257
    %v259 = vpop.f32.mrb[0].mxu0
    %v260 = vadd.f32 %v154, %v259
    %261 = vmatprep.mubr.bf16.mxu0 0
    %262 = vmatmul.mubr.bf16.gmra.mrb[0].mxu0 %v204
    %v263 = vpop.f32.mrb[0].mxu0
    %v264 = vadd.f32 %v159, %v263
    %v265 = vpop.f32.mrb[0].mxu0
    %v266 = vadd.f32 %v159, %v265
    %v267 = vpop.f32.mrb[0].mxu0
    %v268 = vadd.f32 %v164, %v267
    %v269 = vpop.f32.mrb[0].mxu0
    %v270 = vadd.f32 %v164, %v269
    %271 = vmatprep.mubr.bf16.mxu0 0
    %272 = vmatmul.mubr.bf16.gmra.mrb[0].mxu0 %v207
    %v273 = vpop.f32.mrb[0].mxu0
    %v274 = vadd.f32 %v169, %v273
    %v275 = vpop.f32.mrb[0].mxu0
    %v276 = vadd.f32 %v169, %v275
    %v277 = vpop.f32.mrb[0].mxu0
    %v278 = vadd.f32 %v174, %v277
    %v279 = vpop.f32.mrb[0].mxu0
    %v280 = vadd.f32 %v174, %v279
    %281 = vdwg.mxu0
    %282 = vmatprep.subr.bf16.mxu0 %v113
    %283 = vmatpush1.bf16.msra.mxu0 %v112
    %284 = vmatprep.subr.bf16.mxu0 %v115
    %285 = vmatpush1.bf16.msra.mxu0 %v114
    %286 = vmatprep.subr.bf16.mxu0 0
    %287 = vmatpush1.bf16.msra.mxu0 0
    %288 = vmatprep.subr.bf16.mxu0 0
    %289 = vmatpush1.bf16.msra.mxu0 0
    %290 = vmatprep.subr.bf16.mxu0 0
    %291 = vmatpush1.bf16.msra.mxu0 0
    %292 = vmatprep.subr.bf16.mxu0 0
    %293 = vmatpush1.bf16.msra.mxu0 0
    %294 = vmatprep.subr.bf16.mxu0 0
    %295 = vmatpush1.bf16.msra.mxu0 0
    %296 = vmatprep.subr.bf16.mxu0 0
    %297 = vmatpush1.bf16.msra.mxu0 0
    %298 = vmatprep.subr.bf16.mxu0 0
    %299 = vmatpush1.bf16.msra.mxu0 0
    %300 = vmatprep.subr.bf16.mxu0 0
    %301 = vmatpush1.bf16.msra.mxu0 0
    %302 = vmatprep.subr.bf16.mxu0 0
    %303 = vmatpush1.bf16.msra.mxu0 0
    %304 = vmatprep.subr.bf16.mxu0 0
    %305 = vmatpush1.bf16.msra.mxu0 0
    %306 = vmatprep.subr.bf16.mxu0 0
    %307 = vmatpush1.bf16.msra.mxu0 0
    %308 = vmatprep.subr.bf16.mxu0 0
    %309 = vmatpush1.bf16.msra.mxu0 0
    %310 = vmatprep.subr.bf16.mxu0 0
    %311 = vmatpush1.bf16.msra.mxu0 0
    %312 = vmatprep.subr.bf16.mxu0 0
    %313 = vmatpush1.bf16.msra.mxu0 0
    %314 = vmatprep.mubr.bf16.mxu0 0
    %315 = vmatmul.mubr.bf16.gmra.mrb[0].mxu0 %v198
    %v316 = vpop.f32.mrb[0].mxu0
    %v317 = vadd.f32 %v139, %v316
    %v318 = vpop.f32.mrb[0].mxu0
    %v319 = vadd.f32 %v139, %v318
    %v320 = vpop.f32.mrb[0].mxu0
    %v321 = vadd.f32 %v144, %v320
    %v322 = vpop.f32.mrb[0].mxu0
    %v323 = vadd.f32 %v144, %v322
    %324 = vmatprep.mubr.bf16.mxu0 0
    %325 = vmatmul.mubr.bf16.gmra.mrb[0].mxu0 %v201
    %v326 = vpop.f32.mrb[0].mxu0
    %v327 = vadd.f32 %v149, %v326
    %v328 = vpop.f32.mrb[0].mxu0
    %v329 = vadd.f32 %v149, %v328
    %v330 = vpop.f32.mrb[0].mxu0
    %v331 = vadd.f32 %v154, %v330
    %v332 = vpop.f32.mrb[0].mxu0
    %v333 = vadd.f32 %v154, %v332
    %334 = vmatprep.mubr.bf16.mxu0 0
    %335 = vmatmul.mubr.bf16.gmra.mrb[0].mxu0 %v204
    %v336 = vpop.f32.mrb[0].mxu0
    %v337 = vadd.f32 %v159, %v336
    %v338 = vpop.f32.mrb[0].mxu0
    %v339 = vadd.f32 %v159, %v338
    %v340 = vpop.f32.mrb[0].mxu0
    %v341 = vadd.f32 %v164, %v340
    %v342 = vpop.f32.mrb[0].mxu0
    %v343 = vadd.f32 %v164, %v342
    %344 = vmatprep.mubr.bf16.mxu0 0
    %345 = vmatmul.mubr.bf16.gmra.mrb[0].mxu0 %v207
    %v346 = vpop.f32.mrb[0].mxu0
    %v347 = vadd.f32 %v169, %v346
    %v348 = vpop.f32.mrb[0].mxu0
    %v349 = vadd.f32 %v169, %v348
    %v350 = vpop.f32.mrb[0].mxu0
    %v351 = vadd.f32 %v174, %v350
    %v352 = vpop.f32.mrb[0].mxu0
    %v353 = vadd.f32 %v174, %v352
    %354 = vdwg.mxu0
    %v355 = vmax.f32 %v244, 0.0
    %v356 = vmax.f32 %v246, 0.0
    %v357 = vmax.f32 %v317, 0.0
    %v358 = vmax.f32 %v319, 0.0
    %v359 = vmax.f32 %v248, 0.0
    %v360 = vmax.f32 %v250, 0.0
    %v361 = vmax.f32 %v321, 0.0
    %v362 = vmax.f32 %v323, 0.0
    %v363 = vmax.f32 %v254, 0.0
    %v364 = vmax.f32 %v256, 0.0
    %v365 = vmax.f32 %v327, 0.0
    %v366 = vmax.f32 %v329, 0.0
    %v367 = vmax.f32 %v258, 0.0
    %v368 = vmax.f32 %v260, 0.0
    %v369 = vmax.f32 %v331, 0.0
    %v370 = vmax.f32 %v333, 0.0
    %v371 = vmax.f32 %v264, 0.0
    %v372 = vmax.f32 %v266, 0.0
    %v373 = vmax.f32 %v337, 0.0
    %v374 = vmax.f32 %v339, 0.0
    %v375 = vmax.f32 %v268, 0.0
    %v376 = vmax.f32 %v270, 0.0
    %v377 = vmax.f32 %v341, 0.0
    %v378 = vmax.f32 %v343, 0.0
    %v379 = vmax.f32 %v274, 0.0
    %v380 = vmax.f32 %v276, 0.0
    %v381 = vmax.f32 %v347, 0.0
    %v382 = vmax.f32 %v349, 0.0
    %v383 = vmax.f32 %v278, 0.0
    %v384 = vmax.f32 %v280, 0.0
    %v385 = vmax.f32 %v351, 0.0
    %v386 = vmax.f32 %v353, 0.0
    %v387 = vadd.f32 %v355, %v356
    %388 = vadd.xlane.f32.xlu0 %v387
    %v389 = vpop.xlane.xlu0 %388
    %v390 = vadd.f32 %v359, %v360
    %391 = vadd.xlane.f32.xlu0 %v390
    %v392 = vpop.xlane.xlu0 %391
    %v393 = vadd.f32 %v363, %v364
    %394 = vadd.xlane.f32.xlu0 %v393
    %v395 = vpop.xlane.xlu0 %394
    %v396 = vadd.f32 %v367, %v368
    %397 = vadd.xlane.f32.xlu0 %v396
    %v398 = vpop.xlane.xlu0 %397
    %v399 = vadd.f32 %v371, %v372
    %400 = vadd.xlane.f32.xlu0 %v399
    %v401 = vpop.xlane.xlu0 %400
    %v402 = vadd.f32 %v375, %v376
    %403 = vadd.xlane.f32.xlu0 %v402
    %v404 = vpop.xlane.xlu0 %403
    %v405 = vadd.f32 %v379, %v380
    %406 = vadd.xlane.f32.xlu0 %v405
    %v407 = vpop.xlane.xlu0 %406
    %v408 = vadd.f32 %v383, %v384
    %409 = vadd.xlane.f32.xlu0 %v408
    %v410 = vpop.xlane.xlu0 %409
    %v411 = vrcp.pop 256.0
    %v412 = vmul.f32 %v389, %v411
    %v413 = vmul.f32 %v392, %v411
    %v414 = vmul.f32 %v395, %v411
    %v415 = vmul.f32 %v398, %v411
    %v416 = vmul.f32 %v401, %v411
    %v417 = vmul.f32 %v404, %v411
    %v418 = vmul.f32 %v407, %v411
    %v419 = vmul.f32 %v410, %v411
    %v420 = vadd.f32 %v357, %v358
    %421 = vadd.xlane.f32.xlu0 %v420
    %v422 = vpop.xlane.xlu0 %421
    %v423 = vadd.f32 %v361, %v362
    %424 = vadd.xlane.f32.xlu0 %v423
    %v425 = vpop.xlane.xlu0 %424
    %v426 = vadd.f32 %v365, %v366
    %427 = vadd.xlane.f32.xlu0 %v426
    %v428 = vpop.xlane.xlu0 %427
    %v429 = vadd.f32 %v369, %v370
    %430 = vadd.xlane.f32.xlu0 %v429
    %v431 = vpop.xlane.xlu0 %430
    %v432 = vadd.f32 %v373, %v374
    %433 = vadd.xlane.f32.xlu0 %v432
    %v434 = vpop.xlane.xlu0 %433
    %v435 = vadd.f32 %v377, %v378
    %436 = vadd.xlane.f32.xlu0 %v435
    %v437 = vpop.xlane.xlu0 %436
    %v438 = vadd.f32 %v381, %v382
    %439 = vadd.xlane.f32.xlu0 %v438
    %v440 = vpop.xlane.xlu0 %439
    %v441 = vadd.f32 %v385, %v386
    %442 = vadd.xlane.f32.xlu0 %v441
    %v443 = vpop.xlane.xlu0 %442
    %v444 = vmul.f32 %v422, %v411
    %v445 = vmul.f32 %v425, %v411
    %v446 = vmul.f32 %v428, %v411
    %v447 = vmul.f32 %v431, %v411
    %v448 = vmul.f32 %v434, %v411
    %v449 = vmul.f32 %v437, %v411
    %v450 = vmul.f32 %v440, %v411
    %v451 = vmul.f32 %v443, %v411
    %vm452 = vcmask 7168
    %v453 = vsel %vm452, %v412, %v444
    %v454 = vsel %vm452, %v413, %v445
    %v455 = vsel %vm452, %v414, %v446
    %v456 = vsel %vm452, %v415, %v447
    %v457 = vsel %vm452, %v416, %v448
    %v458 = vsel %vm452, %v417, %v449
    %v459 = vsel %vm452, %v418, %v450
    %v460 = vsel %vm452, %v419, %v451
    %v461 = vld [vmem:[%s5] sm:$0xff]
    %v462 = vld [vmem:[%s5 + $0x8] sm:$0xff]
    %v463 = vld [vmem:[%s6] sm:$0xff]
    %v464 = vld [vmem:[%s6 + $0x8] sm:$0xff]
    %466 = vset.pattern.permute.xlu0 0
    %467 = vperm.xlu0 %466, %v463
    %v468 = vpop.permute.xlu0 %467
    %471 = vset.pattern.permute.xlu0 0
    %472 = vperm.xlu0 %471, %v464
    %v473 = vpop.permute.xlu0 %472
    %vm475 = vcmask 523264
    %v477 = vsel %vm475, %v461, 0
    %v480 = vsel %vm475, %v462, 0
    %482 = vmatprep.subr.mxu0 0.0
    %483 = vmatpush1.msra.mxu0 %v453
    %484 = vmatprep.subr.mxu0 0.0
    %485 = vmatpush1.msra.mxu0 %v454
    %486 = vmatprep.subr.mxu0 0.0
    %487 = vmatpush1.msra.mxu0 %v455
    %488 = vmatprep.subr.mxu0 0.0
    %489 = vmatpush1.msra.mxu0 %v456
    %490 = vmatprep.subr.mxu0 0.0
    %491 = vmatpush1.msra.mxu0 %v457
    %492 = vmatprep.subr.mxu0 0.0
    %493 = vmatpush1.msra.mxu0 %v458
    %494 = vmatprep.subr.mxu0 0.0
    %495 = vmatpush1.msra.mxu0 %v459
    %496 = vmatprep.subr.mxu0 0.0
    %497 = vmatpush1.msra.mxu0 %v460
    %498 = vmatprep.subr.mxu0 0.0
    %499 = vmatpush1.msra.mxu0 0.0
    %500 = vmatprep.subr.mxu0 0.0
    %501 = vmatpush1.msra.mxu0 0.0
    %502 = vmatprep.subr.mxu0 0.0
    %503 = vmatpush1.msra.mxu0 0.0
    %504 = vmatprep.subr.mxu0 0.0
    %505 = vmatpush1.msra.mxu0 0.0
    %506 = vmatprep.subr.mxu0 0.0
    %507 = vmatpush1.msra.mxu0 0.0
    %508 = vmatprep.subr.mxu0 0.0
    %509 = vmatpush1.msra.mxu0 0.0
    %510 = vmatprep.subr.mxu0 0.0
    %511 = vmatpush1.msra.mxu0 0.0
    %512 = vmatprep.subr.mxu0 0.0
    %513 = vmatpush1.msra.mxu0 0.0
    %514 = vmatprep.subr.mxu0 0.0
    %515 = vmatpush1.msra.mxu0 0.0
    %516 = vmatprep.subr.mxu0 0.0
    %517 = vmatpush1.msra.mxu0 0.0
    %518 = vmatprep.subr.mxu0 0.0
    %519 = vmatpush1.msra.mxu0 0.0
    %520 = vmatprep.subr.mxu0 0.0
    %521 = vmatpush1.msra.mxu0 0.0
    %522 = vmatprep.subr.mxu0 0.0
    %523 = vmatpush1.msra.mxu0 0.0
    %524 = vmatprep.subr.mxu0 0.0
    %525 = vmatpush1.msra.mxu0 0.0
    %526 = vmatprep.subr.mxu0 0.0
    %527 = vmatpush1.msra.mxu0 0.0
    %528 = vmatprep.subr.mxu0 0.0
    %529 = vmatpush1.msra.mxu0 0.0
    %530 = vmatprep.subr.mxu0 0.0
    %531 = vmatpush1.msra.mxu0 0.0
    %532 = vmatprep.subr.mxu0 0.0
    %533 = vmatpush1.msra.mxu0 0.0
    %534 = vmatprep.subr.mxu0 0.0
    %535 = vmatpush1.msra.mxu0 0.0
    %536 = vmatprep.subr.mxu0 0.0
    %537 = vmatpush1.msra.mxu0 0.0
    %538 = vmatprep.subr.mxu0 0.0
    %539 = vmatpush1.msra.mxu0 0.0
    %540 = vmatprep.subr.mxu0 0.0
    %541 = vmatpush1.msra.mxu0 0.0
    %542 = vmatprep.subr.mxu0 0.0
    %543 = vmatpush1.msra.mxu0 0.0
    %544 = vmatprep.subr.mxu0 0.0
    %545 = vmatpush1.msra.mxu0 0.0
    %546 = vmatprep.mubr.f32.mxu0 0.0
    %547 = vmatmul.mubr.f32.gmra.mrb[0].mxu0 %v477
    %v548 = vpop.f32.mrb[0].mxu0
    %v549 = vadd.f32 %v468, %v548
    %v550 = vpop.f32.mrb[0].mxu0
    %551 = vmatprep.mubr.f32.mxu0 0.0
    %552 = vmatmul.mubr.f32.gmra.mrb[0].mxu0 %v480
    %v553 = vpop.f32.mrb[0].mxu0
    %v554 = vadd.f32 %v473, %v553
    %v555 = vpop.f32.mrb[0].mxu0
    %556 = vdwg.mxu0
    %v557 = vmax.f32 %v549, 0.0
    %v558 = vmax.f32 %v554, 0.0
    %v559 = vld [vmem:[%s7] sm:$0xff]
    %v560 = vld [vmem:[%s7 + $0x8] sm:$0xff]
    %v561 = vld [vmem:[%s7 + $0x10] sm:$0xff]
    %v562 = vld [vmem:[%s7 + $0x18] sm:$0xff]
    %v563 = vld [vmem:[%s7 + $0x20] sm:$0xff]
    %v564 = vld [vmem:[%s7 + $0x28] sm:$0xff]
    %v565 = vld [vmem:[%s7 + $0x30] sm:$0xff]
    %v566 = vld [vmem:[%s7 + $0x38] sm:$0xff]
    %v567 = vld [vmem:[%s8] sm:$0xff]
    %v568 = vld [vmem:[%s8 + $0x8] sm:$0xff]
    %v569 = vld [vmem:[%s8 + $0x10] sm:$0xff]
    %v570 = vld [vmem:[%s8 + $0x18] sm:$0xff]
    %v571 = vld [vmem:[%s8 + $0x20] sm:$0xff]
    %v572 = vld [vmem:[%s8 + $0x28] sm:$0xff]
    %v573 = vld [vmem:[%s8 + $0x30] sm:$0xff]
    %v574 = vld [vmem:[%s8 + $0x38] sm:$0xff]
    %576 = vset.pattern.permute.xlu0 0
    %577 = vperm.xlu0 %576, %v567
    %v578 = vpop.permute.xlu0 %577
    %581 = vset.pattern.permute.xlu0 0
    %582 = vperm.xlu0 %581, %v568
    %v583 = vpop.permute.xlu0 %582
    %586 = vset.pattern.permute.xlu0 0
    %587 = vperm.xlu0 %586, %v569
    %v588 = vpop.permute.xlu0 %587
    %591 = vset.pattern.permute.xlu0 0
    %592 = vperm.xlu0 %591, %v570
    %v593 = vpop.permute.xlu0 %592
    %596 = vset.pattern.permute.xlu0 0
    %597 = vperm.xlu0 %596, %v571
    %v598 = vpop.permute.xlu0 %597
    %601 = vset.pattern.permute.xlu0 0
    %602 = vperm.xlu0 %601, %v572
    %v603 = vpop.permute.xlu0 %602
    %606 = vset.pattern.permute.xlu0 0
    %607 = vperm.xlu0 %606, %v573
    %v608 = vpop.permute.xlu0 %607
    %611 = vset.pattern.permute.xlu0 0
    %612 = vperm.xlu0 %611, %v574
    %v613 = vpop.permute.xlu0 %612
    %vm615 = vcmask 130048
    %v617 = vsel %vm615, %v559, 0
    %v620 = vsel %vm615, %v560, 0
    %v623 = vsel %vm615, %v561, 0
    %v626 = vsel %vm615, %v562, 0
    %v629 = vsel %vm615, %v563, 0
    %v632 = vsel %vm615, %v564, 0
    %v635 = vsel %vm615, %v565, 0
    %v638 = vsel %vm615, %v566, 0
    %640 = vmatprep.subr.mxu0 0.0
    %641 = vmatpush1.msra.mxu0 %v557
    %642 = vmatprep.subr.mxu0 0.0
    %643 = vmatpush1.msra.mxu0 %v558
    %644 = vmatprep.subr.mxu0 0.0
    %645 = vmatpush1.msra.mxu0 0.0
    %646 = vmatprep.subr.mxu0 0.0
    %647 = vmatpush1.msra.mxu0 0.0
    %648 = vmatprep.subr.mxu0 0.0
    %649 = vmatpush1.msra.mxu0 0.0
    %650 = vmatprep.subr.mxu0 0.0
    %651 = vmatpush1.msra.mxu0 0.0
    %652 = vmatprep.subr.mxu0 0.0
    %653 = vmatpush1.msra.mxu0 0.0
    %654 = vmatprep.subr.mxu0 0.0
    %655 = vmatpush1.msra.mxu0 0.0
    %656 = vmatprep.subr.mxu0 0.0
    %657 = vmatpush1.msra.mxu0 0.0
    %658 = vmatprep.subr.mxu0 0.0
    %659 = vmatpush1.msra.mxu0 0.0
    %660 = vmatprep.subr.mxu0 0.0
    %661 = vmatpush1.msra.mxu0 0.0
    %662 = vmatprep.subr.mxu0 0.0
    %663 = vmatpush1.msra.mxu0 0.0
    %664 = vmatprep.subr.mxu0 0.0
    %665 = vmatpush1.msra.mxu0 0.0
    %666 = vmatprep.subr.mxu0 0.0
    %667 = vmatpush1.msra.mxu0 0.0
    %668 = vmatprep.subr.mxu0 0.0
    %669 = vmatpush1.msra.mxu0 0.0
    %670 = vmatprep.subr.mxu0 0.0
    %671 = vmatpush1.msra.mxu0 0.0
    %672 = vmatprep.subr.mxu0 0.0
    %673 = vmatpush1.msra.mxu0 0.0
    %674 = vmatprep.subr.mxu0 0.0
    %675 = vmatpush1.msra.mxu0 0.0
    %676 = vmatprep.subr.mxu0 0.0
    %677 = vmatpush1.msra.mxu0 0.0
    %678 = vmatprep.subr.mxu0 0.0
    %679 = vmatpush1.msra.mxu0 0.0
    %680 = vmatprep.subr.mxu0 0.0
    %681 = vmatpush1.msra.mxu0 0.0
    %682 = vmatprep.subr.mxu0 0.0
    %683 = vmatpush1.msra.mxu0 0.0
    %684 = vmatprep.subr.mxu0 0.0
    %685 = vmatpush1.msra.mxu0 0.0
    %686 = vmatprep.subr.mxu0 0.0
    %687 = vmatpush1.msra.mxu0 0.0
    %688 = vmatprep.subr.mxu0 0.0
    %689 = vmatpush1.msra.mxu0 0.0
    %690 = vmatprep.subr.mxu0 0.0
    %691 = vmatpush1.msra.mxu0 0.0
    %692 = vmatprep.subr.mxu0 0.0
    %693 = vmatpush1.msra.mxu0 0.0
    %694 = vmatprep.subr.mxu0 0.0
    %695 = vmatpush1.msra.mxu0 0.0
    %696 = vmatprep.subr.mxu0 0.0
    %697 = vmatpush1.msra.mxu0 0.0
    %698 = vmatprep.subr.mxu0 0.0
    %699 = vmatpush1.msra.mxu0 0.0
    %700 = vmatprep.subr.mxu0 0.0
    %701 = vmatpush1.msra.mxu0 0.0
    %702 = vmatprep.subr.mxu0 0.0
    %703 = vmatpush1.msra.mxu0 0.0
    %704 = vmatprep.mubr.f32.mxu0 0.0
    %705 = vmatmul.mubr.f32.gmra.mrb[0].mxu0 %v617
    %v706 = vpop.f32.mrb[0].mxu0
    %v707 = vadd.f32 %v578, %v706
    %v708 = vpop.f32.mrb[0].mxu0
    %709 = vmatprep.mubr.f32.mxu0 0.0
    %710 = vmatmul.mubr.f32.gmra.mrb[0].mxu0 %v620
    %v711 = vpop.f32.mrb[0].mxu0
    %v712 = vadd.f32 %v583, %v711
    %v713 = vpop.f32.mrb[0].mxu0
    %714 = vmatprep.mubr.f32.mxu0 0.0
    %715 = vmatmul.mubr.f32.gmra.mrb[0].mxu0 %v623
    %v716 = vpop.f32.mrb[0].mxu0
    %v717 = vadd.f32 %v588, %v716
    %v718 = vpop.f32.mrb[0].mxu0
    %719 = vmatprep.mubr.f32.mxu0 0.0
    %720 = vmatmul.mubr.f32.gmra.mrb[0].mxu0 %v626
    %v721 = vpop.f32.mrb[0].mxu0
    %v722 = vadd.f32 %v593, %v721
    %v723 = vpop.f32.mrb[0].mxu0
    %724 = vmatprep.mubr.f32.mxu0 0.0
    %725 = vmatmul.mubr.f32.gmra.mrb[0].mxu0 %v629
    %v726 = vpop.f32.mrb[0].mxu0
    %v727 = vadd.f32 %v598, %v726
    %v728 = vpop.f32.mrb[0].mxu0
    %729 = vmatprep.mubr.f32.mxu0 0.0
    %730 = vmatmul.mubr.f32.gmra.mrb[0].mxu0 %v632
    %v731 = vpop.f32.mrb[0].mxu0
    %v732 = vadd.f32 %v603, %v731
    %v733 = vpop.f32.mrb[0].mxu0
    %734 = vmatprep.mubr.f32.mxu0 0.0
    %735 = vmatmul.mubr.f32.gmra.mrb[0].mxu0 %v635
    %v736 = vpop.f32.mrb[0].mxu0
    %v737 = vadd.f32 %v608, %v736
    %v738 = vpop.f32.mrb[0].mxu0
    %739 = vmatprep.mubr.f32.mxu0 0.0
    %740 = vmatmul.mubr.f32.gmra.mrb[0].mxu0 %v638
    %v741 = vpop.f32.mrb[0].mxu0
    %v742 = vadd.f32 %v613, %v741
    %v743 = vpop.f32.mrb[0].mxu0
    %744 = vdwg.mxu0
    %v745 = vxor.u32 %v707, 2147483648
    %v746 = vxor.u32 %v712, 2147483648
    %v747 = vxor.u32 %v717, 2147483648
    %v748 = vxor.u32 %v722, 2147483648
    %v749 = vxor.u32 %v727, 2147483648
    %v750 = vxor.u32 %v732, 2147483648
    %v751 = vxor.u32 %v737, 2147483648
    %v752 = vxor.u32 %v742, 2147483648
    %v753 = vmul.f32 %v745, 1.442695
    %v754 = vpow.pop %v753
    %v755 = vmul.f32 %v746, 1.442695
    %v756 = vpow.pop %v755
    %v757 = vmul.f32 %v747, 1.442695
    %v758 = vpow.pop %v757
    %v759 = vmul.f32 %v748, 1.442695
    %v760 = vpow.pop %v759
    %v761 = vmul.f32 %v749, 1.442695
    %v762 = vpow.pop %v761
    %v763 = vmul.f32 %v750, 1.442695
    %v764 = vpow.pop %v763
    %v765 = vmul.f32 %v751, 1.442695
    %v766 = vpow.pop %v765
    %v767 = vmul.f32 %v752, 1.442695
    %v768 = vpow.pop %v767
    %v769 = vadd.f32 %v754, 1.0
    %v770 = vadd.f32 %v756, 1.0
    %v771 = vadd.f32 %v758, 1.0
    %v772 = vadd.f32 %v760, 1.0
    %v773 = vadd.f32 %v762, 1.0
    %v774 = vadd.f32 %v764, 1.0
    %v775 = vadd.f32 %v766, 1.0
    %v776 = vadd.f32 %v768, 1.0
    %v777 = vrcp.pop %v769
    %v778 = vmul.f32 1.0, %v777
    %v779 = vrcp.pop %v770
    %v780 = vmul.f32 1.0, %v779
    %v781 = vrcp.pop %v771
    %v782 = vmul.f32 1.0, %v781
    %v783 = vrcp.pop %v772
    %v784 = vmul.f32 1.0, %v783
    %v785 = vrcp.pop %v773
    %v786 = vmul.f32 1.0, %v785
    %v787 = vrcp.pop %v774
    %v788 = vmul.f32 1.0, %v787
    %v789 = vrcp.pop %v775
    %v790 = vmul.f32 1.0, %v789
    %v791 = vrcp.pop %v776
    %v792 = vmul.f32 1.0, %v791
    %794 = vset.pattern.permute.xlu0 0
    %795 = vperm.xlu0 %794, %v778
    %v796 = vpop.permute.xlu0 %795
    %799 = vset.pattern.permute.xlu0 0
    %800 = vperm.xlu0 %799, %v780
    %v801 = vpop.permute.xlu0 %800
    %804 = vset.pattern.permute.xlu0 0
    %805 = vperm.xlu0 %804, %v782
    %v806 = vpop.permute.xlu0 %805
    %809 = vset.pattern.permute.xlu0 0
    %810 = vperm.xlu0 %809, %v784
    %v811 = vpop.permute.xlu0 %810
    %814 = vset.pattern.permute.xlu0 0
    %815 = vperm.xlu0 %814, %v786
    %v816 = vpop.permute.xlu0 %815
    %819 = vset.pattern.permute.xlu0 0
    %820 = vperm.xlu0 %819, %v788
    %v821 = vpop.permute.xlu0 %820
    %824 = vset.pattern.permute.xlu0 0
    %825 = vperm.xlu0 %824, %v790
    %v826 = vpop.permute.xlu0 %825
    %829 = vset.pattern.permute.xlu0 0
    %830 = vperm.xlu0 %829, %v792
    %v831 = vpop.permute.xlu0 %830
    %833 = vset.pattern.permute.xlu0 1
    %834 = vperm.xlu0 %833, %v778
    %v835 = vpop.permute.xlu0 %834
    %837 = vset.pattern.permute.xlu0 1
    %838 = vperm.xlu0 %837, %v780
    %v839 = vpop.permute.xlu0 %838
    %841 = vset.pattern.permute.xlu0 1
    %842 = vperm.xlu0 %841, %v782
    %v843 = vpop.permute.xlu0 %842
    %845 = vset.pattern.permute.xlu0 1
    %846 = vperm.xlu0 %845, %v784
    %v847 = vpop.permute.xlu0 %846
    %849 = vset.pattern.permute.xlu0 1
    %850 = vperm.xlu0 %849, %v786
    %v851 = vpop.permute.xlu0 %850
    %853 = vset.pattern.permute.xlu0 1
    %854 = vperm.xlu0 %853, %v788
    %v855 = vpop.permute.xlu0 %854
    %857 = vset.pattern.permute.xlu0 1
    %858 = vperm.xlu0 %857, %v790
    %v859 = vpop.permute.xlu0 %858
    %861 = vset.pattern.permute.xlu0 1
    %862 = vperm.xlu0 %861, %v792
    %v863 = vpop.permute.xlu0 %862
    %v865 = vld [vmem:[%s1] sm:$0xff]
    %v866 = vld [vmem:[%s1 + $0x8] sm:$0xff]
    %v867 = vld [vmem:[%s1 + $0x10] sm:$0xff]
    %v868 = vld [vmem:[%s1 + $0x18] sm:$0xff]
    %v869 = vld [vmem:[%s1 + $0x20] sm:$0xff]
    %v870 = vld [vmem:[%s1 + $0x28] sm:$0xff]
    %v871 = vld [vmem:[%s1 + $0x30] sm:$0xff]
    %v872 = vld [vmem:[%s1 + $0x38] sm:$0xff]
    %v873 = vld [vmem:[%s1 + $0x40] sm:$0xff]
    %v874 = vld [vmem:[%s1 + $0x48] sm:$0xff]
    %v875 = vld [vmem:[%s1 + $0x50] sm:$0xff]
    %v876 = vld [vmem:[%s1 + $0x58] sm:$0xff]
    %v877 = vld [vmem:[%s1 + $0x60] sm:$0xff]
    %v878 = vld [vmem:[%s1 + $0x68] sm:$0xff]
    %v879 = vld [vmem:[%s1 + $0x70] sm:$0xff]
    %v880 = vld [vmem:[%s1 + $0x78] sm:$0xff]
    %s881 = scalar_lea.vmem %s1, 128
    %v882 = vld [vmem:[%s881] sm:$0xff]
    %v883 = vld [vmem:[%s881 + $0x8] sm:$0xff]
    %v884 = vld [vmem:[%s881 + $0x10] sm:$0xff]
    %v885 = vld [vmem:[%s881 + $0x18] sm:$0xff]
    %v886 = vld [vmem:[%s881 + $0x20] sm:$0xff]
    %v887 = vld [vmem:[%s881 + $0x28] sm:$0xff]
    %v888 = vld [vmem:[%s881 + $0x30] sm:$0xff]
    %v889 = vld [vmem:[%s881 + $0x38] sm:$0xff]
    %v890 = vld [vmem:[%s881 + $0x40] sm:$0xff]
    %v891 = vld [vmem:[%s881 + $0x48] sm:$0xff]
    %v892 = vld [vmem:[%s881 + $0x50] sm:$0xff]
    %v893 = vld [vmem:[%s881 + $0x58] sm:$0xff]
    %v894 = vld [vmem:[%s881 + $0x60] sm:$0xff]
    %v895 = vld [vmem:[%s881 + $0x68] sm:$0xff]
    %v896 = vld [vmem:[%s881 + $0x70] sm:$0xff]
    %v897 = vld [vmem:[%s881 + $0x78] sm:$0xff]
    %v898 = vmul.f32 %v865, %v796
    %v899 = vmul.f32 %v866, %v796
    %v900 = vmul.f32 %v882, %v835
    %v901 = vmul.f32 %v883, %v835
    %v902 = vmul.f32 %v867, %v801
    %v903 = vmul.f32 %v868, %v801
    %v904 = vmul.f32 %v884, %v839
    %v905 = vmul.f32 %v885, %v839
    %v906 = vmul.f32 %v869, %v806
    %v907 = vmul.f32 %v870, %v806
    %v908 = vmul.f32 %v886, %v843
    %v909 = vmul.f32 %v887, %v843
    %v910 = vmul.f32 %v871, %v811
    %v911 = vmul.f32 %v872, %v811
    %v912 = vmul.f32 %v888, %v847
    %v913 = vmul.f32 %v889, %v847
    %v914 = vmul.f32 %v873, %v816
    %v915 = vmul.f32 %v874, %v816
    %v916 = vmul.f32 %v890, %v851
    %v917 = vmul.f32 %v891, %v851
    %v918 = vmul.f32 %v875, %v821
    %v919 = vmul.f32 %v876, %v821
    %v920 = vmul.f32 %v892, %v855
    %v921 = vmul.f32 %v893, %v855
    %v922 = vmul.f32 %v877, %v826
    %v923 = vmul.f32 %v878, %v826
    %v924 = vmul.f32 %v894, %v859
    %v925 = vmul.f32 %v895, %v859
    %v926 = vmul.f32 %v879, %v831
    %v927 = vmul.f32 %v880, %v831
    %v928 = vmul.f32 %v896, %v863
    %v929 = vmul.f32 %v897, %v863
    %v930 = vld [vmem:[%s9] sm:$0xf]
    %v931 = vld [vmem:[%s9 + $0x4] sm:$0xf]
    %v932 = vpack.c.bf16 %v902, %v898
    %v933 = vpack.c.bf16 %v903, %v899
    %v934 = vpack.c.bf16 %v904, %v900
    %v935 = vpack.c.bf16 %v905, %v901
    %v936 = vpack.c.bf16 %v910, %v906
    %v937 = vpack.c.bf16 %v911, %v907
    %v938 = vpack.c.bf16 %v912, %v908
    %v939 = vpack.c.bf16 %v913, %v909
    %v940 = vpack.c.bf16 %v918, %v914
    %v941 = vpack.c.bf16 %v919, %v915
    %v942 = vpack.c.bf16 %v920, %v916
    %v943 = vpack.c.bf16 %v921, %v917
    %v944 = vpack.c.bf16 %v926, %v922
    %v945 = vpack.c.bf16 %v927, %v923
    %v946 = vpack.c.bf16 %v928, %v924
    %v947 = vpack.c.bf16 %v929, %v925
    %v948 = vld [vmem:[%s10] sm:$0xff]
    %v949 = vld [vmem:[%s10 + $0x8] sm:$0xff]
    %951 = vset.pattern.permute.xlu0 0
    %952 = vperm.xlu0 %951, %v948
    %v953 = vpop.permute.xlu0 %952
    %956 = vset.pattern.permute.xlu0 0
    %957 = vperm.xlu0 %956, %v949
    %v958 = vpop.permute.xlu0 %957
    %v962 = vunpack.c.l.b16 %v930
    %v963 = vunpack.c.l.b16 %v931
    %v964 = vpack.c.b16 %v963, %v962
    %v966 = vsel %vm475, %v964, 0
    %968 = vmatprep.subr.bf16.mxu0 %v933
    %969 = vmatpush1.bf16.msra.mxu0 %v932
    %970 = vmatprep.subr.bf16.mxu0 %v937
    %971 = vmatpush1.bf16.msra.mxu0 %v936
    %972 = vmatprep.subr.bf16.mxu0 %v941
    %973 = vmatpush1.bf16.msra.mxu0 %v940
    %974 = vmatprep.subr.bf16.mxu0 %v945
    %975 = vmatpush1.bf16.msra.mxu0 %v944
    %976 = vmatprep.subr.bf16.mxu0 0
    %977 = vmatpush1.bf16.msra.mxu0 0
    %978 = vmatprep.subr.bf16.mxu0 0
    %979 = vmatpush1.bf16.msra.mxu0 0
    %980 = vmatprep.subr.bf16.mxu0 0
    %981 = vmatpush1.bf16.msra.mxu0 0
    %982 = vmatprep.subr.bf16.mxu0 0
    %983 = vmatpush1.bf16.msra.mxu0 0
    %984 = vmatprep.subr.bf16.mxu0 0
    %985 = vmatpush1.bf16.msra.mxu0 0
    %986 = vmatprep.subr.bf16.mxu0 0
    %987 = vmatpush1.bf16.msra.mxu0 0
    %988 = vmatprep.subr.bf16.mxu0 0
    %989 = vmatpush1.bf16.msra.mxu0 0
    %990 = vmatprep.subr.bf16.mxu0 0
    %991 = vmatpush1.bf16.msra.mxu0 0
    %992 = vmatprep.subr.bf16.mxu0 0
    %993 = vmatpush1.bf16.msra.mxu0 0
    %994 = vmatprep.subr.bf16.mxu0 0
    %995 = vmatpush1.bf16.msra.mxu0 0
    %996 = vmatprep.subr.bf16.mxu0 0
    %997 = vmatpush1.bf16.msra.mxu0 0
    %998 = vmatprep.subr.bf16.mxu0 0
    %999 = vmatpush1.bf16.msra.mxu0 0
    %1000 = vmatprep.mubr.bf16.mxu0 0
    %1001 = vmatmul.mubr.bf16.gmra.mrb[0].mxu0 %v966
    %v1002 = vpop.f32.mrb[0].mxu0
    %v1003 = vadd.f32 %v953, %v1002
    %v1004 = vpop.f32.mrb[0].mxu0
    %v1005 = vadd.f32 %v953, %v1004
    %v1006 = vpop.f32.mrb[0].mxu0
    %v1007 = vadd.f32 %v958, %v1006
    %v1008 = vpop.f32.mrb[0].mxu0
    %v1009 = vadd.f32 %v958, %v1008
    %1010 = vdwg.mxu0
    %1011 = vmatprep.subr.bf16.mxu0 %v935
    %1012 = vmatpush1.bf16.msra.mxu0 %v934
    %1013 = vmatprep.subr.bf16.mxu0 %v939
    %1014 = vmatpush1.bf16.msra.mxu0 %v938
    %1015 = vmatprep.subr.bf16.mxu0 %v943
    %1016 = vmatpush1.bf16.msra.mxu0 %v942
    %1017 = vmatprep.subr.bf16.mxu0 %v947
    %1018 = vmatpush1.bf16.msra.mxu0 %v946
    %1019 = vmatprep.subr.bf16.mxu0 0
    %1020 = vmatpush1.bf16.msra.mxu0 0
    %1021 = vmatprep.subr.bf16.mxu0 0
    %1022 = vmatpush1.bf16.msra.mxu0 0
    %1023 = vmatprep.subr.bf16.mxu0 0
    %1024 = vmatpush1.bf16.msra.mxu0 0
    %1025 = vmatprep.subr.bf16.mxu0 0
    %1026 = vmatpush1.bf16.msra.mxu0 0
    %1027 = vmatprep.subr.bf16.mxu0 0
    %1028 = vmatpush1.bf16.msra.mxu0 0
    %1029 = vmatprep.subr.bf16.mxu0 0
    %1030 = vmatpush1.bf16.msra.mxu0 0
    %1031 = vmatprep.subr.bf16.mxu0 0
    %1032 = vmatpush1.bf16.msra.mxu0 0
    %1033 = vmatprep.subr.bf16.mxu0 0
    %1034 = vmatpush1.bf16.msra.mxu0 0
    %1035 = vmatprep.subr.bf16.mxu0 0
    %1036 = vmatpush1.bf16.msra.mxu0 0
    %1037 = vmatprep.subr.bf16.mxu0 0
    %1038 = vmatpush1.bf16.msra.mxu0 0
    %1039 = vmatprep.subr.bf16.mxu0 0
    %1040 = vmatpush1.bf16.msra.mxu0 0
    %1041 = vmatprep.subr.bf16.mxu0 0
    %1042 = vmatpush1.bf16.msra.mxu0 0
    %1043 = vmatprep.mubr.bf16.mxu0 0
    %1044 = vmatmul.mubr.bf16.gmra.mrb[0].mxu0 %v966
    %v1045 = vpop.f32.mrb[0].mxu0
    %v1046 = vadd.f32 %v953, %v1045
    %v1047 = vpop.f32.mrb[0].mxu0
    %v1048 = vadd.f32 %v953, %v1047
    %v1049 = vpop.f32.mrb[0].mxu0
    %v1050 = vadd.f32 %v958, %v1049
    %v1051 = vpop.f32.mrb[0].mxu0
    %v1052 = vadd.f32 %v958, %v1051
    %1053 = vdwg.mxu0
    %v1054 = vmax.f32 %v1003, 0.0
    %v1055 = vmax.f32 %v1005, 0.0
    %v1056 = vmax.f32 %v1046, 0.0
    %v1057 = vmax.f32 %v1048, 0.0
    %v1058 = vmax.f32 %v1007, 0.0
    %v1059 = vmax.f32 %v1009, 0.0
    %v1060 = vmax.f32 %v1050, 0.0
    %v1061 = vmax.f32 %v1052, 0.0
    %v1062 = vadd.f32 %v1054, %v1058
    %v1063 = vrot.slane %v1062, 4
    %v1064 = vadd.f32 %v1062, %v1063
    %v1065 = vrot.slane %v1064, 2
    %v1066 = vadd.f32 %v1064, %v1065
    %v1067 = vrot.slane %v1066, 1
    %v1068 = vadd.f32 %v1066, %v1067
    %v1069 = vadd.f32 %v1055, %v1059
    %v1070 = vrot.slane %v1069, 4
    %v1071 = vadd.f32 %v1069, %v1070
    %v1072 = vrot.slane %v1071, 2
    %v1073 = vadd.f32 %v1071, %v1072
    %v1074 = vrot.slane %v1073, 1
    %v1075 = vadd.f32 %v1073, %v1074
    %v1076 = vadd.f32 %v1056, %v1060
    %v1077 = vrot.slane %v1076, 4
    %v1078 = vadd.f32 %v1076, %v1077
    %v1079 = vrot.slane %v1078, 2
    %v1080 = vadd.f32 %v1078, %v1079
    %v1081 = vrot.slane %v1080, 1
    %v1082 = vadd.f32 %v1080, %v1081
    %v1083 = vadd.f32 %v1057, %v1061
    %v1084 = vrot.slane %v1083, 4
    %v1085 = vadd.f32 %v1083, %v1084
    %v1086 = vrot.slane %v1085, 2
    %v1087 = vadd.f32 %v1085, %v1086
    %v1088 = vrot.slane %v1087, 1
    %v1089 = vadd.f32 %v1087, %v1088
    %v1090 = vrcp.pop 16.0
    %v1091 = vmul.f32 %v1068, %v1090
    %v1092 = vmul.f32 %v1075, %v1090
    %v1093 = vmul.f32 %v1082, %v1090
    %v1094 = vmul.f32 %v1089, %v1090
    %v1095 = vmax.f32 %v1054, %v1058
    %v1096 = vrot.slane %v1095, 4
    %v1097 = vmax.f32 %v1095, %v1096
    %v1098 = vrot.slane %v1097, 2
    %v1099 = vmax.f32 %v1097, %v1098
    %v1100 = vrot.slane %v1099, 1
    %v1101 = vmax.f32 %v1099, %v1100
    %v1102 = vmax.f32 %v1055, %v1059
    %v1103 = vrot.slane %v1102, 4
    %v1104 = vmax.f32 %v1102, %v1103
    %v1105 = vrot.slane %v1104, 2
    %v1106 = vmax.f32 %v1104, %v1105
    %v1107 = vrot.slane %v1106, 1
    %v1108 = vmax.f32 %v1106, %v1107
    %v1109 = vmax.f32 %v1056, %v1060
    %v1110 = vrot.slane %v1109, 4
    %v1111 = vmax.f32 %v1109, %v1110
    %v1112 = vrot.slane %v1111, 2
    %v1113 = vmax.f32 %v1111, %v1112
    %v1114 = vrot.slane %v1113, 1
    %v1115 = vmax.f32 %v1113, %v1114
    %v1116 = vmax.f32 %v1057, %v1061
    %v1117 = vrot.slane %v1116, 4
    %v1118 = vmax.f32 %v1116, %v1117
    %v1119 = vrot.slane %v1118, 2
    %v1120 = vmax.f32 %v1118, %v1119
    %v1121 = vrot.slane %v1120, 1
    %v1122 = vmax.f32 %v1120, %v1121
    %vm1123 = vcmask 1040384
    %v1124 = vsel %vm1123, %v1091, %v1101
    %v1125 = vsel %vm1123, %v1092, %v1108
    %v1126 = vsel %vm1123, %v1093, %v1115
    %v1127 = vsel %vm1123, %v1094, %v1122
    %1129 = vrot.lane.b32.xlu0 %v1127, 17
    %v1130 = vpop.permute.xlu0 %1129
    %1135 = vrot.lane.b32.xlu0 %v1124, 17
    %v1136 = vpop.permute.xlu0 %1135
    %1137 = vrot.lane.b32.xlu0 %v1125, 17
    %v1138 = vpop.permute.xlu0 %1137
    %1139 = vrot.lane.b32.xlu0 %v1126, 17
    %v1140 = vpop.permute.xlu0 %1139
    %vm1141 = vcmask 138240
    %v1142 = vsel %vm1141, %v1136, %v1138
    %v1143 = vsel %vm1141, %v1138, %v1140
    %v1144 = vsel %vm1141, %v1140, %v1130
    %v1149 = vsel %vm1141, %v1130, %v1136
    %s1150 = sld [smem:[#allocation3]]
    %v1151 = vstv %s1150
    %v1152 = vmul.f32 %v1149, %v1151
    %v1153 = vmul.f32 %v1142, %v1151
    %v1154 = vmul.f32 %v1143, %v1151
    %v1155 = vmul.f32 %v1144, %v1151
    %s1156 = sld [smem:[#allocation3 + $0x1]]
    %v1157 = vstv %s1156
    %v1158 = vmul.f32 %v1149, %v1157
    %v1159 = vmul.f32 %v1142, %v1157
    %v1160 = vmul.f32 %v1143, %v1157
    %v1161 = vmul.f32 %v1144, %v1157
    %v1166 = vrot.slane %v1158, 1
    %v1167 = vrot.slane %v1159, 1
    %v1168 = vrot.slane %v1160, 1
    %v1169 = vrot.slane %v1161, 1
    %v1174 = vadd.f32 %v1152, %v1166
    %v1175 = vadd.f32 %v1153, %v1167
    %v1176 = vadd.f32 %v1154, %v1168
    %v1177 = vadd.f32 %v1155, %v1169
    %v1178 = vmul.f32 %v1174, %v63
    %v1179 = vmul.f32 %v1175, %v64
    %v1180 = vmul.f32 %v1176, %v65
    %v1181 = vmul.f32 %v1177, %v66
    %v1182 = vadd.f32 %v1178, 0.0
    %v1183 = vadd.f32 %v1179, 0.0
    %v1184 = vadd.f32 %v1180, 0.0
    %v1185 = vadd.f32 %v1181, 0.0
    %1186 = vrot.lane.b32.xlu0 %v1127, 16
    %v1187 = vpop.permute.xlu0 %1186
    %1189 = vrot.lane.b32.xlu0 %v1124, 16
    %v1190 = vpop.permute.xlu0 %1189
    %1191 = vrot.lane.b32.xlu0 %v1125, 16
    %v1192 = vpop.permute.xlu0 %1191
    %1193 = vrot.lane.b32.xlu0 %v1126, 16
    %v1194 = vpop.permute.xlu0 %1193
    %v1195 = vsel %vm615, %v1190, %v1192
    %v1196 = vsel %vm615, %v1192, %v1194
    %v1197 = vsel %vm615, %v1194, %v1187
    %v1202 = vsel %vm615, %v1187, %v1190
    %s1203 = sld [smem:[#allocation3 + $0x2]]
    %v1204 = vstv %s1203
    %v1205 = vmul.f32 %v1202, %v1204
    %v1206 = vmul.f32 %v1195, %v1204
    %v1207 = vmul.f32 %v1196, %v1204
    %v1208 = vmul.f32 %v1197, %v1204
    %s1209 = sld [smem:[#allocation3 + $0x3]]
    %v1210 = vstv %s1209
    %v1211 = vmul.f32 %v1202, %v1210
    %v1212 = vmul.f32 %v1195, %v1210
    %v1213 = vmul.f32 %v1196, %v1210
    %v1214 = vmul.f32 %v1197, %v1210
    %v1219 = vrot.slane %v1211, 1
    %v1220 = vrot.slane %v1212, 1
    %v1221 = vrot.slane %v1213, 1
    %v1222 = vrot.slane %v1214, 1
    %v1227 = vadd.f32 %v1205, %v1219
    %v1228 = vadd.f32 %v1206, %v1220
    %v1229 = vadd.f32 %v1207, %v1221
    %v1230 = vadd.f32 %v1208, %v1222
    %v1235 = vrot.slane %v63, 1
    %v1236 = vrot.slane %v64, 1
    %v1237 = vrot.slane %v65, 1
    %v1238 = vrot.slane %v66, 1
    %v1243 = vmul.f32 %v1227, %v1235
    %v1244 = vmul.f32 %v1228, %v1236
    %v1245 = vmul.f32 %v1229, %v1237
    %v1246 = vmul.f32 %v1230, %v1238
    %v1247 = vadd.f32 %v1182, %v1243
    %v1248 = vadd.f32 %v1183, %v1244
    %v1249 = vadd.f32 %v1184, %v1245
    %v1250 = vadd.f32 %v1185, %v1246
    %1251 = vrot.lane.b32.xlu0 %v1127, 15
    %v1252 = vpop.permute.xlu0 %1251
    %1254 = vrot.lane.b32.xlu0 %v1124, 15
    %v1255 = vpop.permute.xlu0 %1254
    %1256 = vrot.lane.b32.xlu0 %v1125, 15
    %v1257 = vpop.permute.xlu0 %1256
    %1258 = vrot.lane.b32.xlu0 %v1126, 15
    %v1259 = vpop.permute.xlu0 %1258
    %vm1260 = vcmask 121856
    %v1261 = vsel %vm1260, %v1255, %v1257
    %v1262 = vsel %vm1260, %v1257, %v1259
    %v1263 = vsel %vm1260, %v1259, %v1252
    %v1268 = vsel %vm1260, %v1252, %v1255
    %s1269 = sld [smem:[#allocation3 + $0x4]]
    %v1270 = vstv %s1269
    %v1271 = vmul.f32 %v1268, %v1270
    %v1272 = vmul.f32 %v1261, %v1270
    %v1273 = vmul.f32 %v1262, %v1270
    %v1274 = vmul.f32 %v1263, %v1270
    %s1275 = sld [smem:[#allocation3 + $0x5]]
    %v1276 = vstv %s1275
    %v1277 = vmul.f32 %v1268, %v1276
    %v1278 = vmul.f32 %v1261, %v1276
    %v1279 = vmul.f32 %v1262, %v1276
    %v1280 = vmul.f32 %v1263, %v1276
    %v1285 = vrot.slane %v1277, 1
    %v1286 = vrot.slane %v1278, 1
    %v1287 = vrot.slane %v1279, 1
    %v1288 = vrot.slane %v1280, 1
    %v1293 = vadd.f32 %v1271, %v1285
    %v1294 = vadd.f32 %v1272, %v1286
    %v1295 = vadd.f32 %v1273, %v1287
    %v1296 = vadd.f32 %v1274, %v1288
    %v1297 = vrot.slane %v63, 2
    %v1298 = vrot.slane %v64, 2
    %v1299 = vrot.slane %v65, 2
    %v1300 = vrot.slane %v66, 2
    %v1305 = vmul.f32 %v1293, %v1297
    %v1306 = vmul.f32 %v1294, %v1298
    %v1307 = vmul.f32 %v1295, %v1299
    %v1308 = vmul.f32 %v1296, %v1300
    %v1309 = vadd.f32 %v1247, %v1305
    %v1310 = vadd.f32 %v1248, %v1306
    %v1311 = vadd.f32 %v1249, %v1307
    %v1312 = vadd.f32 %v1250, %v1308
    %1313 = vrot.lane.b32.xlu0 %v1127, 1
    %v1314 = vpop.permute.xlu0 %1313
    %1316 = vrot.lane.b32.xlu0 %v1124, 1
    %v1317 = vpop.permute.xlu0 %1316
    %1318 = vrot.lane.b32.xlu0 %v1125, 1
    %v1319 = vpop.permute.xlu0 %1318
    %1320 = vrot.lane.b32.xlu0 %v1126, 1
    %v1321 = vpop.permute.xlu0 %1320
    %v1322 = vsel %vm452, %v1317, %v1319
    %v1323 = vsel %vm452, %v1319, %v1321
    %v1324 = vsel %vm452, %v1321, %v1314
    %v1329 = vsel %vm452, %v1314, %v1317
    %s1330 = sld [smem:[#allocation3 + $0x6]]
    %v1331 = vstv %s1330
    %v1332 = vmul.f32 %v1329, %v1331
    %v1333 = vmul.f32 %v1322, %v1331
    %v1334 = vmul.f32 %v1323, %v1331
    %v1335 = vmul.f32 %v1324, %v1331
    %s1336 = sld [smem:[#allocation3 + $0x7]]
    %v1337 = vstv %s1336
    %v1338 = vmul.f32 %v1329, %v1337
    %v1339 = vmul.f32 %v1322, %v1337
    %v1340 = vmul.f32 %v1323, %v1337
    %v1341 = vmul.f32 %v1324, %v1337
    %v1346 = vrot.slane %v1338, 1
    %v1347 = vrot.slane %v1339, 1
    %v1348 = vrot.slane %v1340, 1
    %v1349 = vrot.slane %v1341, 1
    %v1354 = vadd.f32 %v1332, %v1346
    %v1355 = vadd.f32 %v1333, %v1347
    %v1356 = vadd.f32 %v1334, %v1348
    %v1357 = vadd.f32 %v1335, %v1349
    %v1358 = vrot.slane %v63, 3
    %v1359 = vrot.slane %v64, 3
    %v1360 = vrot.slane %v65, 3
    %v1361 = vrot.slane %v66, 3
    %v1366 = vmul.f32 %v1354, %v1358
    %v1367 = vmul.f32 %v1355, %v1359
    %v1368 = vmul.f32 %v1356, %v1360
    %v1369 = vmul.f32 %v1357, %v1361
    %v1370 = vadd.f32 %v1309, %v1366
    %v1371 = vadd.f32 %v1310, %v1367
    %v1372 = vadd.f32 %v1311, %v1368
    %v1373 = vadd.f32 %v1312, %v1369
    %s1374 = sld [smem:[#allocation3 + $0x8]]
    %v1375 = vstv %s1374
    %v1376 = vmul.f32 %v1124, %v1375
    %v1377 = vmul.f32 %v1125, %v1375
    %v1378 = vmul.f32 %v1126, %v1375
    %v1379 = vmul.f32 %v1127, %v1375
    %s1380 = sld [smem:[#allocation3 + $0x9]]
    %v1381 = vstv %s1380
    %v1382 = vmul.f32 %v1124, %v1381
    %v1383 = vmul.f32 %v1125, %v1381
    %v1384 = vmul.f32 %v1126, %v1381
    %v1385 = vmul.f32 %v1127, %v1381
    %v1390 = vrot.slane %v1382, 1
    %v1391 = vrot.slane %v1383, 1
    %v1392 = vrot.slane %v1384, 1
    %v1393 = vrot.slane %v1385, 1
    %v1398 = vadd.f32 %v1376, %v1390
    %v1399 = vadd.f32 %v1377, %v1391
    %v1400 = vadd.f32 %v1378, %v1392
    %v1401 = vadd.f32 %v1379, %v1393
    %v1402 = vrot.slane %v63, 4
    %v1403 = vrot.slane %v64, 4
    %v1404 = vrot.slane %v65, 4
    %v1405 = vrot.slane %v66, 4
    %v1410 = vmul.f32 %v1398, %v1402
    %v1411 = vmul.f32 %v1399, %v1403
    %v1412 = vmul.f32 %v1400, %v1404
    %v1413 = vmul.f32 %v1401, %v1405
    %v1414 = vadd.f32 %v1370, %v1410
    %v1415 = vadd.f32 %v1371, %v1411
    %v1416 = vadd.f32 %v1372, %v1412
    %v1417 = vadd.f32 %v1373, %v1413
    %1418 = vrot.lane.b32.xlu0 %v1124, 127
    %v1419 = vpop.permute.xlu0 %1418
    %1420 = vrot.lane.b32.xlu0 %v1125, 127
    %v1421 = vpop.permute.xlu0 %1420
    %1422 = vrot.lane.b32.xlu0 %v1126, 127
    %v1423 = vpop.permute.xlu0 %1422
    %1424 = vrot.lane.b32.xlu0 %v1127, 127
    %v1425 = vpop.permute.xlu0 %1424
    %vm1426 = vcmask 1039360
    %v1427 = vsel %vm1426, %v1419, %v1421
    %v1428 = vsel %vm1426, %v1421, %v1423
    %v1429 = vsel %vm1426, %v1423, %v1425
    %v1435 = vsel %vm1426, %v1425, %v1419
    %s1436 = sld [smem:[#allocation3 + $0xa]]
    %v1437 = vstv %s1436
    %v1438 = vmul.f32 %v1427, %v1437
    %v1439 = vmul.f32 %v1428, %v1437
    %v1440 = vmul.f32 %v1429, %v1437
    %v1441 = vmul.f32 %v1435, %v1437
    %s1442 = sld [smem:[#allocation3 + $0xb]]
    %v1443 = vstv %s1442
    %v1444 = vmul.f32 %v1427, %v1443
    %v1445 = vmul.f32 %v1428, %v1443
    %v1446 = vmul.f32 %v1429, %v1443
    %v1447 = vmul.f32 %v1435, %v1443
    %v1452 = vrot.slane %v1444, 1
    %v1453 = vrot.slane %v1445, 1
    %v1454 = vrot.slane %v1446, 1
    %v1455 = vrot.slane %v1447, 1
    %v1460 = vadd.f32 %v1438, %v1452
    %v1461 = vadd.f32 %v1439, %v1453
    %v1462 = vadd.f32 %v1440, %v1454
    %v1463 = vadd.f32 %v1441, %v1455
    %v1464 = vrot.slane %v63, 5
    %v1465 = vrot.slane %v64, 5
    %v1466 = vrot.slane %v65, 5
    %v1467 = vrot.slane %v66, 5
    %v1472 = vmul.f32 %v1460, %v1464
    %v1473 = vmul.f32 %v1461, %v1465
    %v1474 = vmul.f32 %v1462, %v1466
    %v1475 = vmul.f32 %v1463, %v1467
    %v1476 = vadd.f32 %v1414, %v1472
    %v1477 = vadd.f32 %v1415, %v1473
    %v1478 = vadd.f32 %v1416, %v1474
    %v1479 = vadd.f32 %v1417, %v1475
    %1480 = vrot.lane.b32.xlu0 %v1124, 113
    %v1481 = vpop.permute.xlu0 %1480
    %1482 = vrot.lane.b32.xlu0 %v1125, 113
    %v1483 = vpop.permute.xlu0 %1482
    %1484 = vrot.lane.b32.xlu0 %v1126, 113
    %v1485 = vpop.permute.xlu0 %1484
    %1486 = vrot.lane.b32.xlu0 %v1127, 113
    %v1487 = vpop.permute.xlu0 %1486
    %vm1488 = vcmask 924672
    %v1489 = vsel %vm1488, %v1481, %v1483
    %v1490 = vsel %vm1488, %v1483, %v1485
    %v1491 = vsel %vm1488, %v1485, %v1487
    %v1497 = vsel %vm1488, %v1487, %v1481
    %s1498 = sld [smem:[#allocation3 + $0xc]]
    %v1499 = vstv %s1498
    %v1500 = vmul.f32 %v1489, %v1499
    %v1501 = vmul.f32 %v1490, %v1499
    %v1502 = vmul.f32 %v1491, %v1499
    %v1503 = vmul.f32 %v1497, %v1499
    %s1504 = sld [smem:[#allocation3 + $0xd]]
    %v1505 = vstv %s1504
    %v1506 = vmul.f32 %v1489, %v1505
    %v1507 = vmul.f32 %v1490, %v1505
    %v1508 = vmul.f32 %v1491, %v1505
    %v1509 = vmul.f32 %v1497, %v1505
    %v1514 = vrot.slane %v1506, 1
    %v1515 = vrot.slane %v1507, 1
    %v1516 = vrot.slane %v1508, 1
    %v1517 = vrot.slane %v1509, 1
    %v1522 = vadd.f32 %v1500, %v1514
    %v1523 = vadd.f32 %v1501, %v1515
    %v1524 = vadd.f32 %v1502, %v1516
    %v1525 = vadd.f32 %v1503, %v1517
    %v1526 = vrot.slane %v63, 6
    %v1527 = vrot.slane %v64, 6
    %v1528 = vrot.slane %v65, 6
    %v1529 = vrot.slane %v66, 6
    %v1534 = vmul.f32 %v1522, %v1526
    %v1535 = vmul.f32 %v1523, %v1527
    %v1536 = vmul.f32 %v1524, %v1528
    %v1537 = vmul.f32 %v1525, %v1529
    %v1538 = vadd.f32 %v1476, %v1534
    %v1539 = vadd.f32 %v1477, %v1535
    %v1540 = vadd.f32 %v1478, %v1536
    %v1541 = vadd.f32 %v1479, %v1537
    %1542 = vrot.lane.b32.xlu0 %v1124, 112
    %v1543 = vpop.permute.xlu0 %1542
    %1544 = vrot.lane.b32.xlu0 %v1125, 112
    %v1545 = vpop.permute.xlu0 %1544
    %1546 = vrot.lane.b32.xlu0 %v1126, 112
    %v1547 = vpop.permute.xlu0 %1546
    %1548 = vrot.lane.b32.xlu0 %v1127, 112
    %v1549 = vpop.permute.xlu0 %1548
    %vm1550 = vcmask 916480
    %v1551 = vsel %vm1550, %v1543, %v1545
    %v1552 = vsel %vm1550, %v1545, %v1547
    %v1553 = vsel %vm1550, %v1547, %v1549
    %v1559 = vsel %vm1550, %v1549, %v1543
    %s1560 = sld [smem:[#allocation3 + $0xe]]
    %v1561 = vstv %s1560
    %v1562 = vmul.f32 %v1551, %v1561
    %v1563 = vmul.f32 %v1552, %v1561
    %v1564 = vmul.f32 %v1553, %v1561
    %v1565 = vmul.f32 %v1559, %v1561
    %s1566 = sld [smem:[#allocation3 + $0xf]]
    %v1567 = vstv %s1566
    %v1568 = vmul.f32 %v1551, %v1567
    %v1569 = vmul.f32 %v1552, %v1567
    %v1570 = vmul.f32 %v1553, %v1567
    %v1571 = vmul.f32 %v1559, %v1567
    %v1576 = vrot.slane %v1568, 1
    %v1577 = vrot.slane %v1569, 1
    %v1578 = vrot.slane %v1570, 1
    %v1579 = vrot.slane %v1571, 1
    %v1584 = vadd.f32 %v1562, %v1576
    %v1585 = vadd.f32 %v1563, %v1577
    %v1586 = vadd.f32 %v1564, %v1578
    %v1587 = vadd.f32 %v1565, %v1579
    %v1588 = vrot.slane %v63, 7
    %v1589 = vrot.slane %v64, 7
    %v1590 = vrot.slane %v65, 7
    %v1591 = vrot.slane %v66, 7
    %v1596 = vmul.f32 %v1584, %v1588
    %v1597 = vmul.f32 %v1585, %v1589
    %v1598 = vmul.f32 %v1586, %v1590
    %v1599 = vmul.f32 %v1587, %v1591
    %v1600 = vadd.f32 %v1538, %v1596
    %v1601 = vadd.f32 %v1539, %v1597
    %v1602 = vadd.f32 %v1540, %v1598
    %v1603 = vadd.f32 %v1541, %v1599
    %1604 = vrot.lane.b32.xlu0 %v1124, 111
    %v1605 = vpop.permute.xlu0 %1604
    %1606 = vrot.lane.b32.xlu0 %v1125, 111
    %v1607 = vpop.permute.xlu0 %1606
    %1608 = vrot.lane.b32.xlu0 %v1126, 111
    %v1609 = vpop.permute.xlu0 %1608
    %1610 = vrot.lane.b32.xlu0 %v1127, 111
    %v1611 = vpop.permute.xlu0 %1610
    %vm1612 = vcmask 908288
    %v1613 = vsel %vm1612, %v1605, %v1607
    %v1614 = vsel %vm1612, %v1607, %v1609
    %v1615 = vsel %vm1612, %v1609, %v1611
    %v1621 = vsel %vm1612, %v1611, %v1605
    %s1622 = sld [smem:[#allocation3 + $0x10]]
    %v1623 = vstv %s1622
    %v1624 = vmul.f32 %v1613, %v1623
    %v1625 = vmul.f32 %v1614, %v1623
    %v1626 = vmul.f32 %v1615, %v1623
    %v1627 = vmul.f32 %v1621, %v1623
    %s1628 = sld [smem:[#allocation3 + $0x11]]
    %v1629 = vstv %s1628
    %v1630 = vmul.f32 %v1613, %v1629
    %v1631 = vmul.f32 %v1614, %v1629
    %v1632 = vmul.f32 %v1615, %v1629
    %v1633 = vmul.f32 %v1621, %v1629
    %v1638 = vrot.slane %v1630, 1
    %v1639 = vrot.slane %v1631, 1
    %v1640 = vrot.slane %v1632, 1
    %v1641 = vrot.slane %v1633, 1
    %v1646 = vadd.f32 %v1624, %v1638
    %v1647 = vadd.f32 %v1625, %v1639
    %v1648 = vadd.f32 %v1626, %v1640
    %v1649 = vadd.f32 %v1627, %v1641
    %v1650 = vmul.f32 %v1646, %v67
    %v1651 = vmul.f32 %v1647, %v68
    %v1652 = vmul.f32 %v1648, %v69
    %v1653 = vmul.f32 %v1649, %v70
    %v1654 = vadd.f32 %v1600, %v1650
    %v1655 = vadd.f32 %v1601, %v1651
    %v1656 = vadd.f32 %v1602, %v1652
    %v1657 = vadd.f32 %v1603, %v1653
    %v1658 = vxor.u32 %v1654, 2147483648
    %v1659 = vxor.u32 %v1655, 2147483648
    %v1660 = vxor.u32 %v1656, 2147483648
    %v1661 = vxor.u32 %v1657, 2147483648
    %v1662 = vmul.f32 %v1658, 1.442695
    %v1663 = vpow.pop %v1662
    %v1664 = vmul.f32 %v1659, 1.442695
    %v1665 = vpow.pop %v1664
    %v1666 = vmul.f32 %v1660, 1.442695
    %v1667 = vpow.pop %v1666
    %v1668 = vmul.f32 %v1661, 1.442695
    %v1669 = vpow.pop %v1668
    %v1670 = vadd.f32 %v1663, 1.0
    %v1671 = vadd.f32 %v1665, 1.0
    %v1672 = vadd.f32 %v1667, 1.0
    %v1673 = vadd.f32 %v1669, 1.0
    %v1674 = vrcp.pop %v1670
    %v1675 = vmul.f32 1.0, %v1674
    %v1676 = vrcp.pop %v1671
    %v1677 = vmul.f32 1.0, %v1676
    %v1678 = vrcp.pop %v1672
    %v1679 = vmul.f32 1.0, %v1678
    %v1680 = vrcp.pop %v1673
    %v1681 = vmul.f32 1.0, %v1680
    %v1682 = vxor.u32 %v1675, 2147483648
    %v1683 = vxor.u32 %v1677, 2147483648
    %v1684 = vxor.u32 %v1679, 2147483648
    %v1685 = vxor.u32 %v1681, 2147483648
    %v1686 = vmul.f32 %v1682, 1.442695
    %v1687 = vpow.pop %v1686
    %v1688 = vmul.f32 %v1683, 1.442695
    %v1689 = vpow.pop %v1688
    %v1690 = vmul.f32 %v1684, 1.442695
    %v1691 = vpow.pop %v1690
    %v1692 = vmul.f32 %v1685, 1.442695
    %v1693 = vpow.pop %v1692
    %v1694 = vadd.f32 %v1687, 1.0
    %v1695 = vadd.f32 %v1689, 1.0
    %v1696 = vadd.f32 %v1691, 1.0
    %v1697 = vadd.f32 %v1693, 1.0
    %v1698 = vrcp.pop %v1694
    %v1699 = vmul.f32 1.0, %v1698
    %v1700 = vrcp.pop %v1695
    %v1701 = vmul.f32 1.0, %v1700
    %v1702 = vrcp.pop %v1696
    %v1703 = vmul.f32 1.0, %v1702
    %v1704 = vrcp.pop %v1697
    %v1705 = vmul.f32 1.0, %v1704
    %1714 = vrot.lane.b32.xlu0 %v901, 17
    %v1715 = vpop.permute.xlu0 %1714
    %1716 = vrot.lane.b32.xlu0 %v905, 17
    %v1717 = vpop.permute.xlu0 %1716
    %1718 = vrot.lane.b32.xlu0 %v909, 17
    %v1719 = vpop.permute.xlu0 %1718
    %1720 = vrot.lane.b32.xlu0 %v913, 17
    %v1721 = vpop.permute.xlu0 %1720
    %1722 = vrot.lane.b32.xlu0 %v917, 17
    %v1723 = vpop.permute.xlu0 %1722
    %1724 = vrot.lane.b32.xlu0 %v921, 17
    %v1725 = vpop.permute.xlu0 %1724
    %1726 = vrot.lane.b32.xlu0 %v925, 17
    %v1727 = vpop.permute.xlu0 %1726
    %1728 = vrot.lane.b32.xlu0 %v929, 17
    %v1729 = vpop.permute.xlu0 %1728
    %1762 = vrot.lane.b32.xlu0 %v898, 17
    %v1763 = vpop.permute.xlu0 %1762
    %1764 = vrot.lane.b32.xlu0 %v899, 17
    %v1765 = vpop.permute.xlu0 %1764
    %1766 = vrot.lane.b32.xlu0 %v900, 17
    %v1767 = vpop.permute.xlu0 %1766
    %1768 = vrot.lane.b32.xlu0 %v902, 17
    %v1769 = vpop.permute.xlu0 %1768
    %1770 = vrot.lane.b32.xlu0 %v903, 17
    %v1771 = vpop.permute.xlu0 %1770
    %1772 = vrot.lane.b32.xlu0 %v904, 17
    %v1773 = vpop.permute.xlu0 %1772
    %1774 = vrot.lane.b32.xlu0 %v906, 17
    %v1775 = vpop.permute.xlu0 %1774
    %1776 = vrot.lane.b32.xlu0 %v907, 17
    %v1777 = vpop.permute.xlu0 %1776
    %1778 = vrot.lane.b32.xlu0 %v908, 17
    %v1779 = vpop.permute.xlu0 %1778
    %1780 = vrot.lane.b32.xlu0 %v910, 17
    %v1781 = vpop.permute.xlu0 %1780
    %1782 = vrot.lane.b32.xlu0 %v911, 17
    %v1783 = vpop.permute.xlu0 %1782
    %1784 = vrot.lane.b32.xlu0 %v912, 17
    %v1785 = vpop.permute.xlu0 %1784
    %1786 = vrot.lane.b32.xlu0 %v914, 17
    %v1787 = vpop.permute.xlu0 %1786
    %1788 = vrot.lane.b32.xlu0 %v915, 17
    %v1789 = vpop.permute.xlu0 %1788
    %1790 = vrot.lane.b32.xlu0 %v916, 17
    %v1791 = vpop.permute.xlu0 %1790
    %1792 = vrot.lane.b32.xlu0 %v918, 17
    %v1793 = vpop.permute.xlu0 %1792
    %1794 = vrot.lane.b32.xlu0 %v919, 17
    %v1795 = vpop.permute.xlu0 %1794
    %1796 = vrot.lane.b32.xlu0 %v920, 17
    %v1797 = vpop.permute.xlu0 %1796
    %1798 = vrot.lane.b32.xlu0 %v922, 17
    %v1799 = vpop.permute.xlu0 %1798
    %1800 = vrot.lane.b32.xlu0 %v923, 17
    %v1801 = vpop.permute.xlu0 %1800
    %1802 = vrot.lane.b32.xlu0 %v924, 17
    %v1803 = vpop.permute.xlu0 %1802
    %1804 = vrot.lane.b32.xlu0 %v926, 17
    %v1805 = vpop.permute.xlu0 %1804
    %1806 = vrot.lane.b32.xlu0 %v927, 17
    %v1807 = vpop.permute.xlu0 %1806
    %1808 = vrot.lane.b32.xlu0 %v928, 17
    %v1809 = vpop.permute.xlu0 %1808
    %v1810 = vsel %vm1141, %v1763, %v1765
    %v1811 = vsel %vm1141, %v1765, %v1767
    %v1812 = vsel %vm1141, %v1767, %v1715
    %v1813 = vsel %vm1141, %v1769, %v1771
    %v1814 = vsel %vm1141, %v1771, %v1773
    %v1815 = vsel %vm1141, %v1773, %v1717
    %v1816 = vsel %vm1141, %v1775, %v1777
    %v1817 = vsel %vm1141, %v1777, %v1779
    %v1818 = vsel %vm1141, %v1779, %v1719
    %v1819 = vsel %vm1141, %v1781, %v1783
    %v1820 = vsel %vm1141, %v1783, %v1785
    %v1821 = vsel %vm1141, %v1785, %v1721
    %v1822 = vsel %vm1141, %v1787, %v1789
    %v1823 = vsel %vm1141, %v1789, %v1791
    %v1824 = vsel %vm1141, %v1791, %v1723
    %v1825 = vsel %vm1141, %v1793, %v1795
    %v1826 = vsel %vm1141, %v1795, %v1797
    %v1827 = vsel %vm1141, %v1797, %v1725
    %v1828 = vsel %vm1141, %v1799, %v1801
    %v1829 = vsel %vm1141, %v1801, %v1803
    %v1830 = vsel %vm1141, %v1803, %v1727
    %v1831 = vsel %vm1141, %v1805, %v1807
    %v1832 = vsel %vm1141, %v1807, %v1809
    %v1833 = vsel %vm1141, %v1809, %v1729
    %v1866 = vsel %vm1141, %v1715, %v1763
    %v1867 = vsel %vm1141, %v1717, %v1769
    %v1868 = vsel %vm1141, %v1719, %v1775
    %v1869 = vsel %vm1141, %v1721, %v1781
    %v1870 = vsel %vm1141, %v1723, %v1787
    %v1871 = vsel %vm1141, %v1725, %v1793
    %v1872 = vsel %vm1141, %v1727, %v1799
    %v1873 = vsel %vm1141, %v1729, %v1805
    %v1874 = vlaneseq
    %v1875 = vshrl.u32 %v1874, 7
    %v1876 = vsub.s32 0, %v1875
    %v1877 = vrot.slane %v63, %v1876
    %v1878 = vlaneseq
    %v1879 = vshrl.u32 %v1878, 7
    %v1880 = vsub.s32 0, %v1879
    %v1881 = vrot.slane %v64, %v1880
    %v1882 = vlaneseq
    %v1883 = vshrl.u32 %v1882, 7
    %v1884 = vsub.s32 0, %v1883
    %v1885 = vrot.slane %v65, %v1884
    %v1886 = vlaneseq
    %v1887 = vshrl.u32 %v1886, 7
    %v1888 = vsub.s32 0, %v1887
    %v1889 = vrot.slane %v66, %v1888
    %v1890 = vmul.f32 %v1866, %v1877
    %v1891 = vmul.f32 %v1810, %v1881
    %v1892 = vmul.f32 %v1811, %v1885
    %v1893 = vmul.f32 %v1812, %v1889
    %v1894 = vmul.f32 %v1867, %v1877
    %v1895 = vmul.f32 %v1813, %v1881
    %v1896 = vmul.f32 %v1814, %v1885
    %v1897 = vmul.f32 %v1815, %v1889
    %v1898 = vmul.f32 %v1868, %v1877
    %v1899 = vmul.f32 %v1816, %v1881
    %v1900 = vmul.f32 %v1817, %v1885
    %v1901 = vmul.f32 %v1818, %v1889
    %v1902 = vmul.f32 %v1869, %v1877
    %v1903 = vmul.f32 %v1819, %v1881
    %v1904 = vmul.f32 %v1820, %v1885
    %v1905 = vmul.f32 %v1821, %v1889
    %v1906 = vmul.f32 %v1870, %v1877
    %v1907 = vmul.f32 %v1822, %v1881
    %v1908 = vmul.f32 %v1823, %v1885
    %v1909 = vmul.f32 %v1824, %v1889
    %v1910 = vmul.f32 %v1871, %v1877
    %v1911 = vmul.f32 %v1825, %v1881
    %v1912 = vmul.f32 %v1826, %v1885
    %v1913 = vmul.f32 %v1827, %v1889
    %v1914 = vmul.f32 %v1872, %v1877
    %v1915 = vmul.f32 %v1828, %v1881
    %v1916 = vmul.f32 %v1829, %v1885
    %v1917 = vmul.f32 %v1830, %v1889
    %v1918 = vmul.f32 %v1873, %v1877
    %v1919 = vmul.f32 %v1831, %v1881
    %v1920 = vmul.f32 %v1832, %v1885
    %v1921 = vmul.f32 %v1833, %v1889
    %v1922 = vpack.c.bf16 %v1894, %v1890
    %v1923 = vpack.c.bf16 %v1895, %v1891
    %v1924 = vpack.c.bf16 %v1896, %v1892
    %v1925 = vpack.c.bf16 %v1897, %v1893
    %v1926 = vpack.c.bf16 %v1902, %v1898
    %v1927 = vpack.c.bf16 %v1903, %v1899
    %v1928 = vpack.c.bf16 %v1904, %v1900
    %v1929 = vpack.c.bf16 %v1905, %v1901
    %v1930 = vpack.c.bf16 %v1910, %v1906
    %v1931 = vpack.c.bf16 %v1911, %v1907
    %v1932 = vpack.c.bf16 %v1912, %v1908
    %v1933 = vpack.c.bf16 %v1913, %v1909
    %v1934 = vpack.c.bf16 %v1918, %v1914
    %v1935 = vpack.c.bf16 %v1919, %v1915
    %v1936 = vpack.c.bf16 %v1920, %v1916
    %v1937 = vpack.c.bf16 %v1921, %v1917
    %1938 = vst [vmem:[#allocation2] sm:$0xff] %v1922
    %1939 = vst [vmem:[#allocation2 + $0x8] sm:$0xff] %v1923
    %1940 = vst [vmem:[#allocation2 + $0x10] sm:$0xff] %v1924
    %1941 = vst [vmem:[#allocation2 + $0x18] sm:$0xff] %v1925
    %1942 = vst [vmem:[#allocation2 + $0x40] sm:$0xff] %v1926
    %1943 = vst [vmem:[#allocation2 + $0x48] sm:$0xff] %v1927
    %1944 = vst [vmem:[#allocation2 + $0x50] sm:$0xff] %v1928
    %1945 = vst [vmem:[#allocation2 + $0x58] sm:$0xff] %v1929
    %1946 = vst [vmem:[#allocation2 + $0x80] sm:$0xff] %v1930
    %1947 = vst [vmem:[#allocation2 + $0x88] sm:$0xff] %v1931
    %1948 = vst [vmem:[#allocation2 + $0x90] sm:$0xff] %v1932
    %1949 = vst [vmem:[#allocation2 + $0x98] sm:$0xff] %v1933
    %1950 = vst [vmem:[#allocation2 + $0xc0] sm:$0xff] %v1934
    %1951 = vst [vmem:[#allocation2 + $0xc8] sm:$0xff] %v1935
    %1952 = vst [vmem:[#allocation2 + $0xd0] sm:$0xff] %v1936
    %1953 = vst [vmem:[#allocation2 + $0xd8] sm:$0xff] %v1937
    %1954 = vrot.lane.b32.xlu0 %v901, 16
    %v1955 = vpop.permute.xlu0 %1954
    %1956 = vrot.lane.b32.xlu0 %v905, 16
    %v1957 = vpop.permute.xlu0 %1956
    %1958 = vrot.lane.b32.xlu0 %v909, 16
    %v1959 = vpop.permute.xlu0 %1958
    %1960 = vrot.lane.b32.xlu0 %v913, 16
    %v1961 = vpop.permute.xlu0 %1960
    %1962 = vrot.lane.b32.xlu0 %v917, 16
    %v1963 = vpop.permute.xlu0 %1962
    %1964 = vrot.lane.b32.xlu0 %v921, 16
    %v1965 = vpop.permute.xlu0 %1964
    %1966 = vrot.lane.b32.xlu0 %v925, 16
    %v1967 = vpop.permute.xlu0 %1966
    %1968 = vrot.lane.b32.xlu0 %v929, 16
    %v1969 = vpop.permute.xlu0 %1968
    %1978 = vrot.lane.b32.xlu0 %v898, 16
    %v1979 = vpop.permute.xlu0 %1978
    %1980 = vrot.lane.b32.xlu0 %v899, 16
    %v1981 = vpop.permute.xlu0 %1980
    %1982 = vrot.lane.b32.xlu0 %v900, 16
    %v1983 = vpop.permute.xlu0 %1982
    %1984 = vrot.lane.b32.xlu0 %v902, 16
    %v1985 = vpop.permute.xlu0 %1984
    %1986 = vrot.lane.b32.xlu0 %v903, 16
    %v1987 = vpop.permute.xlu0 %1986
    %1988 = vrot.lane.b32.xlu0 %v904, 16
    %v1989 = vpop.permute.xlu0 %1988
    %1990 = vrot.lane.b32.xlu0 %v906, 16
    %v1991 = vpop.permute.xlu0 %1990
    %1992 = vrot.lane.b32.xlu0 %v907, 16
    %v1993 = vpop.permute.xlu0 %1992
    %1994 = vrot.lane.b32.xlu0 %v908, 16
    %v1995 = vpop.permute.xlu0 %1994
    %1996 = vrot.lane.b32.xlu0 %v910, 16
    %v1997 = vpop.permute.xlu0 %1996
    %1998 = vrot.lane.b32.xlu0 %v911, 16
    %v1999 = vpop.permute.xlu0 %1998
    %2000 = vrot.lane.b32.xlu0 %v912, 16
    %v2001 = vpop.permute.xlu0 %2000
    %2002 = vrot.lane.b32.xlu0 %v914, 16
    %v2003 = vpop.permute.xlu0 %2002
    %2004 = vrot.lane.b32.xlu0 %v915, 16
    %v2005 = vpop.permute.xlu0 %2004
    %2006 = vrot.lane.b32.xlu0 %v916, 16
    %v2007 = vpop.permute.xlu0 %2006
    %2008 = vrot.lane.b32.xlu0 %v918, 16
    %v2009 = vpop.permute.xlu0 %2008
    %2010 = vrot.lane.b32.xlu0 %v919, 16
    %v2011 = vpop.permute.xlu0 %2010
    %2012 = vrot.lane.b32.xlu0 %v920, 16
    %v2013 = vpop.permute.xlu0 %2012
    %2014 = vrot.lane.b32.xlu0 %v922, 16
    %v2015 = vpop.permute.xlu0 %2014
    %2016 = vrot.lane.b32.xlu0 %v923, 16
    %v2017 = vpop.permute.xlu0 %2016
    %2018 = vrot.lane.b32.xlu0 %v924, 16
    %v2019 = vpop.permute.xlu0 %2018
    %2020 = vrot.lane.b32.xlu0 %v926, 16
    %v2021 = vpop.permute.xlu0 %2020
    %2022 = vrot.lane.b32.xlu0 %v927, 16
    %v2023 = vpop.permute.xlu0 %2022
    %2024 = vrot.lane.b32.xlu0 %v928, 16
    %v2025 = vpop.permute.xlu0 %2024
    %v2026 = vsel %vm615, %v1979, %v1981
    %v2027 = vsel %vm615, %v1981, %v1983
    %v2028 = vsel %vm615, %v1983, %v1955
    %v2029 = vsel %vm615, %v1985, %v1987
    %v2030 = vsel %vm615, %v1987, %v1989
    %v2031 = vsel %vm615, %v1989, %v1957
    %v2032 = vsel %vm615, %v1991, %v1993
    %v2033 = vsel %vm615, %v1993, %v1995
    %v2034 = vsel %vm615, %v1995, %v1959
    %v2035 = vsel %vm615, %v1997, %v1999
    %v2036 = vsel %vm615, %v1999, %v2001
    %v2037 = vsel %vm615, %v2001, %v1961
    %v2038 = vsel %vm615, %v2003, %v2005
    %v2039 = vsel %vm615, %v2005, %v2007
    %v2040 = vsel %vm615, %v2007, %v1963
    %v2041 = vsel %vm615, %v2009, %v2011
    %v2042 = vsel %vm615, %v2011, %v2013
    %v2043 = vsel %vm615, %v2013, %v1965
    %v2044 = vsel %vm615, %v2015, %v2017
    %v2045 = vsel %vm615, %v2017, %v2019
    %v2046 = vsel %vm615, %v2019, %v1967
    %v2047 = vsel %vm615, %v2021, %v2023
    %v2048 = vsel %vm615, %v2023, %v2025
    %v2049 = vsel %vm615, %v2025, %v1969
    %v2082 = vsel %vm615, %v1955, %v1979
    %v2083 = vsel %vm615, %v1957, %v1985
    %v2084 = vsel %vm615, %v1959, %v1991
    %v2085 = vsel %vm615, %v1961, %v1997
    %v2086 = vsel %vm615, %v1963, %v2003
    %v2087 = vsel %vm615, %v1965, %v2009
    %v2088 = vsel %vm615, %v1967, %v2015
    %v2089 = vsel %vm615, %v1969, %v2021
    %v2090 = vlaneseq
    %v2091 = vshrl.u32 %v2090, 7
    %v2092 = vsub.s32 1, %v2091
    %v2093 = vrot.slane %v63, %v2092
    %v2094 = vlaneseq
    %v2095 = vshrl.u32 %v2094, 7
    %v2096 = vsub.s32 1, %v2095
    %v2097 = vrot.slane %v64, %v2096
    %v2098 = vlaneseq
    %v2099 = vshrl.u32 %v2098, 7
    %v2100 = vsub.s32 1, %v2099
    %v2101 = vrot.slane %v65, %v2100
    %v2102 = vlaneseq
    %v2103 = vshrl.u32 %v2102, 7
    %v2104 = vsub.s32 1, %v2103
    %v2105 = vrot.slane %v66, %v2104
    %v2106 = vmul.f32 %v2082, %v2093
    %v2107 = vmul.f32 %v2026, %v2097
    %v2108 = vmul.f32 %v2027, %v2101
    %v2109 = vmul.f32 %v2028, %v2105
    %v2110 = vmul.f32 %v2083, %v2093
    %v2111 = vmul.f32 %v2029, %v2097
    %v2112 = vmul.f32 %v2030, %v2101
    %v2113 = vmul.f32 %v2031, %v2105
    %v2114 = vmul.f32 %v2084, %v2093
    %v2115 = vmul.f32 %v2032, %v2097
    %v2116 = vmul.f32 %v2033, %v2101
    %v2117 = vmul.f32 %v2034, %v2105
    %v2118 = vmul.f32 %v2085, %v2093
    %v2119 = vmul.f32 %v2035, %v2097
    %v2120 = vmul.f32 %v2036, %v2101
    %v2121 = vmul.f32 %v2037, %v2105
    %v2122 = vmul.f32 %v2086, %v2093
    %v2123 = vmul.f32 %v2038, %v2097
    %v2124 = vmul.f32 %v2039, %v2101
    %v2125 = vmul.f32 %v2040, %v2105
    %v2126 = vmul.f32 %v2087, %v2093
    %v2127 = vmul.f32 %v2041, %v2097
    %v2128 = vmul.f32 %v2042, %v2101
    %v2129 = vmul.f32 %v2043, %v2105
    %v2130 = vmul.f32 %v2088, %v2093
    %v2131 = vmul.f32 %v2044, %v2097
    %v2132 = vmul.f32 %v2045, %v2101
    %v2133 = vmul.f32 %v2046, %v2105
    %v2134 = vmul.f32 %v2089, %v2093
    %v2135 = vmul.f32 %v2047, %v2097
    %v2136 = vmul.f32 %v2048, %v2101
    %v2137 = vmul.f32 %v2049, %v2105
    %v2138 = vpack.c.bf16 %v2110, %v2106
    %v2139 = vpack.c.bf16 %v2111, %v2107
    %v2140 = vpack.c.bf16 %v2112, %v2108
    %v2141 = vpack.c.bf16 %v2113, %v2109
    %v2142 = vpack.c.bf16 %v2118, %v2114
    %v2143 = vpack.c.bf16 %v2119, %v2115
    %v2144 = vpack.c.bf16 %v2120, %v2116
    %v2145 = vpack.c.bf16 %v2121, %v2117
    %v2146 = vpack.c.bf16 %v2126, %v2122
    %v2147 = vpack.c.bf16 %v2127, %v2123
    %v2148 = vpack.c.bf16 %v2128, %v2124
    %v2149 = vpack.c.bf16 %v2129, %v2125
    %v2150 = vpack.c.bf16 %v2134, %v2130
    %v2151 = vpack.c.bf16 %v2135, %v2131
    %v2152 = vpack.c.bf16 %v2136, %v2132
    %v2153 = vpack.c.bf16 %v2137, %v2133
    %2154 = vst [vmem:[#allocation2 + $0x100] sm:$0xff] %v2138
    %2155 = vst [vmem:[#allocation2 + $0x108] sm:$0xff] %v2139
    %2156 = vst [vmem:[#allocation2 + $0x110] sm:$0xff] %v2140
    %2157 = vst [vmem:[#allocation2 + $0x118] sm:$0xff] %v2141
    %2158 = vst [vmem:[#allocation2 + $0x140] sm:$0xff] %v2142
    %2159 = vst [vmem:[#allocation2 + $0x148] sm:$0xff] %v2143
    %2160 = vst [vmem:[#allocation2 + $0x150] sm:$0xff] %v2144
    %2161 = vst [vmem:[#allocation2 + $0x158] sm:$0xff] %v2145
    %2162 = vst [vmem:[#allocation2 + $0x180] sm:$0xff] %v2146
    %2163 = vst [vmem:[#allocation2 + $0x188] sm:$0xff] %v2147
    %2164 = vst [vmem:[#allocation2 + $0x190] sm:$0xff] %v2148
    %2165 = vst [vmem:[#allocation2 + $0x198] sm:$0xff] %v2149
    %2166 = vst [vmem:[#allocation2 + $0x1c0] sm:$0xff] %v2150
    %2167 = vst [vmem:[#allocation2 + $0x1c8] sm:$0xff] %v2151
    %2168 = vst [vmem:[#allocation2 + $0x1d0] sm:$0xff] %v2152
    %2169 = vst [vmem:[#allocation2 + $0x1d8] sm:$0xff] %v2153
    %2170 = vrot.lane.b32.xlu0 %v901, 15
    %v2171 = vpop.permute.xlu0 %2170
    %2172 = vrot.lane.b32.xlu0 %v905, 15
    %v2173 = vpop.permute.xlu0 %2172
    %2174 = vrot.lane.b32.xlu0 %v909, 15
    %v2175 = vpop.permute.xlu0 %2174
    %2176 = vrot.lane.b32.xlu0 %v913, 15
    %v2177 = vpop.permute.xlu0 %2176
    %2178 = vrot.lane.b32.xlu0 %v917, 15
    %v2179 = vpop.permute.xlu0 %2178
    %2180 = vrot.lane.b32.xlu0 %v921, 15
    %v2181 = vpop.permute.xlu0 %2180
    %2182 = vrot.lane.b32.xlu0 %v925, 15
    %v2183 = vpop.permute.xlu0 %2182
    %2184 = vrot.lane.b32.xlu0 %v929, 15
    %v2185 = vpop.permute.xlu0 %2184
    %2194 = vrot.lane.b32.xlu0 %v898, 15
    %v2195 = vpop.permute.xlu0 %2194
    %2196 = vrot.lane.b32.xlu0 %v899, 15
    %v2197 = vpop.permute.xlu0 %2196
    %2198 = vrot.lane.b32.xlu0 %v900, 15
    %v2199 = vpop.permute.xlu0 %2198
    %2200 = vrot.lane.b32.xlu0 %v902, 15
    %v2201 = vpop.permute.xlu0 %2200
    %2202 = vrot.lane.b32.xlu0 %v903, 15
    %v2203 = vpop.permute.xlu0 %2202
    %2204 = vrot.lane.b32.xlu0 %v904, 15
    %v2205 = vpop.permute.xlu0 %2204
    %2206 = vrot.lane.b32.xlu0 %v906, 15
    %v2207 = vpop.permute.xlu0 %2206
    %2208 = vrot.lane.b32.xlu0 %v907, 15
    %v2209 = vpop.permute.xlu0 %2208
    %2210 = vrot.lane.b32.xlu0 %v908, 15
    %v2211 = vpop.permute.xlu0 %2210
    %2212 = vrot.lane.b32.xlu0 %v910, 15
    %v2213 = vpop.permute.xlu0 %2212
    %2214 = vrot.lane.b32.xlu0 %v911, 15
    %v2215 = vpop.permute.xlu0 %2214
    %2216 = vrot.lane.b32.xlu0 %v912, 15
    %v2217 = vpop.permute.xlu0 %2216
    %2218 = vrot.lane.b32.xlu0 %v914, 15
    %v2219 = vpop.permute.xlu0 %2218
    %2220 = vrot.lane.b32.xlu0 %v915, 15
    %v2221 = vpop.permute.xlu0 %2220
    %2222 = vrot.lane.b32.xlu0 %v916, 15
    %v2223 = vpop.permute.xlu0 %2222
    %2224 = vrot.lane.b32.xlu0 %v918, 15
    %v2225 = vpop.permute.xlu0 %2224
    %2226 = vrot.lane.b32.xlu0 %v919, 15
    %v2227 = vpop.permute.xlu0 %2226
    %2228 = vrot.lane.b32.xlu0 %v920, 15
    %v2229 = vpop.permute.xlu0 %2228
    %2230 = vrot.lane.b32.xlu0 %v922, 15
    %v2231 = vpop.permute.xlu0 %2230
    %2232 = vrot.lane.b32.xlu0 %v923, 15
    %v2233 = vpop.permute.xlu0 %2232
    %2234 = vrot.lane.b32.xlu0 %v924, 15
    %v2235 = vpop.permute.xlu0 %2234
    %2236 = vrot.lane.b32.xlu0 %v926, 15
    %v2237 = vpop.permute.xlu0 %2236
    %2238 = vrot.lane.b32.xlu0 %v927, 15
    %v2239 = vpop.permute.xlu0 %2238
    %2240 = vrot.lane.b32.xlu0 %v928, 15
    %v2241 = vpop.permute.xlu0 %2240
    %v2242 = vsel %vm1260, %v2195, %v2197
    %v2243 = vsel %vm1260, %v2197, %v2199
    %v2244 = vsel %vm1260, %v2199, %v2171
    %v2245 = vsel %vm1260, %v2201, %v2203
    %v2246 = vsel %vm1260, %v2203, %v2205
    %v2247 = vsel %vm1260, %v2205, %v2173
    %v2248 = vsel %vm1260, %v2207, %v2209
    %v2249 = vsel %vm1260, %v2209, %v2211
    %v2250 = vsel %vm1260, %v2211, %v2175
    %v2251 = vsel %vm1260, %v2213, %v2215
    %v2252 = vsel %vm1260, %v2215, %v2217
    %v2253 = vsel %vm1260, %v2217, %v2177
    %v2254 = vsel %vm1260, %v2219, %v2221
    %v2255 = vsel %vm1260, %v2221, %v2223
    %v2256 = vsel %vm1260, %v2223, %v2179
    %v2257 = vsel %vm1260, %v2225, %v2227
    %v2258 = vsel %vm1260, %v2227, %v2229
    %v2259 = vsel %vm1260, %v2229, %v2181
    %v2260 = vsel %vm1260, %v2231, %v2233
    %v2261 = vsel %vm1260, %v2233, %v2235
    %v2262 = vsel %vm1260, %v2235, %v2183
    %v2263 = vsel %vm1260, %v2237, %v2239
    %v2264 = vsel %vm1260, %v2239, %v2241
    %v2265 = vsel %vm1260, %v2241, %v2185
    %v2298 = vsel %vm1260, %v2171, %v2195
    %v2299 = vsel %vm1260, %v2173, %v2201
    %v2300 = vsel %vm1260, %v2175, %v2207
    %v2301 = vsel %vm1260, %v2177, %v2213
    %v2302 = vsel %vm1260, %v2179, %v2219
    %v2303 = vsel %vm1260, %v2181, %v2225
    %v2304 = vsel %vm1260, %v2183, %v2231
    %v2305 = vsel %vm1260, %v2185, %v2237
    %v2306 = vlaneseq
    %v2307 = vshrl.u32 %v2306, 7
    %v2308 = vsub.s32 2, %v2307
    %v2309 = vrot.slane %v63, %v2308
    %v2310 = vlaneseq
    %v2311 = vshrl.u32 %v2310, 7
    %v2312 = vsub.s32 2, %v2311
    %v2313 = vrot.slane %v64, %v2312
    %v2314 = vlaneseq
    %v2315 = vshrl.u32 %v2314, 7
    %v2316 = vsub.s32 2, %v2315
    %v2317 = vrot.slane %v65, %v2316
    %v2318 = vlaneseq
    %v2319 = vshrl.u32 %v2318, 7
    %v2320 = vsub.s32 2, %v2319
    %v2321 = vrot.slane %v66, %v2320
    %v2322 = vmul.f32 %v2298, %v2309
    %v2323 = vmul.f32 %v2242, %v2313
    %v2324 = vmul.f32 %v2243, %v2317
    %v2325 = vmul.f32 %v2244, %v2321
    %v2326 = vmul.f32 %v2299, %v2309
    %v2327 = vmul.f32 %v2245, %v2313
    %v2328 = vmul.f32 %v2246, %v2317
    %v2329 = vmul.f32 %v2247, %v2321
    %v2330 = vmul.f32 %v2300, %v2309
    %v2331 = vmul.f32 %v2248, %v2313
    %v2332 = vmul.f32 %v2249, %v2317
    %v2333 = vmul.f32 %v2250, %v2321
    %v2334 = vmul.f32 %v2301, %v2309
    %v2335 = vmul.f32 %v2251, %v2313
    %v2336 = vmul.f32 %v2252, %v2317
    %v2337 = vmul.f32 %v2253, %v2321
    %v2338 = vmul.f32 %v2302, %v2309
    %v2339 = vmul.f32 %v2254, %v2313
    %v2340 = vmul.f32 %v2255, %v2317
    %v2341 = vmul.f32 %v2256, %v2321
    %v2342 = vmul.f32 %v2303, %v2309
    %v2343 = vmul.f32 %v2257, %v2313
    %v2344 = vmul.f32 %v2258, %v2317
    %v2345 = vmul.f32 %v2259, %v2321
    %v2346 = vmul.f32 %v2304, %v2309
    %v2347 = vmul.f32 %v2260, %v2313
    %v2348 = vmul.f32 %v2261, %v2317
    %v2349 = vmul.f32 %v2262, %v2321
    %v2350 = vmul.f32 %v2305, %v2309
    %v2351 = vmul.f32 %v2263, %v2313
    %v2352 = vmul.f32 %v2264, %v2317
    %v2353 = vmul.f32 %v2265, %v2321
    %v2354 = vpack.c.bf16 %v2326, %v2322
    %v2355 = vpack.c.bf16 %v2327, %v2323
    %v2356 = vpack.c.bf16 %v2328, %v2324
    %v2357 = vpack.c.bf16 %v2329, %v2325
    %v2358 = vpack.c.bf16 %v2334, %v2330
    %v2359 = vpack.c.bf16 %v2335, %v2331
    %v2360 = vpack.c.bf16 %v2336, %v2332
    %v2361 = vpack.c.bf16 %v2337, %v2333
    %v2362 = vpack.c.bf16 %v2342, %v2338
    %v2363 = vpack.c.bf16 %v2343, %v2339
    %v2364 = vpack.c.bf16 %v2344, %v2340
    %v2365 = vpack.c.bf16 %v2345, %v2341
    %v2366 = vpack.c.bf16 %v2350, %v2346
    %v2367 = vpack.c.bf16 %v2351, %v2347
    %v2368 = vpack.c.bf16 %v2352, %v2348
    %v2369 = vpack.c.bf16 %v2353, %v2349
    %2370 = vst [vmem:[#allocation2 + $0x200] sm:$0xff] %v2354
    %2371 = vst [vmem:[#allocation2 + $0x208] sm:$0xff] %v2355
    %2372 = vst [vmem:[#allocation2 + $0x210] sm:$0xff] %v2356
    %2373 = vst [vmem:[#allocation2 + $0x218] sm:$0xff] %v2357
    %2374 = vst [vmem:[#allocation2 + $0x240] sm:$0xff] %v2358
    %2375 = vst [vmem:[#allocation2 + $0x248] sm:$0xff] %v2359
    %2376 = vst [vmem:[#allocation2 + $0x250] sm:$0xff] %v2360
    %2377 = vst [vmem:[#allocation2 + $0x258] sm:$0xff] %v2361
    %2378 = vst [vmem:[#allocation2 + $0x280] sm:$0xff] %v2362
    %2379 = vst [vmem:[#allocation2 + $0x288] sm:$0xff] %v2363
    %2380 = vst [vmem:[#allocation2 + $0x290] sm:$0xff] %v2364
    %2381 = vst [vmem:[#allocation2 + $0x298] sm:$0xff] %v2365
    %2382 = vst [vmem:[#allocation2 + $0x2c0] sm:$0xff] %v2366
    %2383 = vst [vmem:[#allocation2 + $0x2c8] sm:$0xff] %v2367
    %2384 = vst [vmem:[#allocation2 + $0x2d0] sm:$0xff] %v2368
    %2385 = vst [vmem:[#allocation2 + $0x2d8] sm:$0xff] %v2369
    %2386 = vrot.lane.b32.xlu0 %v901, 1
    %v2387 = vpop.permute.xlu0 %2386
    %2388 = vrot.lane.b32.xlu0 %v905, 1
    %v2389 = vpop.permute.xlu0 %2388
    %2390 = vrot.lane.b32.xlu0 %v909, 1
    %v2391 = vpop.permute.xlu0 %2390
    %2392 = vrot.lane.b32.xlu0 %v913, 1
    %v2393 = vpop.permute.xlu0 %2392
    %2394 = vrot.lane.b32.xlu0 %v917, 1
    %v2395 = vpop.permute.xlu0 %2394
    %2396 = vrot.lane.b32.xlu0 %v921, 1
    %v2397 = vpop.permute.xlu0 %2396
    %2398 = vrot.lane.b32.xlu0 %v925, 1
    %v2399 = vpop.permute.xlu0 %2398
    %2400 = vrot.lane.b32.xlu0 %v929, 1
    %v2401 = vpop.permute.xlu0 %2400
    %2410 = vrot.lane.b32.xlu0 %v898, 1
    %v2411 = vpop.permute.xlu0 %2410
    %2412 = vrot.lane.b32.xlu0 %v899, 1
    %v2413 = vpop.permute.xlu0 %2412
    %2414 = vrot.lane.b32.xlu0 %v900, 1
    %v2415 = vpop.permute.xlu0 %2414
    %2416 = vrot.lane.b32.xlu0 %v902, 1
    %v2417 = vpop.permute.xlu0 %2416
    %2418 = vrot.lane.b32.xlu0 %v903, 1
    %v2419 = vpop.permute.xlu0 %2418
    %2420 = vrot.lane.b32.xlu0 %v904, 1
    %v2421 = vpop.permute.xlu0 %2420
    %2422 = vrot.lane.b32.xlu0 %v906, 1
    %v2423 = vpop.permute.xlu0 %2422
    %2424 = vrot.lane.b32.xlu0 %v907, 1
    %v2425 = vpop.permute.xlu0 %2424
    %2426 = vrot.lane.b32.xlu0 %v908, 1
    %v2427 = vpop.permute.xlu0 %2426
    %2428 = vrot.lane.b32.xlu0 %v910, 1
    %v2429 = vpop.permute.xlu0 %2428
    %2430 = vrot.lane.b32.xlu0 %v911, 1
    %v2431 = vpop.permute.xlu0 %2430
    %2432 = vrot.lane.b32.xlu0 %v912, 1
    %v2433 = vpop.permute.xlu0 %2432
    %2434 = vrot.lane.b32.xlu0 %v914, 1
    %v2435 = vpop.permute.xlu0 %2434
    %2436 = vrot.lane.b32.xlu0 %v915, 1
    %v2437 = vpop.permute.xlu0 %2436
    %2438 = vrot.lane.b32.xlu0 %v916, 1
    %v2439 = vpop.permute.xlu0 %2438
    %2440 = vrot.lane.b32.xlu0 %v918, 1
    %v2441 = vpop.permute.xlu0 %2440
    %2442 = vrot.lane.b32.xlu0 %v919, 1
    %v2443 = vpop.permute.xlu0 %2442
    %2444 = vrot.lane.b32.xlu0 %v920, 1
    %v2445 = vpop.permute.xlu0 %2444
    %2446 = vrot.lane.b32.xlu0 %v922, 1
    %v2447 = vpop.permute.xlu0 %2446
    %2448 = vrot.lane.b32.xlu0 %v923, 1
    %v2449 = vpop.permute.xlu0 %2448
    %2450 = vrot.lane.b32.xlu0 %v924, 1
    %v2451 = vpop.permute.xlu0 %2450
    %2452 = vrot.lane.b32.xlu0 %v926, 1
    %v2453 = vpop.permute.xlu0 %2452
    %2454 = vrot.lane.b32.xlu0 %v927, 1
    %v2455 = vpop.permute.xlu0 %2454
    %2456 = vrot.lane.b32.xlu0 %v928, 1
    %v2457 = vpop.permute.xlu0 %2456
    %v2458 = vsel %vm452, %v2411, %v2413
    %v2459 = vsel %vm452, %v2413, %v2415
    %v2460 = vsel %vm452, %v2415, %v2387
    %v2461 = vsel %vm452, %v2417, %v2419
    %v2462 = vsel %vm452, %v2419, %v2421
    %v2463 = vsel %vm452, %v2421, %v2389
    %v2464 = vsel %vm452, %v2423, %v2425
    %v2465 = vsel %vm452, %v2425, %v2427
    %v2466 = vsel %vm452, %v2427, %v2391
    %v2467 = vsel %vm452, %v2429, %v2431
    %v2468 = vsel %vm452, %v2431, %v2433
    %v2469 = vsel %vm452, %v2433, %v2393
    %v2470 = vsel %vm452, %v2435, %v2437
    %v2471 = vsel %vm452, %v2437, %v2439
    %v2472 = vsel %vm452, %v2439, %v2395
    %v2473 = vsel %vm452, %v2441, %v2443
    %v2474 = vsel %vm452, %v2443, %v2445
    %v2475 = vsel %vm452, %v2445, %v2397
    %v2476 = vsel %vm452, %v2447, %v2449
    %v2477 = vsel %vm452, %v2449, %v2451
    %v2478 = vsel %vm452, %v2451, %v2399
    %v2479 = vsel %vm452, %v2453, %v2455
    %v2480 = vsel %vm452, %v2455, %v2457
    %v2481 = vsel %vm452, %v2457, %v2401
    %v2514 = vsel %vm452, %v2387, %v2411
    %v2515 = vsel %vm452, %v2389, %v2417
    %v2516 = vsel %vm452, %v2391, %v2423
    %v2517 = vsel %vm452, %v2393, %v2429
    %v2518 = vsel %vm452, %v2395, %v2435
    %v2519 = vsel %vm452, %v2397, %v2441
    %v2520 = vsel %vm452, %v2399, %v2447
    %v2521 = vsel %vm452, %v2401, %v2453
    %v2522 = vlaneseq
    %v2523 = vshrl.u32 %v2522, 7
    %v2524 = vsub.s32 3, %v2523
    %v2525 = vrot.slane %v63, %v2524
    %v2526 = vlaneseq
    %v2527 = vshrl.u32 %v2526, 7
    %v2528 = vsub.s32 3, %v2527
    %v2529 = vrot.slane %v64, %v2528
    %v2530 = vlaneseq
    %v2531 = vshrl.u32 %v2530, 7
    %v2532 = vsub.s32 3, %v2531
    %v2533 = vrot.slane %v65, %v2532
    %v2534 = vlaneseq
    %v2535 = vshrl.u32 %v2534, 7
    %v2536 = vsub.s32 3, %v2535
    %v2537 = vrot.slane %v66, %v2536
    %v2538 = vmul.f32 %v2514, %v2525
    %v2539 = vmul.f32 %v2458, %v2529
    %v2540 = vmul.f32 %v2459, %v2533
    %v2541 = vmul.f32 %v2460, %v2537
    %v2542 = vmul.f32 %v2515, %v2525
    %v2543 = vmul.f32 %v2461, %v2529
    %v2544 = vmul.f32 %v2462, %v2533
    %v2545 = vmul.f32 %v2463, %v2537
    %v2546 = vmul.f32 %v2516, %v2525
    %v2547 = vmul.f32 %v2464, %v2529
    %v2548 = vmul.f32 %v2465, %v2533
    %v2549 = vmul.f32 %v2466, %v2537
    %v2550 = vmul.f32 %v2517, %v2525
    %v2551 = vmul.f32 %v2467, %v2529
    %v2552 = vmul.f32 %v2468, %v2533
    %v2553 = vmul.f32 %v2469, %v2537
    %v2554 = vmul.f32 %v2518, %v2525
    %v2555 = vmul.f32 %v2470, %v2529
    %v2556 = vmul.f32 %v2471, %v2533
    %v2557 = vmul.f32 %v2472, %v2537
    %v2558 = vmul.f32 %v2519, %v2525
    %v2559 = vmul.f32 %v2473, %v2529
    %v2560 = vmul.f32 %v2474, %v2533
    %v2561 = vmul.f32 %v2475, %v2537
    %v2562 = vmul.f32 %v2520, %v2525
    %v2563 = vmul.f32 %v2476, %v2529
    %v2564 = vmul.f32 %v2477, %v2533
    %v2565 = vmul.f32 %v2478, %v2537
    %v2566 = vmul.f32 %v2521, %v2525
    %v2567 = vmul.f32 %v2479, %v2529
    %v2568 = vmul.f32 %v2480, %v2533
    %v2569 = vmul.f32 %v2481, %v2537
    %v2570 = vpack.c.bf16 %v2542, %v2538
    %v2571 = vpack.c.bf16 %v2543, %v2539
    %v2572 = vpack.c.bf16 %v2544, %v2540
    %v2573 = vpack.c.bf16 %v2545, %v2541
    %v2574 = vpack.c.bf16 %v2550, %v2546
    %v2575 = vpack.c.bf16 %v2551, %v2547
    %v2576 = vpack.c.bf16 %v2552, %v2548
    %v2577 = vpack.c.bf16 %v2553, %v2549
    %v2578 = vpack.c.bf16 %v2558, %v2554
    %v2579 = vpack.c.bf16 %v2559, %v2555
    %v2580 = vpack.c.bf16 %v2560, %v2556
    %v2581 = vpack.c.bf16 %v2561, %v2557
    %v2582 = vpack.c.bf16 %v2566, %v2562
    %v2583 = vpack.c.bf16 %v2567, %v2563
    %v2584 = vpack.c.bf16 %v2568, %v2564
    %v2585 = vpack.c.bf16 %v2569, %v2565
    %2586 = vst [vmem:[#allocation2 + $0x300] sm:$0xff] %v2570
    %2587 = vst [vmem:[#allocation2 + $0x308] sm:$0xff] %v2571
    %2588 = vst [vmem:[#allocation2 + $0x310] sm:$0xff] %v2572
    %2589 = vst [vmem:[#allocation2 + $0x318] sm:$0xff] %v2573
    %2590 = vst [vmem:[#allocation2 + $0x340] sm:$0xff] %v2574
    %2591 = vst [vmem:[#allocation2 + $0x348] sm:$0xff] %v2575
    %2592 = vst [vmem:[#allocation2 + $0x350] sm:$0xff] %v2576
    %2593 = vst [vmem:[#allocation2 + $0x358] sm:$0xff] %v2577
    %2594 = vst [vmem:[#allocation2 + $0x380] sm:$0xff] %v2578
    %2595 = vst [vmem:[#allocation2 + $0x388] sm:$0xff] %v2579
    %2596 = vst [vmem:[#allocation2 + $0x390] sm:$0xff] %v2580
    %2597 = vst [vmem:[#allocation2 + $0x398] sm:$0xff] %v2581
    %2598 = vst [vmem:[#allocation2 + $0x3c0] sm:$0xff] %v2582
    %2599 = vst [vmem:[#allocation2 + $0x3c8] sm:$0xff] %v2583
    %2600 = vst [vmem:[#allocation2 + $0x3d0] sm:$0xff] %v2584
    %2601 = vst [vmem:[#allocation2 + $0x3d8] sm:$0xff] %v2585
    %v2602 = vlaneseq
    %v2603 = vshrl.u32 %v2602, 7
    %v2604 = vsub.s32 4, %v2603
    %v2605 = vrot.slane %v63, %v2604
    %v2606 = vlaneseq
    %v2607 = vshrl.u32 %v2606, 7
    %v2608 = vsub.s32 4, %v2607
    %v2609 = vrot.slane %v64, %v2608
    %v2610 = vlaneseq
    %v2611 = vshrl.u32 %v2610, 7
    %v2612 = vsub.s32 4, %v2611
    %v2613 = vrot.slane %v65, %v2612
    %v2614 = vlaneseq
    %v2615 = vshrl.u32 %v2614, 7
    %v2616 = vsub.s32 4, %v2615
    %v2617 = vrot.slane %v66, %v2616
    %v2618 = vmul.f32 %v898, %v2605
    %v2619 = vmul.f32 %v899, %v2609
    %v2620 = vmul.f32 %v900, %v2613
    %v2621 = vmul.f32 %v901, %v2617
    %v2622 = vmul.f32 %v902, %v2605
    %v2623 = vmul.f32 %v903, %v2609
    %v2624 = vmul.f32 %v904, %v2613
    %v2625 = vmul.f32 %v905, %v2617
    %v2626 = vmul.f32 %v906, %v2605
    %v2627 = vmul.f32 %v907, %v2609
    %v2628 = vmul.f32 %v908, %v2613
    %v2629 = vmul.f32 %v909, %v2617
    %v2630 = vmul.f32 %v910, %v2605
    %v2631 = vmul.f32 %v911, %v2609
    %v2632 = vmul.f32 %v912, %v2613
    %v2633 = vmul.f32 %v913, %v2617
    %v2634 = vmul.f32 %v914, %v2605
    %v2635 = vmul.f32 %v915, %v2609
    %v2636 = vmul.f32 %v916, %v2613
    %v2637 = vmul.f32 %v917, %v2617
    %v2638 = vmul.f32 %v918, %v2605
    %v2639 = vmul.f32 %v919, %v2609
    %v2640 = vmul.f32 %v920, %v2613
    %v2641 = vmul.f32 %v921, %v2617
    %v2642 = vmul.f32 %v922, %v2605
    %v2643 = vmul.f32 %v923, %v2609
    %v2644 = vmul.f32 %v924, %v2613
    %v2645 = vmul.f32 %v925, %v2617
    %v2646 = vmul.f32 %v926, %v2605
    %v2647 = vmul.f32 %v927, %v2609
    %v2648 = vmul.f32 %v928, %v2613
    %v2649 = vmul.f32 %v929, %v2617
    %v2650 = vpack.c.bf16 %v2622, %v2618
    %v2651 = vpack.c.bf16 %v2623, %v2619
    %v2652 = vpack.c.bf16 %v2624, %v2620
    %v2653 = vpack.c.bf16 %v2625, %v2621
    %v2654 = vpack.c.bf16 %v2630, %v2626
    %v2655 = vpack.c.bf16 %v2631, %v2627
    %v2656 = vpack.c.bf16 %v2632, %v2628
    %v2657 = vpack.c.bf16 %v2633, %v2629
    %v2658 = vpack.c.bf16 %v2638, %v2634
    %v2659 = vpack.c.bf16 %v2639, %v2635
    %v2660 = vpack.c.bf16 %v2640, %v2636
    %v2661 = vpack.c.bf16 %v2641, %v2637
    %v2662 = vpack.c.bf16 %v2646, %v2642
    %v2663 = vpack.c.bf16 %v2647, %v2643
    %v2664 = vpack.c.bf16 %v2648, %v2644
    %v2665 = vpack.c.bf16 %v2649, %v2645
    %2666 = vst [vmem:[#allocation2 + $0x400] sm:$0xff] %v2650
    %2667 = vst [vmem:[#allocation2 + $0x408] sm:$0xff] %v2651
    %2668 = vst [vmem:[#allocation2 + $0x410] sm:$0xff] %v2652
    %2669 = vst [vmem:[#allocation2 + $0x418] sm:$0xff] %v2653
    %2670 = vst [vmem:[#allocation2 + $0x440] sm:$0xff] %v2654
    %2671 = vst [vmem:[#allocation2 + $0x448] sm:$0xff] %v2655
    %2672 = vst [vmem:[#allocation2 + $0x450] sm:$0xff] %v2656
    %2673 = vst [vmem:[#allocation2 + $0x458] sm:$0xff] %v2657
    %2674 = vst [vmem:[#allocation2 + $0x480] sm:$0xff] %v2658
    %2675 = vst [vmem:[#allocation2 + $0x488] sm:$0xff] %v2659
    %2676 = vst [vmem:[#allocation2 + $0x490] sm:$0xff] %v2660
    %2677 = vst [vmem:[#allocation2 + $0x498] sm:$0xff] %v2661
    %2678 = vst [vmem:[#allocation2 + $0x4c0] sm:$0xff] %v2662
    %2679 = vst [vmem:[#allocation2 + $0x4c8] sm:$0xff] %v2663
    %2680 = vst [vmem:[#allocation2 + $0x4d0] sm:$0xff] %v2664
    %2681 = vst [vmem:[#allocation2 + $0x4d8] sm:$0xff] %v2665
    %2682 = vrot.lane.b32.xlu0 %v898, 127
    %v2683 = vpop.permute.xlu0 %2682
    %2684 = vrot.lane.b32.xlu0 %v899, 127
    %v2685 = vpop.permute.xlu0 %2684
    %2686 = vrot.lane.b32.xlu0 %v900, 127
    %v2687 = vpop.permute.xlu0 %2686
    %2688 = vrot.lane.b32.xlu0 %v901, 127
    %v2689 = vpop.permute.xlu0 %2688
    %2690 = vrot.lane.b32.xlu0 %v902, 127
    %v2691 = vpop.permute.xlu0 %2690
    %2692 = vrot.lane.b32.xlu0 %v903, 127
    %v2693 = vpop.permute.xlu0 %2692
    %2694 = vrot.lane.b32.xlu0 %v904, 127
    %v2695 = vpop.permute.xlu0 %2694
    %2696 = vrot.lane.b32.xlu0 %v905, 127
    %v2697 = vpop.permute.xlu0 %2696
    %2698 = vrot.lane.b32.xlu0 %v906, 127
    %v2699 = vpop.permute.xlu0 %2698
    %2700 = vrot.lane.b32.xlu0 %v907, 127
    %v2701 = vpop.permute.xlu0 %2700
    %2702 = vrot.lane.b32.xlu0 %v908, 127
    %v2703 = vpop.permute.xlu0 %2702
    %2704 = vrot.lane.b32.xlu0 %v909, 127
    %v2705 = vpop.permute.xlu0 %2704
    %2706 = vrot.lane.b32.xlu0 %v910, 127
    %v2707 = vpop.permute.xlu0 %2706
    %2708 = vrot.lane.b32.xlu0 %v911, 127
    %v2709 = vpop.permute.xlu0 %2708
    %2710 = vrot.lane.b32.xlu0 %v912, 127
    %v2711 = vpop.permute.xlu0 %2710
    %2712 = vrot.lane.b32.xlu0 %v913, 127
    %v2713 = vpop.permute.xlu0 %2712
    %2714 = vrot.lane.b32.xlu0 %v914, 127
    %v2715 = vpop.permute.xlu0 %2714
    %2716 = vrot.lane.b32.xlu0 %v915, 127
    %v2717 = vpop.permute.xlu0 %2716
    %2718 = vrot.lane.b32.xlu0 %v916, 127
    %v2719 = vpop.permute.xlu0 %2718
    %2720 = vrot.lane.b32.xlu0 %v917, 127
    %v2721 = vpop.permute.xlu0 %2720
    %2722 = vrot.lane.b32.xlu0 %v918, 127
    %v2723 = vpop.permute.xlu0 %2722
    %2724 = vrot.lane.b32.xlu0 %v919, 127
    %v2725 = vpop.permute.xlu0 %2724
    %2726 = vrot.lane.b32.xlu0 %v920, 127
    %v2727 = vpop.permute.xlu0 %2726
    %2728 = vrot.lane.b32.xlu0 %v921, 127
    %v2729 = vpop.permute.xlu0 %2728
    %2730 = vrot.lane.b32.xlu0 %v922, 127
    %v2731 = vpop.permute.xlu0 %2730
    %2732 = vrot.lane.b32.xlu0 %v923, 127
    %v2733 = vpop.permute.xlu0 %2732
    %2734 = vrot.lane.b32.xlu0 %v924, 127
    %v2735 = vpop.permute.xlu0 %2734
    %2736 = vrot.lane.b32.xlu0 %v925, 127
    %v2737 = vpop.permute.xlu0 %2736
    %2738 = vrot.lane.b32.xlu0 %v926, 127
    %v2739 = vpop.permute.xlu0 %2738
    %2740 = vrot.lane.b32.xlu0 %v927, 127
    %v2741 = vpop.permute.xlu0 %2740
    %2742 = vrot.lane.b32.xlu0 %v928, 127
    %v2743 = vpop.permute.xlu0 %2742
    %2744 = vrot.lane.b32.xlu0 %v929, 127
    %v2745 = vpop.permute.xlu0 %2744
    %v2746 = vsel %vm1426, %v2683, %v2685
    %v2747 = vsel %vm1426, %v2685, %v2687
    %v2748 = vsel %vm1426, %v2687, %v2689
    %v2749 = vsel %vm1426, %v2691, %v2693
    %v2750 = vsel %vm1426, %v2693, %v2695
    %v2751 = vsel %vm1426, %v2695, %v2697
    %v2752 = vsel %vm1426, %v2699, %v2701
    %v2753 = vsel %vm1426, %v2701, %v2703
    %v2754 = vsel %vm1426, %v2703, %v2705
    %v2755 = vsel %vm1426, %v2707, %v2709
    %v2756 = vsel %vm1426, %v2709, %v2711
    %v2757 = vsel %vm1426, %v2711, %v2713
    %v2758 = vsel %vm1426, %v2715, %v2717
    %v2759 = vsel %vm1426, %v2717, %v2719
    %v2760 = vsel %vm1426, %v2719, %v2721
    %v2761 = vsel %vm1426, %v2723, %v2725
    %v2762 = vsel %vm1426, %v2725, %v2727
    %v2763 = vsel %vm1426, %v2727, %v2729
    %v2764 = vsel %vm1426, %v2731, %v2733
    %v2765 = vsel %vm1426, %v2733, %v2735
    %v2766 = vsel %vm1426, %v2735, %v2737
    %v2767 = vsel %vm1426, %v2739, %v2741
    %v2768 = vsel %vm1426, %v2741, %v2743
    %v2769 = vsel %vm1426, %v2743, %v2745
    %v2810 = vsel %vm1426, %v2689, %v2683
    %v2811 = vsel %vm1426, %v2697, %v2691
    %v2812 = vsel %vm1426, %v2705, %v2699
    %v2813 = vsel %vm1426, %v2713, %v2707
    %v2814 = vsel %vm1426, %v2721, %v2715
    %v2815 = vsel %vm1426, %v2729, %v2723
    %v2816 = vsel %vm1426, %v2737, %v2731
    %v2817 = vsel %vm1426, %v2745, %v2739
    %v2818 = vlaneseq
    %v2819 = vshrl.u32 %v2818, 7
    %v2820 = vsub.s32 5, %v2819
    %v2821 = vrot.slane %v63, %v2820
    %v2822 = vlaneseq
    %v2823 = vshrl.u32 %v2822, 7
    %v2824 = vsub.s32 5, %v2823
    %v2825 = vrot.slane %v64, %v2824
    %v2826 = vlaneseq
    %v2827 = vshrl.u32 %v2826, 7
    %v2828 = vsub.s32 5, %v2827
    %v2829 = vrot.slane %v65, %v2828
    %v2830 = vlaneseq
    %v2831 = vshrl.u32 %v2830, 7
    %v2832 = vsub.s32 5, %v2831
    %v2833 = vrot.slane %v66, %v2832
    %v2834 = vmul.f32 %v2746, %v2821
    %v2835 = vmul.f32 %v2747, %v2825
    %v2836 = vmul.f32 %v2748, %v2829
    %v2837 = vmul.f32 %v2810, %v2833
    %v2838 = vmul.f32 %v2749, %v2821
    %v2839 = vmul.f32 %v2750, %v2825
    %v2840 = vmul.f32 %v2751, %v2829
    %v2841 = vmul.f32 %v2811, %v2833
    %v2842 = vmul.f32 %v2752, %v2821
    %v2843 = vmul.f32 %v2753, %v2825
    %v2844 = vmul.f32 %v2754, %v2829
    %v2845 = vmul.f32 %v2812, %v2833
    %v2846 = vmul.f32 %v2755, %v2821
    %v2847 = vmul.f32 %v2756, %v2825
    %v2848 = vmul.f32 %v2757, %v2829
    %v2849 = vmul.f32 %v2813, %v2833
    %v2850 = vmul.f32 %v2758, %v2821
    %v2851 = vmul.f32 %v2759, %v2825
    %v2852 = vmul.f32 %v2760, %v2829
    %v2853 = vmul.f32 %v2814, %v2833
    %v2854 = vmul.f32 %v2761, %v2821
    %v2855 = vmul.f32 %v2762, %v2825
    %v2856 = vmul.f32 %v2763, %v2829
    %v2857 = vmul.f32 %v2815, %v2833
    %v2858 = vmul.f32 %v2764, %v2821
    %v2859 = vmul.f32 %v2765, %v2825
    %v2860 = vmul.f32 %v2766, %v2829
    %v2861 = vmul.f32 %v2816, %v2833
    %v2862 = vmul.f32 %v2767, %v2821
    %v2863 = vmul.f32 %v2768, %v2825
    %v2864 = vmul.f32 %v2769, %v2829
    %v2865 = vmul.f32 %v2817, %v2833
    %v2866 = vpack.c.bf16 %v2838, %v2834
    %v2867 = vpack.c.bf16 %v2839, %v2835
    %v2868 = vpack.c.bf16 %v2840, %v2836
    %v2869 = vpack.c.bf16 %v2841, %v2837
    %v2870 = vpack.c.bf16 %v2846, %v2842
    %v2871 = vpack.c.bf16 %v2847, %v2843
    %v2872 = vpack.c.bf16 %v2848, %v2844
    %v2873 = vpack.c.bf16 %v2849, %v2845
    %v2874 = vpack.c.bf16 %v2854, %v2850
    %v2875 = vpack.c.bf16 %v2855, %v2851
    %v2876 = vpack.c.bf16 %v2856, %v2852
    %v2877 = vpack.c.bf16 %v2857, %v2853
    %v2878 = vpack.c.bf16 %v2862, %v2858
    %v2879 = vpack.c.bf16 %v2863, %v2859
    %v2880 = vpack.c.bf16 %v2864, %v2860
    %v2881 = vpack.c.bf16 %v2865, %v2861
    %2882 = vst [vmem:[#allocation2 + $0x500] sm:$0xff] %v2866
    %2883 = vst [vmem:[#allocation2 + $0x508] sm:$0xff] %v2867
    %2884 = vst [vmem:[#allocation2 + $0x510] sm:$0xff] %v2868
    %2885 = vst [vmem:[#allocation2 + $0x518] sm:$0xff] %v2869
    %2886 = vst [vmem:[#allocation2 + $0x540] sm:$0xff] %v2870
    %2887 = vst [vmem:[#allocation2 + $0x548] sm:$0xff] %v2871
    %2888 = vst [vmem:[#allocation2 + $0x550] sm:$0xff] %v2872
    %2889 = vst [vmem:[#allocation2 + $0x558] sm:$0xff] %v2873
    %2890 = vst [vmem:[#allocation2 + $0x580] sm:$0xff] %v2874
    %2891 = vst [vmem:[#allocation2 + $0x588] sm:$0xff] %v2875
    %2892 = vst [vmem:[#allocation2 + $0x590] sm:$0xff] %v2876
    %2893 = vst [vmem:[#allocation2 + $0x598] sm:$0xff] %v2877
    %2894 = vst [vmem:[#allocation2 + $0x5c0] sm:$0xff] %v2878
    %2895 = vst [vmem:[#allocation2 + $0x5c8] sm:$0xff] %v2879
    %2896 = vst [vmem:[#allocation2 + $0x5d0] sm:$0xff] %v2880
    %2897 = vst [vmem:[#allocation2 + $0x5d8] sm:$0xff] %v2881
    %2898 = vrot.lane.b32.xlu0 %v898, 113
    %v2899 = vpop.permute.xlu0 %2898
    %2900 = vrot.lane.b32.xlu0 %v899, 113
    %v2901 = vpop.permute.xlu0 %2900
    %2902 = vrot.lane.b32.xlu0 %v900, 113
    %v2903 = vpop.permute.xlu0 %2902
    %2904 = vrot.lane.b32.xlu0 %v901, 113
    %v2905 = vpop.permute.xlu0 %2904
    %2906 = vrot.lane.b32.xlu0 %v902, 113
    %v2907 = vpop.permute.xlu0 %2906
    %2908 = vrot.lane.b32.xlu0 %v903, 113
    %v2909 = vpop.permute.xlu0 %2908
    %2910 = vrot.lane.b32.xlu0 %v904, 113
    %v2911 = vpop.permute.xlu0 %2910
    %2912 = vrot.lane.b32.xlu0 %v905, 113
    %v2913 = vpop.permute.xlu0 %2912
    %2914 = vrot.lane.b32.xlu0 %v906, 113
    %v2915 = vpop.permute.xlu0 %2914
    %2916 = vrot.lane.b32.xlu0 %v907, 113
    %v2917 = vpop.permute.xlu0 %2916
    %2918 = vrot.lane.b32.xlu0 %v908, 113
    %v2919 = vpop.permute.xlu0 %2918
    %2920 = vrot.lane.b32.xlu0 %v909, 113
    %v2921 = vpop.permute.xlu0 %2920
    %2922 = vrot.lane.b32.xlu0 %v910, 113
    %v2923 = vpop.permute.xlu0 %2922
    %2924 = vrot.lane.b32.xlu0 %v911, 113
    %v2925 = vpop.permute.xlu0 %2924
    %2926 = vrot.lane.b32.xlu0 %v912, 113
    %v2927 = vpop.permute.xlu0 %2926
    %2928 = vrot.lane.b32.xlu0 %v913, 113
    %v2929 = vpop.permute.xlu0 %2928
    %2930 = vrot.lane.b32.xlu0 %v914, 113
    %v2931 = vpop.permute.xlu0 %2930
    %2932 = vrot.lane.b32.xlu0 %v915, 113
    %v2933 = vpop.permute.xlu0 %2932
    %2934 = vrot.lane.b32.xlu0 %v916, 113
    %v2935 = vpop.permute.xlu0 %2934
    %2936 = vrot.lane.b32.xlu0 %v917, 113
    %v2937 = vpop.permute.xlu0 %2936
    %2938 = vrot.lane.b32.xlu0 %v918, 113
    %v2939 = vpop.permute.xlu0 %2938
    %2940 = vrot.lane.b32.xlu0 %v919, 113
    %v2941 = vpop.permute.xlu0 %2940
    %2942 = vrot.lane.b32.xlu0 %v920, 113
    %v2943 = vpop.permute.xlu0 %2942
    %2944 = vrot.lane.b32.xlu0 %v921, 113
    %v2945 = vpop.permute.xlu0 %2944
    %2946 = vrot.lane.b32.xlu0 %v922, 113
    %v2947 = vpop.permute.xlu0 %2946
    %2948 = vrot.lane.b32.xlu0 %v923, 113
    %v2949 = vpop.permute.xlu0 %2948
    %2950 = vrot.lane.b32.xlu0 %v924, 113
    %v2951 = vpop.permute.xlu0 %2950
    %2952 = vrot.lane.b32.xlu0 %v925, 113
    %v2953 = vpop.permute.xlu0 %2952
    %2954 = vrot.lane.b32.xlu0 %v926, 113
    %v2955 = vpop.permute.xlu0 %2954
    %2956 = vrot.lane.b32.xlu0 %v927, 113
    %v2957 = vpop.permute.xlu0 %2956
    %2958 = vrot.lane.b32.xlu0 %v928, 113
    %v2959 = vpop.permute.xlu0 %2958
    %2960 = vrot.lane.b32.xlu0 %v929, 113
    %v2961 = vpop.permute.xlu0 %2960
    %v2962 = vsel %vm1488, %v2899, %v2901
    %v2963 = vsel %vm1488, %v2901, %v2903
    %v2964 = vsel %vm1488, %v2903, %v2905
    %v2965 = vsel %vm1488, %v2907, %v2909
    %v2966 = vsel %vm1488, %v2909, %v2911
    %v2967 = vsel %vm1488, %v2911, %v2913
    %v2968 = vsel %vm1488, %v2915, %v2917
    %v2969 = vsel %vm1488, %v2917, %v2919
    %v2970 = vsel %vm1488, %v2919, %v2921
    %v2971 = vsel %vm1488, %v2923, %v2925
    %v2972 = vsel %vm1488, %v2925, %v2927
    %v2973 = vsel %vm1488, %v2927, %v2929
    %v2974 = vsel %vm1488, %v2931, %v2933
    %v2975 = vsel %vm1488, %v2933, %v2935
    %v2976 = vsel %vm1488, %v2935, %v2937
    %v2977 = vsel %vm1488, %v2939, %v2941
    %v2978 = vsel %vm1488, %v2941, %v2943
    %v2979 = vsel %vm1488, %v2943, %v2945
    %v2980 = vsel %vm1488, %v2947, %v2949
    %v2981 = vsel %vm1488, %v2949, %v2951
    %v2982 = vsel %vm1488, %v2951, %v2953
    %v2983 = vsel %vm1488, %v2955, %v2957
    %v2984 = vsel %vm1488, %v2957, %v2959
    %v2985 = vsel %vm1488, %v2959, %v2961
    %v3026 = vsel %vm1488, %v2905, %v2899
    %v3027 = vsel %vm1488, %v2913, %v2907
    %v3028 = vsel %vm1488, %v2921, %v2915
    %v3029 = vsel %vm1488, %v2929, %v2923
    %v3030 = vsel %vm1488, %v2937, %v2931
    %v3031 = vsel %vm1488, %v2945, %v2939
    %v3032 = vsel %vm1488, %v2953, %v2947
    %v3033 = vsel %vm1488, %v2961, %v2955
    %v3034 = vlaneseq
    %v3035 = vshrl.u32 %v3034, 7
    %v3036 = vsub.s32 6, %v3035
    %v3037 = vrot.slane %v63, %v3036
    %v3038 = vlaneseq
    %v3039 = vshrl.u32 %v3038, 7
    %v3040 = vsub.s32 6, %v3039
    %v3041 = vrot.slane %v64, %v3040
    %v3042 = vlaneseq
    %v3043 = vshrl.u32 %v3042, 7
    %v3044 = vsub.s32 6, %v3043
    %v3045 = vrot.slane %v65, %v3044
    %v3046 = vlaneseq
    %v3047 = vshrl.u32 %v3046, 7
    %v3048 = vsub.s32 6, %v3047
    %v3049 = vrot.slane %v66, %v3048
    %v3050 = vmul.f32 %v2962, %v3037
    %v3051 = vmul.f32 %v2963, %v3041
    %v3052 = vmul.f32 %v2964, %v3045
    %v3053 = vmul.f32 %v3026, %v3049
    %v3054 = vmul.f32 %v2965, %v3037
    %v3055 = vmul.f32 %v2966, %v3041
    %v3056 = vmul.f32 %v2967, %v3045
    %v3057 = vmul.f32 %v3027, %v3049
    %v3058 = vmul.f32 %v2968, %v3037
    %v3059 = vmul.f32 %v2969, %v3041
    %v3060 = vmul.f32 %v2970, %v3045
    %v3061 = vmul.f32 %v3028, %v3049
    %v3062 = vmul.f32 %v2971, %v3037
    %v3063 = vmul.f32 %v2972, %v3041
    %v3064 = vmul.f32 %v2973, %v3045
    %v3065 = vmul.f32 %v3029, %v3049
    %v3066 = vmul.f32 %v2974, %v3037
    %v3067 = vmul.f32 %v2975, %v3041
    %v3068 = vmul.f32 %v2976, %v3045
    %v3069 = vmul.f32 %v3030, %v3049
    %v3070 = vmul.f32 %v2977, %v3037
    %v3071 = vmul.f32 %v2978, %v3041
    %v3072 = vmul.f32 %v2979, %v3045
    %v3073 = vmul.f32 %v3031, %v3049
    %v3074 = vmul.f32 %v2980, %v3037
    %v3075 = vmul.f32 %v2981, %v3041
    %v3076 = vmul.f32 %v2982, %v3045
    %v3077 = vmul.f32 %v3032, %v3049
    %v3078 = vmul.f32 %v2983, %v3037
    %v3079 = vmul.f32 %v2984, %v3041
    %v3080 = vmul.f32 %v2985, %v3045
    %v3081 = vmul.f32 %v3033, %v3049
    %v3082 = vpack.c.bf16 %v3054, %v3050
    %v3083 = vpack.c.bf16 %v3055, %v3051
    %v3084 = vpack.c.bf16 %v3056, %v3052
    %v3085 = vpack.c.bf16 %v3057, %v3053
    %v3086 = vpack.c.bf16 %v3062, %v3058
    %v3087 = vpack.c.bf16 %v3063, %v3059
    %v3088 = vpack.c.bf16 %v3064, %v3060
    %v3089 = vpack.c.bf16 %v3065, %v3061
    %v3090 = vpack.c.bf16 %v3070, %v3066
    %v3091 = vpack.c.bf16 %v3071, %v3067
    %v3092 = vpack.c.bf16 %v3072, %v3068
    %v3093 = vpack.c.bf16 %v3073, %v3069
    %v3094 = vpack.c.bf16 %v3078, %v3074
    %v3095 = vpack.c.bf16 %v3079, %v3075
    %v3096 = vpack.c.bf16 %v3080, %v3076
    %v3097 = vpack.c.bf16 %v3081, %v3077
    %3098 = vst [vmem:[#allocation2 + $0x600] sm:$0xff] %v3082
    %3099 = vst [vmem:[#allocation2 + $0x608] sm:$0xff] %v3083
    %3100 = vst [vmem:[#allocation2 + $0x610] sm:$0xff] %v3084
    %3101 = vst [vmem:[#allocation2 + $0x618] sm:$0xff] %v3085
    %3102 = vst [vmem:[#allocation2 + $0x640] sm:$0xff] %v3086
    %3103 = vst [vmem:[#allocation2 + $0x648] sm:$0xff] %v3087
    %3104 = vst [vmem:[#allocation2 + $0x650] sm:$0xff] %v3088
    %3105 = vst [vmem:[#allocation2 + $0x658] sm:$0xff] %v3089
    %3106 = vst [vmem:[#allocation2 + $0x680] sm:$0xff] %v3090
    %3107 = vst [vmem:[#allocation2 + $0x688] sm:$0xff] %v3091
    %3108 = vst [vmem:[#allocation2 + $0x690] sm:$0xff] %v3092
    %3109 = vst [vmem:[#allocation2 + $0x698] sm:$0xff] %v3093
    %3110 = vst [vmem:[#allocation2 + $0x6c0] sm:$0xff] %v3094
    %3111 = vst [vmem:[#allocation2 + $0x6c8] sm:$0xff] %v3095
    %3112 = vst [vmem:[#allocation2 + $0x6d0] sm:$0xff] %v3096
    %3113 = vst [vmem:[#allocation2 + $0x6d8] sm:$0xff] %v3097
    %3114 = vrot.lane.b32.xlu0 %v898, 112
    %v3115 = vpop.permute.xlu0 %3114
    %3116 = vrot.lane.b32.xlu0 %v899, 112
    %v3117 = vpop.permute.xlu0 %3116
    %3118 = vrot.lane.b32.xlu0 %v900, 112
    %v3119 = vpop.permute.xlu0 %3118
    %3120 = vrot.lane.b32.xlu0 %v901, 112
    %v3121 = vpop.permute.xlu0 %3120
    %3122 = vrot.lane.b32.xlu0 %v902, 112
    %v3123 = vpop.permute.xlu0 %3122
    %3124 = vrot.lane.b32.xlu0 %v903, 112
    %v3125 = vpop.permute.xlu0 %3124
    %3126 = vrot.lane.b32.xlu0 %v904, 112
    %v3127 = vpop.permute.xlu0 %3126
    %3128 = vrot.lane.b32.xlu0 %v905, 112
    %v3129 = vpop.permute.xlu0 %3128
    %3130 = vrot.lane.b32.xlu0 %v906, 112
    %v3131 = vpop.permute.xlu0 %3130
    %3132 = vrot.lane.b32.xlu0 %v907, 112
    %v3133 = vpop.permute.xlu0 %3132
    %3134 = vrot.lane.b32.xlu0 %v908, 112
    %v3135 = vpop.permute.xlu0 %3134
    %3136 = vrot.lane.b32.xlu0 %v909, 112
    %v3137 = vpop.permute.xlu0 %3136
    %3138 = vrot.lane.b32.xlu0 %v910, 112
    %v3139 = vpop.permute.xlu0 %3138
    %3140 = vrot.lane.b32.xlu0 %v911, 112
    %v3141 = vpop.permute.xlu0 %3140
    %3142 = vrot.lane.b32.xlu0 %v912, 112
    %v3143 = vpop.permute.xlu0 %3142
    %3144 = vrot.lane.b32.xlu0 %v913, 112
    %v3145 = vpop.permute.xlu0 %3144
    %3146 = vrot.lane.b32.xlu0 %v914, 112
    %v3147 = vpop.permute.xlu0 %3146
    %3148 = vrot.lane.b32.xlu0 %v915, 112
    %v3149 = vpop.permute.xlu0 %3148
    %3150 = vrot.lane.b32.xlu0 %v916, 112
    %v3151 = vpop.permute.xlu0 %3150
    %3152 = vrot.lane.b32.xlu0 %v917, 112
    %v3153 = vpop.permute.xlu0 %3152
    %3154 = vrot.lane.b32.xlu0 %v918, 112
    %v3155 = vpop.permute.xlu0 %3154
    %3156 = vrot.lane.b32.xlu0 %v919, 112
    %v3157 = vpop.permute.xlu0 %3156
    %3158 = vrot.lane.b32.xlu0 %v920, 112
    %v3159 = vpop.permute.xlu0 %3158
    %3160 = vrot.lane.b32.xlu0 %v921, 112
    %v3161 = vpop.permute.xlu0 %3160
    %3162 = vrot.lane.b32.xlu0 %v922, 112
    %v3163 = vpop.permute.xlu0 %3162
    %3164 = vrot.lane.b32.xlu0 %v923, 112
    %v3165 = vpop.permute.xlu0 %3164
    %3166 = vrot.lane.b32.xlu0 %v924, 112
    %v3167 = vpop.permute.xlu0 %3166
    %3168 = vrot.lane.b32.xlu0 %v925, 112
    %v3169 = vpop.permute.xlu0 %3168
    %3170 = vrot.lane.b32.xlu0 %v926, 112
    %v3171 = vpop.permute.xlu0 %3170
    %3172 = vrot.lane.b32.xlu0 %v927, 112
    %v3173 = vpop.permute.xlu0 %3172
    %3174 = vrot.lane.b32.xlu0 %v928, 112
    %v3175 = vpop.permute.xlu0 %3174
    %3176 = vrot.lane.b32.xlu0 %v929, 112
    %v3177 = vpop.permute.xlu0 %3176
    %v3178 = vsel %vm1550, %v3115, %v3117
    %v3179 = vsel %vm1550, %v3117, %v3119
    %v3180 = vsel %vm1550, %v3119, %v3121
    %v3181 = vsel %vm1550, %v3123, %v3125
    %v3182 = vsel %vm1550, %v3125, %v3127
    %v3183 = vsel %vm1550, %v3127, %v3129
    %v3184 = vsel %vm1550, %v3131, %v3133
    %v3185 = vsel %vm1550, %v3133, %v3135
    %v3186 = vsel %vm1550, %v3135, %v3137
    %v3187 = vsel %vm1550, %v3139, %v3141
    %v3188 = vsel %vm1550, %v3141, %v3143
    %v3189 = vsel %vm1550, %v3143, %v3145
    %v3190 = vsel %vm1550, %v3147, %v3149
    %v3191 = vsel %vm1550, %v3149, %v3151
    %v3192 = vsel %vm1550, %v3151, %v3153
    %v3193 = vsel %vm1550, %v3155, %v3157
    %v3194 = vsel %vm1550, %v3157, %v3159
    %v3195 = vsel %vm1550, %v3159, %v3161
    %v3196 = vsel %vm1550, %v3163, %v3165
    %v3197 = vsel %vm1550, %v3165, %v3167
    %v3198 = vsel %vm1550, %v3167, %v3169
    %v3199 = vsel %vm1550, %v3171, %v3173
    %v3200 = vsel %vm1550, %v3173, %v3175
    %v3201 = vsel %vm1550, %v3175, %v3177
    %v3242 = vsel %vm1550, %v3121, %v3115
    %v3243 = vsel %vm1550, %v3129, %v3123
    %v3244 = vsel %vm1550, %v3137, %v3131
    %v3245 = vsel %vm1550, %v3145, %v3139
    %v3246 = vsel %vm1550, %v3153, %v3147
    %v3247 = vsel %vm1550, %v3161, %v3155
    %v3248 = vsel %vm1550, %v3169, %v3163
    %v3249 = vsel %vm1550, %v3177, %v3171
    %v3250 = vlaneseq
    %v3251 = vshrl.u32 %v3250, 7
    %v3252 = vsub.s32 7, %v3251
    %v3253 = vrot.slane %v63, %v3252
    %v3254 = vlaneseq
    %v3255 = vshrl.u32 %v3254, 7
    %v3256 = vsub.s32 7, %v3255
    %v3257 = vrot.slane %v64, %v3256
    %v3258 = vlaneseq
    %v3259 = vshrl.u32 %v3258, 7
    %v3260 = vsub.s32 7, %v3259
    %v3261 = vrot.slane %v65, %v3260
    %v3262 = vlaneseq
    %v3263 = vshrl.u32 %v3262, 7
    %v3264 = vsub.s32 7, %v3263
    %v3265 = vrot.slane %v66, %v3264
    %v3266 = vmul.f32 %v3178, %v3253
    %v3267 = vmul.f32 %v3179, %v3257
    %v3268 = vmul.f32 %v3180, %v3261
    %v3269 = vmul.f32 %v3242, %v3265
    %v3270 = vmul.f32 %v3181, %v3253
    %v3271 = vmul.f32 %v3182, %v3257
    %v3272 = vmul.f32 %v3183, %v3261
    %v3273 = vmul.f32 %v3243, %v3265
    %v3274 = vmul.f32 %v3184, %v3253
    %v3275 = vmul.f32 %v3185, %v3257
    %v3276 = vmul.f32 %v3186, %v3261
    %v3277 = vmul.f32 %v3244, %v3265
    %v3278 = vmul.f32 %v3187, %v3253
    %v3279 = vmul.f32 %v3188, %v3257
    %v3280 = vmul.f32 %v3189, %v3261
    %v3281 = vmul.f32 %v3245, %v3265
    %v3282 = vmul.f32 %v3190, %v3253
    %v3283 = vmul.f32 %v3191, %v3257
    %v3284 = vmul.f32 %v3192, %v3261
    %v3285 = vmul.f32 %v3246, %v3265
    %v3286 = vmul.f32 %v3193, %v3253
    %v3287 = vmul.f32 %v3194, %v3257
    %v3288 = vmul.f32 %v3195, %v3261
    %v3289 = vmul.f32 %v3247, %v3265
    %v3290 = vmul.f32 %v3196, %v3253
    %v3291 = vmul.f32 %v3197, %v3257
    %v3292 = vmul.f32 %v3198, %v3261
    %v3293 = vmul.f32 %v3248, %v3265
    %v3294 = vmul.f32 %v3199, %v3253
    %v3295 = vmul.f32 %v3200, %v3257
    %v3296 = vmul.f32 %v3201, %v3261
    %v3297 = vmul.f32 %v3249, %v3265
    %v3298 = vpack.c.bf16 %v3270, %v3266
    %v3299 = vpack.c.bf16 %v3271, %v3267
    %v3300 = vpack.c.bf16 %v3272, %v3268
    %v3301 = vpack.c.bf16 %v3273, %v3269
    %v3302 = vpack.c.bf16 %v3278, %v3274
    %v3303 = vpack.c.bf16 %v3279, %v3275
    %v3304 = vpack.c.bf16 %v3280, %v3276
    %v3305 = vpack.c.bf16 %v3281, %v3277
    %v3306 = vpack.c.bf16 %v3286, %v3282
    %v3307 = vpack.c.bf16 %v3287, %v3283
    %v3308 = vpack.c.bf16 %v3288, %v3284
    %v3309 = vpack.c.bf16 %v3289, %v3285
    %v3310 = vpack.c.bf16 %v3294, %v3290
    %v3311 = vpack.c.bf16 %v3295, %v3291
    %v3312 = vpack.c.bf16 %v3296, %v3292
    %v3313 = vpack.c.bf16 %v3297, %v3293
    %3314 = vst [vmem:[#allocation2 + $0x700] sm:$0xff] %v3298
    %3315 = vst [vmem:[#allocation2 + $0x708] sm:$0xff] %v3299
    %3316 = vst [vmem:[#allocation2 + $0x710] sm:$0xff] %v3300
    %3317 = vst [vmem:[#allocation2 + $0x718] sm:$0xff] %v3301
    %3318 = vst [vmem:[#allocation2 + $0x740] sm:$0xff] %v3302
    %3319 = vst [vmem:[#allocation2 + $0x748] sm:$0xff] %v3303
    %3320 = vst [vmem:[#allocation2 + $0x750] sm:$0xff] %v3304
    %3321 = vst [vmem:[#allocation2 + $0x758] sm:$0xff] %v3305
    %3322 = vst [vmem:[#allocation2 + $0x780] sm:$0xff] %v3306
    %3323 = vst [vmem:[#allocation2 + $0x788] sm:$0xff] %v3307
    %3324 = vst [vmem:[#allocation2 + $0x790] sm:$0xff] %v3308
    %3325 = vst [vmem:[#allocation2 + $0x798] sm:$0xff] %v3309
    %3326 = vst [vmem:[#allocation2 + $0x7c0] sm:$0xff] %v3310
    %3327 = vst [vmem:[#allocation2 + $0x7c8] sm:$0xff] %v3311
    %3328 = vst [vmem:[#allocation2 + $0x7d0] sm:$0xff] %v3312
    %3329 = vst [vmem:[#allocation2 + $0x7d8] sm:$0xff] %v3313
    %3330 = vrot.lane.b32.xlu0 %v898, 111
    %v3331 = vpop.permute.xlu0 %3330
    %3332 = vrot.lane.b32.xlu0 %v899, 111
    %v3333 = vpop.permute.xlu0 %3332
    %3334 = vrot.lane.b32.xlu0 %v900, 111
    %v3335 = vpop.permute.xlu0 %3334
    %3336 = vrot.lane.b32.xlu0 %v901, 111
    %v3337 = vpop.permute.xlu0 %3336
    %3338 = vrot.lane.b32.xlu0 %v902, 111
    %v3339 = vpop.permute.xlu0 %3338
    %3340 = vrot.lane.b32.xlu0 %v903, 111
    %v3341 = vpop.permute.xlu0 %3340
    %3342 = vrot.lane.b32.xlu0 %v904, 111
    %v3343 = vpop.permute.xlu0 %3342
    %3344 = vrot.lane.b32.xlu0 %v905, 111
    %v3345 = vpop.permute.xlu0 %3344
    %3346 = vrot.lane.b32.xlu0 %v906, 111
    %v3347 = vpop.permute.xlu0 %3346
    %3348 = vrot.lane.b32.xlu0 %v907, 111
    %v3349 = vpop.permute.xlu0 %3348
    %3350 = vrot.lane.b32.xlu0 %v908, 111
    %v3351 = vpop.permute.xlu0 %3350
    %3352 = vrot.lane.b32.xlu0 %v909, 111
    %v3353 = vpop.permute.xlu0 %3352
    %3354 = vrot.lane.b32.xlu0 %v910, 111
    %v3355 = vpop.permute.xlu0 %3354
    %3356 = vrot.lane.b32.xlu0 %v911, 111
    %v3357 = vpop.permute.xlu0 %3356
    %3358 = vrot.lane.b32.xlu0 %v912, 111
    %v3359 = vpop.permute.xlu0 %3358
    %3360 = vrot.lane.b32.xlu0 %v913, 111
    %v3361 = vpop.permute.xlu0 %3360
    %3362 = vrot.lane.b32.xlu0 %v914, 111
    %v3363 = vpop.permute.xlu0 %3362
    %3364 = vrot.lane.b32.xlu0 %v915, 111
    %v3365 = vpop.permute.xlu0 %3364
    %3366 = vrot.lane.b32.xlu0 %v916, 111
    %v3367 = vpop.permute.xlu0 %3366
    %3368 = vrot.lane.b32.xlu0 %v917, 111
    %v3369 = vpop.permute.xlu0 %3368
    %3370 = vrot.lane.b32.xlu0 %v918, 111
    %v3371 = vpop.permute.xlu0 %3370
    %3372 = vrot.lane.b32.xlu0 %v919, 111
    %v3373 = vpop.permute.xlu0 %3372
    %3374 = vrot.lane.b32.xlu0 %v920, 111
    %v3375 = vpop.permute.xlu0 %3374
    %3376 = vrot.lane.b32.xlu0 %v921, 111
    %v3377 = vpop.permute.xlu0 %3376
    %3378 = vrot.lane.b32.xlu0 %v922, 111
    %v3379 = vpop.permute.xlu0 %3378
    %3380 = vrot.lane.b32.xlu0 %v923, 111
    %v3381 = vpop.permute.xlu0 %3380
    %3382 = vrot.lane.b32.xlu0 %v924, 111
    %v3383 = vpop.permute.xlu0 %3382
    %3384 = vrot.lane.b32.xlu0 %v925, 111
    %v3385 = vpop.permute.xlu0 %3384
    %3386 = vrot.lane.b32.xlu0 %v926, 111
    %v3387 = vpop.permute.xlu0 %3386
    %3388 = vrot.lane.b32.xlu0 %v927, 111
    %v3389 = vpop.permute.xlu0 %3388
    %3390 = vrot.lane.b32.xlu0 %v928, 111
    %v3391 = vpop.permute.xlu0 %3390
    %3392 = vrot.lane.b32.xlu0 %v929, 111
    %v3393 = vpop.permute.xlu0 %3392
    %v3394 = vsel %vm1612, %v3331, %v3333
    %v3395 = vsel %vm1612, %v3333, %v3335
    %v3396 = vsel %vm1612, %v3335, %v3337
    %v3397 = vsel %vm1612, %v3339, %v3341
    %v3398 = vsel %vm1612, %v3341, %v3343
    %v3399 = vsel %vm1612, %v3343, %v3345
    %v3400 = vsel %vm1612, %v3347, %v3349
    %v3401 = vsel %vm1612, %v3349, %v3351
    %v3402 = vsel %vm1612, %v3351, %v3353
    %v3403 = vsel %vm1612, %v3355, %v3357
    %v3404 = vsel %vm1612, %v3357, %v3359
    %v3405 = vsel %vm1612, %v3359, %v3361
    %v3406 = vsel %vm1612, %v3363, %v3365
    %v3407 = vsel %vm1612, %v3365, %v3367
    %v3408 = vsel %vm1612, %v3367, %v3369
    %v3409 = vsel %vm1612, %v3371, %v3373
    %v3410 = vsel %vm1612, %v3373, %v3375
    %v3411 = vsel %vm1612, %v3375, %v3377
    %v3412 = vsel %vm1612, %v3379, %v3381
    %v3413 = vsel %vm1612, %v3381, %v3383
    %v3414 = vsel %vm1612, %v3383, %v3385
    %v3415 = vsel %vm1612, %v3387, %v3389
    %v3416 = vsel %vm1612, %v3389, %v3391
    %v3417 = vsel %vm1612, %v3391, %v3393
    %v3458 = vsel %vm1612, %v3337, %v3331
    %v3459 = vsel %vm1612, %v3345, %v3339
    %v3460 = vsel %vm1612, %v3353, %v3347
    %v3461 = vsel %vm1612, %v3361, %v3355
    %v3462 = vsel %vm1612, %v3369, %v3363
    %v3463 = vsel %vm1612, %v3377, %v3371
    %v3464 = vsel %vm1612, %v3385, %v3379
    %v3465 = vsel %vm1612, %v3393, %v3387
    %v3466 = vlaneseq
    %v3467 = vshrl.u32 %v3466, 7
    %v3468 = vsub.s32 0, %v3467
    %v3469 = vrot.slane %v67, %v3468
    %v3470 = vlaneseq
    %v3471 = vshrl.u32 %v3470, 7
    %v3472 = vsub.s32 0, %v3471
    %v3473 = vrot.slane %v68, %v3472
    %v3474 = vlaneseq
    %v3475 = vshrl.u32 %v3474, 7
    %v3476 = vsub.s32 0, %v3475
    %v3477 = vrot.slane %v69, %v3476
    %v3478 = vlaneseq
    %v3479 = vshrl.u32 %v3478, 7
    %v3480 = vsub.s32 0, %v3479
    %v3481 = vrot.slane %v70, %v3480
    %v3482 = vmul.f32 %v3394, %v3469
    %v3483 = vmul.f32 %v3395, %v3473
    %v3484 = vmul.f32 %v3396, %v3477
    %v3485 = vmul.f32 %v3458, %v3481
    %v3486 = vmul.f32 %v3397, %v3469
    %v3487 = vmul.f32 %v3398, %v3473
    %v3488 = vmul.f32 %v3399, %v3477
    %v3489 = vmul.f32 %v3459, %v3481
    %v3490 = vmul.f32 %v3400, %v3469
    %v3491 = vmul.f32 %v3401, %v3473
    %v3492 = vmul.f32 %v3402, %v3477
    %v3493 = vmul.f32 %v3460, %v3481
    %v3494 = vmul.f32 %v3403, %v3469
    %v3495 = vmul.f32 %v3404, %v3473
    %v3496 = vmul.f32 %v3405, %v3477
    %v3497 = vmul.f32 %v3461, %v3481
    %v3498 = vmul.f32 %v3406, %v3469
    %v3499 = vmul.f32 %v3407, %v3473
    %v3500 = vmul.f32 %v3408, %v3477
    %v3501 = vmul.f32 %v3462, %v3481
    %v3502 = vmul.f32 %v3409, %v3469
    %v3503 = vmul.f32 %v3410, %v3473
    %v3504 = vmul.f32 %v3411, %v3477
    %v3505 = vmul.f32 %v3463, %v3481
    %v3506 = vmul.f32 %v3412, %v3469
    %v3507 = vmul.f32 %v3413, %v3473
    %v3508 = vmul.f32 %v3414, %v3477
    %v3509 = vmul.f32 %v3464, %v3481
    %v3510 = vmul.f32 %v3415, %v3469
    %v3511 = vmul.f32 %v3416, %v3473
    %v3512 = vmul.f32 %v3417, %v3477
    %v3513 = vmul.f32 %v3465, %v3481
    %v3514 = vpack.c.bf16 %v3486, %v3482
    %v3515 = vpack.c.bf16 %v3487, %v3483
    %v3516 = vpack.c.bf16 %v3488, %v3484
    %v3517 = vpack.c.bf16 %v3489, %v3485
    %v3518 = vpack.c.bf16 %v3494, %v3490
    %v3519 = vpack.c.bf16 %v3495, %v3491
    %v3520 = vpack.c.bf16 %v3496, %v3492
    %v3521 = vpack.c.bf16 %v3497, %v3493
    %v3522 = vpack.c.bf16 %v3502, %v3498
    %v3523 = vpack.c.bf16 %v3503, %v3499
    %v3524 = vpack.c.bf16 %v3504, %v3500
    %v3525 = vpack.c.bf16 %v3505, %v3501
    %v3526 = vpack.c.bf16 %v3510, %v3506
    %v3527 = vpack.c.bf16 %v3511, %v3507
    %v3528 = vpack.c.bf16 %v3512, %v3508
    %v3529 = vpack.c.bf16 %v3513, %v3509
    %3530 = vst [vmem:[#allocation2 + $0x800] sm:$0xff] %v3514
    %3531 = vst [vmem:[#allocation2 + $0x808] sm:$0xff] %v3515
    %3532 = vst [vmem:[#allocation2 + $0x810] sm:$0xff] %v3516
    %3533 = vst [vmem:[#allocation2 + $0x818] sm:$0xff] %v3517
    %3534 = vst [vmem:[#allocation2 + $0x840] sm:$0xff] %v3518
    %3535 = vst [vmem:[#allocation2 + $0x848] sm:$0xff] %v3519
    %3536 = vst [vmem:[#allocation2 + $0x850] sm:$0xff] %v3520
    %3537 = vst [vmem:[#allocation2 + $0x858] sm:$0xff] %v3521
    %3538 = vst [vmem:[#allocation2 + $0x880] sm:$0xff] %v3522
    %3539 = vst [vmem:[#allocation2 + $0x888] sm:$0xff] %v3523
    %3540 = vst [vmem:[#allocation2 + $0x890] sm:$0xff] %v3524
    %3541 = vst [vmem:[#allocation2 + $0x898] sm:$0xff] %v3525
    %3542 = vst [vmem:[#allocation2 + $0x8c0] sm:$0xff] %v3526
    %3543 = vst [vmem:[#allocation2 + $0x8c8] sm:$0xff] %v3527
    %3544 = vst [vmem:[#allocation2 + $0x8d0] sm:$0xff] %v3528
    %3545 = vst [vmem:[#allocation2 + $0x8d8] sm:$0xff] %v3529
    %v3546 = vlaneseq
    %v3547 = vshrl.u32 %v3546, 7
    %v3548 = vsub.s32 0, %v3547
    %v3549 = vrot.slane %v1699, %v3548
    %v3550 = vlaneseq
    %v3551 = vshrl.u32 %v3550, 7
    %v3552 = vsub.s32 0, %v3551
    %v3553 = vrot.slane %v1701, %v3552
    %v3554 = vlaneseq
    %v3555 = vshrl.u32 %v3554, 7
    %v3556 = vsub.s32 0, %v3555
    %v3557 = vrot.slane %v1703, %v3556
    %v3558 = vlaneseq
    %v3559 = vshrl.u32 %v3558, 7
    %v3560 = vsub.s32 0, %v3559
    %v3561 = vrot.slane %v1705, %v3560
    %v3562 = vmul.f32 %v355, %v3549
    %v3563 = vmul.f32 %v356, %v3553
    %v3564 = vmul.f32 %v357, %v3557
    %v3565 = vmul.f32 %v358, %v3561
    %v3566 = vmul.f32 %v359, %v3549
    %v3567 = vmul.f32 %v360, %v3553
    %v3568 = vmul.f32 %v361, %v3557
    %v3569 = vmul.f32 %v362, %v3561
    %v3570 = vmul.f32 %v363, %v3549
    %v3571 = vmul.f32 %v364, %v3553
    %v3572 = vmul.f32 %v365, %v3557
    %v3573 = vmul.f32 %v366, %v3561
    %v3574 = vmul.f32 %v367, %v3549
    %v3575 = vmul.f32 %v368, %v3553
    %v3576 = vmul.f32 %v369, %v3557
    %v3577 = vmul.f32 %v370, %v3561
    %v3578 = vmul.f32 %v371, %v3549
    %v3579 = vmul.f32 %v372, %v3553
    %v3580 = vmul.f32 %v373, %v3557
    %v3581 = vmul.f32 %v374, %v3561
    %v3582 = vmul.f32 %v375, %v3549
    %v3583 = vmul.f32 %v376, %v3553
    %v3584 = vmul.f32 %v377, %v3557
    %v3585 = vmul.f32 %v378, %v3561
    %v3586 = vmul.f32 %v379, %v3549
    %v3587 = vmul.f32 %v380, %v3553
    %v3588 = vmul.f32 %v381, %v3557
    %v3589 = vmul.f32 %v382, %v3561
    %v3590 = vmul.f32 %v383, %v3549
    %v3591 = vmul.f32 %v384, %v3553
    %v3592 = vmul.f32 %v385, %v3557
    %v3593 = vmul.f32 %v386, %v3561
    %3602 = vrot.lane.b32.xlu0 %v3565, 17
    %v3603 = vpop.permute.xlu0 %3602
    %3604 = vrot.lane.b32.xlu0 %v3569, 17
    %v3605 = vpop.permute.xlu0 %3604
    %3606 = vrot.lane.b32.xlu0 %v3573, 17
    %v3607 = vpop.permute.xlu0 %3606
    %3608 = vrot.lane.b32.xlu0 %v3577, 17
    %v3609 = vpop.permute.xlu0 %3608
    %3610 = vrot.lane.b32.xlu0 %v3581, 17
    %v3611 = vpop.permute.xlu0 %3610
    %3612 = vrot.lane.b32.xlu0 %v3585, 17
    %v3613 = vpop.permute.xlu0 %3612
    %3614 = vrot.lane.b32.xlu0 %v3589, 17
    %v3615 = vpop.permute.xlu0 %3614
    %3616 = vrot.lane.b32.xlu0 %v3593, 17
    %v3617 = vpop.permute.xlu0 %3616
    %3650 = vrot.lane.b32.xlu0 %v3562, 17
    %v3651 = vpop.permute.xlu0 %3650
    %3652 = vrot.lane.b32.xlu0 %v3563, 17
    %v3653 = vpop.permute.xlu0 %3652
    %3654 = vrot.lane.b32.xlu0 %v3564, 17
    %v3655 = vpop.permute.xlu0 %3654
    %3656 = vrot.lane.b32.xlu0 %v3566, 17
    %v3657 = vpop.permute.xlu0 %3656
    %3658 = vrot.lane.b32.xlu0 %v3567, 17
    %v3659 = vpop.permute.xlu0 %3658
    %3660 = vrot.lane.b32.xlu0 %v3568, 17
    %v3661 = vpop.permute.xlu0 %3660
    %3662 = vrot.lane.b32.xlu0 %v3570, 17
    %v3663 = vpop.permute.xlu0 %3662
    %3664 = vrot.lane.b32.xlu0 %v3571, 17
    %v3665 = vpop.permute.xlu0 %3664
    %3666 = vrot.lane.b32.xlu0 %v3572, 17
    %v3667 = vpop.permute.xlu0 %3666
    %3668 = vrot.lane.b32.xlu0 %v3574, 17
    %v3669 = vpop.permute.xlu0 %3668
    %3670 = vrot.lane.b32.xlu0 %v3575, 17
    %v3671 = vpop.permute.xlu0 %3670
    %3672 = vrot.lane.b32.xlu0 %v3576, 17
    %v3673 = vpop.permute.xlu0 %3672
    %3674 = vrot.lane.b32.xlu0 %v3578, 17
    %v3675 = vpop.permute.xlu0 %3674
    %3676 = vrot.lane.b32.xlu0 %v3579, 17
    %v3677 = vpop.permute.xlu0 %3676
    %3678 = vrot.lane.b32.xlu0 %v3580, 17
    %v3679 = vpop.permute.xlu0 %3678
    %3680 = vrot.lane.b32.xlu0 %v3582, 17
    %v3681 = vpop.permute.xlu0 %3680
    %3682 = vrot.lane.b32.xlu0 %v3583, 17
    %v3683 = vpop.permute.xlu0 %3682
    %3684 = vrot.lane.b32.xlu0 %v3584, 17
    %v3685 = vpop.permute.xlu0 %3684
    %3686 = vrot.lane.b32.xlu0 %v3586, 17
    %v3687 = vpop.permute.xlu0 %3686
    %3688 = vrot.lane.b32.xlu0 %v3587, 17
    %v3689 = vpop.permute.xlu0 %3688
    %3690 = vrot.lane.b32.xlu0 %v3588, 17
    %v3691 = vpop.permute.xlu0 %3690
    %3692 = vrot.lane.b32.xlu0 %v3590, 17
    %v3693 = vpop.permute.xlu0 %3692
    %3694 = vrot.lane.b32.xlu0 %v3591, 17
    %v3695 = vpop.permute.xlu0 %3694
    %3696 = vrot.lane.b32.xlu0 %v3592, 17
    %v3697 = vpop.permute.xlu0 %3696
    %v3698 = vsel %vm1141, %v3651, %v3653
    %v3699 = vsel %vm1141, %v3653, %v3655
    %v3700 = vsel %vm1141, %v3655, %v3603
    %v3701 = vsel %vm1141, %v3657, %v3659
    %v3702 = vsel %vm1141, %v3659, %v3661
    %v3703 = vsel %vm1141, %v3661, %v3605
    %v3704 = vsel %vm1141, %v3663, %v3665
    %v3705 = vsel %vm1141, %v3665, %v3667
    %v3706 = vsel %vm1141, %v3667, %v3607
    %v3707 = vsel %vm1141, %v3669, %v3671
    %v3708 = vsel %vm1141, %v3671, %v3673
    %v3709 = vsel %vm1141, %v3673, %v3609
    %v3710 = vsel %vm1141, %v3675, %v3677
    %v3711 = vsel %vm1141, %v3677, %v3679
    %v3712 = vsel %vm1141, %v3679, %v3611
    %v3713 = vsel %vm1141, %v3681, %v3683
    %v3714 = vsel %vm1141, %v3683, %v3685
    %v3715 = vsel %vm1141, %v3685, %v3613
    %v3716 = vsel %vm1141, %v3687, %v3689
    %v3717 = vsel %vm1141, %v3689, %v3691
    %v3718 = vsel %vm1141, %v3691, %v3615
    %v3719 = vsel %vm1141, %v3693, %v3695
    %v3720 = vsel %vm1141, %v3695, %v3697
    %v3721 = vsel %vm1141, %v3697, %v3617
    %v3754 = vsel %vm1141, %v3603, %v3651
    %v3755 = vsel %vm1141, %v3605, %v3657
    %v3756 = vsel %vm1141, %v3607, %v3663
    %v3757 = vsel %vm1141, %v3609, %v3669
    %v3758 = vsel %vm1141, %v3611, %v3675
    %v3759 = vsel %vm1141, %v3613, %v3681
    %v3760 = vsel %vm1141, %v3615, %v3687
    %v3761 = vsel %vm1141, %v3617, %v3693
    %v3762 = vmul.f32 %v3754, %v1877
    %v3763 = vmul.f32 %v3698, %v1881
    %v3764 = vmul.f32 %v3699, %v1885
    %v3765 = vmul.f32 %v3700, %v1889
    %v3766 = vmul.f32 %v3755, %v1877
    %v3767 = vmul.f32 %v3701, %v1881
    %v3768 = vmul.f32 %v3702, %v1885
    %v3769 = vmul.f32 %v3703, %v1889
    %v3770 = vmul.f32 %v3756, %v1877
    %v3771 = vmul.f32 %v3704, %v1881
    %v3772 = vmul.f32 %v3705, %v1885
    %v3773 = vmul.f32 %v3706, %v1889
    %v3774 = vmul.f32 %v3757, %v1877
    %v3775 = vmul.f32 %v3707, %v1881
    %v3776 = vmul.f32 %v3708, %v1885
    %v3777 = vmul.f32 %v3709, %v1889
    %v3778 = vmul.f32 %v3758, %v1877
    %v3779 = vmul.f32 %v3710, %v1881
    %v3780 = vmul.f32 %v3711, %v1885
    %v3781 = vmul.f32 %v3712, %v1889
    %v3782 = vmul.f32 %v3759, %v1877
    %v3783 = vmul.f32 %v3713, %v1881
    %v3784 = vmul.f32 %v3714, %v1885
    %v3785 = vmul.f32 %v3715, %v1889
    %v3786 = vmul.f32 %v3760, %v1877
    %v3787 = vmul.f32 %v3716, %v1881
    %v3788 = vmul.f32 %v3717, %v1885
    %v3789 = vmul.f32 %v3718, %v1889
    %v3790 = vmul.f32 %v3761, %v1877
    %v3791 = vmul.f32 %v3719, %v1881
    %v3792 = vmul.f32 %v3720, %v1885
    %v3793 = vmul.f32 %v3721, %v1889
    %v3794 = vpack.c.bf16 %v3766, %v3762
    %v3795 = vpack.c.bf16 %v3767, %v3763
    %v3796 = vpack.c.bf16 %v3768, %v3764
    %v3797 = vpack.c.bf16 %v3769, %v3765
    %v3798 = vpack.c.bf16 %v3774, %v3770
    %v3799 = vpack.c.bf16 %v3775, %v3771
    %v3800 = vpack.c.bf16 %v3776, %v3772
    %v3801 = vpack.c.bf16 %v3777, %v3773
    %v3802 = vpack.c.bf16 %v3782, %v3778
    %v3803 = vpack.c.bf16 %v3783, %v3779
    %v3804 = vpack.c.bf16 %v3784, %v3780
    %v3805 = vpack.c.bf16 %v3785, %v3781
    %v3806 = vpack.c.bf16 %v3790, %v3786
    %v3807 = vpack.c.bf16 %v3791, %v3787
    %v3808 = vpack.c.bf16 %v3792, %v3788
    %v3809 = vpack.c.bf16 %v3793, %v3789
    %3810 = vst [vmem:[#allocation2 + $0x20] sm:$0xff] %v3794
    %3811 = vst [vmem:[#allocation2 + $0x28] sm:$0xff] %v3795
    %3812 = vst [vmem:[#allocation2 + $0x30] sm:$0xff] %v3796
    %3813 = vst [vmem:[#allocation2 + $0x38] sm:$0xff] %v3797
    %3814 = vst [vmem:[#allocation2 + $0x60] sm:$0xff] %v3798
    %3815 = vst [vmem:[#allocation2 + $0x68] sm:$0xff] %v3799
    %3816 = vst [vmem:[#allocation2 + $0x70] sm:$0xff] %v3800
    %3817 = vst [vmem:[#allocation2 + $0x78] sm:$0xff] %v3801
    %3818 = vst [vmem:[#allocation2 + $0xa0] sm:$0xff] %v3802
    %3819 = vst [vmem:[#allocation2 + $0xa8] sm:$0xff] %v3803
    %3820 = vst [vmem:[#allocation2 + $0xb0] sm:$0xff] %v3804
    %3821 = vst [vmem:[#allocation2 + $0xb8] sm:$0xff] %v3805
    %3822 = vst [vmem:[#allocation2 + $0xe0] sm:$0xff] %v3806
    %3823 = vst [vmem:[#allocation2 + $0xe8] sm:$0xff] %v3807
    %3824 = vst [vmem:[#allocation2 + $0xf0] sm:$0xff] %v3808
    %3825 = vst [vmem:[#allocation2 + $0xf8] sm:$0xff] %v3809
    %3826 = vrot.lane.b32.xlu0 %v3565, 16
    %v3827 = vpop.permute.xlu0 %3826
    %3828 = vrot.lane.b32.xlu0 %v3569, 16
    %v3829 = vpop.permute.xlu0 %3828
    %3830 = vrot.lane.b32.xlu0 %v3573, 16
    %v3831 = vpop.permute.xlu0 %3830
    %3832 = vrot.lane.b32.xlu0 %v3577, 16
    %v3833 = vpop.permute.xlu0 %3832
    %3834 = vrot.lane.b32.xlu0 %v3581, 16
    %v3835 = vpop.permute.xlu0 %3834
    %3836 = vrot.lane.b32.xlu0 %v3585, 16
    %v3837 = vpop.permute.xlu0 %3836
    %3838 = vrot.lane.b32.xlu0 %v3589, 16
    %v3839 = vpop.permute.xlu0 %3838
    %3840 = vrot.lane.b32.xlu0 %v3593, 16
    %v3841 = vpop.permute.xlu0 %3840
    %3850 = vrot.lane.b32.xlu0 %v3562, 16
    %v3851 = vpop.permute.xlu0 %3850
    %3852 = vrot.lane.b32.xlu0 %v3563, 16
    %v3853 = vpop.permute.xlu0 %3852
    %3854 = vrot.lane.b32.xlu0 %v3564, 16
    %v3855 = vpop.permute.xlu0 %3854
    %3856 = vrot.lane.b32.xlu0 %v3566, 16
    %v3857 = vpop.permute.xlu0 %3856
    %3858 = vrot.lane.b32.xlu0 %v3567, 16
    %v3859 = vpop.permute.xlu0 %3858
    %3860 = vrot.lane.b32.xlu0 %v3568, 16
    %v3861 = vpop.permute.xlu0 %3860
    %3862 = vrot.lane.b32.xlu0 %v3570, 16
    %v3863 = vpop.permute.xlu0 %3862
    %3864 = vrot.lane.b32.xlu0 %v3571, 16
    %v3865 = vpop.permute.xlu0 %3864
    %3866 = vrot.lane.b32.xlu0 %v3572, 16
    %v3867 = vpop.permute.xlu0 %3866
    %3868 = vrot.lane.b32.xlu0 %v3574, 16
    %v3869 = vpop.permute.xlu0 %3868
    %3870 = vrot.lane.b32.xlu0 %v3575, 16
    %v3871 = vpop.permute.xlu0 %3870
    %3872 = vrot.lane.b32.xlu0 %v3576, 16
    %v3873 = vpop.permute.xlu0 %3872
    %3874 = vrot.lane.b32.xlu0 %v3578, 16
    %v3875 = vpop.permute.xlu0 %3874
    %3876 = vrot.lane.b32.xlu0 %v3579, 16
    %v3877 = vpop.permute.xlu0 %3876
    %3878 = vrot.lane.b32.xlu0 %v3580, 16
    %v3879 = vpop.permute.xlu0 %3878
    %3880 = vrot.lane.b32.xlu0 %v3582, 16
    %v3881 = vpop.permute.xlu0 %3880
    %3882 = vrot.lane.b32.xlu0 %v3583, 16
    %v3883 = vpop.permute.xlu0 %3882
    %3884 = vrot.lane.b32.xlu0 %v3584, 16
    %v3885 = vpop.permute.xlu0 %3884
    %3886 = vrot.lane.b32.xlu0 %v3586, 16
    %v3887 = vpop.permute.xlu0 %3886
    %3888 = vrot.lane.b32.xlu0 %v3587, 16
    %v3889 = vpop.permute.xlu0 %3888
    %3890 = vrot.lane.b32.xlu0 %v3588, 16
    %v3891 = vpop.permute.xlu0 %3890
    %3892 = vrot.lane.b32.xlu0 %v3590, 16
    %v3893 = vpop.permute.xlu0 %3892
    %3894 = vrot.lane.b32.xlu0 %v3591, 16
    %v3895 = vpop.permute.xlu0 %3894
    %3896 = vrot.lane.b32.xlu0 %v3592, 16
    %v3897 = vpop.permute.xlu0 %3896
    %v3898 = vsel %vm615, %v3851, %v3853
    %v3899 = vsel %vm615, %v3853, %v3855
    %v3900 = vsel %vm615, %v3855, %v3827
    %v3901 = vsel %vm615, %v3857, %v3859
    %v3902 = vsel %vm615, %v3859, %v3861
    %v3903 = vsel %vm615, %v3861, %v3829
    %v3904 = vsel %vm615, %v3863, %v3865
    %v3905 = vsel %vm615, %v3865, %v3867
    %v3906 = vsel %vm615, %v3867, %v3831
    %v3907 = vsel %vm615, %v3869, %v3871
    %v3908 = vsel %vm615, %v3871, %v3873
    %v3909 = vsel %vm615, %v3873, %v3833
    %v3910 = vsel %vm615, %v3875, %v3877
    %v3911 = vsel %vm615, %v3877, %v3879
    %v3912 = vsel %vm615, %v3879, %v3835
    %v3913 = vsel %vm615, %v3881, %v3883
    %v3914 = vsel %vm615, %v3883, %v3885
    %v3915 = vsel %vm615, %v3885, %v3837
    %v3916 = vsel %vm615, %v3887, %v3889
    %v3917 = vsel %vm615, %v3889, %v3891
    %v3918 = vsel %vm615, %v3891, %v3839
    %v3919 = vsel %vm615, %v3893, %v3895
    %v3920 = vsel %vm615, %v3895, %v3897
    %v3921 = vsel %vm615, %v3897, %v3841
    %v3954 = vsel %vm615, %v3827, %v3851
    %v3955 = vsel %vm615, %v3829, %v3857
    %v3956 = vsel %vm615, %v3831, %v3863
    %v3957 = vsel %vm615, %v3833, %v3869
    %v3958 = vsel %vm615, %v3835, %v3875
    %v3959 = vsel %vm615, %v3837, %v3881
    %v3960 = vsel %vm615, %v3839, %v3887
    %v3961 = vsel %vm615, %v3841, %v3893
    %v3962 = vmul.f32 %v3954, %v2093
    %v3963 = vmul.f32 %v3898, %v2097
    %v3964 = vmul.f32 %v3899, %v2101
    %v3965 = vmul.f32 %v3900, %v2105
    %v3966 = vmul.f32 %v3955, %v2093
    %v3967 = vmul.f32 %v3901, %v2097
    %v3968 = vmul.f32 %v3902, %v2101
    %v3969 = vmul.f32 %v3903, %v2105
    %v3970 = vmul.f32 %v3956, %v2093
    %v3971 = vmul.f32 %v3904, %v2097
    %v3972 = vmul.f32 %v3905, %v2101
    %v3973 = vmul.f32 %v3906, %v2105
    %v3974 = vmul.f32 %v3957, %v2093
    %v3975 = vmul.f32 %v3907, %v2097
    %v3976 = vmul.f32 %v3908, %v2101
    %v3977 = vmul.f32 %v3909, %v2105
    %v3978 = vmul.f32 %v3958, %v2093
    %v3979 = vmul.f32 %v3910, %v2097
    %v3980 = vmul.f32 %v3911, %v2101
    %v3981 = vmul.f32 %v3912, %v2105
    %v3982 = vmul.f32 %v3959, %v2093
    %v3983 = vmul.f32 %v3913, %v2097
    %v3984 = vmul.f32 %v3914, %v2101
    %v3985 = vmul.f32 %v3915, %v2105
    %v3986 = vmul.f32 %v3960, %v2093
    %v3987 = vmul.f32 %v3916, %v2097
    %v3988 = vmul.f32 %v3917, %v2101
    %v3989 = vmul.f32 %v3918, %v2105
    %v3990 = vmul.f32 %v3961, %v2093
    %v3991 = vmul.f32 %v3919, %v2097
    %v3992 = vmul.f32 %v3920, %v2101
    %v3993 = vmul.f32 %v3921, %v2105
    %v3994 = vpack.c.bf16 %v3966, %v3962
    %v3995 = vpack.c.bf16 %v3967, %v3963
    %v3996 = vpack.c.bf16 %v3968, %v3964
    %v3997 = vpack.c.bf16 %v3969, %v3965
    %v3998 = vpack.c.bf16 %v3974, %v3970
    %v3999 = vpack.c.bf16 %v3975, %v3971
    %v4000 = vpack.c.bf16 %v3976, %v3972
    %v4001 = vpack.c.bf16 %v3977, %v3973
    %v4002 = vpack.c.bf16 %v3982, %v3978
    %v4003 = vpack.c.bf16 %v3983, %v3979
    %v4004 = vpack.c.bf16 %v3984, %v3980
    %v4005 = vpack.c.bf16 %v3985, %v3981
    %v4006 = vpack.c.bf16 %v3990, %v3986
    %v4007 = vpack.c.bf16 %v3991, %v3987
    %v4008 = vpack.c.bf16 %v3992, %v3988
    %v4009 = vpack.c.bf16 %v3993, %v3989
    %4010 = vst [vmem:[#allocation2 + $0x120] sm:$0xff] %v3994
    %4011 = vst [vmem:[#allocation2 + $0x128] sm:$0xff] %v3995
    %4012 = vst [vmem:[#allocation2 + $0x130] sm:$0xff] %v3996
    %4013 = vst [vmem:[#allocation2 + $0x138] sm:$0xff] %v3997
    %4014 = vst [vmem:[#allocation2 + $0x160] sm:$0xff] %v3998
    %4015 = vst [vmem:[#allocation2 + $0x168] sm:$0xff] %v3999
    %4016 = vst [vmem:[#allocation2 + $0x170] sm:$0xff] %v4000
    %4017 = vst [vmem:[#allocation2 + $0x178] sm:$0xff] %v4001
    %4018 = vst [vmem:[#allocation2 + $0x1a0] sm:$0xff] %v4002
    %4019 = vst [vmem:[#allocation2 + $0x1a8] sm:$0xff] %v4003
    %4020 = vst [vmem:[#allocation2 + $0x1b0] sm:$0xff] %v4004
    %4021 = vst [vmem:[#allocation2 + $0x1b8] sm:$0xff] %v4005
    %4022 = vst [vmem:[#allocation2 + $0x1e0] sm:$0xff] %v4006
    %4023 = vst [vmem:[#allocation2 + $0x1e8] sm:$0xff] %v4007
    %4024 = vst [vmem:[#allocation2 + $0x1f0] sm:$0xff] %v4008
    %4025 = vst [vmem:[#allocation2 + $0x1f8] sm:$0xff] %v4009
    %4026 = vrot.lane.b32.xlu0 %v3565, 15
    %v4027 = vpop.permute.xlu0 %4026
    %4028 = vrot.lane.b32.xlu0 %v3569, 15
    %v4029 = vpop.permute.xlu0 %4028
    %4030 = vrot.lane.b32.xlu0 %v3573, 15
    %v4031 = vpop.permute.xlu0 %4030
    %4032 = vrot.lane.b32.xlu0 %v3577, 15
    %v4033 = vpop.permute.xlu0 %4032
    %4034 = vrot.lane.b32.xlu0 %v3581, 15
    %v4035 = vpop.permute.xlu0 %4034
    %4036 = vrot.lane.b32.xlu0 %v3585, 15
    %v4037 = vpop.permute.xlu0 %4036
    %4038 = vrot.lane.b32.xlu0 %v3589, 15
    %v4039 = vpop.permute.xlu0 %4038
    %4040 = vrot.lane.b32.xlu0 %v3593, 15
    %v4041 = vpop.permute.xlu0 %4040
    %4050 = vrot.lane.b32.xlu0 %v3562, 15
    %v4051 = vpop.permute.xlu0 %4050
    %4052 = vrot.lane.b32.xlu0 %v3563, 15
    %v4053 = vpop.permute.xlu0 %4052
    %4054 = vrot.lane.b32.xlu0 %v3564, 15
    %v4055 = vpop.permute.xlu0 %4054
    %4056 = vrot.lane.b32.xlu0 %v3566, 15
    %v4057 = vpop.permute.xlu0 %4056
    %4058 = vrot.lane.b32.xlu0 %v3567, 15
    %v4059 = vpop.permute.xlu0 %4058
    %4060 = vrot.lane.b32.xlu0 %v3568, 15
    %v4061 = vpop.permute.xlu0 %4060
    %4062 = vrot.lane.b32.xlu0 %v3570, 15
    %v4063 = vpop.permute.xlu0 %4062
    %4064 = vrot.lane.b32.xlu0 %v3571, 15
    %v4065 = vpop.permute.xlu0 %4064
    %4066 = vrot.lane.b32.xlu0 %v3572, 15
    %v4067 = vpop.permute.xlu0 %4066
    %4068 = vrot.lane.b32.xlu0 %v3574, 15
    %v4069 = vpop.permute.xlu0 %4068
    %4070 = vrot.lane.b32.xlu0 %v3575, 15
    %v4071 = vpop.permute.xlu0 %4070
    %4072 = vrot.lane.b32.xlu0 %v3576, 15
    %v4073 = vpop.permute.xlu0 %4072
    %4074 = vrot.lane.b32.xlu0 %v3578, 15
    %v4075 = vpop.permute.xlu0 %4074
    %4076 = vrot.lane.b32.xlu0 %v3579, 15
    %v4077 = vpop.permute.xlu0 %4076
    %4078 = vrot.lane.b32.xlu0 %v3580, 15
    %v4079 = vpop.permute.xlu0 %4078
    %4080 = vrot.lane.b32.xlu0 %v3582, 15
    %v4081 = vpop.permute.xlu0 %4080
    %4082 = vrot.lane.b32.xlu0 %v3583, 15
    %v4083 = vpop.permute.xlu0 %4082
    %4084 = vrot.lane.b32.xlu0 %v3584, 15
    %v4085 = vpop.permute.xlu0 %4084
    %4086 = vrot.lane.b32.xlu0 %v3586, 15
    %v4087 = vpop.permute.xlu0 %4086
    %4088 = vrot.lane.b32.xlu0 %v3587, 15
    %v4089 = vpop.permute.xlu0 %4088
    %4090 = vrot.lane.b32.xlu0 %v3588, 15
    %v4091 = vpop.permute.xlu0 %4090
    %4092 = vrot.lane.b32.xlu0 %v3590, 15
    %v4093 = vpop.permute.xlu0 %4092
    %4094 = vrot.lane.b32.xlu0 %v3591, 15
    %v4095 = vpop.permute.xlu0 %4094
    %4096 = vrot.lane.b32.xlu0 %v3592, 15
    %v4097 = vpop.permute.xlu0 %4096
    %v4098 = vsel %vm1260, %v4051, %v4053
    %v4099 = vsel %vm1260, %v4053, %v4055
    %v4100 = vsel %vm1260, %v4055, %v4027
    %v4101 = vsel %vm1260, %v4057, %v4059
    %v4102 = vsel %vm1260, %v4059, %v4061
    %v4103 = vsel %vm1260, %v4061, %v4029
    %v4104 = vsel %vm1260, %v4063, %v4065
    %v4105 = vsel %vm1260, %v4065, %v4067
    %v4106 = vsel %vm1260, %v4067, %v4031
    %v4107 = vsel %vm1260, %v4069, %v4071
    %v4108 = vsel %vm1260, %v4071, %v4073
    %v4109 = vsel %vm1260, %v4073, %v4033
    %v4110 = vsel %vm1260, %v4075, %v4077
    %v4111 = vsel %vm1260, %v4077, %v4079
    %v4112 = vsel %vm1260, %v4079, %v4035
    %v4113 = vsel %vm1260, %v4081, %v4083
    %v4114 = vsel %vm1260, %v4083, %v4085
    %v4115 = vsel %vm1260, %v4085, %v4037
    %v4116 = vsel %vm1260, %v4087, %v4089
    %v4117 = vsel %vm1260, %v4089, %v4091
    %v4118 = vsel %vm1260, %v4091, %v4039
    %v4119 = vsel %vm1260, %v4093, %v4095
    %v4120 = vsel %vm1260, %v4095, %v4097
    %v4121 = vsel %vm1260, %v4097, %v4041
    %v4154 = vsel %vm1260, %v4027, %v4051
    %v4155 = vsel %vm1260, %v4029, %v4057
    %v4156 = vsel %vm1260, %v4031, %v4063
    %v4157 = vsel %vm1260, %v4033, %v4069
    %v4158 = vsel %vm1260, %v4035, %v4075
    %v4159 = vsel %vm1260, %v4037, %v4081
    %v4160 = vsel %vm1260, %v4039, %v4087
    %v4161 = vsel %vm1260, %v4041, %v4093
    %v4162 = vmul.f32 %v4154, %v2309
    %v4163 = vmul.f32 %v4098, %v2313
    %v4164 = vmul.f32 %v4099, %v2317
    %v4165 = vmul.f32 %v4100, %v2321
    %v4166 = vmul.f32 %v4155, %v2309
    %v4167 = vmul.f32 %v4101, %v2313
    %v4168 = vmul.f32 %v4102, %v2317
    %v4169 = vmul.f32 %v4103, %v2321
    %v4170 = vmul.f32 %v4156, %v2309
    %v4171 = vmul.f32 %v4104, %v2313
    %v4172 = vmul.f32 %v4105, %v2317
    %v4173 = vmul.f32 %v4106, %v2321
    %v4174 = vmul.f32 %v4157, %v2309
    %v4175 = vmul.f32 %v4107, %v2313
    %v4176 = vmul.f32 %v4108, %v2317
    %v4177 = vmul.f32 %v4109, %v2321
    %v4178 = vmul.f32 %v4158, %v2309
    %v4179 = vmul.f32 %v4110, %v2313
    %v4180 = vmul.f32 %v4111, %v2317
    %v4181 = vmul.f32 %v4112, %v2321
    %v4182 = vmul.f32 %v4159, %v2309
    %v4183 = vmul.f32 %v4113, %v2313
    %v4184 = vmul.f32 %v4114, %v2317
    %v4185 = vmul.f32 %v4115, %v2321
    %v4186 = vmul.f32 %v4160, %v2309
    %v4187 = vmul.f32 %v4116, %v2313
    %v4188 = vmul.f32 %v4117, %v2317
    %v4189 = vmul.f32 %v4118, %v2321
    %v4190 = vmul.f32 %v4161, %v2309
    %v4191 = vmul.f32 %v4119, %v2313
    %v4192 = vmul.f32 %v4120, %v2317
    %v4193 = vmul.f32 %v4121, %v2321
    %v4194 = vpack.c.bf16 %v4166, %v4162
    %v4195 = vpack.c.bf16 %v4167, %v4163
    %v4196 = vpack.c.bf16 %v4168, %v4164
    %v4197 = vpack.c.bf16 %v4169, %v4165
    %v4198 = vpack.c.bf16 %v4174, %v4170
    %v4199 = vpack.c.bf16 %v4175, %v4171
    %v4200 = vpack.c.bf16 %v4176, %v4172
    %v4201 = vpack.c.bf16 %v4177, %v4173
    %v4202 = vpack.c.bf16 %v4182, %v4178
    %v4203 = vpack.c.bf16 %v4183, %v4179
    %v4204 = vpack.c.bf16 %v4184, %v4180
    %v4205 = vpack.c.bf16 %v4185, %v4181
    %v4206 = vpack.c.bf16 %v4190, %v4186
    %v4207 = vpack.c.bf16 %v4191, %v4187
    %v4208 = vpack.c.bf16 %v4192, %v4188
    %v4209 = vpack.c.bf16 %v4193, %v4189
    %4210 = vst [vmem:[#allocation2 + $0x220] sm:$0xff] %v4194
    %4211 = vst [vmem:[#allocation2 + $0x228] sm:$0xff] %v4195
    %4212 = vst [vmem:[#allocation2 + $0x230] sm:$0xff] %v4196
    %4213 = vst [vmem:[#allocation2 + $0x238] sm:$0xff] %v4197
    %4214 = vst [vmem:[#allocation2 + $0x260] sm:$0xff] %v4198
    %4215 = vst [vmem:[#allocation2 + $0x268] sm:$0xff] %v4199
    %4216 = vst [vmem:[#allocation2 + $0x270] sm:$0xff] %v4200
    %4217 = vst [vmem:[#allocation2 + $0x278] sm:$0xff] %v4201
    %4218 = vst [vmem:[#allocation2 + $0x2a0] sm:$0xff] %v4202
    %4219 = vst [vmem:[#allocation2 + $0x2a8] sm:$0xff] %v4203
    %4220 = vst [vmem:[#allocation2 + $0x2b0] sm:$0xff] %v4204
    %4221 = vst [vmem:[#allocation2 + $0x2b8] sm:$0xff] %v4205
    %4222 = vst [vmem:[#allocation2 + $0x2e0] sm:$0xff] %v4206
    %4223 = vst [vmem:[#allocation2 + $0x2e8] sm:$0xff] %v4207
    %4224 = vst [vmem:[#allocation2 + $0x2f0] sm:$0xff] %v4208
    %4225 = vst [vmem:[#allocation2 + $0x2f8] sm:$0xff] %v4209
    %4226 = vrot.lane.b32.xlu0 %v3565, 1
    %v4227 = vpop.permute.xlu0 %4226
    %4228 = vrot.lane.b32.xlu0 %v3569, 1
    %v4229 = vpop.permute.xlu0 %4228
    %4230 = vrot.lane.b32.xlu0 %v3573, 1
    %v4231 = vpop.permute.xlu0 %4230
    %4232 = vrot.lane.b32.xlu0 %v3577, 1
    %v4233 = vpop.permute.xlu0 %4232
    %4234 = vrot.lane.b32.xlu0 %v3581, 1
    %v4235 = vpop.permute.xlu0 %4234
    %4236 = vrot.lane.b32.xlu0 %v3585, 1
    %v4237 = vpop.permute.xlu0 %4236
    %4238 = vrot.lane.b32.xlu0 %v3589, 1
    %v4239 = vpop.permute.xlu0 %4238
    %4240 = vrot.lane.b32.xlu0 %v3593, 1
    %v4241 = vpop.permute.xlu0 %4240
    %4250 = vrot.lane.b32.xlu0 %v3562, 1
    %v4251 = vpop.permute.xlu0 %4250
    %4252 = vrot.lane.b32.xlu0 %v3563, 1
    %v4253 = vpop.permute.xlu0 %4252
    %4254 = vrot.lane.b32.xlu0 %v3564, 1
    %v4255 = vpop.permute.xlu0 %4254
    %4256 = vrot.lane.b32.xlu0 %v3566, 1
    %v4257 = vpop.permute.xlu0 %4256
    %4258 = vrot.lane.b32.xlu0 %v3567, 1
    %v4259 = vpop.permute.xlu0 %4258
    %4260 = vrot.lane.b32.xlu0 %v3568, 1
    %v4261 = vpop.permute.xlu0 %4260
    %4262 = vrot.lane.b32.xlu0 %v3570, 1
    %v4263 = vpop.permute.xlu0 %4262
    %4264 = vrot.lane.b32.xlu0 %v3571, 1
    %v4265 = vpop.permute.xlu0 %4264
    %4266 = vrot.lane.b32.xlu0 %v3572, 1
    %v4267 = vpop.permute.xlu0 %4266
    %4268 = vrot.lane.b32.xlu0 %v3574, 1
    %v4269 = vpop.permute.xlu0 %4268
    %4270 = vrot.lane.b32.xlu0 %v3575, 1
    %v4271 = vpop.permute.xlu0 %4270
    %4272 = vrot.lane.b32.xlu0 %v3576, 1
    %v4273 = vpop.permute.xlu0 %4272
    %4274 = vrot.lane.b32.xlu0 %v3578, 1
    %v4275 = vpop.permute.xlu0 %4274
    %4276 = vrot.lane.b32.xlu0 %v3579, 1
    %v4277 = vpop.permute.xlu0 %4276
    %4278 = vrot.lane.b32.xlu0 %v3580, 1
    %v4279 = vpop.permute.xlu0 %4278
    %4280 = vrot.lane.b32.xlu0 %v3582, 1
    %v4281 = vpop.permute.xlu0 %4280
    %4282 = vrot.lane.b32.xlu0 %v3583, 1
    %v4283 = vpop.permute.xlu0 %4282
    %4284 = vrot.lane.b32.xlu0 %v3584, 1
    %v4285 = vpop.permute.xlu0 %4284
    %4286 = vrot.lane.b32.xlu0 %v3586, 1
    %v4287 = vpop.permute.xlu0 %4286
    %4288 = vrot.lane.b32.xlu0 %v3587, 1
    %v4289 = vpop.permute.xlu0 %4288
    %4290 = vrot.lane.b32.xlu0 %v3588, 1
    %v4291 = vpop.permute.xlu0 %4290
    %4292 = vrot.lane.b32.xlu0 %v3590, 1
    %v4293 = vpop.permute.xlu0 %4292
    %4294 = vrot.lane.b32.xlu0 %v3591, 1
    %v4295 = vpop.permute.xlu0 %4294
    %4296 = vrot.lane.b32.xlu0 %v3592, 1
    %v4297 = vpop.permute.xlu0 %4296
    %v4298 = vsel %vm452, %v4251, %v4253
    %v4299 = vsel %vm452, %v4253, %v4255
    %v4300 = vsel %vm452, %v4255, %v4227
    %v4301 = vsel %vm452, %v4257, %v4259
    %v4302 = vsel %vm452, %v4259, %v4261
    %v4303 = vsel %vm452, %v4261, %v4229
    %v4304 = vsel %vm452, %v4263, %v4265
    %v4305 = vsel %vm452, %v4265, %v4267
    %v4306 = vsel %vm452, %v4267, %v4231
    %v4307 = vsel %vm452, %v4269, %v4271
    %v4308 = vsel %vm452, %v4271, %v4273
    %v4309 = vsel %vm452, %v4273, %v4233
    %v4310 = vsel %vm452, %v4275, %v4277
    %v4311 = vsel %vm452, %v4277, %v4279
    %v4312 = vsel %vm452, %v4279, %v4235
    %v4313 = vsel %vm452, %v4281, %v4283
    %v4314 = vsel %vm452, %v4283, %v4285
    %v4315 = vsel %vm452, %v4285, %v4237
    %v4316 = vsel %vm452, %v4287, %v4289
    %v4317 = vsel %vm452, %v4289, %v4291
    %v4318 = vsel %vm452, %v4291, %v4239
    %v4319 = vsel %vm452, %v4293, %v4295
    %v4320 = vsel %vm452, %v4295, %v4297
    %v4321 = vsel %vm452, %v4297, %v4241
    %v4354 = vsel %vm452, %v4227, %v4251
    %v4355 = vsel %vm452, %v4229, %v4257
    %v4356 = vsel %vm452, %v4231, %v4263
    %v4357 = vsel %vm452, %v4233, %v4269
    %v4358 = vsel %vm452, %v4235, %v4275
    %v4359 = vsel %vm452, %v4237, %v4281
    %v4360 = vsel %vm452, %v4239, %v4287
    %v4361 = vsel %vm452, %v4241, %v4293
    %v4362 = vmul.f32 %v4354, %v2525
    %v4363 = vmul.f32 %v4298, %v2529
    %v4364 = vmul.f32 %v4299, %v2533
    %v4365 = vmul.f32 %v4300, %v2537
    %v4366 = vmul.f32 %v4355, %v2525
    %v4367 = vmul.f32 %v4301, %v2529
    %v4368 = vmul.f32 %v4302, %v2533
    %v4369 = vmul.f32 %v4303, %v2537
    %v4370 = vmul.f32 %v4356, %v2525
    %v4371 = vmul.f32 %v4304, %v2529
    %v4372 = vmul.f32 %v4305, %v2533
    %v4373 = vmul.f32 %v4306, %v2537
    %v4374 = vmul.f32 %v4357, %v2525
    %v4375 = vmul.f32 %v4307, %v2529
    %v4376 = vmul.f32 %v4308, %v2533
    %v4377 = vmul.f32 %v4309, %v2537
    %v4378 = vmul.f32 %v4358, %v2525
    %v4379 = vmul.f32 %v4310, %v2529
    %v4380 = vmul.f32 %v4311, %v2533
    %v4381 = vmul.f32 %v4312, %v2537
    %v4382 = vmul.f32 %v4359, %v2525
    %v4383 = vmul.f32 %v4313, %v2529
    %v4384 = vmul.f32 %v4314, %v2533
    %v4385 = vmul.f32 %v4315, %v2537
    %v4386 = vmul.f32 %v4360, %v2525
    %v4387 = vmul.f32 %v4316, %v2529
    %v4388 = vmul.f32 %v4317, %v2533
    %v4389 = vmul.f32 %v4318, %v2537
    %v4390 = vmul.f32 %v4361, %v2525
    %v4391 = vmul.f32 %v4319, %v2529
    %v4392 = vmul.f32 %v4320, %v2533
    %v4393 = vmul.f32 %v4321, %v2537
    %v4394 = vpack.c.bf16 %v4366, %v4362
    %v4395 = vpack.c.bf16 %v4367, %v4363
    %v4396 = vpack.c.bf16 %v4368, %v4364
    %v4397 = vpack.c.bf16 %v4369, %v4365
    %v4398 = vpack.c.bf16 %v4374, %v4370
    %v4399 = vpack.c.bf16 %v4375, %v4371
    %v4400 = vpack.c.bf16 %v4376, %v4372
    %v4401 = vpack.c.bf16 %v4377, %v4373
    %v4402 = vpack.c.bf16 %v4382, %v4378
    %v4403 = vpack.c.bf16 %v4383, %v4379
    %v4404 = vpack.c.bf16 %v4384, %v4380
    %v4405 = vpack.c.bf16 %v4385, %v4381
    %v4406 = vpack.c.bf16 %v4390, %v4386
    %v4407 = vpack.c.bf16 %v4391, %v4387
    %v4408 = vpack.c.bf16 %v4392, %v4388
    %v4409 = vpack.c.bf16 %v4393, %v4389
    %4410 = vst [vmem:[#allocation2 + $0x320] sm:$0xff] %v4394
    %4411 = vst [vmem:[#allocation2 + $0x328] sm:$0xff] %v4395
    %4412 = vst [vmem:[#allocation2 + $0x330] sm:$0xff] %v4396
    %4413 = vst [vmem:[#allocation2 + $0x338] sm:$0xff] %v4397
    %4414 = vst [vmem:[#allocation2 + $0x360] sm:$0xff] %v4398
    %4415 = vst [vmem:[#allocation2 + $0x368] sm:$0xff] %v4399
    %4416 = vst [vmem:[#allocation2 + $0x370] sm:$0xff] %v4400
    %4417 = vst [vmem:[#allocation2 + $0x378] sm:$0xff] %v4401
    %4418 = vst [vmem:[#allocation2 + $0x3a0] sm:$0xff] %v4402
    %4419 = vst [vmem:[#allocation2 + $0x3a8] sm:$0xff] %v4403
    %4420 = vst [vmem:[#allocation2 + $0x3b0] sm:$0xff] %v4404
    %4421 = vst [vmem:[#allocation2 + $0x3b8] sm:$0xff] %v4405
    %4422 = vst [vmem:[#allocation2 + $0x3e0] sm:$0xff] %v4406
    %4423 = vst [vmem:[#allocation2 + $0x3e8] sm:$0xff] %v4407
    %4424 = vst [vmem:[#allocation2 + $0x3f0] sm:$0xff] %v4408
    %4425 = vst [vmem:[#allocation2 + $0x3f8] sm:$0xff] %v4409
    %v4426 = vmul.f32 %v3562, %v2605
    %v4427 = vmul.f32 %v3563, %v2609
    %v4428 = vmul.f32 %v3564, %v2613
    %v4429 = vmul.f32 %v3565, %v2617
    %v4430 = vmul.f32 %v3566, %v2605
    %v4431 = vmul.f32 %v3567, %v2609
    %v4432 = vmul.f32 %v3568, %v2613
    %v4433 = vmul.f32 %v3569, %v2617
    %v4434 = vmul.f32 %v3570, %v2605
    %v4435 = vmul.f32 %v3571, %v2609
    %v4436 = vmul.f32 %v3572, %v2613
    %v4437 = vmul.f32 %v3573, %v2617
    %v4438 = vmul.f32 %v3574, %v2605
    %v4439 = vmul.f32 %v3575, %v2609
    %v4440 = vmul.f32 %v3576, %v2613
    %v4441 = vmul.f32 %v3577, %v2617
    %v4442 = vmul.f32 %v3578, %v2605
    %v4443 = vmul.f32 %v3579, %v2609
    %v4444 = vmul.f32 %v3580, %v2613
    %v4445 = vmul.f32 %v3581, %v2617
    %v4446 = vmul.f32 %v3582, %v2605
    %v4447 = vmul.f32 %v3583, %v2609
    %v4448 = vmul.f32 %v3584, %v2613
    %v4449 = vmul.f32 %v3585, %v2617
    %v4450 = vmul.f32 %v3586, %v2605
    %v4451 = vmul.f32 %v3587, %v2609
    %v4452 = vmul.f32 %v3588, %v2613
    %v4453 = vmul.f32 %v3589, %v2617
    %v4454 = vmul.f32 %v3590, %v2605
    %v4455 = vmul.f32 %v3591, %v2609
    %v4456 = vmul.f32 %v3592, %v2613
    %v4457 = vmul.f32 %v3593, %v2617
    %v4458 = vpack.c.bf16 %v4430, %v4426
    %v4459 = vpack.c.bf16 %v4431, %v4427
    %v4460 = vpack.c.bf16 %v4432, %v4428
    %v4461 = vpack.c.bf16 %v4433, %v4429
    %v4462 = vpack.c.bf16 %v4438, %v4434
    %v4463 = vpack.c.bf16 %v4439, %v4435
    %v4464 = vpack.c.bf16 %v4440, %v4436
    %v4465 = vpack.c.bf16 %v4441, %v4437
    %v4466 = vpack.c.bf16 %v4446, %v4442
    %v4467 = vpack.c.bf16 %v4447, %v4443
    %v4468 = vpack.c.bf16 %v4448, %v4444
    %v4469 = vpack.c.bf16 %v4449, %v4445
    %v4470 = vpack.c.bf16 %v4454, %v4450
    %v4471 = vpack.c.bf16 %v4455, %v4451
    %v4472 = vpack.c.bf16 %v4456, %v4452
    %v4473 = vpack.c.bf16 %v4457, %v4453
    %4474 = vst [vmem:[#allocation2 + $0x420] sm:$0xff] %v4458
    %4475 = vst [vmem:[#allocation2 + $0x428] sm:$0xff] %v4459
    %4476 = vst [vmem:[#allocation2 + $0x430] sm:$0xff] %v4460
    %4477 = vst [vmem:[#allocation2 + $0x438] sm:$0xff] %v4461
    %4478 = vst [vmem:[#allocation2 + $0x460] sm:$0xff] %v4462
    %4479 = vst [vmem:[#allocation2 + $0x468] sm:$0xff] %v4463
    %4480 = vst [vmem:[#allocation2 + $0x470] sm:$0xff] %v4464
    %4481 = vst [vmem:[#allocation2 + $0x478] sm:$0xff] %v4465
    %4482 = vst [vmem:[#allocation2 + $0x4a0] sm:$0xff] %v4466
    %4483 = vst [vmem:[#allocation2 + $0x4a8] sm:$0xff] %v4467
    %4484 = vst [vmem:[#allocation2 + $0x4b0] sm:$0xff] %v4468
    %4485 = vst [vmem:[#allocation2 + $0x4b8] sm:$0xff] %v4469
    %4486 = vst [vmem:[#allocation2 + $0x4e0] sm:$0xff] %v4470
    %4487 = vst [vmem:[#allocation2 + $0x4e8] sm:$0xff] %v4471
    %4488 = vst [vmem:[#allocation2 + $0x4f0] sm:$0xff] %v4472
    %4489 = vst [vmem:[#allocation2 + $0x4f8] sm:$0xff] %v4473
    %4490 = vrot.lane.b32.xlu0 %v3562, 127
    %v4491 = vpop.permute.xlu0 %4490
    %4492 = vrot.lane.b32.xlu0 %v3563, 127
    %v4493 = vpop.permute.xlu0 %4492
    %4494 = vrot.lane.b32.xlu0 %v3564, 127
    %v4495 = vpop.permute.xlu0 %4494
    %4496 = vrot.lane.b32.xlu0 %v3565, 127
    %v4497 = vpop.permute.xlu0 %4496
    %4498 = vrot.lane.b32.xlu0 %v3566, 127
    %v4499 = vpop.permute.xlu0 %4498
    %4500 = vrot.lane.b32.xlu0 %v3567, 127
    %v4501 = vpop.permute.xlu0 %4500
    %4502 = vrot.lane.b32.xlu0 %v3568, 127
    %v4503 = vpop.permute.xlu0 %4502
    %4504 = vrot.lane.b32.xlu0 %v3569, 127
    %v4505 = vpop.permute.xlu0 %4504
    %4506 = vrot.lane.b32.xlu0 %v3570, 127
    %v4507 = vpop.permute.xlu0 %4506
    %4508 = vrot.lane.b32.xlu0 %v3571, 127
    %v4509 = vpop.permute.xlu0 %4508
    %4510 = vrot.lane.b32.xlu0 %v3572, 127
    %v4511 = vpop.permute.xlu0 %4510
    %4512 = vrot.lane.b32.xlu0 %v3573, 127
    %v4513 = vpop.permute.xlu0 %4512
    %4514 = vrot.lane.b32.xlu0 %v3574, 127
    %v4515 = vpop.permute.xlu0 %4514
    %4516 = vrot.lane.b32.xlu0 %v3575, 127
    %v4517 = vpop.permute.xlu0 %4516
    %4518 = vrot.lane.b32.xlu0 %v3576, 127
    %v4519 = vpop.permute.xlu0 %4518
    %4520 = vrot.lane.b32.xlu0 %v3577, 127
    %v4521 = vpop.permute.xlu0 %4520
    %4522 = vrot.lane.b32.xlu0 %v3578, 127
    %v4523 = vpop.permute.xlu0 %4522
    %4524 = vrot.lane.b32.xlu0 %v3579, 127
    %v4525 = vpop.permute.xlu0 %4524
    %4526 = vrot.lane.b32.xlu0 %v3580, 127
    %v4527 = vpop.permute.xlu0 %4526
    %4528 = vrot.lane.b32.xlu0 %v3581, 127
    %v4529 = vpop.permute.xlu0 %4528
    %4530 = vrot.lane.b32.xlu0 %v3582, 127
    %v4531 = vpop.permute.xlu0 %4530
    %4532 = vrot.lane.b32.xlu0 %v3583, 127
    %v4533 = vpop.permute.xlu0 %4532
    %4534 = vrot.lane.b32.xlu0 %v3584, 127
    %v4535 = vpop.permute.xlu0 %4534
    %4536 = vrot.lane.b32.xlu0 %v3585, 127
    %v4537 = vpop.permute.xlu0 %4536
    %4538 = vrot.lane.b32.xlu0 %v3586, 127
    %v4539 = vpop.permute.xlu0 %4538
    %4540 = vrot.lane.b32.xlu0 %v3587, 127
    %v4541 = vpop.permute.xlu0 %4540
    %4542 = vrot.lane.b32.xlu0 %v3588, 127
    %v4543 = vpop.permute.xlu0 %4542
    %4544 = vrot.lane.b32.xlu0 %v3589, 127
    %v4545 = vpop.permute.xlu0 %4544
    %4546 = vrot.lane.b32.xlu0 %v3590, 127
    %v4547 = vpop.permute.xlu0 %4546
    %4548 = vrot.lane.b32.xlu0 %v3591, 127
    %v4549 = vpop.permute.xlu0 %4548
    %4550 = vrot.lane.b32.xlu0 %v3592, 127
    %v4551 = vpop.permute.xlu0 %4550
    %4552 = vrot.lane.b32.xlu0 %v3593, 127
    %v4553 = vpop.permute.xlu0 %4552
    %v4554 = vsel %vm1426, %v4491, %v4493
    %v4555 = vsel %vm1426, %v4493, %v4495
    %v4556 = vsel %vm1426, %v4495, %v4497
    %v4557 = vsel %vm1426, %v4499, %v4501
    %v4558 = vsel %vm1426, %v4501, %v4503
    %v4559 = vsel %vm1426, %v4503, %v4505
    %v4560 = vsel %vm1426, %v4507, %v4509
    %v4561 = vsel %vm1426, %v4509, %v4511
    %v4562 = vsel %vm1426, %v4511, %v4513
    %v4563 = vsel %vm1426, %v4515, %v4517
    %v4564 = vsel %vm1426, %v4517, %v4519
    %v4565 = vsel %vm1426, %v4519, %v4521
    %v4566 = vsel %vm1426, %v4523, %v4525
    %v4567 = vsel %vm1426, %v4525, %v4527
    %v4568 = vsel %vm1426, %v4527, %v4529
    %v4569 = vsel %vm1426, %v4531, %v4533
    %v4570 = vsel %vm1426, %v4533, %v4535
    %v4571 = vsel %vm1426, %v4535, %v4537
    %v4572 = vsel %vm1426, %v4539, %v4541
    %v4573 = vsel %vm1426, %v4541, %v4543
    %v4574 = vsel %vm1426, %v4543, %v4545
    %v4575 = vsel %vm1426, %v4547, %v4549
    %v4576 = vsel %vm1426, %v4549, %v4551
    %v4577 = vsel %vm1426, %v4551, %v4553
    %v4618 = vsel %vm1426, %v4497, %v4491
    %v4619 = vsel %vm1426, %v4505, %v4499
    %v4620 = vsel %vm1426, %v4513, %v4507
    %v4621 = vsel %vm1426, %v4521, %v4515
    %v4622 = vsel %vm1426, %v4529, %v4523
    %v4623 = vsel %vm1426, %v4537, %v4531
    %v4624 = vsel %vm1426, %v4545, %v4539
    %v4625 = vsel %vm1426, %v4553, %v4547
    %v4626 = vmul.f32 %v4554, %v2821
    %v4627 = vmul.f32 %v4555, %v2825
    %v4628 = vmul.f32 %v4556, %v2829
    %v4629 = vmul.f32 %v4618, %v2833
    %v4630 = vmul.f32 %v4557, %v2821
    %v4631 = vmul.f32 %v4558, %v2825
    %v4632 = vmul.f32 %v4559, %v2829
    %v4633 = vmul.f32 %v4619, %v2833
    %v4634 = vmul.f32 %v4560, %v2821
    %v4635 = vmul.f32 %v4561, %v2825
    %v4636 = vmul.f32 %v4562, %v2829
    %v4637 = vmul.f32 %v4620, %v2833
    %v4638 = vmul.f32 %v4563, %v2821
    %v4639 = vmul.f32 %v4564, %v2825
    %v4640 = vmul.f32 %v4565, %v2829
    %v4641 = vmul.f32 %v4621, %v2833
    %v4642 = vmul.f32 %v4566, %v2821
    %v4643 = vmul.f32 %v4567, %v2825
    %v4644 = vmul.f32 %v4568, %v2829
    %v4645 = vmul.f32 %v4622, %v2833
    %v4646 = vmul.f32 %v4569, %v2821
    %v4647 = vmul.f32 %v4570, %v2825
    %v4648 = vmul.f32 %v4571, %v2829
    %v4649 = vmul.f32 %v4623, %v2833
    %v4650 = vmul.f32 %v4572, %v2821
    %v4651 = vmul.f32 %v4573, %v2825
    %v4652 = vmul.f32 %v4574, %v2829
    %v4653 = vmul.f32 %v4624, %v2833
    %v4654 = vmul.f32 %v4575, %v2821
    %v4655 = vmul.f32 %v4576, %v2825
    %v4656 = vmul.f32 %v4577, %v2829
    %v4657 = vmul.f32 %v4625, %v2833
    %v4658 = vpack.c.bf16 %v4630, %v4626
    %v4659 = vpack.c.bf16 %v4631, %v4627
    %v4660 = vpack.c.bf16 %v4632, %v4628
    %v4661 = vpack.c.bf16 %v4633, %v4629
    %v4662 = vpack.c.bf16 %v4638, %v4634
    %v4663 = vpack.c.bf16 %v4639, %v4635
    %v4664 = vpack.c.bf16 %v4640, %v4636
    %v4665 = vpack.c.bf16 %v4641, %v4637
    %v4666 = vpack.c.bf16 %v4646, %v4642
    %v4667 = vpack.c.bf16 %v4647, %v4643
    %v4668 = vpack.c.bf16 %v4648, %v4644
    %v4669 = vpack.c.bf16 %v4649, %v4645
    %v4670 = vpack.c.bf16 %v4654, %v4650
    %v4671 = vpack.c.bf16 %v4655, %v4651
    %v4672 = vpack.c.bf16 %v4656, %v4652
    %v4673 = vpack.c.bf16 %v4657, %v4653
    %4674 = vst [vmem:[#allocation2 + $0x520] sm:$0xff] %v4658
    %4675 = vst [vmem:[#allocation2 + $0x528] sm:$0xff] %v4659
    %4676 = vst [vmem:[#allocation2 + $0x530] sm:$0xff] %v4660
    %4677 = vst [vmem:[#allocation2 + $0x538] sm:$0xff] %v4661
    %4678 = vst [vmem:[#allocation2 + $0x560] sm:$0xff] %v4662
    %4679 = vst [vmem:[#allocation2 + $0x568] sm:$0xff] %v4663
    %4680 = vst [vmem:[#allocation2 + $0x570] sm:$0xff] %v4664
    %4681 = vst [vmem:[#allocation2 + $0x578] sm:$0xff] %v4665
    %4682 = vst [vmem:[#allocation2 + $0x5a0] sm:$0xff] %v4666
    %4683 = vst [vmem:[#allocation2 + $0x5a8] sm:$0xff] %v4667
    %4684 = vst [vmem:[#allocation2 + $0x5b0] sm:$0xff] %v4668
    %4685 = vst [vmem:[#allocation2 + $0x5b8] sm:$0xff] %v4669
    %4686 = vst [vmem:[#allocation2 + $0x5e0] sm:$0xff] %v4670
    %4687 = vst [vmem:[#allocation2 + $0x5e8] sm:$0xff] %v4671
    %4688 = vst [vmem:[#allocation2 + $0x5f0] sm:$0xff] %v4672
    %4689 = vst [vmem:[#allocation2 + $0x5f8] sm:$0xff] %v4673
    %4690 = vrot.lane.b32.xlu0 %v3562, 113
    %v4691 = vpop.permute.xlu0 %4690
    %4692 = vrot.lane.b32.xlu0 %v3563, 113
    %v4693 = vpop.permute.xlu0 %4692
    %4694 = vrot.lane.b32.xlu0 %v3564, 113
    %v4695 = vpop.permute.xlu0 %4694
    %4696 = vrot.lane.b32.xlu0 %v3565, 113
    %v4697 = vpop.permute.xlu0 %4696
    %4698 = vrot.lane.b32.xlu0 %v3566, 113
    %v4699 = vpop.permute.xlu0 %4698
    %4700 = vrot.lane.b32.xlu0 %v3567, 113
    %v4701 = vpop.permute.xlu0 %4700
    %4702 = vrot.lane.b32.xlu0 %v3568, 113
    %v4703 = vpop.permute.xlu0 %4702
    %4704 = vrot.lane.b32.xlu0 %v3569, 113
    %v4705 = vpop.permute.xlu0 %4704
    %4706 = vrot.lane.b32.xlu0 %v3570, 113
    %v4707 = vpop.permute.xlu0 %4706
    %4708 = vrot.lane.b32.xlu0 %v3571, 113
    %v4709 = vpop.permute.xlu0 %4708
    %4710 = vrot.lane.b32.xlu0 %v3572, 113
    %v4711 = vpop.permute.xlu0 %4710
    %4712 = vrot.lane.b32.xlu0 %v3573, 113
    %v4713 = vpop.permute.xlu0 %4712
    %4714 = vrot.lane.b32.xlu0 %v3574, 113
    %v4715 = vpop.permute.xlu0 %4714
    %4716 = vrot.lane.b32.xlu0 %v3575, 113
    %v4717 = vpop.permute.xlu0 %4716
    %4718 = vrot.lane.b32.xlu0 %v3576, 113
    %v4719 = vpop.permute.xlu0 %4718
    %4720 = vrot.lane.b32.xlu0 %v3577, 113
    %v4721 = vpop.permute.xlu0 %4720
    %4722 = vrot.lane.b32.xlu0 %v3578, 113
    %v4723 = vpop.permute.xlu0 %4722
    %4724 = vrot.lane.b32.xlu0 %v3579, 113
    %v4725 = vpop.permute.xlu0 %4724
    %4726 = vrot.lane.b32.xlu0 %v3580, 113
    %v4727 = vpop.permute.xlu0 %4726
    %4728 = vrot.lane.b32.xlu0 %v3581, 113
    %v4729 = vpop.permute.xlu0 %4728
    %4730 = vrot.lane.b32.xlu0 %v3582, 113
    %v4731 = vpop.permute.xlu0 %4730
    %4732 = vrot.lane.b32.xlu0 %v3583, 113
    %v4733 = vpop.permute.xlu0 %4732
    %4734 = vrot.lane.b32.xlu0 %v3584, 113
    %v4735 = vpop.permute.xlu0 %4734
    %4736 = vrot.lane.b32.xlu0 %v3585, 113
    %v4737 = vpop.permute.xlu0 %4736
    %4738 = vrot.lane.b32.xlu0 %v3586, 113
    %v4739 = vpop.permute.xlu0 %4738
    %4740 = vrot.lane.b32.xlu0 %v3587, 113
    %v4741 = vpop.permute.xlu0 %4740
    %4742 = vrot.lane.b32.xlu0 %v3588, 113
    %v4743 = vpop.permute.xlu0 %4742
    %4744 = vrot.lane.b32.xlu0 %v3589, 113
    %v4745 = vpop.permute.xlu0 %4744
    %4746 = vrot.lane.b32.xlu0 %v3590, 113
    %v4747 = vpop.permute.xlu0 %4746
    %4748 = vrot.lane.b32.xlu0 %v3591, 113
    %v4749 = vpop.permute.xlu0 %4748
    %4750 = vrot.lane.b32.xlu0 %v3592, 113
    %v4751 = vpop.permute.xlu0 %4750
    %4752 = vrot.lane.b32.xlu0 %v3593, 113
    %v4753 = vpop.permute.xlu0 %4752
    %v4754 = vsel %vm1488, %v4691, %v4693
    %v4755 = vsel %vm1488, %v4693, %v4695
    %v4756 = vsel %vm1488, %v4695, %v4697
    %v4757 = vsel %vm1488, %v4699, %v4701
    %v4758 = vsel %vm1488, %v4701, %v4703
    %v4759 = vsel %vm1488, %v4703, %v4705
    %v4760 = vsel %vm1488, %v4707, %v4709
    %v4761 = vsel %vm1488, %v4709, %v4711
    %v4762 = vsel %vm1488, %v4711, %v4713
    %v4763 = vsel %vm1488, %v4715, %v4717
    %v4764 = vsel %vm1488, %v4717, %v4719
    %v4765 = vsel %vm1488, %v4719, %v4721
    %v4766 = vsel %vm1488, %v4723, %v4725
    %v4767 = vsel %vm1488, %v4725, %v4727
    %v4768 = vsel %vm1488, %v4727, %v4729
    %v4769 = vsel %vm1488, %v4731, %v4733
    %v4770 = vsel %vm1488, %v4733, %v4735
    %v4771 = vsel %vm1488, %v4735, %v4737
    %v4772 = vsel %vm1488, %v4739, %v4741
    %v4773 = vsel %vm1488, %v4741, %v4743
    %v4774 = vsel %vm1488, %v4743, %v4745
    %v4775 = vsel %vm1488, %v4747, %v4749
    %v4776 = vsel %vm1488, %v4749, %v4751
    %v4777 = vsel %vm1488, %v4751, %v4753
    %v4818 = vsel %vm1488, %v4697, %v4691
    %v4819 = vsel %vm1488, %v4705, %v4699
    %v4820 = vsel %vm1488, %v4713, %v4707
    %v4821 = vsel %vm1488, %v4721, %v4715
    %v4822 = vsel %vm1488, %v4729, %v4723
    %v4823 = vsel %vm1488, %v4737, %v4731
    %v4824 = vsel %vm1488, %v4745, %v4739
    %v4825 = vsel %vm1488, %v4753, %v4747
    %v4826 = vmul.f32 %v4754, %v3037
    %v4827 = vmul.f32 %v4755, %v3041
    %v4828 = vmul.f32 %v4756, %v3045
    %v4829 = vmul.f32 %v4818, %v3049
    %v4830 = vmul.f32 %v4757, %v3037
    %v4831 = vmul.f32 %v4758, %v3041
    %v4832 = vmul.f32 %v4759, %v3045
    %v4833 = vmul.f32 %v4819, %v3049
    %v4834 = vmul.f32 %v4760, %v3037
    %v4835 = vmul.f32 %v4761, %v3041
    %v4836 = vmul.f32 %v4762, %v3045
    %v4837 = vmul.f32 %v4820, %v3049
    %v4838 = vmul.f32 %v4763, %v3037
    %v4839 = vmul.f32 %v4764, %v3041
    %v4840 = vmul.f32 %v4765, %v3045
    %v4841 = vmul.f32 %v4821, %v3049
    %v4842 = vmul.f32 %v4766, %v3037
    %v4843 = vmul.f32 %v4767, %v3041
    %v4844 = vmul.f32 %v4768, %v3045
    %v4845 = vmul.f32 %v4822, %v3049
    %v4846 = vmul.f32 %v4769, %v3037
    %v4847 = vmul.f32 %v4770, %v3041
    %v4848 = vmul.f32 %v4771, %v3045
    %v4849 = vmul.f32 %v4823, %v3049
    %v4850 = vmul.f32 %v4772, %v3037
    %v4851 = vmul.f32 %v4773, %v3041
    %v4852 = vmul.f32 %v4774, %v3045
    %v4853 = vmul.f32 %v4824, %v3049
    %v4854 = vmul.f32 %v4775, %v3037
    %v4855 = vmul.f32 %v4776, %v3041
    %v4856 = vmul.f32 %v4777, %v3045
    %v4857 = vmul.f32 %v4825, %v3049
    %v4858 = vpack.c.bf16 %v4830, %v4826
    %v4859 = vpack.c.bf16 %v4831, %v4827
    %v4860 = vpack.c.bf16 %v4832, %v4828
    %v4861 = vpack.c.bf16 %v4833, %v4829
    %v4862 = vpack.c.bf16 %v4838, %v4834
    %v4863 = vpack.c.bf16 %v4839, %v4835
    %v4864 = vpack.c.bf16 %v4840, %v4836
    %v4865 = vpack.c.bf16 %v4841, %v4837
    %v4866 = vpack.c.bf16 %v4846, %v4842
    %v4867 = vpack.c.bf16 %v4847, %v4843
    %v4868 = vpack.c.bf16 %v4848, %v4844
    %v4869 = vpack.c.bf16 %v4849, %v4845
    %v4870 = vpack.c.bf16 %v4854, %v4850
    %v4871 = vpack.c.bf16 %v4855, %v4851
    %v4872 = vpack.c.bf16 %v4856, %v4852
    %v4873 = vpack.c.bf16 %v4857, %v4853
    %4874 = vst [vmem:[#allocation2 + $0x620] sm:$0xff] %v4858
    %4875 = vst [vmem:[#allocation2 + $0x628] sm:$0xff] %v4859
    %4876 = vst [vmem:[#allocation2 + $0x630] sm:$0xff] %v4860
    %4877 = vst [vmem:[#allocation2 + $0x638] sm:$0xff] %v4861
    %4878 = vst [vmem:[#allocation2 + $0x660] sm:$0xff] %v4862
    %4879 = vst [vmem:[#allocation2 + $0x668] sm:$0xff] %v4863
    %4880 = vst [vmem:[#allocation2 + $0x670] sm:$0xff] %v4864
    %4881 = vst [vmem:[#allocation2 + $0x678] sm:$0xff] %v4865
    %4882 = vst [vmem:[#allocation2 + $0x6a0] sm:$0xff] %v4866
    %4883 = vst [vmem:[#allocation2 + $0x6a8] sm:$0xff] %v4867
    %4884 = vst [vmem:[#allocation2 + $0x6b0] sm:$0xff] %v4868
    %4885 = vst [vmem:[#allocation2 + $0x6b8] sm:$0xff] %v4869
    %4886 = vst [vmem:[#allocation2 + $0x6e0] sm:$0xff] %v4870
    %4887 = vst [vmem:[#allocation2 + $0x6e8] sm:$0xff] %v4871
    %4888 = vst [vmem:[#allocation2 + $0x6f0] sm:$0xff] %v4872
    %4889 = vst [vmem:[#allocation2 + $0x6f8] sm:$0xff] %v4873
    %4890 = vrot.lane.b32.xlu0 %v3562, 112
    %v4891 = vpop.permute.xlu0 %4890
    %4892 = vrot.lane.b32.xlu0 %v3563, 112
    %v4893 = vpop.permute.xlu0 %4892
    %4894 = vrot.lane.b32.xlu0 %v3564, 112
    %v4895 = vpop.permute.xlu0 %4894
    %4896 = vrot.lane.b32.xlu0 %v3565, 112
    %v4897 = vpop.permute.xlu0 %4896
    %4898 = vrot.lane.b32.xlu0 %v3566, 112
    %v4899 = vpop.permute.xlu0 %4898
    %4900 = vrot.lane.b32.xlu0 %v3567, 112
    %v4901 = vpop.permute.xlu0 %4900
    %4902 = vrot.lane.b32.xlu0 %v3568, 112
    %v4903 = vpop.permute.xlu0 %4902
    %4904 = vrot.lane.b32.xlu0 %v3569, 112
    %v4905 = vpop.permute.xlu0 %4904
    %4906 = vrot.lane.b32.xlu0 %v3570, 112
    %v4907 = vpop.permute.xlu0 %4906
    %4908 = vrot.lane.b32.xlu0 %v3571, 112
    %v4909 = vpop.permute.xlu0 %4908
    %4910 = vrot.lane.b32.xlu0 %v3572, 112
    %v4911 = vpop.permute.xlu0 %4910
    %4912 = vrot.lane.b32.xlu0 %v3573, 112
    %v4913 = vpop.permute.xlu0 %4912
    %4914 = vrot.lane.b32.xlu0 %v3574, 112
    %v4915 = vpop.permute.xlu0 %4914
    %4916 = vrot.lane.b32.xlu0 %v3575, 112
    %v4917 = vpop.permute.xlu0 %4916
    %4918 = vrot.lane.b32.xlu0 %v3576, 112
    %v4919 = vpop.permute.xlu0 %4918
    %4920 = vrot.lane.b32.xlu0 %v3577, 112
    %v4921 = vpop.permute.xlu0 %4920
    %4922 = vrot.lane.b32.xlu0 %v3578, 112
    %v4923 = vpop.permute.xlu0 %4922
    %4924 = vrot.lane.b32.xlu0 %v3579, 112
    %v4925 = vpop.permute.xlu0 %4924
    %4926 = vrot.lane.b32.xlu0 %v3580, 112
    %v4927 = vpop.permute.xlu0 %4926
    %4928 = vrot.lane.b32.xlu0 %v3581, 112
    %v4929 = vpop.permute.xlu0 %4928
    %4930 = vrot.lane.b32.xlu0 %v3582, 112
    %v4931 = vpop.permute.xlu0 %4930
    %4932 = vrot.lane.b32.xlu0 %v3583, 112
    %v4933 = vpop.permute.xlu0 %4932
    %4934 = vrot.lane.b32.xlu0 %v3584, 112
    %v4935 = vpop.permute.xlu0 %4934
    %4936 = vrot.lane.b32.xlu0 %v3585, 112
    %v4937 = vpop.permute.xlu0 %4936
    %4938 = vrot.lane.b32.xlu0 %v3586, 112
    %v4939 = vpop.permute.xlu0 %4938
    %4940 = vrot.lane.b32.xlu0 %v3587, 112
    %v4941 = vpop.permute.xlu0 %4940
    %4942 = vrot.lane.b32.xlu0 %v3588, 112
    %v4943 = vpop.permute.xlu0 %4942
    %4944 = vrot.lane.b32.xlu0 %v3589, 112
    %v4945 = vpop.permute.xlu0 %4944
    %4946 = vrot.lane.b32.xlu0 %v3590, 112
    %v4947 = vpop.permute.xlu0 %4946
    %4948 = vrot.lane.b32.xlu0 %v3591, 112
    %v4949 = vpop.permute.xlu0 %4948
    %4950 = vrot.lane.b32.xlu0 %v3592, 112
    %v4951 = vpop.permute.xlu0 %4950
    %4952 = vrot.lane.b32.xlu0 %v3593, 112
    %v4953 = vpop.permute.xlu0 %4952
    %v4954 = vsel %vm1550, %v4891, %v4893
    %v4955 = vsel %vm1550, %v4893, %v4895
    %v4956 = vsel %vm1550, %v4895, %v4897
    %v4957 = vsel %vm1550, %v4899, %v4901
    %v4958 = vsel %vm1550, %v4901, %v4903
    %v4959 = vsel %vm1550, %v4903, %v4905
    %v4960 = vsel %vm1550, %v4907, %v4909
    %v4961 = vsel %vm1550, %v4909, %v4911
    %v4962 = vsel %vm1550, %v4911, %v4913
    %v4963 = vsel %vm1550, %v4915, %v4917
    %v4964 = vsel %vm1550, %v4917, %v4919
    %v4965 = vsel %vm1550, %v4919, %v4921
    %v4966 = vsel %vm1550, %v4923, %v4925
    %v4967 = vsel %vm1550, %v4925, %v4927
    %v4968 = vsel %vm1550, %v4927, %v4929
    %v4969 = vsel %vm1550, %v4931, %v4933
    %v4970 = vsel %vm1550, %v4933, %v4935
    %v4971 = vsel %vm1550, %v4935, %v4937
    %v4972 = vsel %vm1550, %v4939, %v4941
    %v4973 = vsel %vm1550, %v4941, %v4943
    %v4974 = vsel %vm1550, %v4943, %v4945
    %v4975 = vsel %vm1550, %v4947, %v4949
    %v4976 = vsel %vm1550, %v4949, %v4951
    %v4977 = vsel %vm1550, %v4951, %v4953
    %v5018 = vsel %vm1550, %v4897, %v4891
    %v5019 = vsel %vm1550, %v4905, %v4899
    %v5020 = vsel %vm1550, %v4913, %v4907
    %v5021 = vsel %vm1550, %v4921, %v4915
    %v5022 = vsel %vm1550, %v4929, %v4923
    %v5023 = vsel %vm1550, %v4937, %v4931
    %v5024 = vsel %vm1550, %v4945, %v4939
    %v5025 = vsel %vm1550, %v4953, %v4947
    %v5026 = vmul.f32 %v4954, %v3253
    %v5027 = vmul.f32 %v4955, %v3257
    %v5028 = vmul.f32 %v4956, %v3261
    %v5029 = vmul.f32 %v5018, %v3265
    %v5030 = vmul.f32 %v4957, %v3253
    %v5031 = vmul.f32 %v4958, %v3257
    %v5032 = vmul.f32 %v4959, %v3261
    %v5033 = vmul.f32 %v5019, %v3265
    %v5034 = vmul.f32 %v4960, %v3253
    %v5035 = vmul.f32 %v4961, %v3257
    %v5036 = vmul.f32 %v4962, %v3261
    %v5037 = vmul.f32 %v5020, %v3265
    %v5038 = vmul.f32 %v4963, %v3253
    %v5039 = vmul.f32 %v4964, %v3257
    %v5040 = vmul.f32 %v4965, %v3261
    %v5041 = vmul.f32 %v5021, %v3265
    %v5042 = vmul.f32 %v4966, %v3253
    %v5043 = vmul.f32 %v4967, %v3257
    %v5044 = vmul.f32 %v4968, %v3261
    %v5045 = vmul.f32 %v5022, %v3265
    %v5046 = vmul.f32 %v4969, %v3253
    %v5047 = vmul.f32 %v4970, %v3257
    %v5048 = vmul.f32 %v4971, %v3261
    %v5049 = vmul.f32 %v5023, %v3265
    %v5050 = vmul.f32 %v4972, %v3253
    %v5051 = vmul.f32 %v4973, %v3257
    %v5052 = vmul.f32 %v4974, %v3261
    %v5053 = vmul.f32 %v5024, %v3265
    %v5054 = vmul.f32 %v4975, %v3253
    %v5055 = vmul.f32 %v4976, %v3257
    %v5056 = vmul.f32 %v4977, %v3261
    %v5057 = vmul.f32 %v5025, %v3265
    %v5058 = vpack.c.bf16 %v5030, %v5026
    %v5059 = vpack.c.bf16 %v5031, %v5027
    %v5060 = vpack.c.bf16 %v5032, %v5028
    %v5061 = vpack.c.bf16 %v5033, %v5029
    %v5062 = vpack.c.bf16 %v5038, %v5034
    %v5063 = vpack.c.bf16 %v5039, %v5035
    %v5064 = vpack.c.bf16 %v5040, %v5036
    %v5065 = vpack.c.bf16 %v5041, %v5037
    %v5066 = vpack.c.bf16 %v5046, %v5042
    %v5067 = vpack.c.bf16 %v5047, %v5043
    %v5068 = vpack.c.bf16 %v5048, %v5044
    %v5069 = vpack.c.bf16 %v5049, %v5045
    %v5070 = vpack.c.bf16 %v5054, %v5050
    %v5071 = vpack.c.bf16 %v5055, %v5051
    %v5072 = vpack.c.bf16 %v5056, %v5052
    %v5073 = vpack.c.bf16 %v5057, %v5053
    %5074 = vst [vmem:[#allocation2 + $0x720] sm:$0xff] %v5058
    %5075 = vst [vmem:[#allocation2 + $0x728] sm:$0xff] %v5059
    %5076 = vst [vmem:[#allocation2 + $0x730] sm:$0xff] %v5060
    %5077 = vst [vmem:[#allocation2 + $0x738] sm:$0xff] %v5061
    %5078 = vst [vmem:[#allocation2 + $0x760] sm:$0xff] %v5062
    %5079 = vst [vmem:[#allocation2 + $0x768] sm:$0xff] %v5063
    %5080 = vst [vmem:[#allocation2 + $0x770] sm:$0xff] %v5064
    %5081 = vst [vmem:[#allocation2 + $0x778] sm:$0xff] %v5065
    %5082 = vst [vmem:[#allocation2 + $0x7a0] sm:$0xff] %v5066
    %5083 = vst [vmem:[#allocation2 + $0x7a8] sm:$0xff] %v5067
    %5084 = vst [vmem:[#allocation2 + $0x7b0] sm:$0xff] %v5068
    %5085 = vst [vmem:[#allocation2 + $0x7b8] sm:$0xff] %v5069
    %5086 = vst [vmem:[#allocation2 + $0x7e0] sm:$0xff] %v5070
    %5087 = vst [vmem:[#allocation2 + $0x7e8] sm:$0xff] %v5071
    %5088 = vst [vmem:[#allocation2 + $0x7f0] sm:$0xff] %v5072
    %5089 = vst [vmem:[#allocation2 + $0x7f8] sm:$0xff] %v5073
    %5090 = vrot.lane.b32.xlu0 %v3562, 111
    %v5091 = vpop.permute.xlu0 %5090
    %5092 = vrot.lane.b32.xlu0 %v3563, 111
    %v5093 = vpop.permute.xlu0 %5092
    %5094 = vrot.lane.b32.xlu0 %v3564, 111
    %v5095 = vpop.permute.xlu0 %5094
    %5096 = vrot.lane.b32.xlu0 %v3565, 111
    %v5097 = vpop.permute.xlu0 %5096
    %5098 = vrot.lane.b32.xlu0 %v3566, 111
    %v5099 = vpop.permute.xlu0 %5098
    %5100 = vrot.lane.b32.xlu0 %v3567, 111
    %v5101 = vpop.permute.xlu0 %5100
    %5102 = vrot.lane.b32.xlu0 %v3568, 111
    %v5103 = vpop.permute.xlu0 %5102
    %5104 = vrot.lane.b32.xlu0 %v3569, 111
    %v5105 = vpop.permute.xlu0 %5104
    %5106 = vrot.lane.b32.xlu0 %v3570, 111
    %v5107 = vpop.permute.xlu0 %5106
    %5108 = vrot.lane.b32.xlu0 %v3571, 111
    %v5109 = vpop.permute.xlu0 %5108
    %5110 = vrot.lane.b32.xlu0 %v3572, 111
    %v5111 = vpop.permute.xlu0 %5110
    %5112 = vrot.lane.b32.xlu0 %v3573, 111
    %v5113 = vpop.permute.xlu0 %5112
    %5114 = vrot.lane.b32.xlu0 %v3574, 111
    %v5115 = vpop.permute.xlu0 %5114
    %5116 = vrot.lane.b32.xlu0 %v3575, 111
    %v5117 = vpop.permute.xlu0 %5116
    %5118 = vrot.lane.b32.xlu0 %v3576, 111
    %v5119 = vpop.permute.xlu0 %5118
    %5120 = vrot.lane.b32.xlu0 %v3577, 111
    %v5121 = vpop.permute.xlu0 %5120
    %5122 = vrot.lane.b32.xlu0 %v3578, 111
    %v5123 = vpop.permute.xlu0 %5122
    %5124 = vrot.lane.b32.xlu0 %v3579, 111
    %v5125 = vpop.permute.xlu0 %5124
    %5126 = vrot.lane.b32.xlu0 %v3580, 111
    %v5127 = vpop.permute.xlu0 %5126
    %5128 = vrot.lane.b32.xlu0 %v3581, 111
    %v5129 = vpop.permute.xlu0 %5128
    %5130 = vrot.lane.b32.xlu0 %v3582, 111
    %v5131 = vpop.permute.xlu0 %5130
    %5132 = vrot.lane.b32.xlu0 %v3583, 111
    %v5133 = vpop.permute.xlu0 %5132
    %5134 = vrot.lane.b32.xlu0 %v3584, 111
    %v5135 = vpop.permute.xlu0 %5134
    %5136 = vrot.lane.b32.xlu0 %v3585, 111
    %v5137 = vpop.permute.xlu0 %5136
    %5138 = vrot.lane.b32.xlu0 %v3586, 111
    %v5139 = vpop.permute.xlu0 %5138
    %5140 = vrot.lane.b32.xlu0 %v3587, 111
    %v5141 = vpop.permute.xlu0 %5140
    %5142 = vrot.lane.b32.xlu0 %v3588, 111
    %v5143 = vpop.permute.xlu0 %5142
    %5144 = vrot.lane.b32.xlu0 %v3589, 111
    %v5145 = vpop.permute.xlu0 %5144
    %5146 = vrot.lane.b32.xlu0 %v3590, 111
    %v5147 = vpop.permute.xlu0 %5146
    %5148 = vrot.lane.b32.xlu0 %v3591, 111
    %v5149 = vpop.permute.xlu0 %5148
    %5150 = vrot.lane.b32.xlu0 %v3592, 111
    %v5151 = vpop.permute.xlu0 %5150
    %5152 = vrot.lane.b32.xlu0 %v3593, 111
    %v5153 = vpop.permute.xlu0 %5152
    %v5154 = vsel %vm1612, %v5091, %v5093
    %v5155 = vsel %vm1612, %v5093, %v5095
    %v5156 = vsel %vm1612, %v5095, %v5097
    %v5157 = vsel %vm1612, %v5099, %v5101
    %v5158 = vsel %vm1612, %v5101, %v5103
    %v5159 = vsel %vm1612, %v5103, %v5105
    %v5160 = vsel %vm1612, %v5107, %v5109
    %v5161 = vsel %vm1612, %v5109, %v5111
    %v5162 = vsel %vm1612, %v5111, %v5113
    %v5163 = vsel %vm1612, %v5115, %v5117
    %v5164 = vsel %vm1612, %v5117, %v5119
    %v5165 = vsel %vm1612, %v5119, %v5121
    %v5166 = vsel %vm1612, %v5123, %v5125
    %v5167 = vsel %vm1612, %v5125, %v5127
    %v5168 = vsel %vm1612, %v5127, %v5129
    %v5169 = vsel %vm1612, %v5131, %v5133
    %v5170 = vsel %vm1612, %v5133, %v5135
    %v5171 = vsel %vm1612, %v5135, %v5137
    %v5172 = vsel %vm1612, %v5139, %v5141
    %v5173 = vsel %vm1612, %v5141, %v5143
    %v5174 = vsel %vm1612, %v5143, %v5145
    %v5175 = vsel %vm1612, %v5147, %v5149
    %v5176 = vsel %vm1612, %v5149, %v5151
    %v5177 = vsel %vm1612, %v5151, %v5153
    %v5218 = vsel %vm1612, %v5097, %v5091
    %v5219 = vsel %vm1612, %v5105, %v5099
    %v5220 = vsel %vm1612, %v5113, %v5107
    %v5221 = vsel %vm1612, %v5121, %v5115
    %v5222 = vsel %vm1612, %v5129, %v5123
    %v5223 = vsel %vm1612, %v5137, %v5131
    %v5224 = vsel %vm1612, %v5145, %v5139
    %v5225 = vsel %vm1612, %v5153, %v5147
    %v5226 = vmul.f32 %v5154, %v3469
    %v5227 = vmul.f32 %v5155, %v3473
    %v5228 = vmul.f32 %v5156, %v3477
    %v5229 = vmul.f32 %v5218, %v3481
    %v5230 = vmul.f32 %v5157, %v3469
    %v5231 = vmul.f32 %v5158, %v3473
    %v5232 = vmul.f32 %v5159, %v3477
    %v5233 = vmul.f32 %v5219, %v3481
    %v5234 = vmul.f32 %v5160, %v3469
    %v5235 = vmul.f32 %v5161, %v3473
    %v5236 = vmul.f32 %v5162, %v3477
    %v5237 = vmul.f32 %v5220, %v3481
    %v5238 = vmul.f32 %v5163, %v3469
    %v5239 = vmul.f32 %v5164, %v3473
    %v5240 = vmul.f32 %v5165, %v3477
    %v5241 = vmul.f32 %v5221, %v3481
    %v5242 = vmul.f32 %v5166, %v3469
    %v5243 = vmul.f32 %v5167, %v3473
    %v5244 = vmul.f32 %v5168, %v3477
    %v5245 = vmul.f32 %v5222, %v3481
    %v5246 = vmul.f32 %v5169, %v3469
    %v5247 = vmul.f32 %v5170, %v3473
    %v5248 = vmul.f32 %v5171, %v3477
    %v5249 = vmul.f32 %v5223, %v3481
    %v5250 = vmul.f32 %v5172, %v3469
    %v5251 = vmul.f32 %v5173, %v3473
    %v5252 = vmul.f32 %v5174, %v3477
    %v5253 = vmul.f32 %v5224, %v3481
    %v5254 = vmul.f32 %v5175, %v3469
    %v5255 = vmul.f32 %v5176, %v3473
    %v5256 = vmul.f32 %v5177, %v3477
    %v5257 = vmul.f32 %v5225, %v3481
    %v5258 = vpack.c.bf16 %v5230, %v5226
    %v5259 = vpack.c.bf16 %v5231, %v5227
    %v5260 = vpack.c.bf16 %v5232, %v5228
    %v5261 = vpack.c.bf16 %v5233, %v5229
    %v5262 = vpack.c.bf16 %v5238, %v5234
    %v5263 = vpack.c.bf16 %v5239, %v5235
    %v5264 = vpack.c.bf16 %v5240, %v5236
    %v5265 = vpack.c.bf16 %v5241, %v5237
    %v5266 = vpack.c.bf16 %v5246, %v5242
    %v5267 = vpack.c.bf16 %v5247, %v5243
    %v5268 = vpack.c.bf16 %v5248, %v5244
    %v5269 = vpack.c.bf16 %v5249, %v5245
    %v5270 = vpack.c.bf16 %v5254, %v5250
    %v5271 = vpack.c.bf16 %v5255, %v5251
    %v5272 = vpack.c.bf16 %v5256, %v5252
    %v5273 = vpack.c.bf16 %v5257, %v5253
    %5274 = vst [vmem:[#allocation2 + $0x820] sm:$0xff] %v5258
    %5275 = vst [vmem:[#allocation2 + $0x828] sm:$0xff] %v5259
    %5276 = vst [vmem:[#allocation2 + $0x830] sm:$0xff] %v5260
    %5277 = vst [vmem:[#allocation2 + $0x838] sm:$0xff] %v5261
    %5278 = vst [vmem:[#allocation2 + $0x860] sm:$0xff] %v5262
    %5279 = vst [vmem:[#allocation2 + $0x868] sm:$0xff] %v5263
    %5280 = vst [vmem:[#allocation2 + $0x870] sm:$0xff] %v5264
    %5281 = vst [vmem:[#allocation2 + $0x878] sm:$0xff] %v5265
    %5282 = vst [vmem:[#allocation2 + $0x8a0] sm:$0xff] %v5266
    %5283 = vst [vmem:[#allocation2 + $0x8a8] sm:$0xff] %v5267
    %5284 = vst [vmem:[#allocation2 + $0x8b0] sm:$0xff] %v5268
    %5285 = vst [vmem:[#allocation2 + $0x8b8] sm:$0xff] %v5269
    %5286 = vst [vmem:[#allocation2 + $0x8e0] sm:$0xff] %v5270
    %5287 = vst [vmem:[#allocation2 + $0x8e8] sm:$0xff] %v5271
    %5288 = vst [vmem:[#allocation2 + $0x8f0] sm:$0xff] %v5272
    %5289 = vst [vmem:[#allocation2 + $0x8f8] sm:$0xff] %v5273
    %v5290 = vld [vmem:[%s12] sm:$0xff]
    %v5291 = vld [vmem:[%s12 + $0x8] sm:$0xff]
    %v5292 = vld [vmem:[%s12 + $0x10] sm:$0xf]
    %v5293 = vld [vmem:[%s12 + $0x14] sm:$0xff]
    %v5294 = vld [vmem:[%s12 + $0x1c] sm:$0xff]
    %v5295 = vld [vmem:[%s12 + $0x24] sm:$0xf]
    %v5296 = vld [vmem:[%s12 + $0x28] sm:$0xff]
    %v5297 = vld [vmem:[%s12 + $0x30] sm:$0xff]
    %v5298 = vld [vmem:[%s12 + $0x38] sm:$0xf]
    %v5299 = vld [vmem:[%s12 + $0x3c] sm:$0xff]
    %v5300 = vld [vmem:[%s12 + $0x44] sm:$0xff]
    %v5301 = vld [vmem:[%s12 + $0x4c] sm:$0xf]
    %v5302 = vld [vmem:[%s12 + $0x50] sm:$0xff]
    %v5303 = vld [vmem:[%s12 + $0x58] sm:$0xff]
    %v5304 = vld [vmem:[%s12 + $0x60] sm:$0xf]
    %v5305 = vld [vmem:[%s12 + $0x64] sm:$0xff]
    %v5306 = vld [vmem:[%s12 + $0x6c] sm:$0xff]
    %v5307 = vld [vmem:[%s12 + $0x74] sm:$0xf]
    %v5308 = vld [vmem:[%s12 + $0x78] sm:$0xff]
    %v5309 = vld [vmem:[%s12 + $0x80] sm:$0xff]
    %v5310 = vld [vmem:[%s12 + $0x88] sm:$0xf]
    %v5311 = vld [vmem:[%s12 + $0x8c] sm:$0xff]
    %v5312 = vld [vmem:[%s12 + $0x94] sm:$0xff]
    %v5313 = vld [vmem:[%s12 + $0x9c] sm:$0xf]
    %v5314 = vld [vmem:[#allocation2] sm:$0xff]
    %v5315 = vld [vmem:[#allocation2 + $0x8] sm:$0xff]
    %v5316 = vld [vmem:[#allocation2 + $0x10] sm:$0xff]
    %v5317 = vld [vmem:[#allocation2 + $0x18] sm:$0xff]
    %v5318 = vld [vmem:[#allocation2 + $0x20] sm:$0xff]
    %v5319 = vld [vmem:[#allocation2 + $0x28] sm:$0xff]
    %v5320 = vld [vmem:[#allocation2 + $0x30] sm:$0xff]
    %v5321 = vld [vmem:[#allocation2 + $0x38] sm:$0xff]
    %v5322 = vld [vmem:[#allocation2 + $0x40] sm:$0xff]
    %v5323 = vld [vmem:[#allocation2 + $0x48] sm:$0xff]
    %v5324 = vld [vmem:[#allocation2 + $0x50] sm:$0xff]
    %v5325 = vld [vmem:[#allocation2 + $0x58] sm:$0xff]
    %v5326 = vld [vmem:[#allocation2 + $0x60] sm:$0xff]
    %v5327 = vld [vmem:[#allocation2 + $0x68] sm:$0xff]
    %v5328 = vld [vmem:[#allocation2 + $0x70] sm:$0xff]
    %v5329 = vld [vmem:[#allocation2 + $0x78] sm:$0xff]
    %v5330 = vld [vmem:[#allocation2 + $0x80] sm:$0xff]
    %v5331 = vld [vmem:[#allocation2 + $0x88] sm:$0xff]
    %v5332 = vld [vmem:[#allocation2 + $0x90] sm:$0xff]
    %v5333 = vld [vmem:[#allocation2 + $0x98] sm:$0xff]
    %v5334 = vld [vmem:[#allocation2 + $0xa0] sm:$0xff]
    %v5335 = vld [vmem:[#allocation2 + $0xa8] sm:$0xff]
    %v5336 = vld [vmem:[#allocation2 + $0xb0] sm:$0xff]
    %v5337 = vld [vmem:[#allocation2 + $0xb8] sm:$0xff]
    %v5338 = vld [vmem:[#allocation2 + $0xc0] sm:$0xff]
    %v5339 = vld [vmem:[#allocation2 + $0xc8] sm:$0xff]
    %v5340 = vld [vmem:[#allocation2 + $0xd0] sm:$0xff]
    %v5341 = vld [vmem:[#allocation2 + $0xd8] sm:$0xff]
    %v5342 = vld [vmem:[#allocation2 + $0xe0] sm:$0xff]
    %v5343 = vld [vmem:[#allocation2 + $0xe8] sm:$0xff]
    %v5344 = vld [vmem:[#allocation2 + $0xf0] sm:$0xff]
    %v5345 = vld [vmem:[#allocation2 + $0xf8] sm:$0xff]
    %v5346 = vld [vmem:[#allocation2 + $0x100] sm:$0xff]
    %v5347 = vld [vmem:[#allocation2 + $0x108] sm:$0xff]
    %v5348 = vld [vmem:[#allocation2 + $0x110] sm:$0xff]
    %v5349 = vld [vmem:[#allocation2 + $0x118] sm:$0xff]
    %v5350 = vld [vmem:[#allocation2 + $0x120] sm:$0xff]
    %v5351 = vld [vmem:[#allocation2 + $0x128] sm:$0xff]
    %v5352 = vld [vmem:[#allocation2 + $0x130] sm:$0xff]
    %v5353 = vld [vmem:[#allocation2 + $0x138] sm:$0xff]
    %v5354 = vld [vmem:[#allocation2 + $0x140] sm:$0xff]
    %v5355 = vld [vmem:[#allocation2 + $0x148] sm:$0xff]
    %v5356 = vld [vmem:[#allocation2 + $0x150] sm:$0xff]
    %v5357 = vld [vmem:[#allocation2 + $0x158] sm:$0xff]
    %v5358 = vld [vmem:[#allocation2 + $0x160] sm:$0xff]
    %v5359 = vld [vmem:[#allocation2 + $0x168] sm:$0xff]
    %v5360 = vld [vmem:[#allocation2 + $0x170] sm:$0xff]
    %v5361 = vld [vmem:[#allocation2 + $0x178] sm:$0xff]
    %v5362 = vld [vmem:[#allocation2 + $0x180] sm:$0xff]
    %v5363 = vld [vmem:[#allocation2 + $0x188] sm:$0xff]
    %v5364 = vld [vmem:[#allocation2 + $0x190] sm:$0xff]
    %v5365 = vld [vmem:[#allocation2 + $0x198] sm:$0xff]
    %v5366 = vld [vmem:[#allocation2 + $0x1a0] sm:$0xff]
    %v5367 = vld [vmem:[#allocation2 + $0x1a8] sm:$0xff]
    %v5368 = vld [vmem:[#allocation2 + $0x1b0] sm:$0xff]
    %v5369 = vld [vmem:[#allocation2 + $0x1b8] sm:$0xff]
    %v5370 = vld [vmem:[#allocation2 + $0x1c0] sm:$0xff]
    %v5371 = vld [vmem:[#allocation2 + $0x1c8] sm:$0xff]
    %v5372 = vld [vmem:[#allocation2 + $0x1d0] sm:$0xff]
    %v5373 = vld [vmem:[#allocation2 + $0x1d8] sm:$0xff]
    %v5374 = vld [vmem:[#allocation2 + $0x1e0] sm:$0xff]
    %v5375 = vld [vmem:[#allocation2 + $0x1e8] sm:$0xff]
    %v5376 = vld [vmem:[#allocation2 + $0x1f0] sm:$0xff]
    %v5377 = vld [vmem:[#allocation2 + $0x1f8] sm:$0xff]
    %v5378 = vld [vmem:[#allocation2 + $0x200] sm:$0xff]
    %v5379 = vld [vmem:[#allocation2 + $0x208] sm:$0xff]
    %v5380 = vld [vmem:[#allocation2 + $0x210] sm:$0xff]
    %v5381 = vld [vmem:[#allocation2 + $0x218] sm:$0xff]
    %v5382 = vld [vmem:[#allocation2 + $0x220] sm:$0xff]
    %v5383 = vld [vmem:[#allocation2 + $0x228] sm:$0xff]
    %v5384 = vld [vmem:[#allocation2 + $0x230] sm:$0xff]
    %v5385 = vld [vmem:[#allocation2 + $0x238] sm:$0xff]
    %v5386 = vld [vmem:[#allocation2 + $0x240] sm:$0xff]
    %v5387 = vld [vmem:[#allocation2 + $0x248] sm:$0xff]
    %v5388 = vld [vmem:[#allocation2 + $0x250] sm:$0xff]
    %v5389 = vld [vmem:[#allocation2 + $0x258] sm:$0xff]
    %v5390 = vld [vmem:[#allocation2 + $0x260] sm:$0xff]
    %v5391 = vld [vmem:[#allocation2 + $0x268] sm:$0xff]
    %v5392 = vld [vmem:[#allocation2 + $0x270] sm:$0xff]
    %v5393 = vld [vmem:[#allocation2 + $0x278] sm:$0xff]
    %v5394 = vld [vmem:[#allocation2 + $0x280] sm:$0xff]
    %v5395 = vld [vmem:[#allocation2 + $0x288] sm:$0xff]
    %v5396 = vld [vmem:[#allocation2 + $0x290] sm:$0xff]
    %v5397 = vld [vmem:[#allocation2 + $0x298] sm:$0xff]
    %v5398 = vld [vmem:[#allocation2 + $0x2a0] sm:$0xff]
    %v5399 = vld [vmem:[#allocation2 + $0x2a8] sm:$0xff]
    %v5400 = vld [vmem:[#allocation2 + $0x2b0] sm:$0xff]
    %v5401 = vld [vmem:[#allocation2 + $0x2b8] sm:$0xff]
    %v5402 = vld [vmem:[#allocation2 + $0x2c0] sm:$0xff]
    %v5403 = vld [vmem:[#allocation2 + $0x2c8] sm:$0xff]
    %v5404 = vld [vmem:[#allocation2 + $0x2d0] sm:$0xff]
    %v5405 = vld [vmem:[#allocation2 + $0x2d8] sm:$0xff]
    %v5406 = vld [vmem:[#allocation2 + $0x2e0] sm:$0xff]
    %v5407 = vld [vmem:[#allocation2 + $0x2e8] sm:$0xff]
    %v5408 = vld [vmem:[#allocation2 + $0x2f0] sm:$0xff]
    %v5409 = vld [vmem:[#allocation2 + $0x2f8] sm:$0xff]
    %v5410 = vld [vmem:[#allocation2 + $0x300] sm:$0xff]
    %v5411 = vld [vmem:[#allocation2 + $0x308] sm:$0xff]
    %v5412 = vld [vmem:[#allocation2 + $0x310] sm:$0xff]
    %v5413 = vld [vmem:[#allocation2 + $0x318] sm:$0xff]
    %v5414 = vld [vmem:[#allocation2 + $0x320] sm:$0xff]
    %v5415 = vld [vmem:[#allocation2 + $0x328] sm:$0xff]
    %v5416 = vld [vmem:[#allocation2 + $0x330] sm:$0xff]
    %v5417 = vld [vmem:[#allocation2 + $0x338] sm:$0xff]
    %v5418 = vld [vmem:[#allocation2 + $0x340] sm:$0xff]
    %v5419 = vld [vmem:[#allocation2 + $0x348] sm:$0xff]
    %v5420 = vld [vmem:[#allocation2 + $0x350] sm:$0xff]
    %v5421 = vld [vmem:[#allocation2 + $0x358] sm:$0xff]
    %v5422 = vld [vmem:[#allocation2 + $0x360] sm:$0xff]
    %v5423 = vld [vmem:[#allocation2 + $0x368] sm:$0xff]
    %v5424 = vld [vmem:[#allocation2 + $0x370] sm:$0xff]
    %v5425 = vld [vmem:[#allocation2 + $0x378] sm:$0xff]
    %v5426 = vld [vmem:[#allocation2 + $0x380] sm:$0xff]
    %v5427 = vld [vmem:[#allocation2 + $0x388] sm:$0xff]
    %v5428 = vld [vmem:[#allocation2 + $0x390] sm:$0xff]
    %v5429 = vld [vmem:[#allocation2 + $0x398] sm:$0xff]
    %v5430 = vld [vmem:[#allocation2 + $0x3a0] sm:$0xff]
    %v5431 = vld [vmem:[#allocation2 + $0x3a8] sm:$0xff]
    %v5432 = vld [vmem:[#allocation2 + $0x3b0] sm:$0xff]
    %v5433 = vld [vmem:[#allocation2 + $0x3b8] sm:$0xff]
    %v5434 = vld [vmem:[#allocation2 + $0x3c0] sm:$0xff]
    %v5435 = vld [vmem:[#allocation2 + $0x3c8] sm:$0xff]
    %v5436 = vld [vmem:[#allocation2 + $0x3d0] sm:$0xff]
    %v5437 = vld [vmem:[#allocation2 + $0x3d8] sm:$0xff]
    %v5438 = vld [vmem:[#allocation2 + $0x3e0] sm:$0xff]
    %v5439 = vld [vmem:[#allocation2 + $0x3e8] sm:$0xff]
    %v5440 = vld [vmem:[#allocation2 + $0x3f0] sm:$0xff]
    %v5441 = vld [vmem:[#allocation2 + $0x3f8] sm:$0xff]
    %v5442 = vld [vmem:[#allocation2 + $0x400] sm:$0xff]
    %v5443 = vld [vmem:[#allocation2 + $0x408] sm:$0xff]
    %v5444 = vld [vmem:[#allocation2 + $0x410] sm:$0xff]
    %v5445 = vld [vmem:[#allocation2 + $0x418] sm:$0xff]
    %v5446 = vld [vmem:[#allocation2 + $0x420] sm:$0xff]
    %v5447 = vld [vmem:[#allocation2 + $0x428] sm:$0xff]
    %v5448 = vld [vmem:[#allocation2 + $0x430] sm:$0xff]
    %v5449 = vld [vmem:[#allocation2 + $0x438] sm:$0xff]
    %v5450 = vld [vmem:[#allocation2 + $0x440] sm:$0xff]
    %v5451 = vld [vmem:[#allocation2 + $0x448] sm:$0xff]
    %v5452 = vld [vmem:[#allocation2 + $0x450] sm:$0xff]
    %v5453 = vld [vmem:[#allocation2 + $0x458] sm:$0xff]
    %v5454 = vld [vmem:[#allocation2 + $0x460] sm:$0xff]
    %v5455 = vld [vmem:[#allocation2 + $0x468] sm:$0xff]
    %v5456 = vld [vmem:[#allocation2 + $0x470] sm:$0xff]
    %v5457 = vld [vmem:[#allocation2 + $0x478] sm:$0xff]
    %v5458 = vld [vmem:[#allocation2 + $0x480] sm:$0xff]
    %v5459 = vld [vmem:[#allocation2 + $0x488] sm:$0xff]
    %v5460 = vld [vmem:[#allocation2 + $0x490] sm:$0xff]
    %v5461 = vld [vmem:[#allocation2 + $0x498] sm:$0xff]
    %v5462 = vld [vmem:[#allocation2 + $0x4a0] sm:$0xff]
    %v5463 = vld [vmem:[#allocation2 + $0x4a8] sm:$0xff]
    %v5464 = vld [vmem:[#allocation2 + $0x4b0] sm:$0xff]
    %v5465 = vld [vmem:[#allocation2 + $0x4b8] sm:$0xff]
    %v5466 = vld [vmem:[#allocation2 + $0x4c0] sm:$0xff]
    %v5467 = vld [vmem:[#allocation2 + $0x4c8] sm:$0xff]
    %v5468 = vld [vmem:[#allocation2 + $0x4d0] sm:$0xff]
    %v5469 = vld [vmem:[#allocation2 + $0x4d8] sm:$0xff]
    %v5470 = vld [vmem:[#allocation2 + $0x4e0] sm:$0xff]
    %v5471 = vld [vmem:[#allocation2 + $0x4e8] sm:$0xff]
    %v5472 = vld [vmem:[#allocation2 + $0x4f0] sm:$0xff]
    %v5473 = vld [vmem:[#allocation2 + $0x4f8] sm:$0xff]
    %v5474 = vld [vmem:[#allocation2 + $0x500] sm:$0xff]
    %v5475 = vld [vmem:[#allocation2 + $0x508] sm:$0xff]
    %v5476 = vld [vmem:[#allocation2 + $0x510] sm:$0xff]
    %v5477 = vld [vmem:[#allocation2 + $0x518] sm:$0xff]
    %v5478 = vld [vmem:[#allocation2 + $0x520] sm:$0xff]
    %v5479 = vld [vmem:[#allocation2 + $0x528] sm:$0xff]
    %v5480 = vld [vmem:[#allocation2 + $0x530] sm:$0xff]
    %v5481 = vld [vmem:[#allocation2 + $0x538] sm:$0xff]
    %v5482 = vld [vmem:[#allocation2 + $0x540] sm:$0xff]
    %v5483 = vld [vmem:[#allocation2 + $0x548] sm:$0xff]
    %v5484 = vld [vmem:[#allocation2 + $0x550] sm:$0xff]
    %v5485 = vld [vmem:[#allocation2 + $0x558] sm:$0xff]
    %v5486 = vld [vmem:[#allocation2 + $0x560] sm:$0xff]
    %v5487 = vld [vmem:[#allocation2 + $0x568] sm:$0xff]
    %v5488 = vld [vmem:[#allocation2 + $0x570] sm:$0xff]
    %v5489 = vld [vmem:[#allocation2 + $0x578] sm:$0xff]
    %v5490 = vld [vmem:[#allocation2 + $0x580] sm:$0xff]
    %v5491 = vld [vmem:[#allocation2 + $0x588] sm:$0xff]
    %v5492 = vld [vmem:[#allocation2 + $0x590] sm:$0xff]
    %v5493 = vld [vmem:[#allocation2 + $0x598] sm:$0xff]
    %v5494 = vld [vmem:[#allocation2 + $0x5a0] sm:$0xff]
    %v5495 = vld [vmem:[#allocation2 + $0x5a8] sm:$0xff]
    %v5496 = vld [vmem:[#allocation2 + $0x5b0] sm:$0xff]
    %v5497 = vld [vmem:[#allocation2 + $0x5b8] sm:$0xff]
    %v5498 = vld [vmem:[#allocation2 + $0x5c0] sm:$0xff]
    %v5499 = vld [vmem:[#allocation2 + $0x5c8] sm:$0xff]
    %v5500 = vld [vmem:[#allocation2 + $0x5d0] sm:$0xff]
    %v5501 = vld [vmem:[#allocation2 + $0x5d8] sm:$0xff]
    %v5502 = vld [vmem:[#allocation2 + $0x5e0] sm:$0xff]
    %v5503 = vld [vmem:[#allocation2 + $0x5e8] sm:$0xff]
    %v5504 = vld [vmem:[#allocation2 + $0x5f0] sm:$0xff]
    %v5505 = vld [vmem:[#allocation2 + $0x5f8] sm:$0xff]
    %v5506 = vld [vmem:[#allocation2 + $0x600] sm:$0xff]
    %v5507 = vld [vmem:[#allocation2 + $0x608] sm:$0xff]
    %v5508 = vld [vmem:[#allocation2 + $0x610] sm:$0xff]
    %v5509 = vld [vmem:[#allocation2 + $0x618] sm:$0xff]
    %v5510 = vld [vmem:[#allocation2 + $0x620] sm:$0xff]
    %v5511 = vld [vmem:[#allocation2 + $0x628] sm:$0xff]
    %v5512 = vld [vmem:[#allocation2 + $0x630] sm:$0xff]
    %v5513 = vld [vmem:[#allocation2 + $0x638] sm:$0xff]
    %v5514 = vld [vmem:[#allocation2 + $0x640] sm:$0xff]
    %v5515 = vld [vmem:[#allocation2 + $0x648] sm:$0xff]
    %v5516 = vld [vmem:[#allocation2 + $0x650] sm:$0xff]
    %v5517 = vld [vmem:[#allocation2 + $0x658] sm:$0xff]
    %v5518 = vld [vmem:[#allocation2 + $0x660] sm:$0xff]
    %v5519 = vld [vmem:[#allocation2 + $0x668] sm:$0xff]
    %v5520 = vld [vmem:[#allocation2 + $0x670] sm:$0xff]
    %v5521 = vld [vmem:[#allocation2 + $0x678] sm:$0xff]
    %v5522 = vld [vmem:[#allocation2 + $0x680] sm:$0xff]
    %v5523 = vld [vmem:[#allocation2 + $0x688] sm:$0xff]
    %v5524 = vld [vmem:[#allocation2 + $0x690] sm:$0xff]
    %v5525 = vld [vmem:[#allocation2 + $0x698] sm:$0xff]
    %v5526 = vld [vmem:[#allocation2 + $0x6a0] sm:$0xff]
    %v5527 = vld [vmem:[#allocation2 + $0x6a8] sm:$0xff]
    %v5528 = vld [vmem:[#allocation2 + $0x6b0] sm:$0xff]
    %v5529 = vld [vmem:[#allocation2 + $0x6b8] sm:$0xff]
    %v5530 = vld [vmem:[#allocation2 + $0x6c0] sm:$0xff]
    %v5531 = vld [vmem:[#allocation2 + $0x6c8] sm:$0xff]
    %v5532 = vld [vmem:[#allocation2 + $0x6d0] sm:$0xff]
    %v5533 = vld [vmem:[#allocation2 + $0x6d8] sm:$0xff]
    %v5534 = vld [vmem:[#allocation2 + $0x6e0] sm:$0xff]
    %v5535 = vld [vmem:[#allocation2 + $0x6e8] sm:$0xff]
    %v5536 = vld [vmem:[#allocation2 + $0x6f0] sm:$0xff]
    %v5537 = vld [vmem:[#allocation2 + $0x6f8] sm:$0xff]
    %v5538 = vld [vmem:[#allocation2 + $0x700] sm:$0xff]
    %v5539 = vld [vmem:[#allocation2 + $0x708] sm:$0xff]
    %v5540 = vld [vmem:[#allocation2 + $0x710] sm:$0xff]
    %v5541 = vld [vmem:[#allocation2 + $0x718] sm:$0xff]
    %v5542 = vld [vmem:[#allocation2 + $0x720] sm:$0xff]
    %v5543 = vld [vmem:[#allocation2 + $0x728] sm:$0xff]
    %v5544 = vld [vmem:[#allocation2 + $0x730] sm:$0xff]
    %v5545 = vld [vmem:[#allocation2 + $0x738] sm:$0xff]
    %v5546 = vld [vmem:[#allocation2 + $0x740] sm:$0xff]
    %v5547 = vld [vmem:[#allocation2 + $0x748] sm:$0xff]
    %v5548 = vld [vmem:[#allocation2 + $0x750] sm:$0xff]
    %v5549 = vld [vmem:[#allocation2 + $0x758] sm:$0xff]
    %v5550 = vld [vmem:[#allocation2 + $0x760] sm:$0xff]
    %v5551 = vld [vmem:[#allocation2 + $0x768] sm:$0xff]
    %v5552 = vld [vmem:[#allocation2 + $0x770] sm:$0xff]
    %v5553 = vld [vmem:[#allocation2 + $0x778] sm:$0xff]
    %v5554 = vld [vmem:[#allocation2 + $0x780] sm:$0xff]
    %v5555 = vld [vmem:[#allocation2 + $0x788] sm:$0xff]
    %v5556 = vld [vmem:[#allocation2 + $0x790] sm:$0xff]
    %v5557 = vld [vmem:[#allocation2 + $0x798] sm:$0xff]
    %v5558 = vld [vmem:[#allocation2 + $0x7a0] sm:$0xff]
    %v5559 = vld [vmem:[#allocation2 + $0x7a8] sm:$0xff]
    %v5560 = vld [vmem:[#allocation2 + $0x7b0] sm:$0xff]
    %v5561 = vld [vmem:[#allocation2 + $0x7b8] sm:$0xff]
    %v5562 = vld [vmem:[#allocation2 + $0x7c0] sm:$0xff]
    %v5563 = vld [vmem:[#allocation2 + $0x7c8] sm:$0xff]
    %v5564 = vld [vmem:[#allocation2 + $0x7d0] sm:$0xff]
    %v5565 = vld [vmem:[#allocation2 + $0x7d8] sm:$0xff]
    %v5566 = vld [vmem:[#allocation2 + $0x7e0] sm:$0xff]
    %v5567 = vld [vmem:[#allocation2 + $0x7e8] sm:$0xff]
    %v5568 = vld [vmem:[#allocation2 + $0x7f0] sm:$0xff]
    %v5569 = vld [vmem:[#allocation2 + $0x7f8] sm:$0xff]
    %v5570 = vld [vmem:[#allocation2 + $0x800] sm:$0xff]
    %v5571 = vld [vmem:[#allocation2 + $0x808] sm:$0xff]
    %v5572 = vld [vmem:[#allocation2 + $0x810] sm:$0xff]
    %v5573 = vld [vmem:[#allocation2 + $0x818] sm:$0xff]
    %v5574 = vld [vmem:[#allocation2 + $0x820] sm:$0xff]
    %v5575 = vld [vmem:[#allocation2 + $0x828] sm:$0xff]
    %v5576 = vld [vmem:[#allocation2 + $0x830] sm:$0xff]
    %v5577 = vld [vmem:[#allocation2 + $0x838] sm:$0xff]
    %v5578 = vld [vmem:[#allocation2 + $0x840] sm:$0xff]
    %v5579 = vld [vmem:[#allocation2 + $0x848] sm:$0xff]
    %v5580 = vld [vmem:[#allocation2 + $0x850] sm:$0xff]
    %v5581 = vld [vmem:[#allocation2 + $0x858] sm:$0xff]
    %v5582 = vld [vmem:[#allocation2 + $0x860] sm:$0xff]
    %v5583 = vld [vmem:[#allocation2 + $0x868] sm:$0xff]
    %v5584 = vld [vmem:[#allocation2 + $0x870] sm:$0xff]
    %v5585 = vld [vmem:[#allocation2 + $0x878] sm:$0xff]
    %v5586 = vld [vmem:[#allocation2 + $0x880] sm:$0xff]
    %v5587 = vld [vmem:[#allocation2 + $0x888] sm:$0xff]
    %v5588 = vld [vmem:[#allocation2 + $0x890] sm:$0xff]
    %v5589 = vld [vmem:[#allocation2 + $0x898] sm:$0xff]
    %v5590 = vld [vmem:[#allocation2 + $0x8a0] sm:$0xff]
    %v5591 = vld [vmem:[#allocation2 + $0x8a8] sm:$0xff]
    %v5592 = vld [vmem:[#allocation2 + $0x8b0] sm:$0xff]
    %v5593 = vld [vmem:[#allocation2 + $0x8b8] sm:$0xff]
    %v5594 = vld [vmem:[#allocation2 + $0x8c0] sm:$0xff]
    %v5595 = vld [vmem:[#allocation2 + $0x8c8] sm:$0xff]
    %v5596 = vld [vmem:[#allocation2 + $0x8d0] sm:$0xff]
    %v5597 = vld [vmem:[#allocation2 + $0x8d8] sm:$0xff]
    %v5598 = vld [vmem:[#allocation2 + $0x8e0] sm:$0xff]
    %v5599 = vld [vmem:[#allocation2 + $0x8e8] sm:$0xff]
    %v5600 = vld [vmem:[#allocation2 + $0x8f0] sm:$0xff]
    %v5601 = vld [vmem:[#allocation2 + $0x8f8] sm:$0xff]
    %v5602 = vld [vmem:[%s13] sm:$0xff]
    %v5603 = vld [vmem:[%s13 + $0x8] sm:$0xff]
    %v5604 = vld [vmem:[%s13 + $0x10] sm:$0xff]
    %v5605 = vld [vmem:[%s13 + $0x18] sm:$0xff]
    %v5606 = vld [vmem:[%s13 + $0x20] sm:$0xff]
    %v5607 = vld [vmem:[%s13 + $0x28] sm:$0xff]
    %v5608 = vld [vmem:[%s13 + $0x30] sm:$0xff]
    %v5609 = vld [vmem:[%s13 + $0x38] sm:$0xff]
    %5611 = vset.pattern.permute.xlu0 0
    %5612 = vperm.xlu0 %5611, %v5602
    %v5613 = vpop.permute.xlu0 %5612
    %5616 = vset.pattern.permute.xlu0 0
    %5617 = vperm.xlu0 %5616, %v5603
    %v5618 = vpop.permute.xlu0 %5617
    %5621 = vset.pattern.permute.xlu0 0
    %5622 = vperm.xlu0 %5621, %v5604
    %v5623 = vpop.permute.xlu0 %5622
    %5626 = vset.pattern.permute.xlu0 0
    %5627 = vperm.xlu0 %5626, %v5605
    %v5628 = vpop.permute.xlu0 %5627
    %5631 = vset.pattern.permute.xlu0 0
    %5632 = vperm.xlu0 %5631, %v5606
    %v5633 = vpop.permute.xlu0 %5632
    %5636 = vset.pattern.permute.xlu0 0
    %5637 = vperm.xlu0 %5636, %v5607
    %v5638 = vpop.permute.xlu0 %5637
    %5641 = vset.pattern.permute.xlu0 0
    %5642 = vperm.xlu0 %5641, %v5608
    %v5643 = vpop.permute.xlu0 %5642
    %5646 = vset.pattern.permute.xlu0 0
    %5647 = vperm.xlu0 %5646, %v5609
    %v5648 = vpop.permute.xlu0 %5647
    %v5674 = vunpack.c.l.b16 %v5290
    %v5675 = vunpack.c.h.b16 %v5290
    %v5676 = vunpack.c.l.b16 %v5291
    %v5677 = vunpack.c.h.b16 %v5291
    %v5678 = vunpack.c.l.b16 %v5292
    %v5679 = vunpack.c.l.b16 %v5293
    %v5680 = vunpack.c.h.b16 %v5293
    %v5681 = vunpack.c.l.b16 %v5294
    %v5682 = vunpack.c.h.b16 %v5294
    %v5683 = vunpack.c.l.b16 %v5295
    %v5684 = vunpack.c.l.b16 %v5296
    %v5685 = vunpack.c.h.b16 %v5296
    %v5686 = vunpack.c.l.b16 %v5297
    %v5687 = vunpack.c.h.b16 %v5297
    %v5688 = vunpack.c.l.b16 %v5298
    %v5689 = vunpack.c.l.b16 %v5299
    %v5690 = vunpack.c.h.b16 %v5299
    %v5691 = vunpack.c.l.b16 %v5300
    %v5692 = vunpack.c.h.b16 %v5300
    %v5693 = vunpack.c.l.b16 %v5301
    %v5694 = vunpack.c.l.b16 %v5302
    %v5695 = vunpack.c.h.b16 %v5302
    %v5696 = vunpack.c.l.b16 %v5303
    %v5697 = vunpack.c.h.b16 %v5303
    %v5698 = vunpack.c.l.b16 %v5304
    %v5699 = vunpack.c.l.b16 %v5305
    %v5700 = vunpack.c.h.b16 %v5305
    %v5701 = vunpack.c.l.b16 %v5306
    %v5702 = vunpack.c.h.b16 %v5306
    %v5703 = vunpack.c.l.b16 %v5307
    %v5704 = vunpack.c.l.b16 %v5308
    %v5705 = vunpack.c.h.b16 %v5308
    %v5706 = vunpack.c.l.b16 %v5309
    %v5707 = vunpack.c.h.b16 %v5309
    %v5708 = vunpack.c.l.b16 %v5310
    %v5709 = vunpack.c.l.b16 %v5311
    %v5710 = vunpack.c.h.b16 %v5311
    %v5711 = vunpack.c.l.b16 %v5312
    %v5712 = vunpack.c.h.b16 %v5312
    %v5713 = vunpack.c.l.b16 %v5313
    %v5714 = vpack.c.b16 %v5679, %v5674
    %v5715 = vpack.c.b16 %v5680, %v5675
    %v5716 = vpack.c.b16 %v5681, %v5676
    %v5717 = vpack.c.b16 %v5682, %v5677
    %v5718 = vpack.c.b16 %v5683, %v5678
    %v5719 = vpack.c.b16 %v5689, %v5684
    %v5720 = vpack.c.b16 %v5690, %v5685
    %v5721 = vpack.c.b16 %v5691, %v5686
    %v5722 = vpack.c.b16 %v5692, %v5687
    %v5723 = vpack.c.b16 %v5693, %v5688
    %v5724 = vpack.c.b16 %v5699, %v5694
    %v5725 = vpack.c.b16 %v5700, %v5695
    %v5726 = vpack.c.b16 %v5701, %v5696
    %v5727 = vpack.c.b16 %v5702, %v5697
    %v5728 = vpack.c.b16 %v5703, %v5698
    %v5729 = vpack.c.b16 %v5709, %v5704
    %v5730 = vpack.c.b16 %v5710, %v5705
    %v5731 = vpack.c.b16 %v5711, %v5706
    %v5732 = vpack.c.b16 %v5712, %v5707
    %v5733 = vpack.c.b16 %v5713, %v5708
    %v5751 = vsel %vm475, %v5718, 0
    %v5754 = vsel %vm475, %v5723, 0
    %v5757 = vsel %vm475, %v5728, 0
    %v5760 = vsel %vm475, %v5733, 0
    %5762 = vmatprep.subr.bf16.mxu0 %v5315
    %5763 = vmatpush1.bf16.msra.mxu0 %v5314
    %5764 = vmatprep.subr.bf16.mxu0 %v5323
    %5765 = vmatpush1.bf16.msra.mxu0 %v5322
    %5766 = vmatprep.subr.bf16.mxu0 %v5331
    %5767 = vmatpush1.bf16.msra.mxu0 %v5330
    %5768 = vmatprep.subr.bf16.mxu0 %v5339
    %5769 = vmatpush1.bf16.msra.mxu0 %v5338
    %5770 = vmatprep.subr.bf16.mxu0 %v5347
    %5771 = vmatpush1.bf16.msra.mxu0 %v5346
    %5772 = vmatprep.subr.bf16.mxu0 %v5355
    %5773 = vmatpush1.bf16.msra.mxu0 %v5354
    %5774 = vmatprep.subr.bf16.mxu0 %v5363
    %5775 = vmatpush1.bf16.msra.mxu0 %v5362
    %5776 = vmatprep.subr.bf16.mxu0 %v5371
    %5777 = vmatpush1.bf16.msra.mxu0 %v5370
    %5778 = vmatprep.subr.bf16.mxu0 %v5379
    %5779 = vmatpush1.bf16.msra.mxu0 %v5378
    %5780 = vmatprep.subr.bf16.mxu0 %v5387
    %5781 = vmatpush1.bf16.msra.mxu0 %v5386
    %5782 = vmatprep.subr.bf16.mxu0 %v5395
    %5783 = vmatpush1.bf16.msra.mxu0 %v5394
    %5784 = vmatprep.subr.bf16.mxu0 %v5403
    %5785 = vmatpush1.bf16.msra.mxu0 %v5402
    %5786 = vmatprep.subr.bf16.mxu0 %v5411
    %5787 = vmatpush1.bf16.msra.mxu0 %v5410
    %5788 = vmatprep.subr.bf16.mxu0 %v5419
    %5789 = vmatpush1.bf16.msra.mxu0 %v5418
    %5790 = vmatprep.subr.bf16.mxu0 %v5427
    %5791 = vmatpush1.bf16.msra.mxu0 %v5426
    %5792 = vmatprep.subr.bf16.mxu0 %v5435
    %5793 = vmatpush1.bf16.msra.mxu0 %v5434
    %5794 = vmatprep.mubr.bf16.mxu0 %v5715
    %5795 = vmatmul.mubr.bf16.gmra.mrb[0].mxu0 %v5714
    %v5796 = vpop.f32.mrb[0].mxu0
    %v5797 = vadd.f32 %v5613, %v5796
    %v5798 = vpop.f32.mrb[0].mxu0
    %v5799 = vadd.f32 %v5613, %v5798
    %v5800 = vpop.f32.mrb[0].mxu0
    %v5801 = vadd.f32 %v5618, %v5800
    %v5802 = vpop.f32.mrb[0].mxu0
    %v5803 = vadd.f32 %v5618, %v5802
    %5804 = vmatprep.mubr.bf16.mxu0 %v5720
    %5805 = vmatmul.mubr.bf16.gmra.mrb[0].mxu0 %v5719
    %v5806 = vpop.f32.mrb[0].mxu0
    %v5807 = vadd.f32 %v5623, %v5806
    %v5808 = vpop.f32.mrb[0].mxu0
    %v5809 = vadd.f32 %v5623, %v5808
    %v5810 = vpop.f32.mrb[0].mxu0
    %v5811 = vadd.f32 %v5628, %v5810
    %v5812 = vpop.f32.mrb[0].mxu0
    %v5813 = vadd.f32 %v5628, %v5812
    %5814 = vmatprep.mubr.bf16.mxu0 %v5725
    %5815 = vmatmul.mubr.bf16.gmra.mrb[0].mxu0 %v5724
    %v5816 = vpop.f32.mrb[0].mxu0
    %v5817 = vadd.f32 %v5633, %v5816
    %v5818 = vpop.f32.mrb[0].mxu0
    %v5819 = vadd.f32 %v5633, %v5818
    %v5820 = vpop.f32.mrb[0].mxu0
    %v5821 = vadd.f32 %v5638, %v5820
    %v5822 = vpop.f32.mrb[0].mxu0
    %v5823 = vadd.f32 %v5638, %v5822
    %5824 = vmatprep.mubr.bf16.mxu0 %v5730
    %5825 = vmatmul.mubr.bf16.gmra.mrb[0].mxu0 %v5729
    %v5826 = vpop.f32.mrb[0].mxu0
    %v5827 = vadd.f32 %v5643, %v5826
    %v5828 = vpop.f32.mrb[0].mxu0
    %v5829 = vadd.f32 %v5643, %v5828
    %v5830 = vpop.f32.mrb[0].mxu0
    %v5831 = vadd.f32 %v5648, %v5830
    %v5832 = vpop.f32.mrb[0].mxu0
    %v5833 = vadd.f32 %v5648, %v5832
    %5834 = vdwg.mxu0
    %5835 = vmatprep.subr.bf16.mxu0 %v5443
    %5836 = vmatpush1.bf16.msra.mxu0 %v5442
    %5837 = vmatprep.subr.bf16.mxu0 %v5451
    %5838 = vmatpush1.bf16.msra.mxu0 %v5450
    %5839 = vmatprep.subr.bf16.mxu0 %v5459
    %5840 = vmatpush1.bf16.msra.mxu0 %v5458
    %5841 = vmatprep.subr.bf16.mxu0 %v5467
    %5842 = vmatpush1.bf16.msra.mxu0 %v5466
    %5843 = vmatprep.subr.bf16.mxu0 %v5475
    %5844 = vmatpush1.bf16.msra.mxu0 %v5474
    %5845 = vmatprep.subr.bf16.mxu0 %v5483
    %5846 = vmatpush1.bf16.msra.mxu0 %v5482
    %5847 = vmatprep.subr.bf16.mxu0 %v5491
    %5848 = vmatpush1.bf16.msra.mxu0 %v5490
    %5849 = vmatprep.subr.bf16.mxu0 %v5499
    %5850 = vmatpush1.bf16.msra.mxu0 %v5498
    %5851 = vmatprep.subr.bf16.mxu0 %v5507
    %5852 = vmatpush1.bf16.msra.mxu0 %v5506
    %5853 = vmatprep.subr.bf16.mxu0 %v5515
    %5854 = vmatpush1.bf16.msra.mxu0 %v5514
    %5855 = vmatprep.subr.bf16.mxu0 %v5523
    %5856 = vmatpush1.bf16.msra.mxu0 %v5522
    %5857 = vmatprep.subr.bf16.mxu0 %v5531
    %5858 = vmatpush1.bf16.msra.mxu0 %v5530
    %5859 = vmatprep.subr.bf16.mxu0 %v5539
    %5860 = vmatpush1.bf16.msra.mxu0 %v5538
    %5861 = vmatprep.subr.bf16.mxu0 %v5547
    %5862 = vmatpush1.bf16.msra.mxu0 %v5546
    %5863 = vmatprep.subr.bf16.mxu0 %v5555
    %5864 = vmatpush1.bf16.msra.mxu0 %v5554
    %5865 = vmatprep.subr.bf16.mxu0 %v5563
    %5866 = vmatpush1.bf16.msra.mxu0 %v5562
    %5867 = vmatprep.mubr.bf16.mxu0 %v5717
    %5868 = vmatmul.mubr.bf16.gmra.mrb[0].mxu0 %v5716
    %v5869 = vpop.f32.mrb[0].mxu0
    %v5870 = vadd.f32 %v5797, %v5869
    %v5871 = vpop.f32.mrb[0].mxu0
    %v5872 = vadd.f32 %v5799, %v5871
    %v5873 = vpop.f32.mrb[0].mxu0
    %v5874 = vadd.f32 %v5801, %v5873
    %v5875 = vpop.f32.mrb[0].mxu0
    %v5876 = vadd.f32 %v5803, %v5875
    %5877 = vmatprep.mubr.bf16.mxu0 %v5722
    %5878 = vmatmul.mubr.bf16.gmra.mrb[0].mxu0 %v5721
    %v5879 = vpop.f32.mrb[0].mxu0
    %v5880 = vadd.f32 %v5807, %v5879
    %v5881 = vpop.f32.mrb[0].mxu0
    %v5882 = vadd.f32 %v5809, %v5881
    %v5883 = vpop.f32.mrb[0].mxu0
    %v5884 = vadd.f32 %v5811, %v5883
    %v5885 = vpop.f32.mrb[0].mxu0
    %v5886 = vadd.f32 %v5813, %v5885
    %5887 = vmatprep.mubr.bf16.mxu0 %v5727
    %5888 = vmatmul.mubr.bf16.gmra.mrb[0].mxu0 %v5726
    %v5889 = vpop.f32.mrb[0].mxu0
    %v5890 = vadd.f32 %v5817, %v5889
    %v5891 = vpop.f32.mrb[0].mxu0
    %v5892 = vadd.f32 %v5819, %v5891
    %v5893 = vpop.f32.mrb[0].mxu0
    %v5894 = vadd.f32 %v5821, %v5893
    %v5895 = vpop.f32.mrb[0].mxu0
    %v5896 = vadd.f32 %v5823, %v5895
    %5897 = vmatprep.mubr.bf16.mxu0 %v5732
    %5898 = vmatmul.mubr.bf16.gmra.mrb[0].mxu0 %v5731
    %v5899 = vpop.f32.mrb[0].mxu0
    %v5900 = vadd.f32 %v5827, %v5899
    %v5901 = vpop.f32.mrb[0].mxu0
    %v5902 = vadd.f32 %v5829, %v5901
    %v5903 = vpop.f32.mrb[0].mxu0
    %v5904 = vadd.f32 %v5831, %v5903
    %v5905 = vpop.f32.mrb[0].mxu0
    %v5906 = vadd.f32 %v5833, %v5905
    %5907 = vdwg.mxu0
    %5908 = vmatprep.subr.bf16.mxu0 %v5571
    %5909 = vmatpush1.bf16.msra.mxu0 %v5570
    %5910 = vmatprep.subr.bf16.mxu0 %v5579
    %5911 = vmatpush1.bf16.msra.mxu0 %v5578
    %5912 = vmatprep.subr.bf16.mxu0 %v5587
    %5913 = vmatpush1.bf16.msra.mxu0 %v5586
    %5914 = vmatprep.subr.bf16.mxu0 %v5595
    %5915 = vmatpush1.bf16.msra.mxu0 %v5594
    %5916 = vmatprep.subr.bf16.mxu0 0
    %5917 = vmatpush1.bf16.msra.mxu0 0
    %5918 = vmatprep.subr.bf16.mxu0 0
    %5919 = vmatpush1.bf16.msra.mxu0 0
    %5920 = vmatprep.subr.bf16.mxu0 0
    %5921 = vmatpush1.bf16.msra.mxu0 0
    %5922 = vmatprep.subr.bf16.mxu0 0
    %5923 = vmatpush1.bf16.msra.mxu0 0
    %5924 = vmatprep.subr.bf16.mxu0 0
    %5925 = vmatpush1.bf16.msra.mxu0 0
    %5926 = vmatprep.subr.bf16.mxu0 0
    %5927 = vmatpush1.bf16.msra.mxu0 0
    %5928 = vmatprep.subr.bf16.mxu0 0
    %5929 = vmatpush1.bf16.msra.mxu0 0
    %5930 = vmatprep.subr.bf16.mxu0 0
    %5931 = vmatpush1.bf16.msra.mxu0 0
    %5932 = vmatprep.subr.bf16.mxu0 0
    %5933 = vmatpush1.bf16.msra.mxu0 0
    %5934 = vmatprep.subr.bf16.mxu0 0
    %5935 = vmatpush1.bf16.msra.mxu0 0
    %5936 = vmatprep.subr.bf16.mxu0 0
    %5937 = vmatpush1.bf16.msra.mxu0 0
    %5938 = vmatprep.subr.bf16.mxu0 0
    %5939 = vmatpush1.bf16.msra.mxu0 0
    %5940 = vmatprep.mubr.bf16.mxu0 0
    %5941 = vmatmul.mubr.bf16.gmra.mrb[0].mxu0 %v5751
    %v5942 = vpop.f32.mrb[0].mxu0
    %v5943 = vadd.f32 %v5870, %v5942
    %v5944 = vpop.f32.mrb[0].mxu0
    %v5945 = vadd.f32 %v5872, %v5944
    %v5946 = vpop.f32.mrb[0].mxu0
    %v5947 = vadd.f32 %v5874, %v5946
    %v5948 = vpop.f32.mrb[0].mxu0
    %v5949 = vadd.f32 %v5876, %v5948
    %5950 = vmatprep.mubr.bf16.mxu0 0
    %5951 = vmatmul.mubr.bf16.gmra.mrb[0].mxu0 %v5754
    %v5952 = vpop.f32.mrb[0].mxu0
    %v5953 = vadd.f32 %v5880, %v5952
    %v5954 = vpop.f32.mrb[0].mxu0
    %v5955 = vadd.f32 %v5882, %v5954
    %v5956 = vpop.f32.mrb[0].mxu0
    %v5957 = vadd.f32 %v5884, %v5956
    %v5958 = vpop.f32.mrb[0].mxu0
    %v5959 = vadd.f32 %v5886, %v5958
    %5960 = vmatprep.mubr.bf16.mxu0 0
    %5961 = vmatmul.mubr.bf16.gmra.mrb[0].mxu0 %v5757
    %v5962 = vpop.f32.mrb[0].mxu0
    %v5963 = vadd.f32 %v5890, %v5962
    %v5964 = vpop.f32.mrb[0].mxu0
    %v5965 = vadd.f32 %v5892, %v5964
    %v5966 = vpop.f32.mrb[0].mxu0
    %v5967 = vadd.f32 %v5894, %v5966
    %v5968 = vpop.f32.mrb[0].mxu0
    %v5969 = vadd.f32 %v5896, %v5968
    %5970 = vmatprep.mubr.bf16.mxu0 0
    %5971 = vmatmul.mubr.bf16.gmra.mrb[0].mxu0 %v5760
    %v5972 = vpop.f32.mrb[0].mxu0
    %v5973 = vadd.f32 %v5900, %v5972
    %v5974 = vpop.f32.mrb[0].mxu0
    %v5975 = vadd.f32 %v5902, %v5974
    %v5976 = vpop.f32.mrb[0].mxu0
    %v5977 = vadd.f32 %v5904, %v5976
    %v5978 = vpop.f32.mrb[0].mxu0
    %v5979 = vadd.f32 %v5906, %v5978
    %5980 = vdwg.mxu0
    %5981 = vmatprep.subr.bf16.mxu0 %v5317
    %5982 = vmatpush1.bf16.msra.mxu0 %v5316
    %5983 = vmatprep.subr.bf16.mxu0 %v5325
    %5984 = vmatpush1.bf16.msra.mxu0 %v5324
    %5985 = vmatprep.subr.bf16.mxu0 %v5333
    %5986 = vmatpush1.bf16.msra.mxu0 %v5332
    %5987 = vmatprep.subr.bf16.mxu0 %v5341
    %5988 = vmatpush1.bf16.msra.mxu0 %v5340
    %5989 = vmatprep.subr.bf16.mxu0 %v5349
    %5990 = vmatpush1.bf16.msra.mxu0 %v5348
    %5991 = vmatprep.subr.bf16.mxu0 %v5357
    %5992 = vmatpush1.bf16.msra.mxu0 %v5356
    %5993 = vmatprep.subr.bf16.mxu0 %v5365
    %5994 = vmatpush1.bf16.msra.mxu0 %v5364
    %5995 = vmatprep.subr.bf16.mxu0 %v5373
    %5996 = vmatpush1.bf16.msra.mxu0 %v5372
    %5997 = vmatprep.subr.bf16.mxu0 %v5381
    %5998 = vmatpush1.bf16.msra.mxu0 %v5380
    %5999 = vmatprep.subr.bf16.mxu0 %v5389
    %6000 = vmatpush1.bf16.msra.mxu0 %v5388
    %6001 = vmatprep.subr.bf16.mxu0 %v5397
    %6002 = vmatpush1.bf16.msra.mxu0 %v5396
    %6003 = vmatprep.subr.bf16.mxu0 %v5405
    %6004 = vmatpush1.bf16.msra.mxu0 %v5404
    %6005 = vmatprep.subr.bf16.mxu0 %v5413
    %6006 = vmatpush1.bf16.msra.mxu0 %v5412
    %6007 = vmatprep.subr.bf16.mxu0 %v5421
    %6008 = vmatpush1.bf16.msra.mxu0 %v5420
    %6009 = vmatprep.subr.bf16.mxu0 %v5429
    %6010 = vmatpush1.bf16.msra.mxu0 %v5428
    %6011 = vmatprep.subr.bf16.mxu0 %v5437
    %6012 = vmatpush1.bf16.msra.mxu0 %v5436
    %6013 = vmatprep.mubr.bf16.mxu0 %v5715
    %6014 = vmatmul.mubr.bf16.gmra.mrb[0].mxu0 %v5714
    %v6015 = vpop.f32.mrb[0].mxu0
    %v6016 = vadd.f32 %v5613, %v6015
    %v6017 = vpop.f32.mrb[0].mxu0
    %v6018 = vadd.f32 %v5613, %v6017
    %v6019 = vpop.f32.mrb[0].mxu0
    %v6020 = vadd.f32 %v5618, %v6019
    %v6021 = vpop.f32.mrb[0].mxu0
    %v6022 = vadd.f32 %v5618, %v6021
    %6023 = vmatprep.mubr.bf16.mxu0 %v5720
    %6024 = vmatmul.mubr.bf16.gmra.mrb[0].mxu0 %v5719
    %v6025 = vpop.f32.mrb[0].mxu0
    %v6026 = vadd.f32 %v5623, %v6025
    %v6027 = vpop.f32.mrb[0].mxu0
    %v6028 = vadd.f32 %v5623, %v6027
    %v6029 = vpop.f32.mrb[0].mxu0
    %v6030 = vadd.f32 %v5628, %v6029
    %v6031 = vpop.f32.mrb[0].mxu0
    %v6032 = vadd.f32 %v5628, %v6031
    %6033 = vmatprep.mubr.bf16.mxu0 %v5725
    %6034 = vmatmul.mubr.bf16.gmra.mrb[0].mxu0 %v5724
    %v6035 = vpop.f32.mrb[0].mxu0
    %v6036 = vadd.f32 %v5633, %v6035
    %v6037 = vpop.f32.mrb[0].mxu0
    %v6038 = vadd.f32 %v5633, %v6037
    %v6039 = vpop.f32.mrb[0].mxu0
    %v6040 = vadd.f32 %v5638, %v6039
    %v6041 = vpop.f32.mrb[0].mxu0
    %v6042 = vadd.f32 %v5638, %v6041
    %6043 = vmatprep.mubr.bf16.mxu0 %v5730
    %6044 = vmatmul.mubr.bf16.gmra.mrb[0].mxu0 %v5729
    %v6045 = vpop.f32.mrb[0].mxu0
    %v6046 = vadd.f32 %v5643, %v6045
    %v6047 = vpop.f32.mrb[0].mxu0
    %v6048 = vadd.f32 %v5643, %v6047
    %v6049 = vpop.f32.mrb[0].mxu0
    %v6050 = vadd.f32 %v5648, %v6049
    %v6051 = vpop.f32.mrb[0].mxu0
    %v6052 = vadd.f32 %v5648, %v6051
    %6053 = vdwg.mxu0
    %6054 = vmatprep.subr.bf16.mxu0 %v5445
    %6055 = vmatpush1.bf16.msra.mxu0 %v5444
    %6056 = vmatprep.subr.bf16.mxu0 %v5453
    %6057 = vmatpush1.bf16.msra.mxu0 %v5452
    %6058 = vmatprep.subr.bf16.mxu0 %v5461
    %6059 = vmatpush1.bf16.msra.mxu0 %v5460
    %6060 = vmatprep.subr.bf16.mxu0 %v5469
    %6061 = vmatpush1.bf16.msra.mxu0 %v5468
    %6062 = vmatprep.subr.bf16.mxu0 %v5477
    %6063 = vmatpush1.bf16.msra.mxu0 %v5476
    %6064 = vmatprep.subr.bf16.mxu0 %v5485
    %6065 = vmatpush1.bf16.msra.mxu0 %v5484
    %6066 = vmatprep.subr.bf16.mxu0 %v5493
    %6067 = vmatpush1.bf16.msra.mxu0 %v5492
    %6068 = vmatprep.subr.bf16.mxu0 %v5501
    %6069 = vmatpush1.bf16.msra.mxu0 %v5500
    %6070 = vmatprep.subr.bf16.mxu0 %v5509
    %6071 = vmatpush1.bf16.msra.mxu0 %v5508
    %6072 = vmatprep.subr.bf16.mxu0 %v5517
    %6073 = vmatpush1.bf16.msra.mxu0 %v5516
    %6074 = vmatprep.subr.bf16.mxu0 %v5525
    %6075 = vmatpush1.bf16.msra.mxu0 %v5524
    %6076 = vmatprep.subr.bf16.mxu0 %v5533
    %6077 = vmatpush1.bf16.msra.mxu0 %v5532
    %6078 = vmatprep.subr.bf16.mxu0 %v5541
    %6079 = vmatpush1.bf16.msra.mxu0 %v5540
    %6080 = vmatprep.subr.bf16.mxu0 %v5549
    %6081 = vmatpush1.bf16.msra.mxu0 %v5548
    %6082 = vmatprep.subr.bf16.mxu0 %v5557
    %6083 = vmatpush1.bf16.msra.mxu0 %v5556
    %6084 = vmatprep.subr.bf16.mxu0 %v5565
    %6085 = vmatpush1.bf16.msra.mxu0 %v5564
    %6086 = vmatprep.mubr.bf16.mxu0 %v5717
    %6087 = vmatmul.mubr.bf16.gmra.mrb[0].mxu0 %v5716
    %v6088 = vpop.f32.mrb[0].mxu0
    %v6089 = vadd.f32 %v6016, %v6088
    %v6090 = vpop.f32.mrb[0].mxu0
    %v6091 = vadd.f32 %v6018, %v6090
    %v6092 = vpop.f32.mrb[0].mxu0
    %v6093 = vadd.f32 %v6020, %v6092
    %v6094 = vpop.f32.mrb[0].mxu0
    %v6095 = vadd.f32 %v6022, %v6094
    %6096 = vmatprep.mubr.bf16.mxu0 %v5722
    %6097 = vmatmul.mubr.bf16.gmra.mrb[0].mxu0 %v5721
    %v6098 = vpop.f32.mrb[0].mxu0
    %v6099 = vadd.f32 %v6026, %v6098
    %v6100 = vpop.f32.mrb[0].mxu0
    %v6101 = vadd.f32 %v6028, %v6100
    %v6102 = vpop.f32.mrb[0].mxu0
    %v6103 = vadd.f32 %v6030, %v6102
    %v6104 = vpop.f32.mrb[0].mxu0
    %v6105 = vadd.f32 %v6032, %v6104
    %6106 = vmatprep.mubr.bf16.mxu0 %v5727
    %6107 = vmatmul.mubr.bf16.gmra.mrb[0].mxu0 %v5726
    %v6108 = vpop.f32.mrb[0].mxu0
    %v6109 = vadd.f32 %v6036, %v6108
    %v6110 = vpop.f32.mrb[0].mxu0
    %v6111 = vadd.f32 %v6038, %v6110
    %v6112 = vpop.f32.mrb[0].mxu0
    %v6113 = vadd.f32 %v6040, %v6112
    %v6114 = vpop.f32.mrb[0].mxu0
    %v6115 = vadd.f32 %v6042, %v6114
    %6116 = vmatprep.mubr.bf16.mxu0 %v5732
    %6117 = vmatmul.mubr.bf16.gmra.mrb[0].mxu0 %v5731
    %v6118 = vpop.f32.mrb[0].mxu0
    %v6119 = vadd.f32 %v6046, %v6118
    %v6120 = vpop.f32.mrb[0].mxu0
    %v6121 = vadd.f32 %v6048, %v6120
    %v6122 = vpop.f32.mrb[0].mxu0
    %v6123 = vadd.f32 %v6050, %v6122
    %v6124 = vpop.f32.mrb[0].mxu0
    %v6125 = vadd.f32 %v6052, %v6124
    %6126 = vdwg.mxu0
    %6127 = vmatprep.subr.bf16.mxu0 %v5573
    %6128 = vmatpush1.bf16.msra.mxu0 %v5572
    %6129 = vmatprep.subr.bf16.mxu0 %v5581
    %6130 = vmatpush1.bf16.msra.mxu0 %v5580
    %6131 = vmatprep.subr.bf16.mxu0 %v5589
    %6132 = vmatpush1.bf16.msra.mxu0 %v5588
    %6133 = vmatprep.subr.bf16.mxu0 %v5597
    %6134 = vmatpush1.bf16.msra.mxu0 %v5596
    %6135 = vmatprep.subr.bf16.mxu0 0
    %6136 = vmatpush1.bf16.msra.mxu0 0
    %6137 = vmatprep.subr.bf16.mxu0 0
    %6138 = vmatpush1.bf16.msra.mxu0 0
    %6139 = vmatprep.subr.bf16.mxu0 0
    %6140 = vmatpush1.bf16.msra.mxu0 0
    %6141 = vmatprep.subr.bf16.mxu0 0
    %6142 = vmatpush1.bf16.msra.mxu0 0
    %6143 = vmatprep.subr.bf16.mxu0 0
    %6144 = vmatpush1.bf16.msra.mxu0 0
    %6145 = vmatprep.subr.bf16.mxu0 0
    %6146 = vmatpush1.bf16.msra.mxu0 0
    %6147 = vmatprep.subr.bf16.mxu0 0
    %6148 = vmatpush1.bf16.msra.mxu0 0
    %6149 = vmatprep.subr.bf16.mxu0 0
    %6150 = vmatpush1.bf16.msra.mxu0 0
    %6151 = vmatprep.subr.bf16.mxu0 0
    %6152 = vmatpush1.bf16.msra.mxu0 0
    %6153 = vmatprep.subr.bf16.mxu0 0
    %6154 = vmatpush1.bf16.msra.mxu0 0
    %6155 = vmatprep.subr.bf16.mxu0 0
    %6156 = vmatpush1.bf16.msra.mxu0 0
    %6157 = vmatprep.subr.bf16.mxu0 0
    %6158 = vmatpush1.bf16.msra.mxu0 0
    %6159 = vmatprep.mubr.bf16.mxu0 0
    %6160 = vmatmul.mubr.bf16.gmra.mrb[0].mxu0 %v5751
    %v6161 = vpop.f32.mrb[0].mxu0
    %v6162 = vadd.f32 %v6089, %v6161
    %v6163 = vpop.f32.mrb[0].mxu0
    %v6164 = vadd.f32 %v6091, %v6163
    %v6165 = vpop.f32.mrb[0].mxu0
    %v6166 = vadd.f32 %v6093, %v6165
    %v6167 = vpop.f32.mrb[0].mxu0
    %v6168 = vadd.f32 %v6095, %v6167
    %6169 = vmatprep.mubr.bf16.mxu0 0
    %6170 = vmatmul.mubr.bf16.gmra.mrb[0].mxu0 %v5754
    %v6171 = vpop.f32.mrb[0].mxu0
    %v6172 = vadd.f32 %v6099, %v6171
    %v6173 = vpop.f32.mrb[0].mxu0
    %v6174 = vadd.f32 %v6101, %v6173
    %v6175 = vpop.f32.mrb[0].mxu0
    %v6176 = vadd.f32 %v6103, %v6175
    %v6177 = vpop.f32.mrb[0].mxu0
    %v6178 = vadd.f32 %v6105, %v6177
    %6179 = vmatprep.mubr.bf16.mxu0 0
    %6180 = vmatmul.mubr.bf16.gmra.mrb[0].mxu0 %v5757
    %v6181 = vpop.f32.mrb[0].mxu0
    %v6182 = vadd.f32 %v6109, %v6181
    %v6183 = vpop.f32.mrb[0].mxu0
    %v6184 = vadd.f32 %v6111, %v6183
    %v6185 = vpop.f32.mrb[0].mxu0
    %v6186 = vadd.f32 %v6113, %v6185
    %v6187 = vpop.f32.mrb[0].mxu0
    %v6188 = vadd.f32 %v6115, %v6187
    %6189 = vmatprep.mubr.bf16.mxu0 0
    %6190 = vmatmul.mubr.bf16.gmra.mrb[0].mxu0 %v5760
    %v6191 = vpop.f32.mrb[0].mxu0
    %v6192 = vadd.f32 %v6119, %v6191
    %v6193 = vpop.f32.mrb[0].mxu0
    %v6194 = vadd.f32 %v6121, %v6193
    %v6195 = vpop.f32.mrb[0].mxu0
    %v6196 = vadd.f32 %v6123, %v6195
    %v6197 = vpop.f32.mrb[0].mxu0
    %v6198 = vadd.f32 %v6125, %v6197
    %6199 = vdwg.mxu0
    %6200 = vmatprep.subr.bf16.mxu0 %v5319
    %6201 = vmatpush1.bf16.msra.mxu0 %v5318
    %6202 = vmatprep.subr.bf16.mxu0 %v5327
    %6203 = vmatpush1.bf16.msra.mxu0 %v5326
    %6204 = vmatprep.subr.bf16.mxu0 %v5335
    %6205 = vmatpush1.bf16.msra.mxu0 %v5334
    %6206 = vmatprep.subr.bf16.mxu0 %v5343
    %6207 = vmatpush1.bf16.msra.mxu0 %v5342
    %6208 = vmatprep.subr.bf16.mxu0 %v5351
    %6209 = vmatpush1.bf16.msra.mxu0 %v5350
    %6210 = vmatprep.subr.bf16.mxu0 %v5359
    %6211 = vmatpush1.bf16.msra.mxu0 %v5358
    %6212 = vmatprep.subr.bf16.mxu0 %v5367
    %6213 = vmatpush1.bf16.msra.mxu0 %v5366
    %6214 = vmatprep.subr.bf16.mxu0 %v5375
    %6215 = vmatpush1.bf16.msra.mxu0 %v5374
    %6216 = vmatprep.subr.bf16.mxu0 %v5383
    %6217 = vmatpush1.bf16.msra.mxu0 %v5382
    %6218 = vmatprep.subr.bf16.mxu0 %v5391
    %6219 = vmatpush1.bf16.msra.mxu0 %v5390
    %6220 = vmatprep.subr.bf16.mxu0 %v5399
    %6221 = vmatpush1.bf16.msra.mxu0 %v5398
    %6222 = vmatprep.subr.bf16.mxu0 %v5407
    %6223 = vmatpush1.bf16.msra.mxu0 %v5406
    %6224 = vmatprep.subr.bf16.mxu0 %v5415
    %6225 = vmatpush1.bf16.msra.mxu0 %v5414
    %6226 = vmatprep.subr.bf16.mxu0 %v5423
    %6227 = vmatpush1.bf16.msra.mxu0 %v5422
    %6228 = vmatprep.subr.bf16.mxu0 %v5431
    %6229 = vmatpush1.bf16.msra.mxu0 %v5430
    %6230 = vmatprep.subr.bf16.mxu0 %v5439
    %6231 = vmatpush1.bf16.msra.mxu0 %v5438
    %6232 = vmatprep.mubr.bf16.mxu0 %v5715
    %6233 = vmatmul.mubr.bf16.gmra.mrb[0].mxu0 %v5714
    %v6234 = vpop.f32.mrb[0].mxu0
    %v6235 = vadd.f32 %v5613, %v6234
    %v6236 = vpop.f32.mrb[0].mxu0
    %v6237 = vadd.f32 %v5613, %v6236
    %v6238 = vpop.f32.mrb[0].mxu0
    %v6239 = vadd.f32 %v5618, %v6238
    %v6240 = vpop.f32.mrb[0].mxu0
    %v6241 = vadd.f32 %v5618, %v6240
    %6242 = vmatprep.mubr.bf16.mxu0 %v5720
    %6243 = vmatmul.mubr.bf16.gmra.mrb[0].mxu0 %v5719
    %v6244 = vpop.f32.mrb[0].mxu0
    %v6245 = vadd.f32 %v5623, %v6244
    %v6246 = vpop.f32.mrb[0].mxu0
    %v6247 = vadd.f32 %v5623, %v6246
    %v6248 = vpop.f32.mrb[0].mxu0
    %v6249 = vadd.f32 %v5628, %v6248
    %v6250 = vpop.f32.mrb[0].mxu0
    %v6251 = vadd.f32 %v5628, %v6250
    %6252 = vmatprep.mubr.bf16.mxu0 %v5725
    %6253 = vmatmul.mubr.bf16.gmra.mrb[0].mxu0 %v5724
    %v6254 = vpop.f32.mrb[0].mxu0
    %v6255 = vadd.f32 %v5633, %v6254
    %v6256 = vpop.f32.mrb[0].mxu0
    %v6257 = vadd.f32 %v5633, %v6256
    %v6258 = vpop.f32.mrb[0].mxu0
    %v6259 = vadd.f32 %v5638, %v6258
    %v6260 = vpop.f32.mrb[0].mxu0
    %v6261 = vadd.f32 %v5638, %v6260
    %6262 = vmatprep.mubr.bf16.mxu0 %v5730
    %6263 = vmatmul.mubr.bf16.gmra.mrb[0].mxu0 %v5729
    %v6264 = vpop.f32.mrb[0].mxu0
    %v6265 = vadd.f32 %v5643, %v6264
    %v6266 = vpop.f32.mrb[0].mxu0
    %v6267 = vadd.f32 %v5643, %v6266
    %v6268 = vpop.f32.mrb[0].mxu0
    %v6269 = vadd.f32 %v5648, %v6268
    %v6270 = vpop.f32.mrb[0].mxu0
    %v6271 = vadd.f32 %v5648, %v6270
    %6272 = vdwg.mxu0
    %6273 = vmatprep.subr.bf16.mxu0 %v5447
    %6274 = vmatpush1.bf16.msra.mxu0 %v5446
    %6275 = vmatprep.subr.bf16.mxu0 %v5455
    %6276 = vmatpush1.bf16.msra.mxu0 %v5454
    %6277 = vmatprep.subr.bf16.mxu0 %v5463
    %6278 = vmatpush1.bf16.msra.mxu0 %v5462
    %6279 = vmatprep.subr.bf16.mxu0 %v5471
    %6280 = vmatpush1.bf16.msra.mxu0 %v5470
    %6281 = vmatprep.subr.bf16.mxu0 %v5479
    %6282 = vmatpush1.bf16.msra.mxu0 %v5478
    %6283 = vmatprep.subr.bf16.mxu0 %v5487
    %6284 = vmatpush1.bf16.msra.mxu0 %v5486
    %6285 = vmatprep.subr.bf16.mxu0 %v5495
    %6286 = vmatpush1.bf16.msra.mxu0 %v5494
    %6287 = vmatprep.subr.bf16.mxu0 %v5503
    %6288 = vmatpush1.bf16.msra.mxu0 %v5502
    %6289 = vmatprep.subr.bf16.mxu0 %v5511
    %6290 = vmatpush1.bf16.msra.mxu0 %v5510
    %6291 = vmatprep.subr.bf16.mxu0 %v5519
    %6292 = vmatpush1.bf16.msra.mxu0 %v5518
    %6293 = vmatprep.subr.bf16.mxu0 %v5527
    %6294 = vmatpush1.bf16.msra.mxu0 %v5526
    %6295 = vmatprep.subr.bf16.mxu0 %v5535
    %6296 = vmatpush1.bf16.msra.mxu0 %v5534
    %6297 = vmatprep.subr.bf16.mxu0 %v5543
    %6298 = vmatpush1.bf16.msra.mxu0 %v5542
    %6299 = vmatprep.subr.bf16.mxu0 %v5551
    %6300 = vmatpush1.bf16.msra.mxu0 %v5550
    %6301 = vmatprep.subr.bf16.mxu0 %v5559
    %6302 = vmatpush1.bf16.msra.mxu0 %v5558
    %6303 = vmatprep.subr.bf16.mxu0 %v5567
    %6304 = vmatpush1.bf16.msra.mxu0 %v5566
    %6305 = vmatprep.mubr.bf16.mxu0 %v5717
    %6306 = vmatmul.mubr.bf16.gmra.mrb[0].mxu0 %v5716
    %v6307 = vpop.f32.mrb[0].mxu0
    %v6308 = vadd.f32 %v6235, %v6307
    %v6309 = vpop.f32.mrb[0].mxu0
    %v6310 = vadd.f32 %v6237, %v6309
    %v6311 = vpop.f32.mrb[0].mxu0
    %v6312 = vadd.f32 %v6239, %v6311
    %v6313 = vpop.f32.mrb[0].mxu0
    %v6314 = vadd.f32 %v6241, %v6313
    %6315 = vmatprep.mubr.bf16.mxu0 %v5722
    %6316 = vmatmul.mubr.bf16.gmra.mrb[0].mxu0 %v5721
    %v6317 = vpop.f32.mrb[0].mxu0
    %v6318 = vadd.f32 %v6245, %v6317
    %v6319 = vpop.f32.mrb[0].mxu0
    %v6320 = vadd.f32 %v6247, %v6319
    %v6321 = vpop.f32.mrb[0].mxu0
    %v6322 = vadd.f32 %v6249, %v6321
    %v6323 = vpop.f32.mrb[0].mxu0
    %v6324 = vadd.f32 %v6251, %v6323
    %6325 = vmatprep.mubr.bf16.mxu0 %v5727
    %6326 = vmatmul.mubr.bf16.gmra.mrb[0].mxu0 %v5726
    %v6327 = vpop.f32.mrb[0].mxu0
    %v6328 = vadd.f32 %v6255, %v6327
    %v6329 = vpop.f32.mrb[0].mxu0
    %v6330 = vadd.f32 %v6257, %v6329
    %v6331 = vpop.f32.mrb[0].mxu0
    %v6332 = vadd.f32 %v6259, %v6331
    %v6333 = vpop.f32.mrb[0].mxu0
    %v6334 = vadd.f32 %v6261, %v6333
    %6335 = vmatprep.mubr.bf16.mxu0 %v5732
    %6336 = vmatmul.mubr.bf16.gmra.mrb[0].mxu0 %v5731
    %v6337 = vpop.f32.mrb[0].mxu0
    %v6338 = vadd.f32 %v6265, %v6337
    %v6339 = vpop.f32.mrb[0].mxu0
    %v6340 = vadd.f32 %v6267, %v6339
    %v6341 = vpop.f32.mrb[0].mxu0
    %v6342 = vadd.f32 %v6269, %v6341
    %v6343 = vpop.f32.mrb[0].mxu0
    %v6344 = vadd.f32 %v6271, %v6343
    %6345 = vdwg.mxu0
    %6346 = vmatprep.subr.bf16.mxu0 %v5575
    %6347 = vmatpush1.bf16.msra.mxu0 %v5574
    %6348 = vmatprep.subr.bf16.mxu0 %v5583
    %6349 = vmatpush1.bf16.msra.mxu0 %v5582
    %6350 = vmatprep.subr.bf16.mxu0 %v5591
    %6351 = vmatpush1.bf16.msra.mxu0 %v5590
    %6352 = vmatprep.subr.bf16.mxu0 %v5599
    %6353 = vmatpush1.bf16.msra.mxu0 %v5598
    %6354 = vmatprep.subr.bf16.mxu0 0
    %6355 = vmatpush1.bf16.msra.mxu0 0
    %6356 = vmatprep.subr.bf16.mxu0 0
    %6357 = vmatpush1.bf16.msra.mxu0 0
    %6358 = vmatprep.subr.bf16.mxu0 0
    %6359 = vmatpush1.bf16.msra.mxu0 0
    %6360 = vmatprep.subr.bf16.mxu0 0
    %6361 = vmatpush1.bf16.msra.mxu0 0
    %6362 = vmatprep.subr.bf16.mxu0 0
    %6363 = vmatpush1.bf16.msra.mxu0 0
    %6364 = vmatprep.subr.bf16.mxu0 0
    %6365 = vmatpush1.bf16.msra.mxu0 0
    %6366 = vmatprep.subr.bf16.mxu0 0
    %6367 = vmatpush1.bf16.msra.mxu0 0
    %6368 = vmatprep.subr.bf16.mxu0 0
    %6369 = vmatpush1.bf16.msra.mxu0 0
    %6370 = vmatprep.subr.bf16.mxu0 0
    %6371 = vmatpush1.bf16.msra.mxu0 0
    %6372 = vmatprep.subr.bf16.mxu0 0
    %6373 = vmatpush1.bf16.msra.mxu0 0
    %6374 = vmatprep.subr.bf16.mxu0 0
    %6375 = vmatpush1.bf16.msra.mxu0 0
    %6376 = vmatprep.subr.bf16.mxu0 0
    %6377 = vmatpush1.bf16.msra.mxu0 0
    %6378 = vmatprep.mubr.bf16.mxu0 0
    %6379 = vmatmul.mubr.bf16.gmra.mrb[0].mxu0 %v5751
    %v6380 = vpop.f32.mrb[0].mxu0
    %v6381 = vadd.f32 %v6308, %v6380
    %v6382 = vpop.f32.mrb[0].mxu0
    %v6383 = vadd.f32 %v6310, %v6382
    %v6384 = vpop.f32.mrb[0].mxu0
    %v6385 = vadd.f32 %v6312, %v6384
    %v6386 = vpop.f32.mrb[0].mxu0
    %v6387 = vadd.f32 %v6314, %v6386
    %6388 = vmatprep.mubr.bf16.mxu0 0
    %6389 = vmatmul.mubr.bf16.gmra.mrb[0].mxu0 %v5754
    %v6390 = vpop.f32.mrb[0].mxu0
    %v6391 = vadd.f32 %v6318, %v6390
    %v6392 = vpop.f32.mrb[0].mxu0
    %v6393 = vadd.f32 %v6320, %v6392
    %v6394 = vpop.f32.mrb[0].mxu0
    %v6395 = vadd.f32 %v6322, %v6394
    %v6396 = vpop.f32.mrb[0].mxu0
    %v6397 = vadd.f32 %v6324, %v6396
    %6398 = vmatprep.mubr.bf16.mxu0 0
    %6399 = vmatmul.mubr.bf16.gmra.mrb[0].mxu0 %v5757
    %v6400 = vpop.f32.mrb[0].mxu0
    %v6401 = vadd.f32 %v6328, %v6400
    %v6402 = vpop.f32.mrb[0].mxu0
    %v6403 = vadd.f32 %v6330, %v6402
    %v6404 = vpop.f32.mrb[0].mxu0
    %v6405 = vadd.f32 %v6332, %v6404
    %v6406 = vpop.f32.mrb[0].mxu0
    %v6407 = vadd.f32 %v6334, %v6406
    %6408 = vmatprep.mubr.bf16.mxu0 0
    %6409 = vmatmul.mubr.bf16.gmra.mrb[0].mxu0 %v5760
    %v6410 = vpop.f32.mrb[0].mxu0
    %v6411 = vadd.f32 %v6338, %v6410
    %v6412 = vpop.f32.mrb[0].mxu0
    %v6413 = vadd.f32 %v6340, %v6412
    %v6414 = vpop.f32.mrb[0].mxu0
    %v6415 = vadd.f32 %v6342, %v6414
    %v6416 = vpop.f32.mrb[0].mxu0
    %v6417 = vadd.f32 %v6344, %v6416
    %6418 = vdwg.mxu0
    %6419 = vmatprep.subr.bf16.mxu0 %v5321
    %6420 = vmatpush1.bf16.msra.mxu0 %v5320
    %6421 = vmatprep.subr.bf16.mxu0 %v5329
    %6422 = vmatpush1.bf16.msra.mxu0 %v5328
    %6423 = vmatprep.subr.bf16.mxu0 %v5337
    %6424 = vmatpush1.bf16.msra.mxu0 %v5336
    %6425 = vmatprep.subr.bf16.mxu0 %v5345
    %6426 = vmatpush1.bf16.msra.mxu0 %v5344
    %6427 = vmatprep.subr.bf16.mxu0 %v5353
    %6428 = vmatpush1.bf16.msra.mxu0 %v5352
    %6429 = vmatprep.subr.bf16.mxu0 %v5361
    %6430 = vmatpush1.bf16.msra.mxu0 %v5360
    %6431 = vmatprep.subr.bf16.mxu0 %v5369
    %6432 = vmatpush1.bf16.msra.mxu0 %v5368
    %6433 = vmatprep.subr.bf16.mxu0 %v5377
    %6434 = vmatpush1.bf16.msra.mxu0 %v5376
    %6435 = vmatprep.subr.bf16.mxu0 %v5385
    %6436 = vmatpush1.bf16.msra.mxu0 %v5384
    %6437 = vmatprep.subr.bf16.mxu0 %v5393
    %6438 = vmatpush1.bf16.msra.mxu0 %v5392
    %6439 = vmatprep.subr.bf16.mxu0 %v5401
    %6440 = vmatpush1.bf16.msra.mxu0 %v5400
    %6441 = vmatprep.subr.bf16.mxu0 %v5409
    %6442 = vmatpush1.bf16.msra.mxu0 %v5408
    %6443 = vmatprep.subr.bf16.mxu0 %v5417
    %6444 = vmatpush1.bf16.msra.mxu0 %v5416
    %6445 = vmatprep.subr.bf16.mxu0 %v5425
    %6446 = vmatpush1.bf16.msra.mxu0 %v5424
    %6447 = vmatprep.subr.bf16.mxu0 %v5433
    %6448 = vmatpush1.bf16.msra.mxu0 %v5432
    %6449 = vmatprep.subr.bf16.mxu0 %v5441
    %6450 = vmatpush1.bf16.msra.mxu0 %v5440
    %6451 = vmatprep.mubr.bf16.mxu0 %v5715
    %6452 = vmatmul.mubr.bf16.gmra.mrb[0].mxu0 %v5714
    %v6453 = vpop.f32.mrb[0].mxu0
    %v6454 = vadd.f32 %v5613, %v6453
    %v6455 = vpop.f32.mrb[0].mxu0
    %v6456 = vadd.f32 %v5613, %v6455
    %v6457 = vpop.f32.mrb[0].mxu0
    %v6458 = vadd.f32 %v5618, %v6457
    %v6459 = vpop.f32.mrb[0].mxu0
    %v6460 = vadd.f32 %v5618, %v6459
    %6461 = vmatprep.mubr.bf16.mxu0 %v5720
    %6462 = vmatmul.mubr.bf16.gmra.mrb[0].mxu0 %v5719
    %v6463 = vpop.f32.mrb[0].mxu0
    %v6464 = vadd.f32 %v5623, %v6463
    %v6465 = vpop.f32.mrb[0].mxu0
    %v6466 = vadd.f32 %v5623, %v6465
    %v6467 = vpop.f32.mrb[0].mxu0
    %v6468 = vadd.f32 %v5628, %v6467
    %v6469 = vpop.f32.mrb[0].mxu0
    %v6470 = vadd.f32 %v5628, %v6469
    %6471 = vmatprep.mubr.bf16.mxu0 %v5725
    %6472 = vmatmul.mubr.bf16.gmra.mrb[0].mxu0 %v5724
    %v6473 = vpop.f32.mrb[0].mxu0
    %v6474 = vadd.f32 %v5633, %v6473
    %v6475 = vpop.f32.mrb[0].mxu0
    %v6476 = vadd.f32 %v5633, %v6475
    %v6477 = vpop.f32.mrb[0].mxu0
    %v6478 = vadd.f32 %v5638, %v6477
    %v6479 = vpop.f32.mrb[0].mxu0
    %v6480 = vadd.f32 %v5638, %v6479
    %6481 = vmatprep.mubr.bf16.mxu0 %v5730
    %6482 = vmatmul.mubr.bf16.gmra.mrb[0].mxu0 %v5729
    %v6483 = vpop.f32.mrb[0].mxu0
    %v6484 = vadd.f32 %v5643, %v6483
    %v6485 = vpop.f32.mrb[0].mxu0
    %v6486 = vadd.f32 %v5643, %v6485
    %v6487 = vpop.f32.mrb[0].mxu0
    %v6488 = vadd.f32 %v5648, %v6487
    %v6489 = vpop.f32.mrb[0].mxu0
    %v6490 = vadd.f32 %v5648, %v6489
    %6491 = vdwg.mxu0
    %6492 = vmatprep.subr.bf16.mxu0 %v5449
    %6493 = vmatpush1.bf16.msra.mxu0 %v5448
    %6494 = vmatprep.subr.bf16.mxu0 %v5457
    %6495 = vmatpush1.bf16.msra.mxu0 %v5456
    %6496 = vmatprep.subr.bf16.mxu0 %v5465
    %6497 = vmatpush1.bf16.msra.mxu0 %v5464
    %6498 = vmatprep.subr.bf16.mxu0 %v5473
    %6499 = vmatpush1.bf16.msra.mxu0 %v5472
    %6500 = vmatprep.subr.bf16.mxu0 %v5481
    %6501 = vmatpush1.bf16.msra.mxu0 %v5480
    %6502 = vmatprep.subr.bf16.mxu0 %v5489
    %6503 = vmatpush1.bf16.msra.mxu0 %v5488
    %6504 = vmatprep.subr.bf16.mxu0 %v5497
    %6505 = vmatpush1.bf16.msra.mxu0 %v5496
    %6506 = vmatprep.subr.bf16.mxu0 %v5505
    %6507 = vmatpush1.bf16.msra.mxu0 %v5504
    %6508 = vmatprep.subr.bf16.mxu0 %v5513
    %6509 = vmatpush1.bf16.msra.mxu0 %v5512
    %6510 = vmatprep.subr.bf16.mxu0 %v5521
    %6511 = vmatpush1.bf16.msra.mxu0 %v5520
    %6512 = vmatprep.subr.bf16.mxu0 %v5529
    %6513 = vmatpush1.bf16.msra.mxu0 %v5528
    %6514 = vmatprep.subr.bf16.mxu0 %v5537
    %6515 = vmatpush1.bf16.msra.mxu0 %v5536
    %6516 = vmatprep.subr.bf16.mxu0 %v5545
    %6517 = vmatpush1.bf16.msra.mxu0 %v5544
    %6518 = vmatprep.subr.bf16.mxu0 %v5553
    %6519 = vmatpush1.bf16.msra.mxu0 %v5552
    %6520 = vmatprep.subr.bf16.mxu0 %v5561
    %6521 = vmatpush1.bf16.msra.mxu0 %v5560
    %6522 = vmatprep.subr.bf16.mxu0 %v5569
    %6523 = vmatpush1.bf16.msra.mxu0 %v5568
    %6524 = vmatprep.mubr.bf16.mxu0 %v5717
    %6525 = vmatmul.mubr.bf16.gmra.mrb[0].mxu0 %v5716
    %v6526 = vpop.f32.mrb[0].mxu0
    %v6527 = vadd.f32 %v6454, %v6526
    %v6528 = vpop.f32.mrb[0].mxu0
    %v6529 = vadd.f32 %v6456, %v6528
    %v6530 = vpop.f32.mrb[0].mxu0
    %v6531 = vadd.f32 %v6458, %v6530
    %v6532 = vpop.f32.mrb[0].mxu0
    %v6533 = vadd.f32 %v6460, %v6532
    %6534 = vmatprep.mubr.bf16.mxu0 %v5722
    %6535 = vmatmul.mubr.bf16.gmra.mrb[0].mxu0 %v5721
    %v6536 = vpop.f32.mrb[0].mxu0
    %v6537 = vadd.f32 %v6464, %v6536
    %v6538 = vpop.f32.mrb[0].mxu0
    %v6539 = vadd.f32 %v6466, %v6538
    %v6540 = vpop.f32.mrb[0].mxu0
    %v6541 = vadd.f32 %v6468, %v6540
    %v6542 = vpop.f32.mrb[0].mxu0
    %v6543 = vadd.f32 %v6470, %v6542
    %6544 = vmatprep.mubr.bf16.mxu0 %v5727
    %6545 = vmatmul.mubr.bf16.gmra.mrb[0].mxu0 %v5726
    %v6546 = vpop.f32.mrb[0].mxu0
    %v6547 = vadd.f32 %v6474, %v6546
    %v6548 = vpop.f32.mrb[0].mxu0
    %v6549 = vadd.f32 %v6476, %v6548
    %v6550 = vpop.f32.mrb[0].mxu0
    %v6551 = vadd.f32 %v6478, %v6550
    %v6552 = vpop.f32.mrb[0].mxu0
    %v6553 = vadd.f32 %v6480, %v6552
    %6554 = vmatprep.mubr.bf16.mxu0 %v5732
    %6555 = vmatmul.mubr.bf16.gmra.mrb[0].mxu0 %v5731
    %v6556 = vpop.f32.mrb[0].mxu0
    %v6557 = vadd.f32 %v6484, %v6556
    %v6558 = vpop.f32.mrb[0].mxu0
    %v6559 = vadd.f32 %v6486, %v6558
    %v6560 = vpop.f32.mrb[0].mxu0
    %v6561 = vadd.f32 %v6488, %v6560
    %v6562 = vpop.f32.mrb[0].mxu0
    %v6563 = vadd.f32 %v6490, %v6562
    %6564 = vdwg.mxu0
    %6565 = vmatprep.subr.bf16.mxu0 %v5577
    %6566 = vmatpush1.bf16.msra.mxu0 %v5576
    %6567 = vmatprep.subr.bf16.mxu0 %v5585
    %6568 = vmatpush1.bf16.msra.mxu0 %v5584
    %6569 = vmatprep.subr.bf16.mxu0 %v5593
    %6570 = vmatpush1.bf16.msra.mxu0 %v5592
    %6571 = vmatprep.subr.bf16.mxu0 %v5601
    %6572 = vmatpush1.bf16.msra.mxu0 %v5600
    %6573 = vmatprep.subr.bf16.mxu0 0
    %6574 = vmatpush1.bf16.msra.mxu0 0
    %6575 = vmatprep.subr.bf16.mxu0 0
    %6576 = vmatpush1.bf16.msra.mxu0 0
    %6577 = vmatprep.subr.bf16.mxu0 0
    %6578 = vmatpush1.bf16.msra.mxu0 0
    %6579 = vmatprep.subr.bf16.mxu0 0
    %6580 = vmatpush1.bf16.msra.mxu0 0
    %6581 = vmatprep.subr.bf16.mxu0 0
    %6582 = vmatpush1.bf16.msra.mxu0 0
    %6583 = vmatprep.subr.bf16.mxu0 0
    %6584 = vmatpush1.bf16.msra.mxu0 0
    %6585 = vmatprep.subr.bf16.mxu0 0
    %6586 = vmatpush1.bf16.msra.mxu0 0
    %6587 = vmatprep.subr.bf16.mxu0 0
    %6588 = vmatpush1.bf16.msra.mxu0 0
    %6589 = vmatprep.subr.bf16.mxu0 0
    %6590 = vmatpush1.bf16.msra.mxu0 0
    %6591 = vmatprep.subr.bf16.mxu0 0
    %6592 = vmatpush1.bf16.msra.mxu0 0
    %6593 = vmatprep.subr.bf16.mxu0 0
    %6594 = vmatpush1.bf16.msra.mxu0 0
    %6595 = vmatprep.subr.bf16.mxu0 0
    %6596 = vmatpush1.bf16.msra.mxu0 0
    %6597 = vmatprep.mubr.bf16.mxu0 0
    %6598 = vmatmul.mubr.bf16.gmra.mrb[0].mxu0 %v5751
    %v6599 = vpop.f32.mrb[0].mxu0
    %v6600 = vadd.f32 %v6527, %v6599
    %v6601 = vpop.f32.mrb[0].mxu0
    %v6602 = vadd.f32 %v6529, %v6601
    %v6603 = vpop.f32.mrb[0].mxu0
    %v6604 = vadd.f32 %v6531, %v6603
    %v6605 = vpop.f32.mrb[0].mxu0
    %v6606 = vadd.f32 %v6533, %v6605
    %6607 = vmatprep.mubr.bf16.mxu0 0
    %6608 = vmatmul.mubr.bf16.gmra.mrb[0].mxu0 %v5754
    %v6609 = vpop.f32.mrb[0].mxu0
    %v6610 = vadd.f32 %v6537, %v6609
    %v6611 = vpop.f32.mrb[0].mxu0
    %v6612 = vadd.f32 %v6539, %v6611
    %v6613 = vpop.f32.mrb[0].mxu0
    %v6614 = vadd.f32 %v6541, %v6613
    %v6615 = vpop.f32.mrb[0].mxu0
    %v6616 = vadd.f32 %v6543, %v6615
    %6617 = vmatprep.mubr.bf16.mxu0 0
    %6618 = vmatmul.mubr.bf16.gmra.mrb[0].mxu0 %v5757
    %v6619 = vpop.f32.mrb[0].mxu0
    %v6620 = vadd.f32 %v6547, %v6619
    %v6621 = vpop.f32.mrb[0].mxu0
    %v6622 = vadd.f32 %v6549, %v6621
    %v6623 = vpop.f32.mrb[0].mxu0
    %v6624 = vadd.f32 %v6551, %v6623
    %v6625 = vpop.f32.mrb[0].mxu0
    %v6626 = vadd.f32 %v6553, %v6625
    %6627 = vmatprep.mubr.bf16.mxu0 0
    %6628 = vmatmul.mubr.bf16.gmra.mrb[0].mxu0 %v5760
    %v6629 = vpop.f32.mrb[0].mxu0
    %v6630 = vadd.f32 %v6557, %v6629
    %v6631 = vpop.f32.mrb[0].mxu0
    %v6632 = vadd.f32 %v6559, %v6631
    %v6633 = vpop.f32.mrb[0].mxu0
    %v6634 = vadd.f32 %v6561, %v6633
    %v6635 = vpop.f32.mrb[0].mxu0
    %v6636 = vadd.f32 %v6563, %v6635
    %6637 = vdwg.mxu0
    %v6638 = vmax.f32 %v5943, 0.0
    %v6639 = vmax.f32 %v5945, 0.0
    %v6640 = vmax.f32 %v6162, 0.0
    %v6641 = vmax.f32 %v6164, 0.0
    %v6642 = vmax.f32 %v6381, 0.0
    %v6643 = vmax.f32 %v6383, 0.0
    %v6644 = vmax.f32 %v6600, 0.0
    %v6645 = vmax.f32 %v6602, 0.0
    %v6646 = vmax.f32 %v5947, 0.0
    %v6647 = vmax.f32 %v5949, 0.0
    %v6648 = vmax.f32 %v6166, 0.0
    %v6649 = vmax.f32 %v6168, 0.0
    %v6650 = vmax.f32 %v6385, 0.0
    %v6651 = vmax.f32 %v6387, 0.0
    %v6652 = vmax.f32 %v6604, 0.0
    %v6653 = vmax.f32 %v6606, 0.0
    %v6654 = vmax.f32 %v5953, 0.0
    %v6655 = vmax.f32 %v5955, 0.0
    %v6656 = vmax.f32 %v6172, 0.0
    %v6657 = vmax.f32 %v6174, 0.0
    %v6658 = vmax.f32 %v6391, 0.0
    %v6659 = vmax.f32 %v6393, 0.0
    %v6660 = vmax.f32 %v6610, 0.0
    %v6661 = vmax.f32 %v6612, 0.0
    %v6662 = vmax.f32 %v5957, 0.0
    %v6663 = vmax.f32 %v5959, 0.0
    %v6664 = vmax.f32 %v6176, 0.0
    %v6665 = vmax.f32 %v6178, 0.0
    %v6666 = vmax.f32 %v6395, 0.0
    %v6667 = vmax.f32 %v6397, 0.0
    %v6668 = vmax.f32 %v6614, 0.0
    %v6669 = vmax.f32 %v6616, 0.0
    %v6670 = vmax.f32 %v5963, 0.0
    %v6671 = vmax.f32 %v5965, 0.0
    %v6672 = vmax.f32 %v6182, 0.0
    %v6673 = vmax.f32 %v6184, 0.0
    %v6674 = vmax.f32 %v6401, 0.0
    %v6675 = vmax.f32 %v6403, 0.0
    %v6676 = vmax.f32 %v6620, 0.0
    %v6677 = vmax.f32 %v6622, 0.0
    %v6678 = vmax.f32 %v5967, 0.0
    %v6679 = vmax.f32 %v5969, 0.0
    %v6680 = vmax.f32 %v6186, 0.0
    %v6681 = vmax.f32 %v6188, 0.0
    %v6682 = vmax.f32 %v6405, 0.0
    %v6683 = vmax.f32 %v6407, 0.0
    %v6684 = vmax.f32 %v6624, 0.0
    %v6685 = vmax.f32 %v6626, 0.0
    %v6686 = vmax.f32 %v5973, 0.0
    %v6687 = vmax.f32 %v5975, 0.0
    %v6688 = vmax.f32 %v6192, 0.0
    %v6689 = vmax.f32 %v6194, 0.0
    %v6690 = vmax.f32 %v6411, 0.0
    %v6691 = vmax.f32 %v6413, 0.0
    %v6692 = vmax.f32 %v6630, 0.0
    %v6693 = vmax.f32 %v6632, 0.0
    %v6694 = vmax.f32 %v5977, 0.0
    %v6695 = vmax.f32 %v5979, 0.0
    %v6696 = vmax.f32 %v6196, 0.0
    %v6697 = vmax.f32 %v6198, 0.0
    %v6698 = vmax.f32 %v6415, 0.0
    %v6699 = vmax.f32 %v6417, 0.0
    %v6700 = vmax.f32 %v6634, 0.0
    %v6701 = vmax.f32 %v6636, 0.0
    %6702 = vst [vmem:[%s14] sm:$0xff] %v6638
    %6703 = vst [vmem:[%s14 + $0x8] sm:$0xff] %v6639
    %6704 = vst [vmem:[%s14 + $0x10] sm:$0xff] %v6646
    %6705 = vst [vmem:[%s14 + $0x18] sm:$0xff] %v6647
    %6706 = vst [vmem:[%s14 + $0x20] sm:$0xff] %v6654
    %6707 = vst [vmem:[%s14 + $0x28] sm:$0xff] %v6655
    %6708 = vst [vmem:[%s14 + $0x30] sm:$0xff] %v6662
    %6709 = vst [vmem:[%s14 + $0x38] sm:$0xff] %v6663
    %6710 = vst [vmem:[%s14 + $0x40] sm:$0xff] %v6670
    %6711 = vst [vmem:[%s14 + $0x48] sm:$0xff] %v6671
    %6712 = vst [vmem:[%s14 + $0x50] sm:$0xff] %v6678
    %6713 = vst [vmem:[%s14 + $0x58] sm:$0xff] %v6679
    %6714 = vst [vmem:[%s14 + $0x60] sm:$0xff] %v6686
    %6715 = vst [vmem:[%s14 + $0x68] sm:$0xff] %v6687
    %6716 = vst [vmem:[%s14 + $0x70] sm:$0xff] %v6694
    %6717 = vst [vmem:[%s14 + $0x78] sm:$0xff] %v6695
    %s6718 = scalar_lea.vmem %s14, 128
    %6719 = vst [vmem:[%s6718] sm:$0xff] %v6640
    %6720 = vst [vmem:[%s6718 + $0x8] sm:$0xff] %v6641
    %6721 = vst [vmem:[%s6718 + $0x10] sm:$0xff] %v6648
    %6722 = vst [vmem:[%s6718 + $0x18] sm:$0xff] %v6649
    %6723 = vst [vmem:[%s6718 + $0x20] sm:$0xff] %v6656
    %6724 = vst [vmem:[%s6718 + $0x28] sm:$0xff] %v6657
    %6725 = vst [vmem:[%s6718 + $0x30] sm:$0xff] %v6664
    %6726 = vst [vmem:[%s6718 + $0x38] sm:$0xff] %v6665
    %6727 = vst [vmem:[%s6718 + $0x40] sm:$0xff] %v6672
    %6728 = vst [vmem:[%s6718 + $0x48] sm:$0xff] %v6673
    %6729 = vst [vmem:[%s6718 + $0x50] sm:$0xff] %v6680
    %6730 = vst [vmem:[%s6718 + $0x58] sm:$0xff] %v6681
    %6731 = vst [vmem:[%s6718 + $0x60] sm:$0xff] %v6688
    %6732 = vst [vmem:[%s6718 + $0x68] sm:$0xff] %v6689
    %6733 = vst [vmem:[%s6718 + $0x70] sm:$0xff] %v6696
    %6734 = vst [vmem:[%s6718 + $0x78] sm:$0xff] %v6697
    %6735 = vst [vmem:[%s15] sm:$0xff] %v6642
    %6736 = vst [vmem:[%s15 + $0x8] sm:$0xff] %v6643
    %6737 = vst [vmem:[%s15 + $0x10] sm:$0xff] %v6650
    %6738 = vst [vmem:[%s15 + $0x18] sm:$0xff] %v6651
    %6739 = vst [vmem:[%s15 + $0x20] sm:$0xff] %v6658
    %6740 = vst [vmem:[%s15 + $0x28] sm:$0xff] %v6659
    %6741 = vst [vmem:[%s15 + $0x30] sm:$0xff] %v6666
    %6742 = vst [vmem:[%s15 + $0x38] sm:$0xff] %v6667
    %6743 = vst [vmem:[%s15 + $0x40] sm:$0xff] %v6674
    %6744 = vst [vmem:[%s15 + $0x48] sm:$0xff] %v6675
    %6745 = vst [vmem:[%s15 + $0x50] sm:$0xff] %v6682
    %6746 = vst [vmem:[%s15 + $0x58] sm:$0xff] %v6683
    %6747 = vst [vmem:[%s15 + $0x60] sm:$0xff] %v6690
    %6748 = vst [vmem:[%s15 + $0x68] sm:$0xff] %v6691
    %6749 = vst [vmem:[%s15 + $0x70] sm:$0xff] %v6698
    %6750 = vst [vmem:[%s15 + $0x78] sm:$0xff] %v6699
    %s6751 = scalar_lea.vmem %s15, 128
    %6752 = vst [vmem:[%s6751] sm:$0xff] %v6644
    %6753 = vst [vmem:[%s6751 + $0x8] sm:$0xff] %v6645
    %6754 = vst [vmem:[%s6751 + $0x10] sm:$0xff] %v6652
    %6755 = vst [vmem:[%s6751 + $0x18] sm:$0xff] %v6653
    %6756 = vst [vmem:[%s6751 + $0x20] sm:$0xff] %v6660
    %6757 = vst [vmem:[%s6751 + $0x28] sm:$0xff] %v6661
    %6758 = vst [vmem:[%s6751 + $0x30] sm:$0xff] %v6668
    %6759 = vst [vmem:[%s6751 + $0x38] sm:$0xff] %v6669
    %6760 = vst [vmem:[%s6751 + $0x40] sm:$0xff] %v6676
    %6761 = vst [vmem:[%s6751 + $0x48] sm:$0xff] %v6677
    %6762 = vst [vmem:[%s6751 + $0x50] sm:$0xff] %v6684
    %6763 = vst [vmem:[%s6751 + $0x58] sm:$0xff] %v6685
    %6764 = vst [vmem:[%s6751 + $0x60] sm:$0xff] %v6692
    %6765 = vst [vmem:[%s6751 + $0x68] sm:$0xff] %v6693
    %6766 = vst [vmem:[%s6751 + $0x70] sm:$0xff] %v6700
    %6767 = vst [vmem:[%s6751 + $0x78] sm:$0xff] %v6701
    // Predicated region
    $region62: #{_lambda_.1} parent=1 // pred_check
      _
    $region63: #{_lambda_.1} parent=1 // pred_check_branch
      %6769 = sbr.rel (0) target = $region65
    $region64: #{_lambda_.1} parent=1 // pred_region
      _
    $region65: #{_lambda_.1} parent=1 // pred_fallthru
      _
    // Predicated region
    $region66: #{_lambda_.1} parent=1 // pred_check
      _
    $region67: #{_lambda_.1} parent=1 // pred_check_branch
      %6771 = sbr.rel (0) target = $region69
    $region68: #{_lambda_.1} parent=1 // pred_region
      _
    $region69: #{_lambda_.1} parent=1 // pred_fallthru
      _
    // Predicated region
    $region70: #{_lambda_.1} parent=1 // pred_check
      _
    $region71: #{_lambda_.1} parent=1 // pred_check_branch
      %6773 = sbr.rel (0) target = $region73
    $region72: #{_lambda_.1} parent=1 // pred_region
      _
    $region73: #{_lambda_.1} parent=1 // pred_fallthru
      _
    // Predicated region
    $region74: #{_lambda_.1} parent=1 // pred_check
      _
    $region75: #{_lambda_.1} parent=1 // pred_check_branch
      %6775 = sbr.rel (0) target = $region77
    $region76: #{_lambda_.1} parent=1 // pred_region
      _
    $region77: #{_lambda_.1} parent=1 // pred_fallthru
      _
    %6776 = vsyncpa [#allocation4], 1

</llo_original>
